<compile_context>
chip_gen: v7x
topology: tpu7x:2x2x1
jax: 0.10.0
libtpu: 0.0.40
codegen_flags: <defaults>
</compile_context>

<pallas_src>
import functools

import jax
import jax.numpy as jnp
from jax import lax
from jax.experimental import pallas as pl
from jax.experimental.pallas import tpu as pltpu

# Staged matmul-operand dtype (review item #1).  Accumulation is always f32.
MATMUL_DTYPE = jnp.bfloat16

_TAPS = tuple((ky, kx) for ky in range(3) for kx in range(3))
_DILATIONS = (1, 2, 4, 8)


def _esp_fused_kernel(xg_ref, xres_ref, wc1_ref, wd_ref, gamma_ref, beta_ref,
                      mask_ref, out_ref, col_ref, o1_ref,
                      *, N, Cin, n, nOut, H, W, Wp, Lp, G, Wg, eps):
    """Fused: c1 conv -> 4 dilated convs (+adds+concat) -> residual -> BN -> ReLU."""
    inv_count = 1.0 / float(N * H * W)
    mask = mask_ref[...]                       # (1, N*Lp): 1.0 at valid positions

    # o1 guard bands must stay exactly zero (dilated taps read them as conv
    # zero-padding).  o1 is tiny, so zero the whole buffer once (aligned full-
    # lane sweep); the interiors are fully overwritten below.
    o1_ref[...] = jnp.zeros_like(o1_ref)

    # ---- c1: 3x3 conv (Cin -> n) as ONE im2col matmul over all batches -------
    # col rows ordered (tap, cin); every store is 16-sublane / 128-lane aligned.
    for t, (ky, kx) in enumerate(_TAPS):
        s = (ky - 1) * Wp + (kx - 1)
        for b in range(N):
            col_ref[pl.ds(t * Cin, Cin), pl.ds(b * Lp, Lp)] = (
                xg_ref[:, pl.ds(b * Wg + G + s, Lp)])
    out1 = jnp.dot(wc1_ref[...], col_ref[...],
                   preferred_element_type=jnp.float32)          # (n, N*Lp) f32
    # Mask the halo so the dilated stage sees true zero padding of out1.
    out1 = out1 * mask
    for b in range(N):   # G and b*Wg are multiples of 128 -> unmasked stores
        o1_ref[:, pl.ds(b * Wg + G, Lp)] = (
            out1[:, b * Lp:(b + 1) * Lp].astype(o1_ref.dtype))

    # ---- d1/d2/d4/d8 + hierarchical adds + concat: ONE matmul, K = 36n -------
    # wd_ref is block-structured so the output rows come out directly as
    # [d1, d2, d2+d4, d2+d4+d8] in final channel order.  Per (tap, batch) the
    # four dilation windows are stacked into one (4n, Lp) value -> one aligned
    # 16-row store instead of four sublane-misaligned 4-row stores.
    for t, (ky, kx) in enumerate(_TAPS):
        base = (ky - 1) * Wp + (kx - 1)
        for b in range(N):
            stacked = jnp.concatenate(
                [o1_ref[:, pl.ds(b * Wg + G + base * d, Lp)]
                 for d in _DILATIONS], axis=0)                  # (4n, Lp) bf16
            col_ref[pl.ds(t * 4 * n, 4 * n), pl.ds(b * Lp, Lp)] = stacked
    combine = jnp.dot(wd_ref[...], col_ref[...],
                      preferred_element_type=jnp.float32)       # (nOut, N*Lp)

    # ---- residual (f32) + mask, fused BN (training batch stats) + ReLU -------
    y = (xres_ref[...] + combine) * mask
    ssum = jnp.sum(y, axis=1, keepdims=True)                    # (nOut, 1)
    ssq = jnp.sum(y * y, axis=1, keepdims=True)
    mean = ssum * inv_count
    var = ssq * inv_count - mean * mean
    scale = gamma_ref[...] * lax.rsqrt(var + eps)
    bias = beta_ref[...] - mean * scale
    out_ref[...] = jnp.maximum(y * scale + bias, 0.0)


def esp_block_forward(x_nchw, params, *, eps=1e-3):
    """DilatedParllelResidualBlockB1 forward (training-mode BN + ReLU). NCHW in/out."""
    wc1, wd1, wd2, wd4, wd8 = (params[k] for k in ("wc1", "wd1", "wd2", "wd4", "wd8"))
    gamma, beta = params["gamma"], params["beta"]

    x = x_nchw.astype(jnp.float32)
    N, Cin, H, W = x.shape
    n = wc1.shape[-1]
    n1 = wd1.shape[-1]
    nOut = n1 + 3 * n
    assert Cin == nOut, "residual add requires nIn == nOut"
    assert Cin == 4 * n, "kernel assumes nOut % 4 == 0 (n1 == n) so the im2col scratch is shared"

    P = 8                                   # halo >= max dilation
    Hp, Wp = H + 2 * P, W + 2 * P
    Lp = Hp * Wp                            # lane-dense flat spatial axis (1024)
    # flat guard >= max tap shift (8*(Wp+1)), rounded up to 128 so centre-tap /
    # residual / o1-interior slices and per-batch segment starts are lane-aligned.
    G = (P * Wp + P + 127) // 128 * 128
    Wg = Lp + 2 * G
    K = 9 * Cin                             # contraction size for both matmuls

    # ---- layout plumbing (outside the kernel) --------------------------------
    xpad = jnp.pad(x, ((0, 0), (0, 0), (P, P), (P, P))).reshape(N, Cin, Lp)
    # residual view: lane-dense (Cin, N*Lp), kept f32 for the residual add
    x_res = jnp.transpose(xpad, (1, 0, 2)).reshape(Cin, N * Lp)
    # guarded im2col view: (Cin, N*Wg), cast to bf16 ONCE here (not per tap)
    x_guard = jnp.transpose(jnp.pad(xpad, ((0, 0), (0, 0), (G, G))),
                            (1, 0, 2)).reshape(Cin, N * Wg).astype(MATMUL_DTYPE)

    # validity mask over the padded flat spatial axis, tiled over batch lanes
    row_ok = (jnp.arange(Hp) >= P) & (jnp.arange(Hp) < P + H)
    col_ok = (jnp.arange(Wp) >= P) & (jnp.arange(Wp) < P + W)
    mask = jnp.tile(
        (row_ok[:, None] & col_ok[None, :]).astype(jnp.float32).reshape(1, Lp),
        (1, N))

    # c1 weight: HWIO (3,3,Cin,n) -> (n, 9*Cin), columns ordered (tap, cin)
    wc1f = jnp.transpose(wc1, (3, 0, 1, 2)).reshape(n, 9 * Cin).astype(MATMUL_DTYPE)

    # dilated weights folded into one block-structured matrix (nOut, 9*4*n)
    # with the hierarchical adds and the channel concat baked into the rows.
    def tap_mat(w):                         # HWIO (3,3,n,co) -> (co, 9, n)
        return jnp.transpose(w, (3, 0, 1, 2)).reshape(w.shape[-1], 9, n)

    w1, w2, w4, w8 = map(tap_mat, (wd1, wd2, wd4, wd8))
    blk = jnp.zeros((nOut, 9, 4, n), jnp.float32)
    blk = blk.at[0:n1, :, 0, :].set(w1)                    # d1
    blk = blk.at[n1:n1 + n, :, 1, :].set(w2)               # add1 = d2
    blk = blk.at[n1 + n:n1 + 2 * n, :, 1, :].set(w2)       # add2 = d2 + d4
    blk = blk.at[n1 + n:n1 + 2 * n, :, 2, :].set(w4)
    blk = blk.at[n1 + 2 * n:, :, 1, :].set(w2)             # add3 = d2 + d4 + d8
    blk = blk.at[n1 + 2 * n:, :, 2, :].set(w4)
    blk = blk.at[n1 + 2 * n:, :, 3, :].set(w8)
    wdf = blk.reshape(nOut, 9 * 4 * n).astype(MATMUL_DTYPE)

    kern = functools.partial(
        _esp_fused_kernel, N=N, Cin=Cin, n=n, nOut=nOut, H=H, W=W,
        Wp=Wp, Lp=Lp, G=G, Wg=Wg, eps=eps)

    y_flat = pl.pallas_call(
        kern,
        out_shape=jax.ShapeDtypeStruct((nOut, N * Lp), jnp.float32),
        grid_spec=pltpu.PrefetchScalarGridSpec(
            num_scalar_prefetch=0,
            grid=(1,),                 # fully fused; batch lives on the lane axis
            in_specs=[
                pl.BlockSpec((Cin, N * Wg), lambda i: (0, 0)),   # guarded bf16 x
                pl.BlockSpec((Cin, N * Lp), lambda i: (0, 0)),   # residual f32 x
                pl.BlockSpec((n, K), lambda i: (0, 0)),
                pl.BlockSpec((nOut, K), lambda i: (0, 0)),
                pl.BlockSpec((nOut, 1), lambda i: (0, 0)),
                pl.BlockSpec((nOut, 1), lambda i: (0, 0)),
                pl.BlockSpec((1, N * Lp), lambda i: (0, 0)),
            ],
            out_specs=pl.BlockSpec((nOut, N * Lp), lambda i: (0, 0)),
            scratch_shapes=[
                pltpu.VMEM((K, N * Lp), MATMUL_DTYPE),   # shared im2col buffer
                pltpu.VMEM((n, N * Wg), MATMUL_DTYPE),   # out1, guarded + masked
            ],
        ),
        compiler_params=pltpu.CompilerParams(
            dimension_semantics=("arbitrary",),
            vmem_limit_bytes=64 * 1024 * 1024),
    )(x_guard, x_res, wc1f, wdf,
      gamma.reshape(nOut, 1).astype(jnp.float32),
      beta.reshape(nOut, 1).astype(jnp.float32),
      mask)

    # drop the halo and restore NCHW (plain XLA slice/transpose = layout plumbing)
    y = y_flat.reshape(nOut, N, Hp, Wp).transpose(1, 0, 2, 3)
    return y[:, :, P:P + H, P:P + W]


# ------------------------- pure-JAX reference ---------------------------------
def ref_forward(x_nchw, params, *, stage_dtype=jnp.float32):
    """ESP block reference.  stage_dtype=bf16 emulates the kernel's operand
    staging (f32 accumulation) for a tight kernel-logic check."""
    x = jnp.transpose(x_nchw, (0, 2, 3, 1)).astype(jnp.float32)

    def conv(inp, w, d):
        return lax.conv_general_dilated(
            inp.astype(stage_dtype), w.astype(stage_dtype),
            window_strides=(1, 1), padding=[(d, d), (d, d)],
            rhs_dilation=(d, d),
            dimension_numbers=("NHWC", "HWIO", "NHWC"),
            preferred_element_type=jnp.float32)

    out1 = conv(x, params["wc1"], 1)
    d1 = conv(out1, params["wd1"], 1)
    d2 = conv(out1, params["wd2"], 2)
    d4 = conv(out1, params["wd4"], 4)
    d8 = conv(out1, params["wd8"], 8)
    add1 = d2
    add2 = add1 + d4
    add3 = add2 + d8
    combine = jnp.concatenate([d1, add1, add2, add3], axis=-1)
    y = x + combine
    mean = jnp.mean(y, axis=(0, 1, 2))
    var = jnp.mean((y - mean) ** 2, axis=(0, 1, 2))
    out = (y - mean) * lax.rsqrt(var + 1e-3) * params["gamma"] + params["beta"]
    out = jnp.maximum(out, 0.0)
    return jnp.transpose(out, (0, 3, 1, 2))


# --------------------------------- main ----------------------------------------
if __name__ == "__main__":
    key = jax.random.PRNGKey(0)
    N, C, H, W = 2, 16, 16, 16        # small shapes; nIn == nOut == 16
    nIn = nOut = C
    k = 4
    n = nOut // k                     # 4
    n1 = nOut - (k - 1) * n           # 4

    ks = jax.random.split(key, 6)
    x = jax.random.normal(ks[0], (N, C, H, W), jnp.float32)
    params = {
        # weights in HWIO layout (3, 3, in_ch, out_ch)
        "wc1": 0.1 * jax.random.normal(ks[1], (3, 3, nIn, n), jnp.float32),
        "wd1": 0.1 * jax.random.normal(ks[2], (3, 3, n, n1), jnp.float32),
        "wd2": 0.1 * jax.random.normal(ks[3], (3, 3, n, n), jnp.float32),
        "wd4": 0.1 * jax.random.normal(ks[4], (3, 3, n, n), jnp.float32),
        "wd8": 0.1 * jax.random.normal(ks[5], (3, 3, n, n), jnp.float32),
        # BatchNorm affine params at PyTorch defaults (weight=1, bias=0)
        "gamma": jnp.ones((nOut,), jnp.float32),
        "beta": jnp.zeros((nOut,), jnp.float32),
    }

    out = jax.block_until_ready(esp_block_forward(x, params))
    assert out.shape == (N, nOut, H, W)

    # (1) kernel-logic check: reference with matching bf16 operand staging
    #     (tight tolerance -- only accumulation-order differences remain).
    ref_staged = ref_forward(x, params, stage_dtype=MATMUL_DTYPE)
    ok_logic = bool(jnp.allclose(out, ref_staged, atol=5e-3, rtol=5e-3))
    # (2) module-semantics check vs full-f32 reference; tolerance widened to
    #     cover the deliberate bf16 staging of the two conv stages.
    ref_f32 = ref_forward(x, params, stage_dtype=jnp.float32)
    ok_f32 = bool(jnp.allclose(out, ref_f32, atol=2.5e-2, rtol=2.5e-2))

    if ok_logic and ok_f32:
        print("KERNEL_OK")
    else:
        print("MISMATCH staged_err=%.3e f32_err=%.3e" % (
            float(jnp.max(jnp.abs(out - ref_staged))),
            float(jnp.max(jnp.abs(out - ref_f32)))))
</pallas_src>

<mosaic_0001>
module attributes {stable_mosaic.version = 11 : i64} {
  func.func @_esp_fused_kernel(%arg0: i32, %arg1: memref<16x3584xbf16, #tpu.memory_space<vmem>>, %arg2: memref<16x2048xf32, #tpu.memory_space<vmem>>, %arg3: memref<4x144xbf16, #tpu.memory_space<vmem>>, %arg4: memref<16x144xbf16, #tpu.memory_space<vmem>>, %arg5: memref<16x1xf32, #tpu.memory_space<vmem>>, %arg6: memref<16x1xf32, #tpu.memory_space<vmem>>, %arg7: memref<1x2048xf32, #tpu.memory_space<vmem>>, %arg8: memref<16x2048xf32, #tpu.memory_space<vmem>>, %arg9: memref<144x2048xbf16, #tpu.memory_space<vmem>>, %arg10: memref<4x3584xbf16, #tpu.memory_space<vmem>>) attributes {dimension_semantics = [#tpu.dimension_semantics<arbitrary>], iteration_bounds = array<i64: 1>, scalar_prefetch = 0 : i64, scratch_operands = 2 : i64, tpu.core_type = #tpu.core_type<tc>, window_params = [{pipeline_mode = #tpu.pipeline_mode<synchronous>, transform_indices = @transform_0, window_bounds = array<i64: 16, 3584>}, {pipeline_mode = #tpu.pipeline_mode<synchronous>, transform_indices = @transform_1, window_bounds = array<i64: 16, 2048>}, {pipeline_mode = #tpu.pipeline_mode<synchronous>, transform_indices = @transform_2, window_bounds = array<i64: 4, 144>}, {pipeline_mode = #tpu.pipeline_mode<synchronous>, transform_indices = @transform_3, window_bounds = array<i64: 16, 144>}, {pipeline_mode = #tpu.pipeline_mode<synchronous>, transform_indices = @transform_4, window_bounds = array<i64: 16, 1>}, {pipeline_mode = #tpu.pipeline_mode<synchronous>, transform_indices = @transform_5, window_bounds = array<i64: 16, 1>}, {pipeline_mode = #tpu.pipeline_mode<synchronous>, transform_indices = @transform_6, window_bounds = array<i64: 1, 2048>}, {pipeline_mode = #tpu.pipeline_mode<synchronous>, transform_indices = @transform_7, window_bounds = array<i64: 16, 2048>}]} {
    %c0 = arith.constant 0 : index
    %c0_0 = arith.constant 0 : index
    %0 = vector.load %arg7[%c0, %c0_0] : memref<1x2048xf32, #tpu.memory_space<vmem>>, vector<1x2048xf32>
    %cst = arith.constant 0.000000e+00 : bf16
    %1 = vector.broadcast %cst : bf16 to vector<4x3584xbf16>
    %c0_1 = arith.constant 0 : index
    %c0_2 = arith.constant 0 : index
    %2 = vector.load %arg10[%c0_1, %c0_2] : memref<4x3584xbf16, #tpu.memory_space<vmem>>, vector<4x3584xbf16>
    tpu.vector_store %arg10[%c0_1, %c0_2], %1 {strides = array<i32>} : memref<4x3584xbf16, #tpu.memory_space<vmem>>, vector<4x3584xbf16>,
    %c0_3 = arith.constant 0 : index
    %c351 = arith.constant 351 : index
    %3 = vector.load %arg1[%c0_3, %c351] : memref<16x3584xbf16, #tpu.memory_space<vmem>>, vector<16x1024xbf16>
    %c0_4 = arith.constant 0 : index
    %c0_5 = arith.constant 0 : index
    %4 = vector.load %arg9[%c0_4, %c0_5] : memref<144x2048xbf16, #tpu.memory_space<vmem>>, vector<16x1024xbf16>
    tpu.vector_store %arg9[%c0_4, %c0_5], %3 {strides = array<i32>} : memref<144x2048xbf16, #tpu.memory_space<vmem>>, vector<16x1024xbf16>,
    %c0_6 = arith.constant 0 : index
    %c2143 = arith.constant 2143 : index
    %5 = vector.load %arg1[%c0_6, %c2143] : memref<16x3584xbf16, #tpu.memory_space<vmem>>, vector<16x1024xbf16>
    %c0_7 = arith.constant 0 : index
    %c1024 = arith.constant 1024 : index
    %6 = vector.load %arg9[%c0_7, %c1024] : memref<144x2048xbf16, #tpu.memory_space<vmem>>, vector<16x1024xbf16>
    tpu.vector_store %arg9[%c0_7, %c1024], %5 {strides = array<i32>} : memref<144x2048xbf16, #tpu.memory_space<vmem>>, vector<16x1024xbf16>,
    %c0_8 = arith.constant 0 : index
    %c352 = arith.constant 352 : index
    %7 = vector.load %arg1[%c0_8, %c352] : memref<16x3584xbf16, #tpu.memory_space<vmem>>, vector<16x1024xbf16>
    %c16 = arith.constant 16 : index
    %c0_9 = arith.constant 0 : index
    %8 = vector.load %arg9[%c16, %c0_9] : memref<144x2048xbf16, #tpu.memory_space<vmem>>, vector<16x1024xbf16>
    tpu.vector_store %arg9[%c16, %c0_9], %7 {strides = array<i32>} : memref<144x2048xbf16, #tpu.memory_space<vmem>>, vector<16x1024xbf16>,
    %c0_10 = arith.constant 0 : index
    %c2144 = arith.constant 2144 : index
    %9 = vector.load %arg1[%c0_10, %c2144] : memref<16x3584xbf16, #tpu.memory_space<vmem>>, vector<16x1024xbf16>
    %c16_11 = arith.constant 16 : index
    %c1024_12 = arith.constant 1024 : index
    %10 = vector.load %arg9[%c16_11, %c1024_12] : memref<144x2048xbf16, #tpu.memory_space<vmem>>, vector<16x1024xbf16>
    tpu.vector_store %arg9[%c16_11, %c1024_12], %9 {strides = array<i32>} : memref<144x2048xbf16, #tpu.memory_space<vmem>>, vector<16x1024xbf16>,
    %c0_13 = arith.constant 0 : index
    %c353 = arith.constant 353 : index
    %11 = vector.load %arg1[%c0_13, %c353] : memref<16x3584xbf16, #tpu.memory_space<vmem>>, vector<16x1024xbf16>
    %c32 = arith.constant 32 : index
    %c0_14 = arith.constant 0 : index
    %12 = vector.load %arg9[%c32, %c0_14] : memref<144x2048xbf16, #tpu.memory_space<vmem>>, vector<16x1024xbf16>
    tpu.vector_store %arg9[%c32, %c0_14], %11 {strides = array<i32>} : memref<144x2048xbf16, #tpu.memory_space<vmem>>, vector<16x1024xbf16>,
    %c0_15 = arith.constant 0 : index
    %c2145 = arith.constant 2145 : index
    %13 = vector.load %arg1[%c0_15, %c2145] : memref<16x3584xbf16, #tpu.memory_space<vmem>>, vector<16x1024xbf16>
    %c32_16 = arith.constant 32 : index
    %c1024_17 = arith.constant 1024 : index
    %14 = vector.load %arg9[%c32_16, %c1024_17] : memref<144x2048xbf16, #tpu.memory_space<vmem>>, vector<16x1024xbf16>
    tpu.vector_store %arg9[%c32_16, %c1024_17], %13 {strides = array<i32>} : memref<144x2048xbf16, #tpu.memory_space<vmem>>, vector<16x1024xbf16>,
    %c0_18 = arith.constant 0 : index
    %c383 = arith.constant 383 : index
    %15 = vector.load %arg1[%c0_18, %c383] : memref<16x3584xbf16, #tpu.memory_space<vmem>>, vector<16x1024xbf16>
    %c48 = arith.constant 48 : index
    %c0_19 = arith.constant 0 : index
    %16 = vector.load %arg9[%c48, %c0_19] : memref<144x2048xbf16, #tpu.memory_space<vmem>>, vector<16x1024xbf16>
    tpu.vector_store %arg9[%c48, %c0_19], %15 {strides = array<i32>} : memref<144x2048xbf16, #tpu.memory_space<vmem>>, vector<16x1024xbf16>,
    %c0_20 = arith.constant 0 : index
    %c2175 = arith.constant 2175 : index
    %17 = vector.load %arg1[%c0_20, %c2175] : memref<16x3584xbf16, #tpu.memory_space<vmem>>, vector<16x1024xbf16>
    %c48_21 = arith.constant 48 : index
    %c1024_22 = arith.constant 1024 : index
    %18 = vector.load %arg9[%c48_21, %c1024_22] : memref<144x2048xbf16, #tpu.memory_space<vmem>>, vector<16x1024xbf16>
    tpu.vector_store %arg9[%c48_21, %c1024_22], %17 {strides = array<i32>} : memref<144x2048xbf16, #tpu.memory_space<vmem>>, vector<16x1024xbf16>,
    %c0_23 = arith.constant 0 : index
    %c384 = arith.constant 384 : index
    %19 = vector.load %arg1[%c0_23, %c384] : memref<16x3584xbf16, #tpu.memory_space<vmem>>, vector<16x1024xbf16>
    %c64 = arith.constant 64 : index
    %c0_24 = arith.constant 0 : index
    %20 = vector.load %arg9[%c64, %c0_24] : memref<144x2048xbf16, #tpu.memory_space<vmem>>, vector<16x1024xbf16>
    tpu.vector_store %arg9[%c64, %c0_24], %19 {strides = array<i32>} : memref<144x2048xbf16, #tpu.memory_space<vmem>>, vector<16x1024xbf16>,
    %c0_25 = arith.constant 0 : index
    %c2176 = arith.constant 2176 : index
    %21 = vector.load %arg1[%c0_25, %c2176] : memref<16x3584xbf16, #tpu.memory_space<vmem>>, vector<16x1024xbf16>
    %c64_26 = arith.constant 64 : index
    %c1024_27 = arith.constant 1024 : index
    %22 = vector.load %arg9[%c64_26, %c1024_27] : memref<144x2048xbf16, #tpu.memory_space<vmem>>, vector<16x1024xbf16>
    tpu.vector_store %arg9[%c64_26, %c1024_27], %21 {strides = array<i32>} : memref<144x2048xbf16, #tpu.memory_space<vmem>>, vector<16x1024xbf16>,
    %c0_28 = arith.constant 0 : index
    %c385 = arith.constant 385 : index
    %23 = vector.load %arg1[%c0_28, %c385] : memref<16x3584xbf16, #tpu.memory_space<vmem>>, vector<16x1024xbf16>
    %c80 = arith.constant 80 : index
    %c0_29 = arith.constant 0 : index
    %24 = vector.load %arg9[%c80, %c0_29] : memref<144x2048xbf16, #tpu.memory_space<vmem>>, vector<16x1024xbf16>
    tpu.vector_store %arg9[%c80, %c0_29], %23 {strides = array<i32>} : memref<144x2048xbf16, #tpu.memory_space<vmem>>, vector<16x1024xbf16>,
    %c0_30 = arith.constant 0 : index
    %c2177 = arith.constant 2177 : index
    %25 = vector.load %arg1[%c0_30, %c2177] : memref<16x3584xbf16, #tpu.memory_space<vmem>>, vector<16x1024xbf16>
    %c80_31 = arith.constant 80 : index
    %c1024_32 = arith.constant 1024 : index
    %26 = vector.load %arg9[%c80_31, %c1024_32] : memref<144x2048xbf16, #tpu.memory_space<vmem>>, vector<16x1024xbf16>
    tpu.vector_store %arg9[%c80_31, %c1024_32], %25 {strides = array<i32>} : memref<144x2048xbf16, #tpu.memory_space<vmem>>, vector<16x1024xbf16>,
    %c0_33 = arith.constant 0 : index
    %c415 = arith.constant 415 : index
    %27 = vector.load %arg1[%c0_33, %c415] : memref<16x3584xbf16, #tpu.memory_space<vmem>>, vector<16x1024xbf16>
    %c96 = arith.constant 96 : index
    %c0_34 = arith.constant 0 : index
    %28 = vector.load %arg9[%c96, %c0_34] : memref<144x2048xbf16, #tpu.memory_space<vmem>>, vector<16x1024xbf16>
    tpu.vector_store %arg9[%c96, %c0_34], %27 {strides = array<i32>} : memref<144x2048xbf16, #tpu.memory_space<vmem>>, vector<16x1024xbf16>,
    %c0_35 = arith.constant 0 : index
    %c2207 = arith.constant 2207 : index
    %29 = vector.load %arg1[%c0_35, %c2207] : memref<16x3584xbf16, #tpu.memory_space<vmem>>, vector<16x1024xbf16>
    %c96_36 = arith.constant 96 : index
    %c1024_37 = arith.constant 1024 : index
    %30 = vector.load %arg9[%c96_36, %c1024_37] : memref<144x2048xbf16, #tpu.memory_space<vmem>>, vector<16x1024xbf16>
    tpu.vector_store %arg9[%c96_36, %c1024_37], %29 {strides = array<i32>} : memref<144x2048xbf16, #tpu.memory_space<vmem>>, vector<16x1024xbf16>,
    %c0_38 = arith.constant 0 : index
    %c416 = arith.constant 416 : index
    %31 = vector.load %arg1[%c0_38, %c416] : memref<16x3584xbf16, #tpu.memory_space<vmem>>, vector<16x1024xbf16>
    %c112 = arith.constant 112 : index
    %c0_39 = arith.constant 0 : index
    %32 = vector.load %arg9[%c112, %c0_39] : memref<144x2048xbf16, #tpu.memory_space<vmem>>, vector<16x1024xbf16>
    tpu.vector_store %arg9[%c112, %c0_39], %31 {strides = array<i32>} : memref<144x2048xbf16, #tpu.memory_space<vmem>>, vector<16x1024xbf16>,
    %c0_40 = arith.constant 0 : index
    %c2208 = arith.constant 2208 : index
    %33 = vector.load %arg1[%c0_40, %c2208] : memref<16x3584xbf16, #tpu.memory_space<vmem>>, vector<16x1024xbf16>
    %c112_41 = arith.constant 112 : index
    %c1024_42 = arith.constant 1024 : index
    %34 = vector.load %arg9[%c112_41, %c1024_42] : memref<144x2048xbf16, #tpu.memory_space<vmem>>, vector<16x1024xbf16>
    tpu.vector_store %arg9[%c112_41, %c1024_42], %33 {strides = array<i32>} : memref<144x2048xbf16, #tpu.memory_space<vmem>>, vector<16x1024xbf16>,
    %c0_43 = arith.constant 0 : index
    %c417 = arith.constant 417 : index
    %35 = vector.load %arg1[%c0_43, %c417] : memref<16x3584xbf16, #tpu.memory_space<vmem>>, vector<16x1024xbf16>
    %c128 = arith.constant 128 : index
    %c0_44 = arith.constant 0 : index
    %36 = vector.load %arg9[%c128, %c0_44] : memref<144x2048xbf16, #tpu.memory_space<vmem>>, vector<16x1024xbf16>
    tpu.vector_store %arg9[%c128, %c0_44], %35 {strides = array<i32>} : memref<144x2048xbf16, #tpu.memory_space<vmem>>, vector<16x1024xbf16>,
    %c0_45 = arith.constant 0 : index
    %c2209 = arith.constant 2209 : index
    %37 = vector.load %arg1[%c0_45, %c2209] : memref<16x3584xbf16, #tpu.memory_space<vmem>>, vector<16x1024xbf16>
    %c128_46 = arith.constant 128 : index
    %c1024_47 = arith.constant 1024 : index
    %38 = vector.load %arg9[%c128_46, %c1024_47] : memref<144x2048xbf16, #tpu.memory_space<vmem>>, vector<16x1024xbf16>
    tpu.vector_store %arg9[%c128_46, %c1024_47], %37 {strides = array<i32>} : memref<144x2048xbf16, #tpu.memory_space<vmem>>, vector<16x1024xbf16>,
    %c0_48 = arith.constant 0 : index
    %c0_49 = arith.constant 0 : index
    %39 = vector.load %arg3[%c0_48, %c0_49] : memref<4x144xbf16, #tpu.memory_space<vmem>>, vector<4x144xbf16>
    %c0_50 = arith.constant 0 : index
    %c0_51 = arith.constant 0 : index
    %40 = vector.load %arg9[%c0_50, %c0_51] : memref<144x2048xbf16, #tpu.memory_space<vmem>>, vector<144x2048xbf16>
    %cst_52 = arith.constant dense<0.000000e+00> : vector<4x2048xf32>
    %41 = tpu.matmul %39, %40, %cst_52 {dimension_numbers = #tpu.dot_dimension_numbers<[1], [0], [0], [1], [0, 0, 1, 1], [], []>} : vector<4x144xbf16>, vector<144x2048xbf16>, vector<4x2048xf32> -> vector<4x2048xf32>
    %42 = vector.broadcast %0 : vector<1x2048xf32> to vector<4x2048xf32>
    %43 = arith.mulf %41, %42 : vector<4x2048xf32>
    %44 = vector.extract_strided_slice %43 {offsets = [0, 0], sizes = [4, 1024], strides = [1, 1]} : vector<4x2048xf32> to vector<4x1024xf32>
    %45 = arith.truncf %44 : vector<4x1024xf32> to vector<4x1024xbf16>
    %c0_53 = arith.constant 0 : index
    %c384_54 = arith.constant 384 : index
    %46 = vector.load %arg10[%c0_53, %c384_54] : memref<4x3584xbf16, #tpu.memory_space<vmem>>, vector<4x1024xbf16>
    tpu.vector_store %arg10[%c0_53, %c384_54], %45 {strides = array<i32>} : memref<4x3584xbf16, #tpu.memory_space<vmem>>, vector<4x1024xbf16>,
    %47 = vector.extract_strided_slice %43 {offsets = [0, 1024], sizes = [4, 1024], strides = [1, 1]} : vector<4x2048xf32> to vector<4x1024xf32>
    %48 = arith.truncf %47 : vector<4x1024xf32> to vector<4x1024xbf16>
    %c0_55 = arith.constant 0 : index
    %c2176_56 = arith.constant 2176 : index
    %49 = vector.load %arg10[%c0_55, %c2176_56] : memref<4x3584xbf16, #tpu.memory_space<vmem>>, vector<4x1024xbf16>
    tpu.vector_store %arg10[%c0_55, %c2176_56], %48 {strides = array<i32>} : memref<4x3584xbf16, #tpu.memory_space<vmem>>, vector<4x1024xbf16>,
    %c0_57 = arith.constant 0 : index
    %c351_58 = arith.constant 351 : index
    %50 = vector.load %arg10[%c0_57, %c351_58] : memref<4x3584xbf16, #tpu.memory_space<vmem>>, vector<4x1024xbf16>
    %c0_59 = arith.constant 0 : index
    %c318 = arith.constant 318 : index
    %51 = vector.load %arg10[%c0_59, %c318] : memref<4x3584xbf16, #tpu.memory_space<vmem>>, vector<4x1024xbf16>
    %c0_60 = arith.constant 0 : index
    %c252 = arith.constant 252 : index
    %52 = vector.load %arg10[%c0_60, %c252] : memref<4x3584xbf16, #tpu.memory_space<vmem>>, vector<4x1024xbf16>
    %c0_61 = arith.constant 0 : index
    %c120 = arith.constant 120 : index
    %53 = vector.load %arg10[%c0_61, %c120] : memref<4x3584xbf16, #tpu.memory_space<vmem>>, vector<4x1024xbf16>
    %54 = tpu.concatenate %50, %51, %52, %53 in 0 : vector<4x1024xbf16>, vector<4x1024xbf16>, vector<4x1024xbf16>, vector<4x1024xbf16> -> vector<16x1024xbf16>
    %c0_62 = arith.constant 0 : index
    %c0_63 = arith.constant 0 : index
    %55 = vector.load %arg9[%c0_62, %c0_63] : memref<144x2048xbf16, #tpu.memory_space<vmem>>, vector<16x1024xbf16>
    tpu.vector_store %arg9[%c0_62, %c0_63], %54 {strides = array<i32>} : memref<144x2048xbf16, #tpu.memory_space<vmem>>, vector<16x1024xbf16>,
    %c0_64 = arith.constant 0 : index
    %c2143_65 = arith.constant 2143 : index
    %56 = vector.load %arg10[%c0_64, %c2143_65] : memref<4x3584xbf16, #tpu.memory_space<vmem>>, vector<4x1024xbf16>
    %c0_66 = arith.constant 0 : index
    %c2110 = arith.constant 2110 : index
    %57 = vector.load %arg10[%c0_66, %c2110] : memref<4x3584xbf16, #tpu.memory_space<vmem>>, vector<4x1024xbf16>
    %c0_67 = arith.constant 0 : index
    %c2044 = arith.constant 2044 : index
    %58 = vector.load %arg10[%c0_67, %c2044] : memref<4x3584xbf16, #tpu.memory_space<vmem>>, vector<4x1024xbf16>
    %c0_68 = arith.constant 0 : index
    %c1912 = arith.constant 1912 : index
    %59 = vector.load %arg10[%c0_68, %c1912] : memref<4x3584xbf16, #tpu.memory_space<vmem>>, vector<4x1024xbf16>
    %60 = tpu.concatenate %56, %57, %58, %59 in 0 : vector<4x1024xbf16>, vector<4x1024xbf16>, vector<4x1024xbf16>, vector<4x1024xbf16> -> vector<16x1024xbf16>
    %c0_69 = arith.constant 0 : index
    %c1024_70 = arith.constant 1024 : index
    %61 = vector.load %arg9[%c0_69, %c1024_70] : memref<144x2048xbf16, #tpu.memory_space<vmem>>, vector<16x1024xbf16>
    tpu.vector_store %arg9[%c0_69, %c1024_70], %60 {strides = array<i32>} : memref<144x2048xbf16, #tpu.memory_space<vmem>>, vector<16x1024xbf16>,
    %c0_71 = arith.constant 0 : index
    %c352_72 = arith.constant 352 : index
    %62 = vector.load %arg10[%c0_71, %c352_72] : memref<4x3584xbf16, #tpu.memory_space<vmem>>, vector<4x1024xbf16>
    %c0_73 = arith.constant 0 : index
    %c320 = arith.constant 320 : index
    %63 = vector.load %arg10[%c0_73, %c320] : memref<4x3584xbf16, #tpu.memory_space<vmem>>, vector<4x1024xbf16>
    %c0_74 = arith.constant 0 : index
    %c256 = arith.constant 256 : index
    %64 = vector.load %arg10[%c0_74, %c256] : memref<4x3584xbf16, #tpu.memory_space<vmem>>, vector<4x1024xbf16>
    %c0_75 = arith.constant 0 : index
    %c128_76 = arith.constant 128 : index
    %65 = vector.load %arg10[%c0_75, %c128_76] : memref<4x3584xbf16, #tpu.memory_space<vmem>>, vector<4x1024xbf16>
    %66 = tpu.concatenate %62, %63, %64, %65 in 0 : vector<4x1024xbf16>, vector<4x1024xbf16>, vector<4x1024xbf16>, vector<4x1024xbf16> -> vector<16x1024xbf16>
    %c16_77 = arith.constant 16 : index
    %c0_78 = arith.constant 0 : index
    %67 = vector.load %arg9[%c16_77, %c0_78] : memref<144x2048xbf16, #tpu.memory_space<vmem>>, vector<16x1024xbf16>
    tpu.vector_store %arg9[%c16_77, %c0_78], %66 {strides = array<i32>} : memref<144x2048xbf16, #tpu.memory_space<vmem>>, vector<16x1024xbf16>,
    %c0_79 = arith.constant 0 : index
    %c2144_80 = arith.constant 2144 : index
    %68 = vector.load %arg10[%c0_79, %c2144_80] : memref<4x3584xbf16, #tpu.memory_space<vmem>>, vector<4x1024xbf16>
    %c0_81 = arith.constant 0 : index
    %c2112 = arith.constant 2112 : index
    %69 = vector.load %arg10[%c0_81, %c2112] : memref<4x3584xbf16, #tpu.memory_space<vmem>>, vector<4x1024xbf16>
    %c0_82 = arith.constant 0 : index
    %c2048 = arith.constant 2048 : index
    %70 = vector.load %arg10[%c0_82, %c2048] : memref<4x3584xbf16, #tpu.memory_space<vmem>>, vector<4x1024xbf16>
    %c0_83 = arith.constant 0 : index
    %c1920 = arith.constant 1920 : index
    %71 = vector.load %arg10[%c0_83, %c1920] : memref<4x3584xbf16, #tpu.memory_space<vmem>>, vector<4x1024xbf16>
    %72 = tpu.concatenate %68, %69, %70, %71 in 0 : vector<4x1024xbf16>, vector<4x1024xbf16>, vector<4x1024xbf16>, vector<4x1024xbf16> -> vector<16x1024xbf16>
    %c16_84 = arith.constant 16 : index
    %c1024_85 = arith.constant 1024 : index
    %73 = vector.load %arg9[%c16_84, %c1024_85] : memref<144x2048xbf16, #tpu.memory_space<vmem>>, vector<16x1024xbf16>
    tpu.vector_store %arg9[%c16_84, %c1024_85], %72 {strides = array<i32>} : memref<144x2048xbf16, #tpu.memory_space<vmem>>, vector<16x1024xbf16>,
    %c0_86 = arith.constant 0 : index
    %c353_87 = arith.constant 353 : index
    %74 = vector.load %arg10[%c0_86, %c353_87] : memref<4x3584xbf16, #tpu.memory_space<vmem>>, vector<4x1024xbf16>
    %c0_88 = arith.constant 0 : index
    %c322 = arith.constant 322 : index
    %75 = vector.load %arg10[%c0_88, %c322] : memref<4x3584xbf16, #tpu.memory_space<vmem>>, vector<4x1024xbf16>
    %c0_89 = arith.constant 0 : index
    %c260 = arith.constant 260 : index
    %76 = vector.load %arg10[%c0_89, %c260] : memref<4x3584xbf16, #tpu.memory_space<vmem>>, vector<4x1024xbf16>
    %c0_90 = arith.constant 0 : index
    %c136 = arith.constant 136 : index
    %77 = vector.load %arg10[%c0_90, %c136] : memref<4x3584xbf16, #tpu.memory_space<vmem>>, vector<4x1024xbf16>
    %78 = tpu.concatenate %74, %75, %76, %77 in 0 : vector<4x1024xbf16>, vector<4x1024xbf16>, vector<4x1024xbf16>, vector<4x1024xbf16> -> vector<16x1024xbf16>
    %c32_91 = arith.constant 32 : index
    %c0_92 = arith.constant 0 : index
    %79 = vector.load %arg9[%c32_91, %c0_92] : memref<144x2048xbf16, #tpu.memory_space<vmem>>, vector<16x1024xbf16>
    tpu.vector_store %arg9[%c32_91, %c0_92], %78 {strides = array<i32>} : memref<144x2048xbf16, #tpu.memory_space<vmem>>, vector<16x1024xbf16>,
    %c0_93 = arith.constant 0 : index
    %c2145_94 = arith.constant 2145 : index
    %80 = vector.load %arg10[%c0_93, %c2145_94] : memref<4x3584xbf16, #tpu.memory_space<vmem>>, vector<4x1024xbf16>
    %c0_95 = arith.constant 0 : index
    %c2114 = arith.constant 2114 : index
    %81 = vector.load %arg10[%c0_95, %c2114] : memref<4x3584xbf16, #tpu.memory_space<vmem>>, vector<4x1024xbf16>
    %c0_96 = arith.constant 0 : index
    %c2052 = arith.constant 2052 : index
    %82 = vector.load %arg10[%c0_96, %c2052] : memref<4x3584xbf16, #tpu.memory_space<vmem>>, vector<4x1024xbf16>
    %c0_97 = arith.constant 0 : index
    %c1928 = arith.constant 1928 : index
    %83 = vector.load %arg10[%c0_97, %c1928] : memref<4x3584xbf16, #tpu.memory_space<vmem>>, vector<4x1024xbf16>
    %84 = tpu.concatenate %80, %81, %82, %83 in 0 : vector<4x1024xbf16>, vector<4x1024xbf16>, vector<4x1024xbf16>, vector<4x1024xbf16> -> vector<16x1024xbf16>
    %c32_98 = arith.constant 32 : index
    %c1024_99 = arith.constant 1024 : index
    %85 = vector.load %arg9[%c32_98, %c1024_99] : memref<144x2048xbf16, #tpu.memory_space<vmem>>, vector<16x1024xbf16>
    tpu.vector_store %arg9[%c32_98, %c1024_99], %84 {strides = array<i32>} : memref<144x2048xbf16, #tpu.memory_space<vmem>>, vector<16x1024xbf16>,
    %c0_100 = arith.constant 0 : index
    %c383_101 = arith.constant 383 : index
    %86 = vector.load %arg10[%c0_100, %c383_101] : memref<4x3584xbf16, #tpu.memory_space<vmem>>, vector<4x1024xbf16>
    %c0_102 = arith.constant 0 : index
    %c382 = arith.constant 382 : index
    %87 = vector.load %arg10[%c0_102, %c382] : memref<4x3584xbf16, #tpu.memory_space<vmem>>, vector<4x1024xbf16>
    %c0_103 = arith.constant 0 : index
    %c380 = arith.constant 380 : index
    %88 = vector.load %arg10[%c0_103, %c380] : memref<4x3584xbf16, #tpu.memory_space<vmem>>, vector<4x1024xbf16>
    %c0_104 = arith.constant 0 : index
    %c376 = arith.constant 376 : index
    %89 = vector.load %arg10[%c0_104, %c376] : memref<4x3584xbf16, #tpu.memory_space<vmem>>, vector<4x1024xbf16>
    %90 = tpu.concatenate %86, %87, %88, %89 in 0 : vector<4x1024xbf16>, vector<4x1024xbf16>, vector<4x1024xbf16>, vector<4x1024xbf16> -> vector<16x1024xbf16>
    %c48_105 = arith.constant 48 : index
    %c0_106 = arith.constant 0 : index
    %91 = vector.load %arg9[%c48_105, %c0_106] : memref<144x2048xbf16, #tpu.memory_space<vmem>>, vector<16x1024xbf16>
    tpu.vector_store %arg9[%c48_105, %c0_106], %90 {strides = array<i32>} : memref<144x2048xbf16, #tpu.memory_space<vmem>>, vector<16x1024xbf16>,
    %c0_107 = arith.constant 0 : index
    %c2175_108 = arith.constant 2175 : index
    %92 = vector.load %arg10[%c0_107, %c2175_108] : memref<4x3584xbf16, #tpu.memory_space<vmem>>, vector<4x1024xbf16>
    %c0_109 = arith.constant 0 : index
    %c2174 = arith.constant 2174 : index
    %93 = vector.load %arg10[%c0_109, %c2174] : memref<4x3584xbf16, #tpu.memory_space<vmem>>, vector<4x1024xbf16>
    %c0_110 = arith.constant 0 : index
    %c2172 = arith.constant 2172 : index
    %94 = vector.load %arg10[%c0_110, %c2172] : memref<4x3584xbf16, #tpu.memory_space<vmem>>, vector<4x1024xbf16>
    %c0_111 = arith.constant 0 : index
    %c2168 = arith.constant 2168 : index
    %95 = vector.load %arg10[%c0_111, %c2168] : memref<4x3584xbf16, #tpu.memory_space<vmem>>, vector<4x1024xbf16>
    %96 = tpu.concatenate %92, %93, %94, %95 in 0 : vector<4x1024xbf16>, vector<4x1024xbf16>, vector<4x1024xbf16>, vector<4x1024xbf16> -> vector<16x1024xbf16>
    %c48_112 = arith.constant 48 : index
    %c1024_113 = arith.constant 1024 : index
    %97 = vector.load %arg9[%c48_112, %c1024_113] : memref<144x2048xbf16, #tpu.memory_space<vmem>>, vector<16x1024xbf16>
    tpu.vector_store %arg9[%c48_112, %c1024_113], %96 {strides = array<i32>} : memref<144x2048xbf16, #tpu.memory_space<vmem>>, vector<16x1024xbf16>,
    %c0_114 = arith.constant 0 : index
    %c384_115 = arith.constant 384 : index
    %98 = vector.load %arg10[%c0_114, %c384_115] : memref<4x3584xbf16, #tpu.memory_space<vmem>>, vector<4x1024xbf16>
    %c0_116 = arith.constant 0 : index
    %c384_117 = arith.constant 384 : index
    %99 = vector.load %arg10[%c0_116, %c384_117] : memref<4x3584xbf16, #tpu.memory_space<vmem>>, vector<4x1024xbf16>
    %c0_118 = arith.constant 0 : index
    %c384_119 = arith.constant 384 : index
    %100 = vector.load %arg10[%c0_118, %c384_119] : memref<4x3584xbf16, #tpu.memory_space<vmem>>, vector<4x1024xbf16>
    %c0_120 = arith.constant 0 : index
    %c384_121 = arith.constant 384 : index
    %101 = vector.load %arg10[%c0_120, %c384_121] : memref<4x3584xbf16, #tpu.memory_space<vmem>>, vector<4x1024xbf16>
    %102 = tpu.concatenate %98, %99, %100, %101 in 0 : vector<4x1024xbf16>, vector<4x1024xbf16>, vector<4x1024xbf16>, vector<4x1024xbf16> -> vector<16x1024xbf16>
    %c64_122 = arith.constant 64 : index
    %c0_123 = arith.constant 0 : index
    %103 = vector.load %arg9[%c64_122, %c0_123] : memref<144x2048xbf16, #tpu.memory_space<vmem>>, vector<16x1024xbf16>
    tpu.vector_store %arg9[%c64_122, %c0_123], %102 {strides = array<i32>} : memref<144x2048xbf16, #tpu.memory_space<vmem>>, vector<16x1024xbf16>,
    %c0_124 = arith.constant 0 : index
    %c2176_125 = arith.constant 2176 : index
    %104 = vector.load %arg10[%c0_124, %c2176_125] : memref<4x3584xbf16, #tpu.memory_space<vmem>>, vector<4x1024xbf16>
    %c0_126 = arith.constant 0 : index
    %c2176_127 = arith.constant 2176 : index
    %105 = vector.load %arg10[%c0_126, %c2176_127] : memref<4x3584xbf16, #tpu.memory_space<vmem>>, vector<4x1024xbf16>
    %c0_128 = arith.constant 0 : index
    %c2176_129 = arith.constant 2176 : index
    %106 = vector.load %arg10[%c0_128, %c2176_129] : memref<4x3584xbf16, #tpu.memory_space<vmem>>, vector<4x1024xbf16>
    %c0_130 = arith.constant 0 : index
    %c2176_131 = arith.constant 2176 : index
    %107 = vector.load %arg10[%c0_130, %c2176_131] : memref<4x3584xbf16, #tpu.memory_space<vmem>>, vector<4x1024xbf16>
    %108 = tpu.concatenate %104, %105, %106, %107 in 0 : vector<4x1024xbf16>, vector<4x1024xbf16>, vector<4x1024xbf16>, vector<4x1024xbf16> -> vector<16x1024xbf16>
    %c64_132 = arith.constant 64 : index
    %c1024_133 = arith.constant 1024 : index
    %109 = vector.load %arg9[%c64_132, %c1024_133] : memref<144x2048xbf16, #tpu.memory_space<vmem>>, vector<16x1024xbf16>
    tpu.vector_store %arg9[%c64_132, %c1024_133], %108 {strides = array<i32>} : memref<144x2048xbf16, #tpu.memory_space<vmem>>, vector<16x1024xbf16>,
    %c0_134 = arith.constant 0 : index
    %c385_135 = arith.constant 385 : index
    %110 = vector.load %arg10[%c0_134, %c385_135] : memref<4x3584xbf16, #tpu.memory_space<vmem>>, vector<4x1024xbf16>
    %c0_136 = arith.constant 0 : index
    %c386 = arith.constant 386 : index
    %111 = vector.load %arg10[%c0_136, %c386] : memref<4x3584xbf16, #tpu.memory_space<vmem>>, vector<4x1024xbf16>
    %c0_137 = arith.constant 0 : index
    %c388 = arith.constant 388 : index
    %112 = vector.load %arg10[%c0_137, %c388] : memref<4x3584xbf16, #tpu.memory_space<vmem>>, vector<4x1024xbf16>
    %c0_138 = arith.constant 0 : index
    %c392 = arith.constant 392 : index
    %113 = vector.load %arg10[%c0_138, %c392] : memref<4x3584xbf16, #tpu.memory_space<vmem>>, vector<4x1024xbf16>
    %114 = tpu.concatenate %110, %111, %112, %113 in 0 : vector<4x1024xbf16>, vector<4x1024xbf16>, vector<4x1024xbf16>, vector<4x1024xbf16> -> vector<16x1024xbf16>
    %c80_139 = arith.constant 80 : index
    %c0_140 = arith.constant 0 : index
    %115 = vector.load %arg9[%c80_139, %c0_140] : memref<144x2048xbf16, #tpu.memory_space<vmem>>, vector<16x1024xbf16>
    tpu.vector_store %arg9[%c80_139, %c0_140], %114 {strides = array<i32>} : memref<144x2048xbf16, #tpu.memory_space<vmem>>, vector<16x1024xbf16>,
    %c0_141 = arith.constant 0 : index
    %c2177_142 = arith.constant 2177 : index
    %116 = vector.load %arg10[%c0_141, %c2177_142] : memref<4x3584xbf16, #tpu.memory_space<vmem>>, vector<4x1024xbf16>
    %c0_143 = arith.constant 0 : index
    %c2178 = arith.constant 2178 : index
    %117 = vector.load %arg10[%c0_143, %c2178] : memref<4x3584xbf16, #tpu.memory_space<vmem>>, vector<4x1024xbf16>
    %c0_144 = arith.constant 0 : index
    %c2180 = arith.constant 2180 : index
    %118 = vector.load %arg10[%c0_144, %c2180] : memref<4x3584xbf16, #tpu.memory_space<vmem>>, vector<4x1024xbf16>
    %c0_145 = arith.constant 0 : index
    %c2184 = arith.constant 2184 : index
    %119 = vector.load %arg10[%c0_145, %c2184] : memref<4x3584xbf16, #tpu.memory_space<vmem>>, vector<4x1024xbf16>
    %120 = tpu.concatenate %116, %117, %118, %119 in 0 : vector<4x1024xbf16>, vector<4x1024xbf16>, vector<4x1024xbf16>, vector<4x1024xbf16> -> vector<16x1024xbf16>
    %c80_146 = arith.constant 80 : index
    %c1024_147 = arith.constant 1024 : index
    %121 = vector.load %arg9[%c80_146, %c1024_147] : memref<144x2048xbf16, #tpu.memory_space<vmem>>, vector<16x1024xbf16>
    tpu.vector_store %arg9[%c80_146, %c1024_147], %120 {strides = array<i32>} : memref<144x2048xbf16, #tpu.memory_space<vmem>>, vector<16x1024xbf16>,
    %c0_148 = arith.constant 0 : index
    %c415_149 = arith.constant 415 : index
    %122 = vector.load %arg10[%c0_148, %c415_149] : memref<4x3584xbf16, #tpu.memory_space<vmem>>, vector<4x1024xbf16>
    %c0_150 = arith.constant 0 : index
    %c446 = arith.constant 446 : index
    %123 = vector.load %arg10[%c0_150, %c446] : memref<4x3584xbf16, #tpu.memory_space<vmem>>, vector<4x1024xbf16>
    %c0_151 = arith.constant 0 : index
    %c508 = arith.constant 508 : index
    %124 = vector.load %arg10[%c0_151, %c508] : memref<4x3584xbf16, #tpu.memory_space<vmem>>, vector<4x1024xbf16>
    %c0_152 = arith.constant 0 : index
    %c632 = arith.constant 632 : index
    %125 = vector.load %arg10[%c0_152, %c632] : memref<4x3584xbf16, #tpu.memory_space<vmem>>, vector<4x1024xbf16>
    %126 = tpu.concatenate %122, %123, %124, %125 in 0 : vector<4x1024xbf16>, vector<4x1024xbf16>, vector<4x1024xbf16>, vector<4x1024xbf16> -> vector<16x1024xbf16>
    %c96_153 = arith.constant 96 : index
    %c0_154 = arith.constant 0 : index
    %127 = vector.load %arg9[%c96_153, %c0_154] : memref<144x2048xbf16, #tpu.memory_space<vmem>>, vector<16x1024xbf16>
    tpu.vector_store %arg9[%c96_153, %c0_154], %126 {strides = array<i32>} : memref<144x2048xbf16, #tpu.memory_space<vmem>>, vector<16x1024xbf16>,
    %c0_155 = arith.constant 0 : index
    %c2207_156 = arith.constant 2207 : index
    %128 = vector.load %arg10[%c0_155, %c2207_156] : memref<4x3584xbf16, #tpu.memory_space<vmem>>, vector<4x1024xbf16>
    %c0_157 = arith.constant 0 : index
    %c2238 = arith.constant 2238 : index
    %129 = vector.load %arg10[%c0_157, %c2238] : memref<4x3584xbf16, #tpu.memory_space<vmem>>, vector<4x1024xbf16>
    %c0_158 = arith.constant 0 : index
    %c2300 = arith.constant 2300 : index
    %130 = vector.load %arg10[%c0_158, %c2300] : memref<4x3584xbf16, #tpu.memory_space<vmem>>, vector<4x1024xbf16>
    %c0_159 = arith.constant 0 : index
    %c2424 = arith.constant 2424 : index
    %131 = vector.load %arg10[%c0_159, %c2424] : memref<4x3584xbf16, #tpu.memory_space<vmem>>, vector<4x1024xbf16>
    %132 = tpu.concatenate %128, %129, %130, %131 in 0 : vector<4x1024xbf16>, vector<4x1024xbf16>, vector<4x1024xbf16>, vector<4x1024xbf16> -> vector<16x1024xbf16>
    %c96_160 = arith.constant 96 : index
    %c1024_161 = arith.constant 1024 : index
    %133 = vector.load %arg9[%c96_160, %c1024_161] : memref<144x2048xbf16, #tpu.memory_space<vmem>>, vector<16x1024xbf16>
    tpu.vector_store %arg9[%c96_160, %c1024_161], %132 {strides = array<i32>} : memref<144x2048xbf16, #tpu.memory_space<vmem>>, vector<16x1024xbf16>,
    %c0_162 = arith.constant 0 : index
    %c416_163 = arith.constant 416 : index
    %134 = vector.load %arg10[%c0_162, %c416_163] : memref<4x3584xbf16, #tpu.memory_space<vmem>>, vector<4x1024xbf16>
    %c0_164 = arith.constant 0 : index
    %c448 = arith.constant 448 : index
    %135 = vector.load %arg10[%c0_164, %c448] : memref<4x3584xbf16, #tpu.memory_space<vmem>>, vector<4x1024xbf16>
    %c0_165 = arith.constant 0 : index
    %c512 = arith.constant 512 : index
    %136 = vector.load %arg10[%c0_165, %c512] : memref<4x3584xbf16, #tpu.memory_space<vmem>>, vector<4x1024xbf16>
    %c0_166 = arith.constant 0 : index
    %c640 = arith.constant 640 : index
    %137 = vector.load %arg10[%c0_166, %c640] : memref<4x3584xbf16, #tpu.memory_space<vmem>>, vector<4x1024xbf16>
    %138 = tpu.concatenate %134, %135, %136, %137 in 0 : vector<4x1024xbf16>, vector<4x1024xbf16>, vector<4x1024xbf16>, vector<4x1024xbf16> -> vector<16x1024xbf16>
    %c112_167 = arith.constant 112 : index
    %c0_168 = arith.constant 0 : index
    %139 = vector.load %arg9[%c112_167, %c0_168] : memref<144x2048xbf16, #tpu.memory_space<vmem>>, vector<16x1024xbf16>
    tpu.vector_store %arg9[%c112_167, %c0_168], %138 {strides = array<i32>} : memref<144x2048xbf16, #tpu.memory_space<vmem>>, vector<16x1024xbf16>,
    %c0_169 = arith.constant 0 : index
    %c2208_170 = arith.constant 2208 : index
    %140 = vector.load %arg10[%c0_169, %c2208_170] : memref<4x3584xbf16, #tpu.memory_space<vmem>>, vector<4x1024xbf16>
    %c0_171 = arith.constant 0 : index
    %c2240 = arith.constant 2240 : index
    %141 = vector.load %arg10[%c0_171, %c2240] : memref<4x3584xbf16, #tpu.memory_space<vmem>>, vector<4x1024xbf16>
    %c0_172 = arith.constant 0 : index
    %c2304 = arith.constant 2304 : index
    %142 = vector.load %arg10[%c0_172, %c2304] : memref<4x3584xbf16, #tpu.memory_space<vmem>>, vector<4x1024xbf16>
    %c0_173 = arith.constant 0 : index
    %c2432 = arith.constant 2432 : index
    %143 = vector.load %arg10[%c0_173, %c2432] : memref<4x3584xbf16, #tpu.memory_space<vmem>>, vector<4x1024xbf16>
    %144 = tpu.concatenate %140, %141, %142, %143 in 0 : vector<4x1024xbf16>, vector<4x1024xbf16>, vector<4x1024xbf16>, vector<4x1024xbf16> -> vector<16x1024xbf16>
    %c112_174 = arith.constant 112 : index
    %c1024_175 = arith.constant 1024 : index
    %145 = vector.load %arg9[%c112_174, %c1024_175] : memref<144x2048xbf16, #tpu.memory_space<vmem>>, vector<16x1024xbf16>
    tpu.vector_store %arg9[%c112_174, %c1024_175], %144 {strides = array<i32>} : memref<144x2048xbf16, #tpu.memory_space<vmem>>, vector<16x1024xbf16>,
    %c0_176 = arith.constant 0 : index
    %c417_177 = arith.constant 417 : index
    %146 = vector.load %arg10[%c0_176, %c417_177] : memref<4x3584xbf16, #tpu.memory_space<vmem>>, vector<4x1024xbf16>
    %c0_178 = arith.constant 0 : index
    %c450 = arith.constant 450 : index
    %147 = vector.load %arg10[%c0_178, %c450] : memref<4x3584xbf16, #tpu.memory_space<vmem>>, vector<4x1024xbf16>
    %c0_179 = arith.constant 0 : index
    %c516 = arith.constant 516 : index
    %148 = vector.load %arg10[%c0_179, %c516] : memref<4x3584xbf16, #tpu.memory_space<vmem>>, vector<4x1024xbf16>
    %c0_180 = arith.constant 0 : index
    %c648 = arith.constant 648 : index
    %149 = vector.load %arg10[%c0_180, %c648] : memref<4x3584xbf16, #tpu.memory_space<vmem>>, vector<4x1024xbf16>
    %150 = tpu.concatenate %146, %147, %148, %149 in 0 : vector<4x1024xbf16>, vector<4x1024xbf16>, vector<4x1024xbf16>, vector<4x1024xbf16> -> vector<16x1024xbf16>
    %c128_181 = arith.constant 128 : index
    %c0_182 = arith.constant 0 : index
    %151 = vector.load %arg9[%c128_181, %c0_182] : memref<144x2048xbf16, #tpu.memory_space<vmem>>, vector<16x1024xbf16>
    tpu.vector_store %arg9[%c128_181, %c0_182], %150 {strides = array<i32>} : memref<144x2048xbf16, #tpu.memory_space<vmem>>, vector<16x1024xbf16>,
    %c0_183 = arith.constant 0 : index
    %c2209_184 = arith.constant 2209 : index
    %152 = vector.load %arg10[%c0_183, %c2209_184] : memref<4x3584xbf16, #tpu.memory_space<vmem>>, vector<4x1024xbf16>
    %c0_185 = arith.constant 0 : index
    %c2242 = arith.constant 2242 : index
    %153 = vector.load %arg10[%c0_185, %c2242] : memref<4x3584xbf16, #tpu.memory_space<vmem>>, vector<4x1024xbf16>
    %c0_186 = arith.constant 0 : index
    %c2308 = arith.constant 2308 : index
    %154 = vector.load %arg10[%c0_186, %c2308] : memref<4x3584xbf16, #tpu.memory_space<vmem>>, vector<4x1024xbf16>
    %c0_187 = arith.constant 0 : index
    %c2440 = arith.constant 2440 : index
    %155 = vector.load %arg10[%c0_187, %c2440] : memref<4x3584xbf16, #tpu.memory_space<vmem>>, vector<4x1024xbf16>
    %156 = tpu.concatenate %152, %153, %154, %155 in 0 : vector<4x1024xbf16>, vector<4x1024xbf16>, vector<4x1024xbf16>, vector<4x1024xbf16> -> vector<16x1024xbf16>
    %c128_188 = arith.constant 128 : index
    %c1024_189 = arith.constant 1024 : index
    %157 = vector.load %arg9[%c128_188, %c1024_189] : memref<144x2048xbf16, #tpu.memory_space<vmem>>, vector<16x1024xbf16>
    tpu.vector_store %arg9[%c128_188, %c1024_189], %156 {strides = array<i32>} : memref<144x2048xbf16, #tpu.memory_space<vmem>>, vector<16x1024xbf16>,
    %c0_190 = arith.constant 0 : index
    %c0_191 = arith.constant 0 : index
    %158 = vector.load %arg4[%c0_190, %c0_191] : memref<16x144xbf16, #tpu.memory_space<vmem>>, vector<16x144xbf16>
    %c0_192 = arith.constant 0 : index
    %c0_193 = arith.constant 0 : index
    %159 = vector.load %arg9[%c0_192, %c0_193] : memref<144x2048xbf16, #tpu.memory_space<vmem>>, vector<144x2048xbf16>
    %cst_194 = arith.constant dense<0.000000e+00> : vector<16x2048xf32>
    %160 = tpu.matmul %158, %159, %cst_194 {dimension_numbers = #tpu.dot_dimension_numbers<[1], [0], [0], [1], [0, 0, 1, 1], [], []>} : vector<16x144xbf16>, vector<144x2048xbf16>, vector<16x2048xf32> -> vector<16x2048xf32>
    %c0_195 = arith.constant 0 : index
    %c0_196 = arith.constant 0 : index
    %161 = vector.load %arg2[%c0_195, %c0_196] : memref<16x2048xf32, #tpu.memory_space<vmem>>, vector<16x2048xf32>
    %162 = arith.addf %161, %160 : vector<16x2048xf32>
    %163 = vector.broadcast %0 : vector<1x2048xf32> to vector<16x2048xf32>
    %164 = arith.mulf %162, %163 : vector<16x2048xf32>
    %cst_197 = arith.constant dense<0.000000e+00> : vector<16xf32>
    %165 = vector.multi_reduction <add>, %164, %cst_197 [1] : vector<16x2048xf32> to vector<16xf32>
    %166 = vector.shape_cast %165 : vector<16xf32> to vector<16x1xf32>
    %167 = arith.mulf %164, %164 : vector<16x2048xf32>
    %cst_198 = arith.constant dense<0.000000e+00> : vector<16xf32>
    %168 = vector.multi_reduction <add>, %167, %cst_198 [1] : vector<16x2048xf32> to vector<16xf32>
    %169 = vector.shape_cast %168 : vector<16xf32> to vector<16x1xf32>
    %cst_199 = arith.constant 0.001953125 : f32
    %170 = vector.broadcast %cst_199 : f32 to vector<16x1xf32>
    %171 = arith.mulf %166, %170 : vector<16x1xf32>
    %cst_200 = arith.constant 0.001953125 : f32
    %172 = vector.broadcast %cst_200 : f32 to vector<16x1xf32>
    %173 = arith.mulf %169, %172 : vector<16x1xf32>
    %174 = arith.mulf %171, %171 : vector<16x1xf32>
    %175 = arith.subf %173, %174 : vector<16x1xf32>
    %c0_201 = arith.constant 0 : index
    %c0_202 = arith.constant 0 : index
    %176 = vector.load %arg5[%c0_201, %c0_202] : memref<16x1xf32, #tpu.memory_space<vmem>>, vector<16x1xf32>
    %cst_203 = arith.constant 1.000000e-03 : f32
    %177 = vector.broadcast %cst_203 : f32 to vector<16x1xf32>
    %178 = arith.addf %175, %177 : vector<16x1xf32>
    %179 = math.rsqrt %178 : vector<16x1xf32>
    %180 = arith.mulf %176, %179 : vector<16x1xf32>
    %c0_204 = arith.constant 0 : index
    %c0_205 = arith.constant 0 : index
    %181 = vector.load %arg6[%c0_204, %c0_205] : memref<16x1xf32, #tpu.memory_space<vmem>>, vector<16x1xf32>
    %182 = arith.mulf %171, %180 : vector<16x1xf32>
    %183 = arith.subf %181, %182 : vector<16x1xf32>
    %184 = vector.broadcast %180 : vector<16x1xf32> to vector<16x2048xf32>
    %185 = arith.mulf %164, %184 : vector<16x2048xf32>
    %186 = vector.broadcast %183 : vector<16x1xf32> to vector<16x2048xf32>
    %187 = arith.addf %185, %186 : vector<16x2048xf32>
    %cst_206 = arith.constant 0.000000e+00 : f32
    %188 = vector.broadcast %cst_206 : f32 to vector<16x2048xf32>
    %189 = arith.maximumf %187, %188 : vector<16x2048xf32>
    %c0_207 = arith.constant 0 : index
    %c0_208 = arith.constant 0 : index
    %190 = vector.load %arg8[%c0_207, %c0_208] : memref<16x2048xf32, #tpu.memory_space<vmem>>, vector<16x2048xf32>
    tpu.vector_store %arg8[%c0_207, %c0_208], %189 {strides = array<i32>} : memref<16x2048xf32, #tpu.memory_space<vmem>>, vector<16x2048xf32>,
    return
  }
  func.func @transform_0(%arg0: i32) -> (i32, i32) {
    %c0_i32 = arith.constant 0 : i32
    %c0_i32_0 = arith.constant 0 : i32
    %c0_i32_1 = arith.constant 0 : i32
    return %c0_i32, %c0_i32_0 : i32, i32
  }
  func.func @transform_1(%arg0: i32) -> (i32, i32) {
    %c0_i32 = arith.constant 0 : i32
    %c0_i32_0 = arith.constant 0 : i32
    %c0_i32_1 = arith.constant 0 : i32
    return %c0_i32, %c0_i32_0 : i32, i32
  }
  func.func @transform_2(%arg0: i32) -> (i32, i32) {
    %c0_i32 = arith.constant 0 : i32
    %c0_i32_0 = arith.constant 0 : i32
    %c0_i32_1 = arith.constant 0 : i32
    return %c0_i32, %c0_i32_0 : i32, i32
  }
  func.func @transform_3(%arg0: i32) -> (i32, i32) {
    %c0_i32 = arith.constant 0 : i32
    %c0_i32_0 = arith.constant 0 : i32
    %c0_i32_1 = arith.constant 0 : i32
    return %c0_i32, %c0_i32_0 : i32, i32
  }
  func.func @transform_4(%arg0: i32) -> (i32, i32) {
    %c0_i32 = arith.constant 0 : i32
    %c0_i32_0 = arith.constant 0 : i32
    %c0_i32_1 = arith.constant 0 : i32
    return %c0_i32, %c0_i32_0 : i32, i32
  }
  func.func @transform_5(%arg0: i32) -> (i32, i32) {
    %c0_i32 = arith.constant 0 : i32
    %c0_i32_0 = arith.constant 0 : i32
    %c0_i32_1 = arith.constant 0 : i32
    return %c0_i32, %c0_i32_0 : i32, i32
  }
  func.func @transform_6(%arg0: i32) -> (i32, i32) {
    %c0_i32 = arith.constant 0 : i32
    %c0_i32_0 = arith.constant 0 : i32
    %c0_i32_1 = arith.constant 0 : i32
    return %c0_i32, %c0_i32_0 : i32, i32
  }
  func.func @transform_7(%arg0: i32) -> (i32, i32) {
    %c0_i32 = arith.constant 0 : i32
    %c0_i32_0 = arith.constant 0 : i32
    %c0_i32_1 = arith.constant 0 : i32
    return %c0_i32, %c0_i32_0 : i32, i32
  }
}

</mosaic_0001>

<llo_original>
// kernel: tpu_custom_call.1
$region0: #{tpu_custom_call.1}
  #allocation0 [shape = 'u32[]', space=smem, size = 0x4, offset = 0x4, fixed_abs, tag = 'smem constant byte address 0x4 - core index']
  #allocation1 [shape = 'u32[144,128]{1,0:T(1,128)}', space=vmem, size = 0x12000, scoped, tag = 'internal scratch']
  #allocation2 [shape = 'bf16[144,2048]{1,0:T(16,128)(2,1)}', space=vmem, size = 0x90000, scoped, tag = 'scratch operand']
  #allocation3 [shape = 'bf16[4,3584]{1,0:T(4,128)(2,1)}', space=vmem, size = 0x7000, scoped, tag = 'scratch operand']
  %s0 = inlined_call_operand.hbm [shape: bf16[16,3584], index: 0, kind: input, shape index: {}]
  %s1 = inlined_call_operand.hbm [shape: f32[16,2048], index: 1, kind: input, shape index: {}]
  %s2 = inlined_call_operand.hbm [shape: bf16[4,144], index: 2, kind: input, shape index: {}]
  %s3 = inlined_call_operand.hbm [shape: bf16[16,144], index: 3, kind: input, shape index: {}]
  %s4 = inlined_call_operand.hbm [shape: f32[16,1], index: 4, kind: input, shape index: {}]
  %s5 = inlined_call_operand.hbm [shape: f32[16,1], index: 5, kind: input, shape index: {}]
  %s6 = inlined_call_operand.hbm [shape: f32[1,2048], index: 6, kind: input, shape index: {}]
  %s7 = inlined_call_operand.hbm [shape: f32[16,2048], index: 7, kind: output, shape index: {}]
  %s8 = sld [smem:[#allocation0]]
  $region66: #{tpu_custom_call.1} parent=0
    _
  %s10 = ssub.s32 1, %s8
  %s11 = scalar_select 0, %s10, %s8
  $region1: #{tpu_custom_call.1} parent=0
    #allocation4 [shape = 'u8[114688]{0}', space=vmem, size = 0x1c000, scoped, tag = 'input window, operand 0, single buffered']
    #allocation5 [shape = 's32[1]{0}', space=sflag, size = 0x4, scoped, tag = 'scoped memory for tpu_custom_call.1']
    #allocation6 [shape = 's32[1]{0}', space=sflag, size = 0x4, scoped, tag = 'scoped memory for tpu_custom_call.1']
    #allocation7 [shape = 'u8[131072]{0}', space=vmem, size = 0x20000, scoped, tag = 'input window, operand 1, single buffered']
    #allocation8 [shape = 's32[1]{0}', space=sflag, size = 0x4, scoped, tag = 'scoped memory for tpu_custom_call.1']
    #allocation9 [shape = 'u8[2048]{0}', space=vmem, size = 0x800, scoped, tag = 'input window, operand 2, single buffered']
    #allocation10 [shape = 'u8[8192]{0}', space=vmem, size = 0x2000, scoped, tag = 'input window, operand 3, single buffered']
    #allocation11 [shape = 's32[1]{0}', space=sflag, size = 0x4, scoped, tag = 'scoped memory for tpu_custom_call.1']
    #allocation12 [shape = 'u8[8192]{0}', space=vmem, size = 0x2000, scoped, tag = 'input window, operand 4, single buffered']
    #allocation13 [shape = 'u8[8192]{0}', space=vmem, size = 0x2000, scoped, tag = 'input window, operand 5, single buffered']
    #allocation14 [shape = 's32[1]{0}', space=sflag, size = 0x4, scoped, tag = 'scoped memory for tpu_custom_call.1']
    #allocation15 [shape = 'u8[8192]{0}', space=vmem, size = 0x2000, scoped, tag = 'input window, operand 6, single buffered']
    #allocation16 [shape = 'u8[131072]{0}', space=vmem, size = 0x20000, scoped, tag = 'output window, operand 0, single buffered']
    %12 = vsyncpa [#allocation5], 0
    %13 = vsyncpa [#allocation8], 0
    %14 = vsyncpa [#allocation11], 0
    %15 = vsyncpa [#allocation14], 0
    %16 = vsyncpa [#allocation6], 0
    // Predicated region
    $region2: #{tpu_custom_call.1} parent=1 // pred_check
      _
    $region3: #{tpu_custom_call.1} parent=1 // pred_check_branch
      %18 = sbr.rel (0) target = $region5
    $region4: #{tpu_custom_call.1} parent=1 // pred_region
      %s20 = ssub.s32 3584, 3584
      %21 = vsyncadd [#allocation5], %s20
      %s22 = sshll.u32 [#allocation4], 4
      %s23 = int_to_ptr.vmem [resolvable:$true] %s22
      %28 = dma.hbm_to_vmem [thread:$0]  %s0, 3584, %s23, [#allocation5], 1792, 1792, 112
    $region5: #{tpu_custom_call.1} parent=1 // pred_fallthru
      _
    // Predicated region
    $region6: #{tpu_custom_call.1} parent=1 // pred_check
      _
    $region7: #{tpu_custom_call.1} parent=1 // pred_check_branch
      %30 = sbr.rel (0) target = $region9
    $region8: #{tpu_custom_call.1} parent=1 // pred_region
      %s32 = ssub.s32 4096, 4096
      %33 = vsyncadd [#allocation8], %s32
      %s34 = sshll.u32 [#allocation7], 4
      %s35 = int_to_ptr.vmem [resolvable:$true] %s34
      %40 = dma.hbm_to_vmem [thread:$0]  %s1, 4096, %s35, [#allocation8], 2048, 2048, 128
    $region9: #{tpu_custom_call.1} parent=1 // pred_fallthru
      _
    // Predicated region
    $region10: #{tpu_custom_call.1} parent=1 // pred_check
      _
    $region11: #{tpu_custom_call.1} parent=1 // pred_check_branch
      %42 = sbr.rel (0) target = $region13
    $region12: #{tpu_custom_call.1} parent=1 // pred_region
      %s44 = ssub.s32 64, 64
      %45 = vsyncadd [#allocation8], %s44
      %s47 = sshll.u32 [#allocation9], 4
      %s48 = int_to_ptr.vmem [resolvable:$true] %s47
      %50 = dma.hbm_to_vmem [thread:$0]  %s2, 64, %s48, [#allocation8]
    $region13: #{tpu_custom_call.1} parent=1 // pred_fallthru
      _
    // Predicated region
    $region14: #{tpu_custom_call.1} parent=1 // pred_check
      _
    $region15: #{tpu_custom_call.1} parent=1 // pred_check_branch
      %52 = sbr.rel (0) target = $region17
    $region16: #{tpu_custom_call.1} parent=1 // pred_region
      %s54 = ssub.s32 256, 256
      %55 = vsyncadd [#allocation11], %s54
      %s56 = sshll.u32 [#allocation10], 4
      %s57 = int_to_ptr.vmem [resolvable:$true] %s56
      %62 = dma.hbm_to_vmem [thread:$0]  %s3, 256, %s57, [#allocation11], 128, 128, 8
    $region17: #{tpu_custom_call.1} parent=1 // pred_fallthru
      _
    // Predicated region
    $region18: #{tpu_custom_call.1} parent=1 // pred_check
      _
    $region19: #{tpu_custom_call.1} parent=1 // pred_check_branch
      %64 = sbr.rel (0) target = $region21
    $region20: #{tpu_custom_call.1} parent=1 // pred_region
      %s66 = ssub.s32 256, 256
      %67 = vsyncadd [#allocation11], %s66
      %s68 = sshll.u32 [#allocation12], 4
      %s69 = int_to_ptr.vmem [resolvable:$true] %s68
      %74 = dma.hbm_to_vmem [thread:$0]  %s4, 256, %s69, [#allocation11], 128, 128, 8
    $region21: #{tpu_custom_call.1} parent=1 // pred_fallthru
      _
    // Predicated region
    $region22: #{tpu_custom_call.1} parent=1 // pred_check
      _
    $region23: #{tpu_custom_call.1} parent=1 // pred_check_branch
      %76 = sbr.rel (0) target = $region25
    $region24: #{tpu_custom_call.1} parent=1 // pred_region
      %s78 = ssub.s32 256, 256
      %79 = vsyncadd [#allocation14], %s78
      %s80 = sshll.u32 [#allocation13], 4
      %s81 = int_to_ptr.vmem [resolvable:$true] %s80
      %86 = dma.hbm_to_vmem [thread:$0]  %s5, 256, %s81, [#allocation14], 128, 128, 8
    $region25: #{tpu_custom_call.1} parent=1 // pred_fallthru
      _
    // Predicated region
    $region26: #{tpu_custom_call.1} parent=1 // pred_check
      _
    $region27: #{tpu_custom_call.1} parent=1 // pred_check_branch
      %88 = sbr.rel (0) target = $region29
    $region28: #{tpu_custom_call.1} parent=1 // pred_region
      %s90 = ssub.s32 256, 256
      %91 = vsyncadd [#allocation14], %s90
      %s93 = sshll.u32 [#allocation15], 4
      %s94 = int_to_ptr.vmem [resolvable:$true] %s93
      %96 = dma.hbm_to_vmem [thread:$0]  %s6, 256, %s94, [#allocation14]
    $region29: #{tpu_custom_call.1} parent=1 // pred_fallthru
      _
    // Predicated region
    $region30: #{tpu_custom_call.1} parent=1 // pred_check
      _
    $region31: #{tpu_custom_call.1} parent=1 // pred_check_branch
      %98 = sbr.rel (0) target = $region33
    $region32: #{tpu_custom_call.1} parent=1 // pred_region
      %99 = dma.done [#allocation5], 3584
    $region33: #{tpu_custom_call.1} parent=1 // pred_fallthru
      _
    // Predicated region
    $region34: #{tpu_custom_call.1} parent=1 // pred_check
      _
    $region35: #{tpu_custom_call.1} parent=1 // pred_check_branch
      %101 = sbr.rel (0) target = $region37
    $region36: #{tpu_custom_call.1} parent=1 // pred_region
      %102 = dma.done [#allocation8], 4096
    $region37: #{tpu_custom_call.1} parent=1 // pred_fallthru
      _
    // Predicated region
    $region38: #{tpu_custom_call.1} parent=1 // pred_check
      _
    $region39: #{tpu_custom_call.1} parent=1 // pred_check_branch
      %104 = sbr.rel (0) target = $region41
    $region40: #{tpu_custom_call.1} parent=1 // pred_region
      %105 = dma.done [#allocation8], 64
    $region41: #{tpu_custom_call.1} parent=1 // pred_fallthru
      _
    // Predicated region
    $region42: #{tpu_custom_call.1} parent=1 // pred_check
      _
    $region43: #{tpu_custom_call.1} parent=1 // pred_check_branch
      %107 = sbr.rel (0) target = $region45
    $region44: #{tpu_custom_call.1} parent=1 // pred_region
      %108 = dma.done [#allocation11], 256
    $region45: #{tpu_custom_call.1} parent=1 // pred_fallthru
      _
    // Predicated region
    $region46: #{tpu_custom_call.1} parent=1 // pred_check
      _
    $region47: #{tpu_custom_call.1} parent=1 // pred_check_branch
      %110 = sbr.rel (0) target = $region49
    $region48: #{tpu_custom_call.1} parent=1 // pred_region
      %111 = dma.done [#allocation11], 256
    $region49: #{tpu_custom_call.1} parent=1 // pred_fallthru
      _
    // Predicated region
    $region50: #{tpu_custom_call.1} parent=1 // pred_check
      _
    $region51: #{tpu_custom_call.1} parent=1 // pred_check_branch
      %113 = sbr.rel (0) target = $region53
    $region52: #{tpu_custom_call.1} parent=1 // pred_region
      %114 = dma.done [#allocation14], 256
    $region53: #{tpu_custom_call.1} parent=1 // pred_fallthru
      _
    // Predicated region
    $region54: #{tpu_custom_call.1} parent=1 // pred_check
      _
    $region55: #{tpu_custom_call.1} parent=1 // pred_check_branch
      %116 = sbr.rel (0) target = $region57
    $region56: #{tpu_custom_call.1} parent=1 // pred_region
      %117 = dma.done [#allocation14], 256
    $region57: #{tpu_custom_call.1} parent=1 // pred_fallthru
      _
    %v119 = vld [vmem:[#allocation15] sm:$0xff]
    %v120 = vld [vmem:[#allocation15 + $0x8] sm:$0xff]
    %121 = vst [vmem:[#allocation3] sm:$0xff] 0
    %122 = vst [vmem:[#allocation3 + $0x8] sm:$0xff] 0
    %123 = vst [vmem:[#allocation3 + $0x10] sm:$0xff] 0
    %124 = vst [vmem:[#allocation3 + $0x18] sm:$0xff] 0
    %125 = vst [vmem:[#allocation3 + $0x20] sm:$0xff] 0
    %126 = vst [vmem:[#allocation3 + $0x28] sm:$0xff] 0
    %127 = vst [vmem:[#allocation3 + $0x30] sm:$0xff] 0
    %v128 = vld [vmem:[#allocation4 + $0x8] sm:$0xff]
    %v129 = vld [vmem:[#allocation4 + $0x10] sm:$0xff]
    %v130 = vld [vmem:[#allocation4 + $0x18] sm:$0xff]
    %v131 = vld [vmem:[#allocation4 + $0x20] sm:$0xff]
    %v132 = vld [vmem:[#allocation4 + $0x28] sm:$0xf]
    %v133 = vld [vmem:[#allocation4 + $0x78] sm:$0xff]
    %v134 = vld [vmem:[#allocation4 + $0x80] sm:$0xff]
    %v135 = vld [vmem:[#allocation4 + $0x88] sm:$0xff]
    %v136 = vld [vmem:[#allocation4 + $0x90] sm:$0xff]
    %v137 = vld [vmem:[#allocation4 + $0x98] sm:$0xf]
    %v148 = vunpack.c.l.b16 %v128
    %v149 = vunpack.c.h.b16 %v128
    %v150 = vunpack.c.l.b16 %v129
    %v151 = vunpack.c.h.b16 %v129
    %v152 = vunpack.c.l.b16 %v130
    %v153 = vunpack.c.h.b16 %v130
    %v154 = vunpack.c.l.b16 %v131
    %v155 = vunpack.c.h.b16 %v131
    %v156 = vunpack.c.l.b16 %v132
    %v157 = vunpack.c.l.b16 %v133
    %v158 = vunpack.c.h.b16 %v133
    %v159 = vunpack.c.l.b16 %v134
    %v160 = vunpack.c.h.b16 %v134
    %v161 = vunpack.c.l.b16 %v135
    %v162 = vunpack.c.h.b16 %v135
    %v163 = vunpack.c.l.b16 %v136
    %v164 = vunpack.c.h.b16 %v136
    %v165 = vunpack.c.l.b16 %v137
    %v166 = vpack.c.b16 %v157, %v148
    %v167 = vpack.c.b16 %v158, %v149
    %v168 = vpack.c.b16 %v159, %v150
    %v169 = vpack.c.b16 %v160, %v151
    %v170 = vpack.c.b16 %v161, %v152
    %v171 = vpack.c.b16 %v162, %v153
    %v172 = vpack.c.b16 %v163, %v154
    %v173 = vpack.c.b16 %v164, %v155
    %v174 = vpack.c.b16 %v165, %v156
    %175 = vrot.lane.b32.xlu0 %v166, 33
    %v176 = vpop.permute.xlu0 %175
    %177 = vrot.lane.b32.xlu0 %v167, 33
    %v178 = vpop.permute.xlu0 %177
    %179 = vrot.lane.b32.xlu0 %v168, 33
    %v180 = vpop.permute.xlu0 %179
    %181 = vrot.lane.b32.xlu0 %v169, 33
    %v182 = vpop.permute.xlu0 %181
    %183 = vrot.lane.b32.xlu0 %v170, 33
    %v184 = vpop.permute.xlu0 %183
    %185 = vrot.lane.b32.xlu0 %v171, 33
    %v186 = vpop.permute.xlu0 %185
    %187 = vrot.lane.b32.xlu0 %v172, 33
    %v188 = vpop.permute.xlu0 %187
    %189 = vrot.lane.b32.xlu0 %v173, 33
    %v190 = vpop.permute.xlu0 %189
    %191 = vrot.lane.b32.xlu0 %v174, 33
    %v192 = vpop.permute.xlu0 %191
    %vm193 = vcmask 269312
    %v194 = vsel %vm193, %v176, %v178
    %v195 = vsel %vm193, %v178, %v180
    %v196 = vsel %vm193, %v180, %v182
    %v197 = vsel %vm193, %v182, %v184
    %v198 = vsel %vm193, %v184, %v186
    %v199 = vsel %vm193, %v186, %v188
    %v200 = vsel %vm193, %v188, %v190
    %v201 = vsel %vm193, %v190, %v192
    %210 = vst [vmem:[#allocation2] sm:$0xff] %v194
    %211 = vst [vmem:[#allocation2 + $0x8] sm:$0xff] %v195
    %212 = vst [vmem:[#allocation2 + $0x10] sm:$0xff] %v196
    %213 = vst [vmem:[#allocation2 + $0x18] sm:$0xff] %v197
    %214 = vst [vmem:[#allocation2 + $0x20] sm:$0xff] %v198
    %215 = vst [vmem:[#allocation2 + $0x28] sm:$0xff] %v199
    %216 = vst [vmem:[#allocation2 + $0x30] sm:$0xff] %v200
    %217 = vst [vmem:[#allocation2 + $0x38] sm:$0xff] %v201
    %v218 = vld [vmem:[#allocation4 + $0x40] sm:$0xff]
    %v219 = vld [vmem:[#allocation4 + $0x48] sm:$0xff]
    %v220 = vld [vmem:[#allocation4 + $0x50] sm:$0xff]
    %v221 = vld [vmem:[#allocation4 + $0x58] sm:$0xff]
    %v222 = vld [vmem:[#allocation4 + $0x60] sm:$0xf]
    %v223 = vld [vmem:[#allocation4 + $0xb0] sm:$0xff]
    %v224 = vld [vmem:[#allocation4 + $0xb8] sm:$0xff]
    %v225 = vld [vmem:[#allocation4 + $0xc0] sm:$0xff]
    %v226 = vld [vmem:[#allocation4 + $0xc8] sm:$0xff]
    %v227 = vld [vmem:[#allocation4 + $0xd0] sm:$0xf]
    %v238 = vunpack.c.l.b16 %v218
    %v239 = vunpack.c.h.b16 %v218
    %v240 = vunpack.c.l.b16 %v219
    %v241 = vunpack.c.h.b16 %v219
    %v242 = vunpack.c.l.b16 %v220
    %v243 = vunpack.c.h.b16 %v220
    %v244 = vunpack.c.l.b16 %v221
    %v245 = vunpack.c.h.b16 %v221
    %v246 = vunpack.c.l.b16 %v222
    %v247 = vunpack.c.l.b16 %v223
    %v248 = vunpack.c.h.b16 %v223
    %v249 = vunpack.c.l.b16 %v224
    %v250 = vunpack.c.h.b16 %v224
    %v251 = vunpack.c.l.b16 %v225
    %v252 = vunpack.c.h.b16 %v225
    %v253 = vunpack.c.l.b16 %v226
    %v254 = vunpack.c.h.b16 %v226
    %v255 = vunpack.c.l.b16 %v227
    %v256 = vpack.c.b16 %v247, %v238
    %v257 = vpack.c.b16 %v248, %v239
    %v258 = vpack.c.b16 %v249, %v240
    %v259 = vpack.c.b16 %v250, %v241
    %v260 = vpack.c.b16 %v251, %v242
    %v261 = vpack.c.b16 %v252, %v243
    %v262 = vpack.c.b16 %v253, %v244
    %v263 = vpack.c.b16 %v254, %v245
    %v264 = vpack.c.b16 %v255, %v246
    %265 = vrot.lane.b32.xlu0 %v256, 33
    %v266 = vpop.permute.xlu0 %265
    %267 = vrot.lane.b32.xlu0 %v257, 33
    %v268 = vpop.permute.xlu0 %267
    %269 = vrot.lane.b32.xlu0 %v258, 33
    %v270 = vpop.permute.xlu0 %269
    %271 = vrot.lane.b32.xlu0 %v259, 33
    %v272 = vpop.permute.xlu0 %271
    %273 = vrot.lane.b32.xlu0 %v260, 33
    %v274 = vpop.permute.xlu0 %273
    %275 = vrot.lane.b32.xlu0 %v261, 33
    %v276 = vpop.permute.xlu0 %275
    %277 = vrot.lane.b32.xlu0 %v262, 33
    %v278 = vpop.permute.xlu0 %277
    %279 = vrot.lane.b32.xlu0 %v263, 33
    %v280 = vpop.permute.xlu0 %279
    %281 = vrot.lane.b32.xlu0 %v264, 33
    %v282 = vpop.permute.xlu0 %281
    %v283 = vsel %vm193, %v266, %v268
    %v284 = vsel %vm193, %v268, %v270
    %v285 = vsel %vm193, %v270, %v272
    %v286 = vsel %vm193, %v272, %v274
    %v287 = vsel %vm193, %v274, %v276
    %v288 = vsel %vm193, %v276, %v278
    %v289 = vsel %vm193, %v278, %v280
    %v290 = vsel %vm193, %v280, %v282
    %299 = vst [vmem:[#allocation2 + $0x40] sm:$0xff] %v283
    %300 = vst [vmem:[#allocation2 + $0x48] sm:$0xff] %v284
    %301 = vst [vmem:[#allocation2 + $0x50] sm:$0xff] %v285
    %302 = vst [vmem:[#allocation2 + $0x58] sm:$0xff] %v286
    %303 = vst [vmem:[#allocation2 + $0x60] sm:$0xff] %v287
    %304 = vst [vmem:[#allocation2 + $0x68] sm:$0xff] %v288
    %305 = vst [vmem:[#allocation2 + $0x70] sm:$0xff] %v289
    %306 = vst [vmem:[#allocation2 + $0x78] sm:$0xff] %v290
    %v307 = vld [vmem:[#allocation4 + $0x8] sm:$0xff]
    %v308 = vld [vmem:[#allocation4 + $0x10] sm:$0xff]
    %v309 = vld [vmem:[#allocation4 + $0x18] sm:$0xff]
    %v310 = vld [vmem:[#allocation4 + $0x20] sm:$0xff]
    %v311 = vld [vmem:[#allocation4 + $0x28] sm:$0xf]
    %v312 = vld [vmem:[#allocation4 + $0x78] sm:$0xff]
    %v313 = vld [vmem:[#allocation4 + $0x80] sm:$0xff]
    %v314 = vld [vmem:[#allocation4 + $0x88] sm:$0xff]
    %v315 = vld [vmem:[#allocation4 + $0x90] sm:$0xff]
    %v316 = vld [vmem:[#allocation4 + $0x98] sm:$0xf]
    %v327 = vunpack.c.l.b16 %v307
    %v328 = vunpack.c.h.b16 %v307
    %v329 = vunpack.c.l.b16 %v308
    %v330 = vunpack.c.h.b16 %v308
    %v331 = vunpack.c.l.b16 %v309
    %v332 = vunpack.c.h.b16 %v309
    %v333 = vunpack.c.l.b16 %v310
    %v334 = vunpack.c.h.b16 %v310
    %v335 = vunpack.c.l.b16 %v311
    %v336 = vunpack.c.l.b16 %v312
    %v337 = vunpack.c.h.b16 %v312
    %v338 = vunpack.c.l.b16 %v313
    %v339 = vunpack.c.h.b16 %v313
    %v340 = vunpack.c.l.b16 %v314
    %v341 = vunpack.c.h.b16 %v314
    %v342 = vunpack.c.l.b16 %v315
    %v343 = vunpack.c.h.b16 %v315
    %v344 = vunpack.c.l.b16 %v316
    %v345 = vpack.c.b16 %v336, %v327
    %v346 = vpack.c.b16 %v337, %v328
    %v347 = vpack.c.b16 %v338, %v329
    %v348 = vpack.c.b16 %v339, %v330
    %v349 = vpack.c.b16 %v340, %v331
    %v350 = vpack.c.b16 %v341, %v332
    %v351 = vpack.c.b16 %v342, %v333
    %v352 = vpack.c.b16 %v343, %v334
    %v353 = vpack.c.b16 %v344, %v335
    %354 = vrot.lane.b32.xlu0 %v345, 32
    %v355 = vpop.permute.xlu0 %354
    %356 = vrot.lane.b32.xlu0 %v346, 32
    %v357 = vpop.permute.xlu0 %356
    %358 = vrot.lane.b32.xlu0 %v347, 32
    %v359 = vpop.permute.xlu0 %358
    %360 = vrot.lane.b32.xlu0 %v348, 32
    %v361 = vpop.permute.xlu0 %360
    %362 = vrot.lane.b32.xlu0 %v349, 32
    %v363 = vpop.permute.xlu0 %362
    %364 = vrot.lane.b32.xlu0 %v350, 32
    %v365 = vpop.permute.xlu0 %364
    %366 = vrot.lane.b32.xlu0 %v351, 32
    %v367 = vpop.permute.xlu0 %366
    %368 = vrot.lane.b32.xlu0 %v352, 32
    %v369 = vpop.permute.xlu0 %368
    %370 = vrot.lane.b32.xlu0 %v353, 32
    %v371 = vpop.permute.xlu0 %370
    %vm372 = vcmask 261120
    %v373 = vsel %vm372, %v355, %v357
    %v374 = vsel %vm372, %v357, %v359
    %v375 = vsel %vm372, %v359, %v361
    %v376 = vsel %vm372, %v361, %v363
    %v377 = vsel %vm372, %v363, %v365
    %v378 = vsel %vm372, %v365, %v367
    %v379 = vsel %vm372, %v367, %v369
    %v380 = vsel %vm372, %v369, %v371
    %389 = vst [vmem:[#allocation2 + $0x80] sm:$0xff] %v373
    %390 = vst [vmem:[#allocation2 + $0x88] sm:$0xff] %v374
    %391 = vst [vmem:[#allocation2 + $0x90] sm:$0xff] %v375
    %392 = vst [vmem:[#allocation2 + $0x98] sm:$0xff] %v376
    %393 = vst [vmem:[#allocation2 + $0xa0] sm:$0xff] %v377
    %394 = vst [vmem:[#allocation2 + $0xa8] sm:$0xff] %v378
    %395 = vst [vmem:[#allocation2 + $0xb0] sm:$0xff] %v379
    %396 = vst [vmem:[#allocation2 + $0xb8] sm:$0xff] %v380
    %v397 = vld [vmem:[#allocation4 + $0x40] sm:$0xff]
    %v398 = vld [vmem:[#allocation4 + $0x48] sm:$0xff]
    %v399 = vld [vmem:[#allocation4 + $0x50] sm:$0xff]
    %v400 = vld [vmem:[#allocation4 + $0x58] sm:$0xff]
    %v401 = vld [vmem:[#allocation4 + $0x60] sm:$0xf]
    %v402 = vld [vmem:[#allocation4 + $0xb0] sm:$0xff]
    %v403 = vld [vmem:[#allocation4 + $0xb8] sm:$0xff]
    %v404 = vld [vmem:[#allocation4 + $0xc0] sm:$0xff]
    %v405 = vld [vmem:[#allocation4 + $0xc8] sm:$0xff]
    %v406 = vld [vmem:[#allocation4 + $0xd0] sm:$0xf]
    %v417 = vunpack.c.l.b16 %v397
    %v418 = vunpack.c.h.b16 %v397
    %v419 = vunpack.c.l.b16 %v398
    %v420 = vunpack.c.h.b16 %v398
    %v421 = vunpack.c.l.b16 %v399
    %v422 = vunpack.c.h.b16 %v399
    %v423 = vunpack.c.l.b16 %v400
    %v424 = vunpack.c.h.b16 %v400
    %v425 = vunpack.c.l.b16 %v401
    %v426 = vunpack.c.l.b16 %v402
    %v427 = vunpack.c.h.b16 %v402
    %v428 = vunpack.c.l.b16 %v403
    %v429 = vunpack.c.h.b16 %v403
    %v430 = vunpack.c.l.b16 %v404
    %v431 = vunpack.c.h.b16 %v404
    %v432 = vunpack.c.l.b16 %v405
    %v433 = vunpack.c.h.b16 %v405
    %v434 = vunpack.c.l.b16 %v406
    %v435 = vpack.c.b16 %v426, %v417
    %v436 = vpack.c.b16 %v427, %v418
    %v437 = vpack.c.b16 %v428, %v419
    %v438 = vpack.c.b16 %v429, %v420
    %v439 = vpack.c.b16 %v430, %v421
    %v440 = vpack.c.b16 %v431, %v422
    %v441 = vpack.c.b16 %v432, %v423
    %v442 = vpack.c.b16 %v433, %v424
    %v443 = vpack.c.b16 %v434, %v425
    %444 = vrot.lane.b32.xlu0 %v435, 32
    %v445 = vpop.permute.xlu0 %444
    %446 = vrot.lane.b32.xlu0 %v436, 32
    %v447 = vpop.permute.xlu0 %446
    %448 = vrot.lane.b32.xlu0 %v437, 32
    %v449 = vpop.permute.xlu0 %448
    %450 = vrot.lane.b32.xlu0 %v438, 32
    %v451 = vpop.permute.xlu0 %450
    %452 = vrot.lane.b32.xlu0 %v439, 32
    %v453 = vpop.permute.xlu0 %452
    %454 = vrot.lane.b32.xlu0 %v440, 32
    %v455 = vpop.permute.xlu0 %454
    %456 = vrot.lane.b32.xlu0 %v441, 32
    %v457 = vpop.permute.xlu0 %456
    %458 = vrot.lane.b32.xlu0 %v442, 32
    %v459 = vpop.permute.xlu0 %458
    %460 = vrot.lane.b32.xlu0 %v443, 32
    %v461 = vpop.permute.xlu0 %460
    %v462 = vsel %vm372, %v445, %v447
    %v463 = vsel %vm372, %v447, %v449
    %v464 = vsel %vm372, %v449, %v451
    %v465 = vsel %vm372, %v451, %v453
    %v466 = vsel %vm372, %v453, %v455
    %v467 = vsel %vm372, %v455, %v457
    %v468 = vsel %vm372, %v457, %v459
    %v469 = vsel %vm372, %v459, %v461
    %478 = vst [vmem:[#allocation2 + $0xc0] sm:$0xff] %v462
    %479 = vst [vmem:[#allocation2 + $0xc8] sm:$0xff] %v463
    %480 = vst [vmem:[#allocation2 + $0xd0] sm:$0xff] %v464
    %481 = vst [vmem:[#allocation2 + $0xd8] sm:$0xff] %v465
    %482 = vst [vmem:[#allocation2 + $0xe0] sm:$0xff] %v466
    %483 = vst [vmem:[#allocation2 + $0xe8] sm:$0xff] %v467
    %484 = vst [vmem:[#allocation2 + $0xf0] sm:$0xff] %v468
    %485 = vst [vmem:[#allocation2 + $0xf8] sm:$0xff] %v469
    %v486 = vld [vmem:[#allocation4 + $0x8] sm:$0xff]
    %v487 = vld [vmem:[#allocation4 + $0x10] sm:$0xff]
    %v488 = vld [vmem:[#allocation4 + $0x18] sm:$0xff]
    %v489 = vld [vmem:[#allocation4 + $0x20] sm:$0xff]
    %v490 = vld [vmem:[#allocation4 + $0x28] sm:$0xf]
    %v491 = vld [vmem:[#allocation4 + $0x78] sm:$0xff]
    %v492 = vld [vmem:[#allocation4 + $0x80] sm:$0xff]
    %v493 = vld [vmem:[#allocation4 + $0x88] sm:$0xff]
    %v494 = vld [vmem:[#allocation4 + $0x90] sm:$0xff]
    %v495 = vld [vmem:[#allocation4 + $0x98] sm:$0xf]
    %v506 = vunpack.c.l.b16 %v486
    %v507 = vunpack.c.h.b16 %v486
    %v508 = vunpack.c.l.b16 %v487
    %v509 = vunpack.c.h.b16 %v487
    %v510 = vunpack.c.l.b16 %v488
    %v511 = vunpack.c.h.b16 %v488
    %v512 = vunpack.c.l.b16 %v489
    %v513 = vunpack.c.h.b16 %v489
    %v514 = vunpack.c.l.b16 %v490
    %v515 = vunpack.c.l.b16 %v491
    %v516 = vunpack.c.h.b16 %v491
    %v517 = vunpack.c.l.b16 %v492
    %v518 = vunpack.c.h.b16 %v492
    %v519 = vunpack.c.l.b16 %v493
    %v520 = vunpack.c.h.b16 %v493
    %v521 = vunpack.c.l.b16 %v494
    %v522 = vunpack.c.h.b16 %v494
    %v523 = vunpack.c.l.b16 %v495
    %v524 = vpack.c.b16 %v515, %v506
    %v525 = vpack.c.b16 %v516, %v507
    %v526 = vpack.c.b16 %v517, %v508
    %v527 = vpack.c.b16 %v518, %v509
    %v528 = vpack.c.b16 %v519, %v510
    %v529 = vpack.c.b16 %v520, %v511
    %v530 = vpack.c.b16 %v521, %v512
    %v531 = vpack.c.b16 %v522, %v513
    %v532 = vpack.c.b16 %v523, %v514
    %533 = vrot.lane.b32.xlu0 %v524, 31
    %v534 = vpop.permute.xlu0 %533
    %535 = vrot.lane.b32.xlu0 %v525, 31
    %v536 = vpop.permute.xlu0 %535
    %537 = vrot.lane.b32.xlu0 %v526, 31
    %v538 = vpop.permute.xlu0 %537
    %539 = vrot.lane.b32.xlu0 %v527, 31
    %v540 = vpop.permute.xlu0 %539
    %541 = vrot.lane.b32.xlu0 %v528, 31
    %v542 = vpop.permute.xlu0 %541
    %543 = vrot.lane.b32.xlu0 %v529, 31
    %v544 = vpop.permute.xlu0 %543
    %545 = vrot.lane.b32.xlu0 %v530, 31
    %v546 = vpop.permute.xlu0 %545
    %547 = vrot.lane.b32.xlu0 %v531, 31
    %v548 = vpop.permute.xlu0 %547
    %549 = vrot.lane.b32.xlu0 %v532, 31
    %v550 = vpop.permute.xlu0 %549
    %vm551 = vcmask 252928
    %v552 = vsel %vm551, %v534, %v536
    %v553 = vsel %vm551, %v536, %v538
    %v554 = vsel %vm551, %v538, %v540
    %v555 = vsel %vm551, %v540, %v542
    %v556 = vsel %vm551, %v542, %v544
    %v557 = vsel %vm551, %v544, %v546
    %v558 = vsel %vm551, %v546, %v548
    %v559 = vsel %vm551, %v548, %v550
    %568 = vst [vmem:[#allocation2 + $0x100] sm:$0xff] %v552
    %569 = vst [vmem:[#allocation2 + $0x108] sm:$0xff] %v553
    %570 = vst [vmem:[#allocation2 + $0x110] sm:$0xff] %v554
    %571 = vst [vmem:[#allocation2 + $0x118] sm:$0xff] %v555
    %572 = vst [vmem:[#allocation2 + $0x120] sm:$0xff] %v556
    %573 = vst [vmem:[#allocation2 + $0x128] sm:$0xff] %v557
    %574 = vst [vmem:[#allocation2 + $0x130] sm:$0xff] %v558
    %575 = vst [vmem:[#allocation2 + $0x138] sm:$0xff] %v559
    %v576 = vld [vmem:[#allocation4 + $0x40] sm:$0xff]
    %v577 = vld [vmem:[#allocation4 + $0x48] sm:$0xff]
    %v578 = vld [vmem:[#allocation4 + $0x50] sm:$0xff]
    %v579 = vld [vmem:[#allocation4 + $0x58] sm:$0xff]
    %v580 = vld [vmem:[#allocation4 + $0x60] sm:$0xf]
    %v581 = vld [vmem:[#allocation4 + $0xb0] sm:$0xff]
    %v582 = vld [vmem:[#allocation4 + $0xb8] sm:$0xff]
    %v583 = vld [vmem:[#allocation4 + $0xc0] sm:$0xff]
    %v584 = vld [vmem:[#allocation4 + $0xc8] sm:$0xff]
    %v585 = vld [vmem:[#allocation4 + $0xd0] sm:$0xf]
    %v596 = vunpack.c.l.b16 %v576
    %v597 = vunpack.c.h.b16 %v576
    %v598 = vunpack.c.l.b16 %v577
    %v599 = vunpack.c.h.b16 %v577
    %v600 = vunpack.c.l.b16 %v578
    %v601 = vunpack.c.h.b16 %v578
    %v602 = vunpack.c.l.b16 %v579
    %v603 = vunpack.c.h.b16 %v579
    %v604 = vunpack.c.l.b16 %v580
    %v605 = vunpack.c.l.b16 %v581
    %v606 = vunpack.c.h.b16 %v581
    %v607 = vunpack.c.l.b16 %v582
    %v608 = vunpack.c.h.b16 %v582
    %v609 = vunpack.c.l.b16 %v583
    %v610 = vunpack.c.h.b16 %v583
    %v611 = vunpack.c.l.b16 %v584
    %v612 = vunpack.c.h.b16 %v584
    %v613 = vunpack.c.l.b16 %v585
    %v614 = vpack.c.b16 %v605, %v596
    %v615 = vpack.c.b16 %v606, %v597
    %v616 = vpack.c.b16 %v607, %v598
    %v617 = vpack.c.b16 %v608, %v599
    %v618 = vpack.c.b16 %v609, %v600
    %v619 = vpack.c.b16 %v610, %v601
    %v620 = vpack.c.b16 %v611, %v602
    %v621 = vpack.c.b16 %v612, %v603
    %v622 = vpack.c.b16 %v613, %v604
    %623 = vrot.lane.b32.xlu0 %v614, 31
    %v624 = vpop.permute.xlu0 %623
    %625 = vrot.lane.b32.xlu0 %v615, 31
    %v626 = vpop.permute.xlu0 %625
    %627 = vrot.lane.b32.xlu0 %v616, 31
    %v628 = vpop.permute.xlu0 %627
    %629 = vrot.lane.b32.xlu0 %v617, 31
    %v630 = vpop.permute.xlu0 %629
    %631 = vrot.lane.b32.xlu0 %v618, 31
    %v632 = vpop.permute.xlu0 %631
    %633 = vrot.lane.b32.xlu0 %v619, 31
    %v634 = vpop.permute.xlu0 %633
    %635 = vrot.lane.b32.xlu0 %v620, 31
    %v636 = vpop.permute.xlu0 %635
    %637 = vrot.lane.b32.xlu0 %v621, 31
    %v638 = vpop.permute.xlu0 %637
    %639 = vrot.lane.b32.xlu0 %v622, 31
    %v640 = vpop.permute.xlu0 %639
    %v641 = vsel %vm551, %v624, %v626
    %v642 = vsel %vm551, %v626, %v628
    %v643 = vsel %vm551, %v628, %v630
    %v644 = vsel %vm551, %v630, %v632
    %v645 = vsel %vm551, %v632, %v634
    %v646 = vsel %vm551, %v634, %v636
    %v647 = vsel %vm551, %v636, %v638
    %v648 = vsel %vm551, %v638, %v640
    %657 = vst [vmem:[#allocation2 + $0x140] sm:$0xff] %v641
    %658 = vst [vmem:[#allocation2 + $0x148] sm:$0xff] %v642
    %659 = vst [vmem:[#allocation2 + $0x150] sm:$0xff] %v643
    %660 = vst [vmem:[#allocation2 + $0x158] sm:$0xff] %v644
    %661 = vst [vmem:[#allocation2 + $0x160] sm:$0xff] %v645
    %662 = vst [vmem:[#allocation2 + $0x168] sm:$0xff] %v646
    %663 = vst [vmem:[#allocation2 + $0x170] sm:$0xff] %v647
    %664 = vst [vmem:[#allocation2 + $0x178] sm:$0xff] %v648
    %v665 = vld [vmem:[#allocation4 + $0x8] sm:$0xff]
    %v666 = vld [vmem:[#allocation4 + $0x10] sm:$0xff]
    %v667 = vld [vmem:[#allocation4 + $0x18] sm:$0xff]
    %v668 = vld [vmem:[#allocation4 + $0x20] sm:$0xff]
    %v669 = vld [vmem:[#allocation4 + $0x28] sm:$0xf]
    %v670 = vld [vmem:[#allocation4 + $0x78] sm:$0xff]
    %v671 = vld [vmem:[#allocation4 + $0x80] sm:$0xff]
    %v672 = vld [vmem:[#allocation4 + $0x88] sm:$0xff]
    %v673 = vld [vmem:[#allocation4 + $0x90] sm:$0xff]
    %v674 = vld [vmem:[#allocation4 + $0x98] sm:$0xf]
    %v685 = vunpack.c.l.b16 %v665
    %v686 = vunpack.c.h.b16 %v665
    %v687 = vunpack.c.l.b16 %v666
    %v688 = vunpack.c.h.b16 %v666
    %v689 = vunpack.c.l.b16 %v667
    %v690 = vunpack.c.h.b16 %v667
    %v691 = vunpack.c.l.b16 %v668
    %v692 = vunpack.c.h.b16 %v668
    %v693 = vunpack.c.l.b16 %v669
    %v694 = vunpack.c.l.b16 %v670
    %v695 = vunpack.c.h.b16 %v670
    %v696 = vunpack.c.l.b16 %v671
    %v697 = vunpack.c.h.b16 %v671
    %v698 = vunpack.c.l.b16 %v672
    %v699 = vunpack.c.h.b16 %v672
    %v700 = vunpack.c.l.b16 %v673
    %v701 = vunpack.c.h.b16 %v673
    %v702 = vunpack.c.l.b16 %v674
    %v703 = vpack.c.b16 %v694, %v685
    %v704 = vpack.c.b16 %v695, %v686
    %v705 = vpack.c.b16 %v696, %v687
    %v706 = vpack.c.b16 %v697, %v688
    %v707 = vpack.c.b16 %v698, %v689
    %v708 = vpack.c.b16 %v699, %v690
    %v709 = vpack.c.b16 %v700, %v691
    %v710 = vpack.c.b16 %v701, %v692
    %v711 = vpack.c.b16 %v702, %v693
    %712 = vrot.lane.b32.xlu0 %v703, 1
    %v713 = vpop.permute.xlu0 %712
    %714 = vrot.lane.b32.xlu0 %v704, 1
    %v715 = vpop.permute.xlu0 %714
    %716 = vrot.lane.b32.xlu0 %v705, 1
    %v717 = vpop.permute.xlu0 %716
    %718 = vrot.lane.b32.xlu0 %v706, 1
    %v719 = vpop.permute.xlu0 %718
    %720 = vrot.lane.b32.xlu0 %v707, 1
    %v721 = vpop.permute.xlu0 %720
    %722 = vrot.lane.b32.xlu0 %v708, 1
    %v723 = vpop.permute.xlu0 %722
    %724 = vrot.lane.b32.xlu0 %v709, 1
    %v725 = vpop.permute.xlu0 %724
    %726 = vrot.lane.b32.xlu0 %v710, 1
    %v727 = vpop.permute.xlu0 %726
    %728 = vrot.lane.b32.xlu0 %v711, 1
    %v729 = vpop.permute.xlu0 %728
    %vm730 = vcmask 7168
    %v731 = vsel %vm730, %v713, %v715
    %v732 = vsel %vm730, %v715, %v717
    %v733 = vsel %vm730, %v717, %v719
    %v734 = vsel %vm730, %v719, %v721
    %v735 = vsel %vm730, %v721, %v723
    %v736 = vsel %vm730, %v723, %v725
    %v737 = vsel %vm730, %v725, %v727
    %v738 = vsel %vm730, %v727, %v729
    %747 = vst [vmem:[#allocation2 + $0x180] sm:$0xff] %v731
    %748 = vst [vmem:[#allocation2 + $0x188] sm:$0xff] %v732
    %749 = vst [vmem:[#allocation2 + $0x190] sm:$0xff] %v733
    %750 = vst [vmem:[#allocation2 + $0x198] sm:$0xff] %v734
    %751 = vst [vmem:[#allocation2 + $0x1a0] sm:$0xff] %v735
    %752 = vst [vmem:[#allocation2 + $0x1a8] sm:$0xff] %v736
    %753 = vst [vmem:[#allocation2 + $0x1b0] sm:$0xff] %v737
    %754 = vst [vmem:[#allocation2 + $0x1b8] sm:$0xff] %v738
    %v755 = vld [vmem:[#allocation4 + $0x40] sm:$0xff]
    %v756 = vld [vmem:[#allocation4 + $0x48] sm:$0xff]
    %v757 = vld [vmem:[#allocation4 + $0x50] sm:$0xff]
    %v758 = vld [vmem:[#allocation4 + $0x58] sm:$0xff]
    %v759 = vld [vmem:[#allocation4 + $0x60] sm:$0xf]
    %v760 = vld [vmem:[#allocation4 + $0xb0] sm:$0xff]
    %v761 = vld [vmem:[#allocation4 + $0xb8] sm:$0xff]
    %v762 = vld [vmem:[#allocation4 + $0xc0] sm:$0xff]
    %v763 = vld [vmem:[#allocation4 + $0xc8] sm:$0xff]
    %v764 = vld [vmem:[#allocation4 + $0xd0] sm:$0xf]
    %v775 = vunpack.c.l.b16 %v755
    %v776 = vunpack.c.h.b16 %v755
    %v777 = vunpack.c.l.b16 %v756
    %v778 = vunpack.c.h.b16 %v756
    %v779 = vunpack.c.l.b16 %v757
    %v780 = vunpack.c.h.b16 %v757
    %v781 = vunpack.c.l.b16 %v758
    %v782 = vunpack.c.h.b16 %v758
    %v783 = vunpack.c.l.b16 %v759
    %v784 = vunpack.c.l.b16 %v760
    %v785 = vunpack.c.h.b16 %v760
    %v786 = vunpack.c.l.b16 %v761
    %v787 = vunpack.c.h.b16 %v761
    %v788 = vunpack.c.l.b16 %v762
    %v789 = vunpack.c.h.b16 %v762
    %v790 = vunpack.c.l.b16 %v763
    %v791 = vunpack.c.h.b16 %v763
    %v792 = vunpack.c.l.b16 %v764
    %v793 = vpack.c.b16 %v784, %v775
    %v794 = vpack.c.b16 %v785, %v776
    %v795 = vpack.c.b16 %v786, %v777
    %v796 = vpack.c.b16 %v787, %v778
    %v797 = vpack.c.b16 %v788, %v779
    %v798 = vpack.c.b16 %v789, %v780
    %v799 = vpack.c.b16 %v790, %v781
    %v800 = vpack.c.b16 %v791, %v782
    %v801 = vpack.c.b16 %v792, %v783
    %802 = vrot.lane.b32.xlu0 %v793, 1
    %v803 = vpop.permute.xlu0 %802
    %804 = vrot.lane.b32.xlu0 %v794, 1
    %v805 = vpop.permute.xlu0 %804
    %806 = vrot.lane.b32.xlu0 %v795, 1
    %v807 = vpop.permute.xlu0 %806
    %808 = vrot.lane.b32.xlu0 %v796, 1
    %v809 = vpop.permute.xlu0 %808
    %810 = vrot.lane.b32.xlu0 %v797, 1
    %v811 = vpop.permute.xlu0 %810
    %812 = vrot.lane.b32.xlu0 %v798, 1
    %v813 = vpop.permute.xlu0 %812
    %814 = vrot.lane.b32.xlu0 %v799, 1
    %v815 = vpop.permute.xlu0 %814
    %816 = vrot.lane.b32.xlu0 %v800, 1
    %v817 = vpop.permute.xlu0 %816
    %818 = vrot.lane.b32.xlu0 %v801, 1
    %v819 = vpop.permute.xlu0 %818
    %v820 = vsel %vm730, %v803, %v805
    %v821 = vsel %vm730, %v805, %v807
    %v822 = vsel %vm730, %v807, %v809
    %v823 = vsel %vm730, %v809, %v811
    %v824 = vsel %vm730, %v811, %v813
    %v825 = vsel %vm730, %v813, %v815
    %v826 = vsel %vm730, %v815, %v817
    %v827 = vsel %vm730, %v817, %v819
    %836 = vst [vmem:[#allocation2 + $0x1c0] sm:$0xff] %v820
    %837 = vst [vmem:[#allocation2 + $0x1c8] sm:$0xff] %v821
    %838 = vst [vmem:[#allocation2 + $0x1d0] sm:$0xff] %v822
    %839 = vst [vmem:[#allocation2 + $0x1d8] sm:$0xff] %v823
    %840 = vst [vmem:[#allocation2 + $0x1e0] sm:$0xff] %v824
    %841 = vst [vmem:[#allocation2 + $0x1e8] sm:$0xff] %v825
    %842 = vst [vmem:[#allocation2 + $0x1f0] sm:$0xff] %v826
    %843 = vst [vmem:[#allocation2 + $0x1f8] sm:$0xff] %v827
    %v844 = vld [vmem:[#allocation4 + $0xc] sm:$0xff]
    %v845 = vld [vmem:[#allocation4 + $0x14] sm:$0xff]
    %v846 = vld [vmem:[#allocation4 + $0x1c] sm:$0xff]
    %v847 = vld [vmem:[#allocation4 + $0x24] sm:$0xff]
    %v848 = vld [vmem:[#allocation4 + $0x7c] sm:$0xff]
    %v849 = vld [vmem:[#allocation4 + $0x84] sm:$0xff]
    %v850 = vld [vmem:[#allocation4 + $0x8c] sm:$0xff]
    %v851 = vld [vmem:[#allocation4 + $0x94] sm:$0xff]
    %v860 = vunpack.c.l.b16 %v844
    %v861 = vunpack.c.h.b16 %v844
    %v862 = vunpack.c.l.b16 %v845
    %v863 = vunpack.c.h.b16 %v845
    %v864 = vunpack.c.l.b16 %v846
    %v865 = vunpack.c.h.b16 %v846
    %v866 = vunpack.c.l.b16 %v847
    %v867 = vunpack.c.h.b16 %v847
    %v868 = vunpack.c.l.b16 %v848
    %v869 = vunpack.c.h.b16 %v848
    %v870 = vunpack.c.l.b16 %v849
    %v871 = vunpack.c.h.b16 %v849
    %v872 = vunpack.c.l.b16 %v850
    %v873 = vunpack.c.h.b16 %v850
    %v874 = vunpack.c.l.b16 %v851
    %v875 = vunpack.c.h.b16 %v851
    %v876 = vpack.c.b16 %v868, %v860
    %v877 = vpack.c.b16 %v869, %v861
    %v878 = vpack.c.b16 %v870, %v862
    %v879 = vpack.c.b16 %v871, %v863
    %v880 = vpack.c.b16 %v872, %v864
    %v881 = vpack.c.b16 %v873, %v865
    %v882 = vpack.c.b16 %v874, %v866
    %v883 = vpack.c.b16 %v875, %v867
    %892 = vst [vmem:[#allocation2 + $0x200] sm:$0xff] %v876
    %893 = vst [vmem:[#allocation2 + $0x208] sm:$0xff] %v877
    %894 = vst [vmem:[#allocation2 + $0x210] sm:$0xff] %v878
    %895 = vst [vmem:[#allocation2 + $0x218] sm:$0xff] %v879
    %896 = vst [vmem:[#allocation2 + $0x220] sm:$0xff] %v880
    %897 = vst [vmem:[#allocation2 + $0x228] sm:$0xff] %v881
    %898 = vst [vmem:[#allocation2 + $0x230] sm:$0xff] %v882
    %899 = vst [vmem:[#allocation2 + $0x238] sm:$0xff] %v883
    %v900 = vld [vmem:[#allocation4 + $0x44] sm:$0xff]
    %v901 = vld [vmem:[#allocation4 + $0x4c] sm:$0xff]
    %v902 = vld [vmem:[#allocation4 + $0x54] sm:$0xff]
    %v903 = vld [vmem:[#allocation4 + $0x5c] sm:$0xff]
    %v904 = vld [vmem:[#allocation4 + $0xb4] sm:$0xff]
    %v905 = vld [vmem:[#allocation4 + $0xbc] sm:$0xff]
    %v906 = vld [vmem:[#allocation4 + $0xc4] sm:$0xff]
    %v907 = vld [vmem:[#allocation4 + $0xcc] sm:$0xff]
    %v916 = vunpack.c.l.b16 %v900
    %v917 = vunpack.c.h.b16 %v900
    %v918 = vunpack.c.l.b16 %v901
    %v919 = vunpack.c.h.b16 %v901
    %v920 = vunpack.c.l.b16 %v902
    %v921 = vunpack.c.h.b16 %v902
    %v922 = vunpack.c.l.b16 %v903
    %v923 = vunpack.c.h.b16 %v903
    %v924 = vunpack.c.l.b16 %v904
    %v925 = vunpack.c.h.b16 %v904
    %v926 = vunpack.c.l.b16 %v905
    %v927 = vunpack.c.h.b16 %v905
    %v928 = vunpack.c.l.b16 %v906
    %v929 = vunpack.c.h.b16 %v906
    %v930 = vunpack.c.l.b16 %v907
    %v931 = vunpack.c.h.b16 %v907
    %v932 = vpack.c.b16 %v924, %v916
    %v933 = vpack.c.b16 %v925, %v917
    %v934 = vpack.c.b16 %v926, %v918
    %v935 = vpack.c.b16 %v927, %v919
    %v936 = vpack.c.b16 %v928, %v920
    %v937 = vpack.c.b16 %v929, %v921
    %v938 = vpack.c.b16 %v930, %v922
    %v939 = vpack.c.b16 %v931, %v923
    %948 = vst [vmem:[#allocation2 + $0x240] sm:$0xff] %v932
    %949 = vst [vmem:[#allocation2 + $0x248] sm:$0xff] %v933
    %950 = vst [vmem:[#allocation2 + $0x250] sm:$0xff] %v934
    %951 = vst [vmem:[#allocation2 + $0x258] sm:$0xff] %v935
    %952 = vst [vmem:[#allocation2 + $0x260] sm:$0xff] %v936
    %953 = vst [vmem:[#allocation2 + $0x268] sm:$0xff] %v937
    %954 = vst [vmem:[#allocation2 + $0x270] sm:$0xff] %v938
    %955 = vst [vmem:[#allocation2 + $0x278] sm:$0xff] %v939
    %v956 = vld [vmem:[#allocation4 + $0xc] sm:$0xff]
    %v957 = vld [vmem:[#allocation4 + $0x14] sm:$0xff]
    %v958 = vld [vmem:[#allocation4 + $0x1c] sm:$0xff]
    %v959 = vld [vmem:[#allocation4 + $0x24] sm:$0xff]
    %v960 = vld [vmem:[#allocation4 + $0x2c] sm:$0xf]
    %v961 = vld [vmem:[#allocation4 + $0x7c] sm:$0xff]
    %v962 = vld [vmem:[#allocation4 + $0x84] sm:$0xff]
    %v963 = vld [vmem:[#allocation4 + $0x8c] sm:$0xff]
    %v964 = vld [vmem:[#allocation4 + $0x94] sm:$0xff]
    %v965 = vld [vmem:[#allocation4 + $0x9c] sm:$0xf]
    %v976 = vunpack.c.l.b16 %v956
    %v977 = vunpack.c.h.b16 %v956
    %v978 = vunpack.c.l.b16 %v957
    %v979 = vunpack.c.h.b16 %v957
    %v980 = vunpack.c.l.b16 %v958
    %v981 = vunpack.c.h.b16 %v958
    %v982 = vunpack.c.l.b16 %v959
    %v983 = vunpack.c.h.b16 %v959
    %v984 = vunpack.c.l.b16 %v960
    %v985 = vunpack.c.l.b16 %v961
    %v986 = vunpack.c.h.b16 %v961
    %v987 = vunpack.c.l.b16 %v962
    %v988 = vunpack.c.h.b16 %v962
    %v989 = vunpack.c.l.b16 %v963
    %v990 = vunpack.c.h.b16 %v963
    %v991 = vunpack.c.l.b16 %v964
    %v992 = vunpack.c.h.b16 %v964
    %v993 = vunpack.c.l.b16 %v965
    %v994 = vpack.c.b16 %v985, %v976
    %v995 = vpack.c.b16 %v986, %v977
    %v996 = vpack.c.b16 %v987, %v978
    %v997 = vpack.c.b16 %v988, %v979
    %v998 = vpack.c.b16 %v989, %v980
    %v999 = vpack.c.b16 %v990, %v981
    %v1000 = vpack.c.b16 %v991, %v982
    %v1001 = vpack.c.b16 %v992, %v983
    %v1002 = vpack.c.b16 %v993, %v984
    %1003 = vrot.lane.b32.xlu0 %v994, 127
    %v1004 = vpop.permute.xlu0 %1003
    %1005 = vrot.lane.b32.xlu0 %v995, 127
    %v1006 = vpop.permute.xlu0 %1005
    %1007 = vrot.lane.b32.xlu0 %v996, 127
    %v1008 = vpop.permute.xlu0 %1007
    %1009 = vrot.lane.b32.xlu0 %v997, 127
    %v1010 = vpop.permute.xlu0 %1009
    %1011 = vrot.lane.b32.xlu0 %v998, 127
    %v1012 = vpop.permute.xlu0 %1011
    %1013 = vrot.lane.b32.xlu0 %v999, 127
    %v1014 = vpop.permute.xlu0 %1013
    %1015 = vrot.lane.b32.xlu0 %v1000, 127
    %v1016 = vpop.permute.xlu0 %1015
    %1017 = vrot.lane.b32.xlu0 %v1001, 127
    %v1018 = vpop.permute.xlu0 %1017
    %1019 = vrot.lane.b32.xlu0 %v1002, 127
    %v1020 = vpop.permute.xlu0 %1019
    %vm1021 = vcmask 1039360
    %v1022 = vsel %vm1021, %v1004, %v1006
    %v1023 = vsel %vm1021, %v1006, %v1008
    %v1024 = vsel %vm1021, %v1008, %v1010
    %v1025 = vsel %vm1021, %v1010, %v1012
    %v1026 = vsel %vm1021, %v1012, %v1014
    %v1027 = vsel %vm1021, %v1014, %v1016
    %v1028 = vsel %vm1021, %v1016, %v1018
    %v1029 = vsel %vm1021, %v1018, %v1020
    %1038 = vst [vmem:[#allocation2 + $0x280] sm:$0xff] %v1022
    %1039 = vst [vmem:[#allocation2 + $0x288] sm:$0xff] %v1023
    %1040 = vst [vmem:[#allocation2 + $0x290] sm:$0xff] %v1024
    %1041 = vst [vmem:[#allocation2 + $0x298] sm:$0xff] %v1025
    %1042 = vst [vmem:[#allocation2 + $0x2a0] sm:$0xff] %v1026
    %1043 = vst [vmem:[#allocation2 + $0x2a8] sm:$0xff] %v1027
    %1044 = vst [vmem:[#allocation2 + $0x2b0] sm:$0xff] %v1028
    %1045 = vst [vmem:[#allocation2 + $0x2b8] sm:$0xff] %v1029
    %v1046 = vld [vmem:[#allocation4 + $0x44] sm:$0xff]
    %v1047 = vld [vmem:[#allocation4 + $0x4c] sm:$0xff]
    %v1048 = vld [vmem:[#allocation4 + $0x54] sm:$0xff]
    %v1049 = vld [vmem:[#allocation4 + $0x5c] sm:$0xff]
    %v1050 = vld [vmem:[#allocation4 + $0x64] sm:$0xf]
    %v1051 = vld [vmem:[#allocation4 + $0xb4] sm:$0xff]
    %v1052 = vld [vmem:[#allocation4 + $0xbc] sm:$0xff]
    %v1053 = vld [vmem:[#allocation4 + $0xc4] sm:$0xff]
    %v1054 = vld [vmem:[#allocation4 + $0xcc] sm:$0xff]
    %v1055 = vld [vmem:[#allocation4 + $0xd4] sm:$0xf]
    %v1066 = vunpack.c.l.b16 %v1046
    %v1067 = vunpack.c.h.b16 %v1046
    %v1068 = vunpack.c.l.b16 %v1047
    %v1069 = vunpack.c.h.b16 %v1047
    %v1070 = vunpack.c.l.b16 %v1048
    %v1071 = vunpack.c.h.b16 %v1048
    %v1072 = vunpack.c.l.b16 %v1049
    %v1073 = vunpack.c.h.b16 %v1049
    %v1074 = vunpack.c.l.b16 %v1050
    %v1075 = vunpack.c.l.b16 %v1051
    %v1076 = vunpack.c.h.b16 %v1051
    %v1077 = vunpack.c.l.b16 %v1052
    %v1078 = vunpack.c.h.b16 %v1052
    %v1079 = vunpack.c.l.b16 %v1053
    %v1080 = vunpack.c.h.b16 %v1053
    %v1081 = vunpack.c.l.b16 %v1054
    %v1082 = vunpack.c.h.b16 %v1054
    %v1083 = vunpack.c.l.b16 %v1055
    %v1084 = vpack.c.b16 %v1075, %v1066
    %v1085 = vpack.c.b16 %v1076, %v1067
    %v1086 = vpack.c.b16 %v1077, %v1068
    %v1087 = vpack.c.b16 %v1078, %v1069
    %v1088 = vpack.c.b16 %v1079, %v1070
    %v1089 = vpack.c.b16 %v1080, %v1071
    %v1090 = vpack.c.b16 %v1081, %v1072
    %v1091 = vpack.c.b16 %v1082, %v1073
    %v1092 = vpack.c.b16 %v1083, %v1074
    %1093 = vrot.lane.b32.xlu0 %v1084, 127
    %v1094 = vpop.permute.xlu0 %1093
    %1095 = vrot.lane.b32.xlu0 %v1085, 127
    %v1096 = vpop.permute.xlu0 %1095
    %1097 = vrot.lane.b32.xlu0 %v1086, 127
    %v1098 = vpop.permute.xlu0 %1097
    %1099 = vrot.lane.b32.xlu0 %v1087, 127
    %v1100 = vpop.permute.xlu0 %1099
    %1101 = vrot.lane.b32.xlu0 %v1088, 127
    %v1102 = vpop.permute.xlu0 %1101
    %1103 = vrot.lane.b32.xlu0 %v1089, 127
    %v1104 = vpop.permute.xlu0 %1103
    %1105 = vrot.lane.b32.xlu0 %v1090, 127
    %v1106 = vpop.permute.xlu0 %1105
    %1107 = vrot.lane.b32.xlu0 %v1091, 127
    %v1108 = vpop.permute.xlu0 %1107
    %1109 = vrot.lane.b32.xlu0 %v1092, 127
    %v1110 = vpop.permute.xlu0 %1109
    %v1111 = vsel %vm1021, %v1094, %v1096
    %v1112 = vsel %vm1021, %v1096, %v1098
    %v1113 = vsel %vm1021, %v1098, %v1100
    %v1114 = vsel %vm1021, %v1100, %v1102
    %v1115 = vsel %vm1021, %v1102, %v1104
    %v1116 = vsel %vm1021, %v1104, %v1106
    %v1117 = vsel %vm1021, %v1106, %v1108
    %v1118 = vsel %vm1021, %v1108, %v1110
    %1127 = vst [vmem:[#allocation2 + $0x2c0] sm:$0xff] %v1111
    %1128 = vst [vmem:[#allocation2 + $0x2c8] sm:$0xff] %v1112
    %1129 = vst [vmem:[#allocation2 + $0x2d0] sm:$0xff] %v1113
    %1130 = vst [vmem:[#allocation2 + $0x2d8] sm:$0xff] %v1114
    %1131 = vst [vmem:[#allocation2 + $0x2e0] sm:$0xff] %v1115
    %1132 = vst [vmem:[#allocation2 + $0x2e8] sm:$0xff] %v1116
    %1133 = vst [vmem:[#allocation2 + $0x2f0] sm:$0xff] %v1117
    %1134 = vst [vmem:[#allocation2 + $0x2f8] sm:$0xff] %v1118
    %v1135 = vld [vmem:[#allocation4 + $0xc] sm:$0xff]
    %v1136 = vld [vmem:[#allocation4 + $0x14] sm:$0xff]
    %v1137 = vld [vmem:[#allocation4 + $0x1c] sm:$0xff]
    %v1138 = vld [vmem:[#allocation4 + $0x24] sm:$0xff]
    %v1139 = vld [vmem:[#allocation4 + $0x2c] sm:$0xf]
    %v1140 = vld [vmem:[#allocation4 + $0x7c] sm:$0xff]
    %v1141 = vld [vmem:[#allocation4 + $0x84] sm:$0xff]
    %v1142 = vld [vmem:[#allocation4 + $0x8c] sm:$0xff]
    %v1143 = vld [vmem:[#allocation4 + $0x94] sm:$0xff]
    %v1144 = vld [vmem:[#allocation4 + $0x9c] sm:$0xf]
    %v1155 = vunpack.c.l.b16 %v1135
    %v1156 = vunpack.c.h.b16 %v1135
    %v1157 = vunpack.c.l.b16 %v1136
    %v1158 = vunpack.c.h.b16 %v1136
    %v1159 = vunpack.c.l.b16 %v1137
    %v1160 = vunpack.c.h.b16 %v1137
    %v1161 = vunpack.c.l.b16 %v1138
    %v1162 = vunpack.c.h.b16 %v1138
    %v1163 = vunpack.c.l.b16 %v1139
    %v1164 = vunpack.c.l.b16 %v1140
    %v1165 = vunpack.c.h.b16 %v1140
    %v1166 = vunpack.c.l.b16 %v1141
    %v1167 = vunpack.c.h.b16 %v1141
    %v1168 = vunpack.c.l.b16 %v1142
    %v1169 = vunpack.c.h.b16 %v1142
    %v1170 = vunpack.c.l.b16 %v1143
    %v1171 = vunpack.c.h.b16 %v1143
    %v1172 = vunpack.c.l.b16 %v1144
    %v1173 = vpack.c.b16 %v1164, %v1155
    %v1174 = vpack.c.b16 %v1165, %v1156
    %v1175 = vpack.c.b16 %v1166, %v1157
    %v1176 = vpack.c.b16 %v1167, %v1158
    %v1177 = vpack.c.b16 %v1168, %v1159
    %v1178 = vpack.c.b16 %v1169, %v1160
    %v1179 = vpack.c.b16 %v1170, %v1161
    %v1180 = vpack.c.b16 %v1171, %v1162
    %v1181 = vpack.c.b16 %v1172, %v1163
    %1182 = vrot.lane.b32.xlu0 %v1173, 97
    %v1183 = vpop.permute.xlu0 %1182
    %1184 = vrot.lane.b32.xlu0 %v1174, 97
    %v1185 = vpop.permute.xlu0 %1184
    %1186 = vrot.lane.b32.xlu0 %v1175, 97
    %v1187 = vpop.permute.xlu0 %1186
    %1188 = vrot.lane.b32.xlu0 %v1176, 97
    %v1189 = vpop.permute.xlu0 %1188
    %1190 = vrot.lane.b32.xlu0 %v1177, 97
    %v1191 = vpop.permute.xlu0 %1190
    %1192 = vrot.lane.b32.xlu0 %v1178, 97
    %v1193 = vpop.permute.xlu0 %1192
    %1194 = vrot.lane.b32.xlu0 %v1179, 97
    %v1195 = vpop.permute.xlu0 %1194
    %1196 = vrot.lane.b32.xlu0 %v1180, 97
    %v1197 = vpop.permute.xlu0 %1196
    %1198 = vrot.lane.b32.xlu0 %v1181, 97
    %v1199 = vpop.permute.xlu0 %1198
    %vm1200 = vcmask 793600
    %v1201 = vsel %vm1200, %v1183, %v1185
    %v1202 = vsel %vm1200, %v1185, %v1187
    %v1203 = vsel %vm1200, %v1187, %v1189
    %v1204 = vsel %vm1200, %v1189, %v1191
    %v1205 = vsel %vm1200, %v1191, %v1193
    %v1206 = vsel %vm1200, %v1193, %v1195
    %v1207 = vsel %vm1200, %v1195, %v1197
    %v1208 = vsel %vm1200, %v1197, %v1199
    %1217 = vst [vmem:[#allocation2 + $0x300] sm:$0xff] %v1201
    %1218 = vst [vmem:[#allocation2 + $0x308] sm:$0xff] %v1202
    %1219 = vst [vmem:[#allocation2 + $0x310] sm:$0xff] %v1203
    %1220 = vst [vmem:[#allocation2 + $0x318] sm:$0xff] %v1204
    %1221 = vst [vmem:[#allocation2 + $0x320] sm:$0xff] %v1205
    %1222 = vst [vmem:[#allocation2 + $0x328] sm:$0xff] %v1206
    %1223 = vst [vmem:[#allocation2 + $0x330] sm:$0xff] %v1207
    %1224 = vst [vmem:[#allocation2 + $0x338] sm:$0xff] %v1208
    %v1225 = vld [vmem:[#allocation4 + $0x44] sm:$0xff]
    %v1226 = vld [vmem:[#allocation4 + $0x4c] sm:$0xff]
    %v1227 = vld [vmem:[#allocation4 + $0x54] sm:$0xff]
    %v1228 = vld [vmem:[#allocation4 + $0x5c] sm:$0xff]
    %v1229 = vld [vmem:[#allocation4 + $0x64] sm:$0xf]
    %v1230 = vld [vmem:[#allocation4 + $0xb4] sm:$0xff]
    %v1231 = vld [vmem:[#allocation4 + $0xbc] sm:$0xff]
    %v1232 = vld [vmem:[#allocation4 + $0xc4] sm:$0xff]
    %v1233 = vld [vmem:[#allocation4 + $0xcc] sm:$0xff]
    %v1234 = vld [vmem:[#allocation4 + $0xd4] sm:$0xf]
    %v1245 = vunpack.c.l.b16 %v1225
    %v1246 = vunpack.c.h.b16 %v1225
    %v1247 = vunpack.c.l.b16 %v1226
    %v1248 = vunpack.c.h.b16 %v1226
    %v1249 = vunpack.c.l.b16 %v1227
    %v1250 = vunpack.c.h.b16 %v1227
    %v1251 = vunpack.c.l.b16 %v1228
    %v1252 = vunpack.c.h.b16 %v1228
    %v1253 = vunpack.c.l.b16 %v1229
    %v1254 = vunpack.c.l.b16 %v1230
    %v1255 = vunpack.c.h.b16 %v1230
    %v1256 = vunpack.c.l.b16 %v1231
    %v1257 = vunpack.c.h.b16 %v1231
    %v1258 = vunpack.c.l.b16 %v1232
    %v1259 = vunpack.c.h.b16 %v1232
    %v1260 = vunpack.c.l.b16 %v1233
    %v1261 = vunpack.c.h.b16 %v1233
    %v1262 = vunpack.c.l.b16 %v1234
    %v1263 = vpack.c.b16 %v1254, %v1245
    %v1264 = vpack.c.b16 %v1255, %v1246
    %v1265 = vpack.c.b16 %v1256, %v1247
    %v1266 = vpack.c.b16 %v1257, %v1248
    %v1267 = vpack.c.b16 %v1258, %v1249
    %v1268 = vpack.c.b16 %v1259, %v1250
    %v1269 = vpack.c.b16 %v1260, %v1251
    %v1270 = vpack.c.b16 %v1261, %v1252
    %v1271 = vpack.c.b16 %v1262, %v1253
    %1272 = vrot.lane.b32.xlu0 %v1263, 97
    %v1273 = vpop.permute.xlu0 %1272
    %1274 = vrot.lane.b32.xlu0 %v1264, 97
    %v1275 = vpop.permute.xlu0 %1274
    %1276 = vrot.lane.b32.xlu0 %v1265, 97
    %v1277 = vpop.permute.xlu0 %1276
    %1278 = vrot.lane.b32.xlu0 %v1266, 97
    %v1279 = vpop.permute.xlu0 %1278
    %1280 = vrot.lane.b32.xlu0 %v1267, 97
    %v1281 = vpop.permute.xlu0 %1280
    %1282 = vrot.lane.b32.xlu0 %v1268, 97
    %v1283 = vpop.permute.xlu0 %1282
    %1284 = vrot.lane.b32.xlu0 %v1269, 97
    %v1285 = vpop.permute.xlu0 %1284
    %1286 = vrot.lane.b32.xlu0 %v1270, 97
    %v1287 = vpop.permute.xlu0 %1286
    %1288 = vrot.lane.b32.xlu0 %v1271, 97
    %v1289 = vpop.permute.xlu0 %1288
    %v1290 = vsel %vm1200, %v1273, %v1275
    %v1291 = vsel %vm1200, %v1275, %v1277
    %v1292 = vsel %vm1200, %v1277, %v1279
    %v1293 = vsel %vm1200, %v1279, %v1281
    %v1294 = vsel %vm1200, %v1281, %v1283
    %v1295 = vsel %vm1200, %v1283, %v1285
    %v1296 = vsel %vm1200, %v1285, %v1287
    %v1297 = vsel %vm1200, %v1287, %v1289
    %1306 = vst [vmem:[#allocation2 + $0x340] sm:$0xff] %v1290
    %1307 = vst [vmem:[#allocation2 + $0x348] sm:$0xff] %v1291
    %1308 = vst [vmem:[#allocation2 + $0x350] sm:$0xff] %v1292
    %1309 = vst [vmem:[#allocation2 + $0x358] sm:$0xff] %v1293
    %1310 = vst [vmem:[#allocation2 + $0x360] sm:$0xff] %v1294
    %1311 = vst [vmem:[#allocation2 + $0x368] sm:$0xff] %v1295
    %1312 = vst [vmem:[#allocation2 + $0x370] sm:$0xff] %v1296
    %1313 = vst [vmem:[#allocation2 + $0x378] sm:$0xff] %v1297
    %v1314 = vld [vmem:[#allocation4 + $0xc] sm:$0xff]
    %v1315 = vld [vmem:[#allocation4 + $0x14] sm:$0xff]
    %v1316 = vld [vmem:[#allocation4 + $0x1c] sm:$0xff]
    %v1317 = vld [vmem:[#allocation4 + $0x24] sm:$0xff]
    %v1318 = vld [vmem:[#allocation4 + $0x2c] sm:$0xf]
    %v1319 = vld [vmem:[#allocation4 + $0x7c] sm:$0xff]
    %v1320 = vld [vmem:[#allocation4 + $0x84] sm:$0xff]
    %v1321 = vld [vmem:[#allocation4 + $0x8c] sm:$0xff]
    %v1322 = vld [vmem:[#allocation4 + $0x94] sm:$0xff]
    %v1323 = vld [vmem:[#allocation4 + $0x9c] sm:$0xf]
    %v1334 = vunpack.c.l.b16 %v1314
    %v1335 = vunpack.c.h.b16 %v1314
    %v1336 = vunpack.c.l.b16 %v1315
    %v1337 = vunpack.c.h.b16 %v1315
    %v1338 = vunpack.c.l.b16 %v1316
    %v1339 = vunpack.c.h.b16 %v1316
    %v1340 = vunpack.c.l.b16 %v1317
    %v1341 = vunpack.c.h.b16 %v1317
    %v1342 = vunpack.c.l.b16 %v1318
    %v1343 = vunpack.c.l.b16 %v1319
    %v1344 = vunpack.c.h.b16 %v1319
    %v1345 = vunpack.c.l.b16 %v1320
    %v1346 = vunpack.c.h.b16 %v1320
    %v1347 = vunpack.c.l.b16 %v1321
    %v1348 = vunpack.c.h.b16 %v1321
    %v1349 = vunpack.c.l.b16 %v1322
    %v1350 = vunpack.c.h.b16 %v1322
    %v1351 = vunpack.c.l.b16 %v1323
    %v1352 = vpack.c.b16 %v1343, %v1334
    %v1353 = vpack.c.b16 %v1344, %v1335
    %v1354 = vpack.c.b16 %v1345, %v1336
    %v1355 = vpack.c.b16 %v1346, %v1337
    %v1356 = vpack.c.b16 %v1347, %v1338
    %v1357 = vpack.c.b16 %v1348, %v1339
    %v1358 = vpack.c.b16 %v1349, %v1340
    %v1359 = vpack.c.b16 %v1350, %v1341
    %v1360 = vpack.c.b16 %v1351, %v1342
    %1361 = vrot.lane.b32.xlu0 %v1352, 96
    %v1362 = vpop.permute.xlu0 %1361
    %1363 = vrot.lane.b32.xlu0 %v1353, 96
    %v1364 = vpop.permute.xlu0 %1363
    %1365 = vrot.lane.b32.xlu0 %v1354, 96
    %v1366 = vpop.permute.xlu0 %1365
    %1367 = vrot.lane.b32.xlu0 %v1355, 96
    %v1368 = vpop.permute.xlu0 %1367
    %1369 = vrot.lane.b32.xlu0 %v1356, 96
    %v1370 = vpop.permute.xlu0 %1369
    %1371 = vrot.lane.b32.xlu0 %v1357, 96
    %v1372 = vpop.permute.xlu0 %1371
    %1373 = vrot.lane.b32.xlu0 %v1358, 96
    %v1374 = vpop.permute.xlu0 %1373
    %1375 = vrot.lane.b32.xlu0 %v1359, 96
    %v1376 = vpop.permute.xlu0 %1375
    %1377 = vrot.lane.b32.xlu0 %v1360, 96
    %v1378 = vpop.permute.xlu0 %1377
    %vm1379 = vcmask 785408
    %v1380 = vsel %vm1379, %v1362, %v1364
    %v1381 = vsel %vm1379, %v1364, %v1366
    %v1382 = vsel %vm1379, %v1366, %v1368
    %v1383 = vsel %vm1379, %v1368, %v1370
    %v1384 = vsel %vm1379, %v1370, %v1372
    %v1385 = vsel %vm1379, %v1372, %v1374
    %v1386 = vsel %vm1379, %v1374, %v1376
    %v1387 = vsel %vm1379, %v1376, %v1378
    %1396 = vst [vmem:[#allocation2 + $0x380] sm:$0xff] %v1380
    %1397 = vst [vmem:[#allocation2 + $0x388] sm:$0xff] %v1381
    %1398 = vst [vmem:[#allocation2 + $0x390] sm:$0xff] %v1382
    %1399 = vst [vmem:[#allocation2 + $0x398] sm:$0xff] %v1383
    %1400 = vst [vmem:[#allocation2 + $0x3a0] sm:$0xff] %v1384
    %1401 = vst [vmem:[#allocation2 + $0x3a8] sm:$0xff] %v1385
    %1402 = vst [vmem:[#allocation2 + $0x3b0] sm:$0xff] %v1386
    %1403 = vst [vmem:[#allocation2 + $0x3b8] sm:$0xff] %v1387
    %v1404 = vld [vmem:[#allocation4 + $0x44] sm:$0xff]
    %v1405 = vld [vmem:[#allocation4 + $0x4c] sm:$0xff]
    %v1406 = vld [vmem:[#allocation4 + $0x54] sm:$0xff]
    %v1407 = vld [vmem:[#allocation4 + $0x5c] sm:$0xff]
    %v1408 = vld [vmem:[#allocation4 + $0x64] sm:$0xf]
    %v1409 = vld [vmem:[#allocation4 + $0xb4] sm:$0xff]
    %v1410 = vld [vmem:[#allocation4 + $0xbc] sm:$0xff]
    %v1411 = vld [vmem:[#allocation4 + $0xc4] sm:$0xff]
    %v1412 = vld [vmem:[#allocation4 + $0xcc] sm:$0xff]
    %v1413 = vld [vmem:[#allocation4 + $0xd4] sm:$0xf]
    %v1424 = vunpack.c.l.b16 %v1404
    %v1425 = vunpack.c.h.b16 %v1404
    %v1426 = vunpack.c.l.b16 %v1405
    %v1427 = vunpack.c.h.b16 %v1405
    %v1428 = vunpack.c.l.b16 %v1406
    %v1429 = vunpack.c.h.b16 %v1406
    %v1430 = vunpack.c.l.b16 %v1407
    %v1431 = vunpack.c.h.b16 %v1407
    %v1432 = vunpack.c.l.b16 %v1408
    %v1433 = vunpack.c.l.b16 %v1409
    %v1434 = vunpack.c.h.b16 %v1409
    %v1435 = vunpack.c.l.b16 %v1410
    %v1436 = vunpack.c.h.b16 %v1410
    %v1437 = vunpack.c.l.b16 %v1411
    %v1438 = vunpack.c.h.b16 %v1411
    %v1439 = vunpack.c.l.b16 %v1412
    %v1440 = vunpack.c.h.b16 %v1412
    %v1441 = vunpack.c.l.b16 %v1413
    %v1442 = vpack.c.b16 %v1433, %v1424
    %v1443 = vpack.c.b16 %v1434, %v1425
    %v1444 = vpack.c.b16 %v1435, %v1426
    %v1445 = vpack.c.b16 %v1436, %v1427
    %v1446 = vpack.c.b16 %v1437, %v1428
    %v1447 = vpack.c.b16 %v1438, %v1429
    %v1448 = vpack.c.b16 %v1439, %v1430
    %v1449 = vpack.c.b16 %v1440, %v1431
    %v1450 = vpack.c.b16 %v1441, %v1432
    %1451 = vrot.lane.b32.xlu0 %v1442, 96
    %v1452 = vpop.permute.xlu0 %1451
    %1453 = vrot.lane.b32.xlu0 %v1443, 96
    %v1454 = vpop.permute.xlu0 %1453
    %1455 = vrot.lane.b32.xlu0 %v1444, 96
    %v1456 = vpop.permute.xlu0 %1455
    %1457 = vrot.lane.b32.xlu0 %v1445, 96
    %v1458 = vpop.permute.xlu0 %1457
    %1459 = vrot.lane.b32.xlu0 %v1446, 96
    %v1460 = vpop.permute.xlu0 %1459
    %1461 = vrot.lane.b32.xlu0 %v1447, 96
    %v1462 = vpop.permute.xlu0 %1461
    %1463 = vrot.lane.b32.xlu0 %v1448, 96
    %v1464 = vpop.permute.xlu0 %1463
    %1465 = vrot.lane.b32.xlu0 %v1449, 96
    %v1466 = vpop.permute.xlu0 %1465
    %1467 = vrot.lane.b32.xlu0 %v1450, 96
    %v1468 = vpop.permute.xlu0 %1467
    %v1469 = vsel %vm1379, %v1452, %v1454
    %v1470 = vsel %vm1379, %v1454, %v1456
    %v1471 = vsel %vm1379, %v1456, %v1458
    %v1472 = vsel %vm1379, %v1458, %v1460
    %v1473 = vsel %vm1379, %v1460, %v1462
    %v1474 = vsel %vm1379, %v1462, %v1464
    %v1475 = vsel %vm1379, %v1464, %v1466
    %v1476 = vsel %vm1379, %v1466, %v1468
    %1485 = vst [vmem:[#allocation2 + $0x3c0] sm:$0xff] %v1469
    %1486 = vst [vmem:[#allocation2 + $0x3c8] sm:$0xff] %v1470
    %1487 = vst [vmem:[#allocation2 + $0x3d0] sm:$0xff] %v1471
    %1488 = vst [vmem:[#allocation2 + $0x3d8] sm:$0xff] %v1472
    %1489 = vst [vmem:[#allocation2 + $0x3e0] sm:$0xff] %v1473
    %1490 = vst [vmem:[#allocation2 + $0x3e8] sm:$0xff] %v1474
    %1491 = vst [vmem:[#allocation2 + $0x3f0] sm:$0xff] %v1475
    %1492 = vst [vmem:[#allocation2 + $0x3f8] sm:$0xff] %v1476
    %v1493 = vld [vmem:[#allocation4 + $0xc] sm:$0xff]
    %v1494 = vld [vmem:[#allocation4 + $0x14] sm:$0xff]
    %v1495 = vld [vmem:[#allocation4 + $0x1c] sm:$0xff]
    %v1496 = vld [vmem:[#allocation4 + $0x24] sm:$0xff]
    %v1497 = vld [vmem:[#allocation4 + $0x2c] sm:$0xf]
    %v1498 = vld [vmem:[#allocation4 + $0x7c] sm:$0xff]
    %v1499 = vld [vmem:[#allocation4 + $0x84] sm:$0xff]
    %v1500 = vld [vmem:[#allocation4 + $0x8c] sm:$0xff]
    %v1501 = vld [vmem:[#allocation4 + $0x94] sm:$0xff]
    %v1502 = vld [vmem:[#allocation4 + $0x9c] sm:$0xf]
    %v1513 = vunpack.c.l.b16 %v1493
    %v1514 = vunpack.c.h.b16 %v1493
    %v1515 = vunpack.c.l.b16 %v1494
    %v1516 = vunpack.c.h.b16 %v1494
    %v1517 = vunpack.c.l.b16 %v1495
    %v1518 = vunpack.c.h.b16 %v1495
    %v1519 = vunpack.c.l.b16 %v1496
    %v1520 = vunpack.c.h.b16 %v1496
    %v1521 = vunpack.c.l.b16 %v1497
    %v1522 = vunpack.c.l.b16 %v1498
    %v1523 = vunpack.c.h.b16 %v1498
    %v1524 = vunpack.c.l.b16 %v1499
    %v1525 = vunpack.c.h.b16 %v1499
    %v1526 = vunpack.c.l.b16 %v1500
    %v1527 = vunpack.c.h.b16 %v1500
    %v1528 = vunpack.c.l.b16 %v1501
    %v1529 = vunpack.c.h.b16 %v1501
    %v1530 = vunpack.c.l.b16 %v1502
    %v1531 = vpack.c.b16 %v1522, %v1513
    %v1532 = vpack.c.b16 %v1523, %v1514
    %v1533 = vpack.c.b16 %v1524, %v1515
    %v1534 = vpack.c.b16 %v1525, %v1516
    %v1535 = vpack.c.b16 %v1526, %v1517
    %v1536 = vpack.c.b16 %v1527, %v1518
    %v1537 = vpack.c.b16 %v1528, %v1519
    %v1538 = vpack.c.b16 %v1529, %v1520
    %v1539 = vpack.c.b16 %v1530, %v1521
    %1540 = vrot.lane.b32.xlu0 %v1531, 95
    %v1541 = vpop.permute.xlu0 %1540
    %1542 = vrot.lane.b32.xlu0 %v1532, 95
    %v1543 = vpop.permute.xlu0 %1542
    %1544 = vrot.lane.b32.xlu0 %v1533, 95
    %v1545 = vpop.permute.xlu0 %1544
    %1546 = vrot.lane.b32.xlu0 %v1534, 95
    %v1547 = vpop.permute.xlu0 %1546
    %1548 = vrot.lane.b32.xlu0 %v1535, 95
    %v1549 = vpop.permute.xlu0 %1548
    %1550 = vrot.lane.b32.xlu0 %v1536, 95
    %v1551 = vpop.permute.xlu0 %1550
    %1552 = vrot.lane.b32.xlu0 %v1537, 95
    %v1553 = vpop.permute.xlu0 %1552
    %1554 = vrot.lane.b32.xlu0 %v1538, 95
    %v1555 = vpop.permute.xlu0 %1554
    %1556 = vrot.lane.b32.xlu0 %v1539, 95
    %v1557 = vpop.permute.xlu0 %1556
    %vm1558 = vcmask 777216
    %v1559 = vsel %vm1558, %v1541, %v1543
    %v1560 = vsel %vm1558, %v1543, %v1545
    %v1561 = vsel %vm1558, %v1545, %v1547
    %v1562 = vsel %vm1558, %v1547, %v1549
    %v1563 = vsel %vm1558, %v1549, %v1551
    %v1564 = vsel %vm1558, %v1551, %v1553
    %v1565 = vsel %vm1558, %v1553, %v1555
    %v1566 = vsel %vm1558, %v1555, %v1557
    %1575 = vst [vmem:[#allocation2 + $0x400] sm:$0xff] %v1559
    %1576 = vst [vmem:[#allocation2 + $0x408] sm:$0xff] %v1560
    %1577 = vst [vmem:[#allocation2 + $0x410] sm:$0xff] %v1561
    %1578 = vst [vmem:[#allocation2 + $0x418] sm:$0xff] %v1562
    %1579 = vst [vmem:[#allocation2 + $0x420] sm:$0xff] %v1563
    %1580 = vst [vmem:[#allocation2 + $0x428] sm:$0xff] %v1564
    %1581 = vst [vmem:[#allocation2 + $0x430] sm:$0xff] %v1565
    %1582 = vst [vmem:[#allocation2 + $0x438] sm:$0xff] %v1566
    %v1583 = vld [vmem:[#allocation4 + $0x44] sm:$0xff]
    %v1584 = vld [vmem:[#allocation4 + $0x4c] sm:$0xff]
    %v1585 = vld [vmem:[#allocation4 + $0x54] sm:$0xff]
    %v1586 = vld [vmem:[#allocation4 + $0x5c] sm:$0xff]
    %v1587 = vld [vmem:[#allocation4 + $0x64] sm:$0xf]
    %v1588 = vld [vmem:[#allocation4 + $0xb4] sm:$0xff]
    %v1589 = vld [vmem:[#allocation4 + $0xbc] sm:$0xff]
    %v1590 = vld [vmem:[#allocation4 + $0xc4] sm:$0xff]
    %v1591 = vld [vmem:[#allocation4 + $0xcc] sm:$0xff]
    %v1592 = vld [vmem:[#allocation4 + $0xd4] sm:$0xf]
    %v1603 = vunpack.c.l.b16 %v1583
    %v1604 = vunpack.c.h.b16 %v1583
    %v1605 = vunpack.c.l.b16 %v1584
    %v1606 = vunpack.c.h.b16 %v1584
    %v1607 = vunpack.c.l.b16 %v1585
    %v1608 = vunpack.c.h.b16 %v1585
    %v1609 = vunpack.c.l.b16 %v1586
    %v1610 = vunpack.c.h.b16 %v1586
    %v1611 = vunpack.c.l.b16 %v1587
    %v1612 = vunpack.c.l.b16 %v1588
    %v1613 = vunpack.c.h.b16 %v1588
    %v1614 = vunpack.c.l.b16 %v1589
    %v1615 = vunpack.c.h.b16 %v1589
    %v1616 = vunpack.c.l.b16 %v1590
    %v1617 = vunpack.c.h.b16 %v1590
    %v1618 = vunpack.c.l.b16 %v1591
    %v1619 = vunpack.c.h.b16 %v1591
    %v1620 = vunpack.c.l.b16 %v1592
    %v1621 = vpack.c.b16 %v1612, %v1603
    %v1622 = vpack.c.b16 %v1613, %v1604
    %v1623 = vpack.c.b16 %v1614, %v1605
    %v1624 = vpack.c.b16 %v1615, %v1606
    %v1625 = vpack.c.b16 %v1616, %v1607
    %v1626 = vpack.c.b16 %v1617, %v1608
    %v1627 = vpack.c.b16 %v1618, %v1609
    %v1628 = vpack.c.b16 %v1619, %v1610
    %v1629 = vpack.c.b16 %v1620, %v1611
    %1630 = vrot.lane.b32.xlu0 %v1621, 95
    %v1631 = vpop.permute.xlu0 %1630
    %1632 = vrot.lane.b32.xlu0 %v1622, 95
    %v1633 = vpop.permute.xlu0 %1632
    %1634 = vrot.lane.b32.xlu0 %v1623, 95
    %v1635 = vpop.permute.xlu0 %1634
    %1636 = vrot.lane.b32.xlu0 %v1624, 95
    %v1637 = vpop.permute.xlu0 %1636
    %1638 = vrot.lane.b32.xlu0 %v1625, 95
    %v1639 = vpop.permute.xlu0 %1638
    %1640 = vrot.lane.b32.xlu0 %v1626, 95
    %v1641 = vpop.permute.xlu0 %1640
    %1642 = vrot.lane.b32.xlu0 %v1627, 95
    %v1643 = vpop.permute.xlu0 %1642
    %1644 = vrot.lane.b32.xlu0 %v1628, 95
    %v1645 = vpop.permute.xlu0 %1644
    %1646 = vrot.lane.b32.xlu0 %v1629, 95
    %v1647 = vpop.permute.xlu0 %1646
    %v1648 = vsel %vm1558, %v1631, %v1633
    %v1649 = vsel %vm1558, %v1633, %v1635
    %v1650 = vsel %vm1558, %v1635, %v1637
    %v1651 = vsel %vm1558, %v1637, %v1639
    %v1652 = vsel %vm1558, %v1639, %v1641
    %v1653 = vsel %vm1558, %v1641, %v1643
    %v1654 = vsel %vm1558, %v1643, %v1645
    %v1655 = vsel %vm1558, %v1645, %v1647
    %1664 = vst [vmem:[#allocation2 + $0x440] sm:$0xff] %v1648
    %1665 = vst [vmem:[#allocation2 + $0x448] sm:$0xff] %v1649
    %1666 = vst [vmem:[#allocation2 + $0x450] sm:$0xff] %v1650
    %1667 = vst [vmem:[#allocation2 + $0x458] sm:$0xff] %v1651
    %1668 = vst [vmem:[#allocation2 + $0x460] sm:$0xff] %v1652
    %1669 = vst [vmem:[#allocation2 + $0x468] sm:$0xff] %v1653
    %1670 = vst [vmem:[#allocation2 + $0x470] sm:$0xff] %v1654
    %1671 = vst [vmem:[#allocation2 + $0x478] sm:$0xff] %v1655
    %v1672 = vld [vmem:[#allocation9] sm:$0xf]
    %v1673 = vld [vmem:[#allocation2] sm:$0xff]
    %v1674 = vld [vmem:[#allocation2 + $0x8] sm:$0xff]
    %v1675 = vld [vmem:[#allocation2 + $0x10] sm:$0xff]
    %v1676 = vld [vmem:[#allocation2 + $0x18] sm:$0xff]
    %v1677 = vld [vmem:[#allocation2 + $0x20] sm:$0xff]
    %v1678 = vld [vmem:[#allocation2 + $0x28] sm:$0xff]
    %v1679 = vld [vmem:[#allocation2 + $0x30] sm:$0xff]
    %v1680 = vld [vmem:[#allocation2 + $0x38] sm:$0xff]
    %v1681 = vld [vmem:[#allocation2 + $0x40] sm:$0xff]
    %v1682 = vld [vmem:[#allocation2 + $0x48] sm:$0xff]
    %v1683 = vld [vmem:[#allocation2 + $0x50] sm:$0xff]
    %v1684 = vld [vmem:[#allocation2 + $0x58] sm:$0xff]
    %v1685 = vld [vmem:[#allocation2 + $0x60] sm:$0xff]
    %v1686 = vld [vmem:[#allocation2 + $0x68] sm:$0xff]
    %v1687 = vld [vmem:[#allocation2 + $0x70] sm:$0xff]
    %v1688 = vld [vmem:[#allocation2 + $0x78] sm:$0xff]
    %v1689 = vld [vmem:[#allocation2 + $0x80] sm:$0xff]
    %v1690 = vld [vmem:[#allocation2 + $0x88] sm:$0xff]
    %v1691 = vld [vmem:[#allocation2 + $0x90] sm:$0xff]
    %v1692 = vld [vmem:[#allocation2 + $0x98] sm:$0xff]
    %v1693 = vld [vmem:[#allocation2 + $0xa0] sm:$0xff]
    %v1694 = vld [vmem:[#allocation2 + $0xa8] sm:$0xff]
    %v1695 = vld [vmem:[#allocation2 + $0xb0] sm:$0xff]
    %v1696 = vld [vmem:[#allocation2 + $0xb8] sm:$0xff]
    %v1697 = vld [vmem:[#allocation2 + $0xc0] sm:$0xff]
    %v1698 = vld [vmem:[#allocation2 + $0xc8] sm:$0xff]
    %v1699 = vld [vmem:[#allocation2 + $0xd0] sm:$0xff]
    %v1700 = vld [vmem:[#allocation2 + $0xd8] sm:$0xff]
    %v1701 = vld [vmem:[#allocation2 + $0xe0] sm:$0xff]
    %v1702 = vld [vmem:[#allocation2 + $0xe8] sm:$0xff]
    %v1703 = vld [vmem:[#allocation2 + $0xf0] sm:$0xff]
    %v1704 = vld [vmem:[#allocation2 + $0xf8] sm:$0xff]
    %v1705 = vld [vmem:[#allocation2 + $0x100] sm:$0xff]
    %v1706 = vld [vmem:[#allocation2 + $0x108] sm:$0xff]
    %v1707 = vld [vmem:[#allocation2 + $0x110] sm:$0xff]
    %v1708 = vld [vmem:[#allocation2 + $0x118] sm:$0xff]
    %v1709 = vld [vmem:[#allocation2 + $0x120] sm:$0xff]
    %v1710 = vld [vmem:[#allocation2 + $0x128] sm:$0xff]
    %v1711 = vld [vmem:[#allocation2 + $0x130] sm:$0xff]
    %v1712 = vld [vmem:[#allocation2 + $0x138] sm:$0xff]
    %v1713 = vld [vmem:[#allocation2 + $0x140] sm:$0xff]
    %v1714 = vld [vmem:[#allocation2 + $0x148] sm:$0xff]
    %v1715 = vld [vmem:[#allocation2 + $0x150] sm:$0xff]
    %v1716 = vld [vmem:[#allocation2 + $0x158] sm:$0xff]
    %v1717 = vld [vmem:[#allocation2 + $0x160] sm:$0xff]
    %v1718 = vld [vmem:[#allocation2 + $0x168] sm:$0xff]
    %v1719 = vld [vmem:[#allocation2 + $0x170] sm:$0xff]
    %v1720 = vld [vmem:[#allocation2 + $0x178] sm:$0xff]
    %v1721 = vld [vmem:[#allocation2 + $0x180] sm:$0xff]
    %v1722 = vld [vmem:[#allocation2 + $0x188] sm:$0xff]
    %v1723 = vld [vmem:[#allocation2 + $0x190] sm:$0xff]
    %v1724 = vld [vmem:[#allocation2 + $0x198] sm:$0xff]
    %v1725 = vld [vmem:[#allocation2 + $0x1a0] sm:$0xff]
    %v1726 = vld [vmem:[#allocation2 + $0x1a8] sm:$0xff]
    %v1727 = vld [vmem:[#allocation2 + $0x1b0] sm:$0xff]
    %v1728 = vld [vmem:[#allocation2 + $0x1b8] sm:$0xff]
    %v1729 = vld [vmem:[#allocation2 + $0x1c0] sm:$0xff]
    %v1730 = vld [vmem:[#allocation2 + $0x1c8] sm:$0xff]
    %v1731 = vld [vmem:[#allocation2 + $0x1d0] sm:$0xff]
    %v1732 = vld [vmem:[#allocation2 + $0x1d8] sm:$0xff]
    %v1733 = vld [vmem:[#allocation2 + $0x1e0] sm:$0xff]
    %v1734 = vld [vmem:[#allocation2 + $0x1e8] sm:$0xff]
    %v1735 = vld [vmem:[#allocation2 + $0x1f0] sm:$0xff]
    %v1736 = vld [vmem:[#allocation2 + $0x1f8] sm:$0xff]
    %v1737 = vld [vmem:[#allocation2 + $0x200] sm:$0xff]
    %v1738 = vld [vmem:[#allocation2 + $0x208] sm:$0xff]
    %v1739 = vld [vmem:[#allocation2 + $0x210] sm:$0xff]
    %v1740 = vld [vmem:[#allocation2 + $0x218] sm:$0xff]
    %v1741 = vld [vmem:[#allocation2 + $0x220] sm:$0xff]
    %v1742 = vld [vmem:[#allocation2 + $0x228] sm:$0xff]
    %v1743 = vld [vmem:[#allocation2 + $0x230] sm:$0xff]
    %v1744 = vld [vmem:[#allocation2 + $0x238] sm:$0xff]
    %v1745 = vld [vmem:[#allocation2 + $0x240] sm:$0xff]
    %v1746 = vld [vmem:[#allocation2 + $0x248] sm:$0xff]
    %v1747 = vld [vmem:[#allocation2 + $0x250] sm:$0xff]
    %v1748 = vld [vmem:[#allocation2 + $0x258] sm:$0xff]
    %v1749 = vld [vmem:[#allocation2 + $0x260] sm:$0xff]
    %v1750 = vld [vmem:[#allocation2 + $0x268] sm:$0xff]
    %v1751 = vld [vmem:[#allocation2 + $0x270] sm:$0xff]
    %v1752 = vld [vmem:[#allocation2 + $0x278] sm:$0xff]
    %v1753 = vld [vmem:[#allocation2 + $0x280] sm:$0xff]
    %v1754 = vld [vmem:[#allocation2 + $0x288] sm:$0xff]
    %v1755 = vld [vmem:[#allocation2 + $0x290] sm:$0xff]
    %v1756 = vld [vmem:[#allocation2 + $0x298] sm:$0xff]
    %v1757 = vld [vmem:[#allocation2 + $0x2a0] sm:$0xff]
    %v1758 = vld [vmem:[#allocation2 + $0x2a8] sm:$0xff]
    %v1759 = vld [vmem:[#allocation2 + $0x2b0] sm:$0xff]
    %v1760 = vld [vmem:[#allocation2 + $0x2b8] sm:$0xff]
    %v1761 = vld [vmem:[#allocation2 + $0x2c0] sm:$0xff]
    %v1762 = vld [vmem:[#allocation2 + $0x2c8] sm:$0xff]
    %v1763 = vld [vmem:[#allocation2 + $0x2d0] sm:$0xff]
    %v1764 = vld [vmem:[#allocation2 + $0x2d8] sm:$0xff]
    %v1765 = vld [vmem:[#allocation2 + $0x2e0] sm:$0xff]
    %v1766 = vld [vmem:[#allocation2 + $0x2e8] sm:$0xff]
    %v1767 = vld [vmem:[#allocation2 + $0x2f0] sm:$0xff]
    %v1768 = vld [vmem:[#allocation2 + $0x2f8] sm:$0xff]
    %v1769 = vld [vmem:[#allocation2 + $0x300] sm:$0xff]
    %v1770 = vld [vmem:[#allocation2 + $0x308] sm:$0xff]
    %v1771 = vld [vmem:[#allocation2 + $0x310] sm:$0xff]
    %v1772 = vld [vmem:[#allocation2 + $0x318] sm:$0xff]
    %v1773 = vld [vmem:[#allocation2 + $0x320] sm:$0xff]
    %v1774 = vld [vmem:[#allocation2 + $0x328] sm:$0xff]
    %v1775 = vld [vmem:[#allocation2 + $0x330] sm:$0xff]
    %v1776 = vld [vmem:[#allocation2 + $0x338] sm:$0xff]
    %v1777 = vld [vmem:[#allocation2 + $0x340] sm:$0xff]
    %v1778 = vld [vmem:[#allocation2 + $0x348] sm:$0xff]
    %v1779 = vld [vmem:[#allocation2 + $0x350] sm:$0xff]
    %v1780 = vld [vmem:[#allocation2 + $0x358] sm:$0xff]
    %v1781 = vld [vmem:[#allocation2 + $0x360] sm:$0xff]
    %v1782 = vld [vmem:[#allocation2 + $0x368] sm:$0xff]
    %v1783 = vld [vmem:[#allocation2 + $0x370] sm:$0xff]
    %v1784 = vld [vmem:[#allocation2 + $0x378] sm:$0xff]
    %v1785 = vld [vmem:[#allocation2 + $0x380] sm:$0xff]
    %v1786 = vld [vmem:[#allocation2 + $0x388] sm:$0xff]
    %v1787 = vld [vmem:[#allocation2 + $0x390] sm:$0xff]
    %v1788 = vld [vmem:[#allocation2 + $0x398] sm:$0xff]
    %v1789 = vld [vmem:[#allocation2 + $0x3a0] sm:$0xff]
    %v1790 = vld [vmem:[#allocation2 + $0x3a8] sm:$0xff]
    %v1791 = vld [vmem:[#allocation2 + $0x3b0] sm:$0xff]
    %v1792 = vld [vmem:[#allocation2 + $0x3b8] sm:$0xff]
    %v1793 = vld [vmem:[#allocation2 + $0x3c0] sm:$0xff]
    %v1794 = vld [vmem:[#allocation2 + $0x3c8] sm:$0xff]
    %v1795 = vld [vmem:[#allocation2 + $0x3d0] sm:$0xff]
    %v1796 = vld [vmem:[#allocation2 + $0x3d8] sm:$0xff]
    %v1797 = vld [vmem:[#allocation2 + $0x3e0] sm:$0xff]
    %v1798 = vld [vmem:[#allocation2 + $0x3e8] sm:$0xff]
    %v1799 = vld [vmem:[#allocation2 + $0x3f0] sm:$0xff]
    %v1800 = vld [vmem:[#allocation2 + $0x3f8] sm:$0xff]
    %v1801 = vld [vmem:[#allocation2 + $0x400] sm:$0xff]
    %v1802 = vld [vmem:[#allocation2 + $0x408] sm:$0xff]
    %v1803 = vld [vmem:[#allocation2 + $0x410] sm:$0xff]
    %v1804 = vld [vmem:[#allocation2 + $0x418] sm:$0xff]
    %v1805 = vld [vmem:[#allocation2 + $0x420] sm:$0xff]
    %v1806 = vld [vmem:[#allocation2 + $0x428] sm:$0xff]
    %v1807 = vld [vmem:[#allocation2 + $0x430] sm:$0xff]
    %v1808 = vld [vmem:[#allocation2 + $0x438] sm:$0xff]
    %v1809 = vld [vmem:[#allocation2 + $0x440] sm:$0xff]
    %v1810 = vld [vmem:[#allocation2 + $0x448] sm:$0xff]
    %v1811 = vld [vmem:[#allocation2 + $0x450] sm:$0xff]
    %v1812 = vld [vmem:[#allocation2 + $0x458] sm:$0xff]
    %v1813 = vld [vmem:[#allocation2 + $0x460] sm:$0xff]
    %v1814 = vld [vmem:[#allocation2 + $0x468] sm:$0xff]
    %v1815 = vld [vmem:[#allocation2 + $0x470] sm:$0xff]
    %v1816 = vld [vmem:[#allocation2 + $0x478] sm:$0xff]
    %v1819 = vunpack.c.l.s4 1983009808
    %v1820 = vunpack.c.0.s8 %v1819
    %v1821 = vlaneseq
    %v1822 = vshrl.u32 %v1821, 7
    %v1823 = vsub.s32 %v1820, %v1822
    %v1824 = vrot.slane %v1672, %v1823
    %v1825 = vcombine.high %v1824, %v1824
    %vm1827 = vcmask 130048
    %v1829 = vsel %vm1827, %v1825, 0
    %1831 = vmatprep.subr.bf16.mxu0 %v1674
    %1832 = vmatpush1.bf16.msra.mxu0 %v1673
    %1833 = vmatprep.subr.bf16.mxu0 %v1690
    %1834 = vmatpush1.bf16.msra.mxu0 %v1689
    %1835 = vmatprep.subr.bf16.mxu0 %v1706
    %1836 = vmatpush1.bf16.msra.mxu0 %v1705
    %1837 = vmatprep.subr.bf16.mxu0 %v1722
    %1838 = vmatpush1.bf16.msra.mxu0 %v1721
    %1839 = vmatprep.subr.bf16.mxu0 %v1738
    %1840 = vmatpush1.bf16.msra.mxu0 %v1737
    %1841 = vmatprep.subr.bf16.mxu0 %v1754
    %1842 = vmatpush1.bf16.msra.mxu0 %v1753
    %1843 = vmatprep.subr.bf16.mxu0 %v1770
    %1844 = vmatpush1.bf16.msra.mxu0 %v1769
    %1845 = vmatprep.subr.bf16.mxu0 %v1786
    %1846 = vmatpush1.bf16.msra.mxu0 %v1785
    %1847 = vmatprep.subr.bf16.mxu0 %v1802
    %1848 = vmatpush1.bf16.msra.mxu0 %v1801
    %1849 = vmatprep.subr.bf16.mxu0 0
    %1850 = vmatpush1.bf16.msra.mxu0 0
    %1851 = vmatprep.subr.bf16.mxu0 0
    %1852 = vmatpush1.bf16.msra.mxu0 0
    %1853 = vmatprep.subr.bf16.mxu0 0
    %1854 = vmatpush1.bf16.msra.mxu0 0
    %1855 = vmatprep.subr.bf16.mxu0 0
    %1856 = vmatpush1.bf16.msra.mxu0 0
    %1857 = vmatprep.subr.bf16.mxu0 0
    %1858 = vmatpush1.bf16.msra.mxu0 0
    %1859 = vmatprep.subr.bf16.mxu0 0
    %1860 = vmatpush1.bf16.msra.mxu0 0
    %1861 = vmatprep.subr.bf16.mxu0 0
    %1862 = vmatpush1.bf16.msra.mxu0 0
    %1863 = vmatprep.mubr.bf16.mxu0 %v1829
    %1864 = vmatmul.mubr.bf16.gmra.mrb[0].mxu0 %v1824
    %v1865 = vpop.f32.mrb[0].mxu0
    %v1866 = vadd.f32 0.0, %v1865
    %v1867 = vpop.f32.mrb[0].mxu0
    %v1868 = vadd.f32 0.0, %v1867
    %v1869 = vpop.f32.mrb[0].mxu0
    %v1870 = vpop.f32.mrb[0].mxu0
    %1871 = vdwg.mxu0
    %1872 = vmatprep.subr.bf16.mxu0 %v1676
    %1873 = vmatpush1.bf16.msra.mxu0 %v1675
    %1874 = vmatprep.subr.bf16.mxu0 %v1692
    %1875 = vmatpush1.bf16.msra.mxu0 %v1691
    %1876 = vmatprep.subr.bf16.mxu0 %v1708
    %1877 = vmatpush1.bf16.msra.mxu0 %v1707
    %1878 = vmatprep.subr.bf16.mxu0 %v1724
    %1879 = vmatpush1.bf16.msra.mxu0 %v1723
    %1880 = vmatprep.subr.bf16.mxu0 %v1740
    %1881 = vmatpush1.bf16.msra.mxu0 %v1739
    %1882 = vmatprep.subr.bf16.mxu0 %v1756
    %1883 = vmatpush1.bf16.msra.mxu0 %v1755
    %1884 = vmatprep.subr.bf16.mxu0 %v1772
    %1885 = vmatpush1.bf16.msra.mxu0 %v1771
    %1886 = vmatprep.subr.bf16.mxu0 %v1788
    %1887 = vmatpush1.bf16.msra.mxu0 %v1787
    %1888 = vmatprep.subr.bf16.mxu0 %v1804
    %1889 = vmatpush1.bf16.msra.mxu0 %v1803
    %1890 = vmatprep.subr.bf16.mxu0 0
    %1891 = vmatpush1.bf16.msra.mxu0 0
    %1892 = vmatprep.subr.bf16.mxu0 0
    %1893 = vmatpush1.bf16.msra.mxu0 0
    %1894 = vmatprep.subr.bf16.mxu0 0
    %1895 = vmatpush1.bf16.msra.mxu0 0
    %1896 = vmatprep.subr.bf16.mxu0 0
    %1897 = vmatpush1.bf16.msra.mxu0 0
    %1898 = vmatprep.subr.bf16.mxu0 0
    %1899 = vmatpush1.bf16.msra.mxu0 0
    %1900 = vmatprep.subr.bf16.mxu0 0
    %1901 = vmatpush1.bf16.msra.mxu0 0
    %1902 = vmatprep.subr.bf16.mxu0 0
    %1903 = vmatpush1.bf16.msra.mxu0 0
    %1904 = vmatprep.mubr.bf16.mxu0 %v1829
    %1905 = vmatmul.mubr.bf16.gmra.mrb[0].mxu0 %v1824
    %v1906 = vpop.f32.mrb[0].mxu0
    %v1907 = vadd.f32 0.0, %v1906
    %v1908 = vpop.f32.mrb[0].mxu0
    %v1909 = vadd.f32 0.0, %v1908
    %v1910 = vpop.f32.mrb[0].mxu0
    %v1911 = vpop.f32.mrb[0].mxu0
    %1912 = vdwg.mxu0
    %1913 = vmatprep.subr.bf16.mxu0 %v1678
    %1914 = vmatpush1.bf16.msra.mxu0 %v1677
    %1915 = vmatprep.subr.bf16.mxu0 %v1694
    %1916 = vmatpush1.bf16.msra.mxu0 %v1693
    %1917 = vmatprep.subr.bf16.mxu0 %v1710
    %1918 = vmatpush1.bf16.msra.mxu0 %v1709
    %1919 = vmatprep.subr.bf16.mxu0 %v1726
    %1920 = vmatpush1.bf16.msra.mxu0 %v1725
    %1921 = vmatprep.subr.bf16.mxu0 %v1742
    %1922 = vmatpush1.bf16.msra.mxu0 %v1741
    %1923 = vmatprep.subr.bf16.mxu0 %v1758
    %1924 = vmatpush1.bf16.msra.mxu0 %v1757
    %1925 = vmatprep.subr.bf16.mxu0 %v1774
    %1926 = vmatpush1.bf16.msra.mxu0 %v1773
    %1927 = vmatprep.subr.bf16.mxu0 %v1790
    %1928 = vmatpush1.bf16.msra.mxu0 %v1789
    %1929 = vmatprep.subr.bf16.mxu0 %v1806
    %1930 = vmatpush1.bf16.msra.mxu0 %v1805
    %1931 = vmatprep.subr.bf16.mxu0 0
    %1932 = vmatpush1.bf16.msra.mxu0 0
    %1933 = vmatprep.subr.bf16.mxu0 0
    %1934 = vmatpush1.bf16.msra.mxu0 0
    %1935 = vmatprep.subr.bf16.mxu0 0
    %1936 = vmatpush1.bf16.msra.mxu0 0
    %1937 = vmatprep.subr.bf16.mxu0 0
    %1938 = vmatpush1.bf16.msra.mxu0 0
    %1939 = vmatprep.subr.bf16.mxu0 0
    %1940 = vmatpush1.bf16.msra.mxu0 0
    %1941 = vmatprep.subr.bf16.mxu0 0
    %1942 = vmatpush1.bf16.msra.mxu0 0
    %1943 = vmatprep.subr.bf16.mxu0 0
    %1944 = vmatpush1.bf16.msra.mxu0 0
    %1945 = vmatprep.mubr.bf16.mxu0 %v1829
    %1946 = vmatmul.mubr.bf16.gmra.mrb[0].mxu0 %v1824
    %v1947 = vpop.f32.mrb[0].mxu0
    %v1948 = vadd.f32 0.0, %v1947
    %v1949 = vpop.f32.mrb[0].mxu0
    %v1950 = vadd.f32 0.0, %v1949
    %v1951 = vpop.f32.mrb[0].mxu0
    %v1952 = vpop.f32.mrb[0].mxu0
    %1953 = vdwg.mxu0
    %1954 = vmatprep.subr.bf16.mxu0 %v1680
    %1955 = vmatpush1.bf16.msra.mxu0 %v1679
    %1956 = vmatprep.subr.bf16.mxu0 %v1696
    %1957 = vmatpush1.bf16.msra.mxu0 %v1695
    %1958 = vmatprep.subr.bf16.mxu0 %v1712
    %1959 = vmatpush1.bf16.msra.mxu0 %v1711
    %1960 = vmatprep.subr.bf16.mxu0 %v1728
    %1961 = vmatpush1.bf16.msra.mxu0 %v1727
    %1962 = vmatprep.subr.bf16.mxu0 %v1744
    %1963 = vmatpush1.bf16.msra.mxu0 %v1743
    %1964 = vmatprep.subr.bf16.mxu0 %v1760
    %1965 = vmatpush1.bf16.msra.mxu0 %v1759
    %1966 = vmatprep.subr.bf16.mxu0 %v1776
    %1967 = vmatpush1.bf16.msra.mxu0 %v1775
    %1968 = vmatprep.subr.bf16.mxu0 %v1792
    %1969 = vmatpush1.bf16.msra.mxu0 %v1791
    %1970 = vmatprep.subr.bf16.mxu0 %v1808
    %1971 = vmatpush1.bf16.msra.mxu0 %v1807
    %1972 = vmatprep.subr.bf16.mxu0 0
    %1973 = vmatpush1.bf16.msra.mxu0 0
    %1974 = vmatprep.subr.bf16.mxu0 0
    %1975 = vmatpush1.bf16.msra.mxu0 0
    %1976 = vmatprep.subr.bf16.mxu0 0
    %1977 = vmatpush1.bf16.msra.mxu0 0
    %1978 = vmatprep.subr.bf16.mxu0 0
    %1979 = vmatpush1.bf16.msra.mxu0 0
    %1980 = vmatprep.subr.bf16.mxu0 0
    %1981 = vmatpush1.bf16.msra.mxu0 0
    %1982 = vmatprep.subr.bf16.mxu0 0
    %1983 = vmatpush1.bf16.msra.mxu0 0
    %1984 = vmatprep.subr.bf16.mxu0 0
    %1985 = vmatpush1.bf16.msra.mxu0 0
    %1986 = vmatprep.mubr.bf16.mxu0 %v1829
    %1987 = vmatmul.mubr.bf16.gmra.mrb[0].mxu0 %v1824
    %v1988 = vpop.f32.mrb[0].mxu0
    %v1989 = vadd.f32 0.0, %v1988
    %v1990 = vpop.f32.mrb[0].mxu0
    %v1991 = vadd.f32 0.0, %v1990
    %v1992 = vpop.f32.mrb[0].mxu0
    %v1993 = vpop.f32.mrb[0].mxu0
    %1994 = vdwg.mxu0
    %1995 = vmatprep.subr.bf16.mxu0 %v1682
    %1996 = vmatpush1.bf16.msra.mxu0 %v1681
    %1997 = vmatprep.subr.bf16.mxu0 %v1698
    %1998 = vmatpush1.bf16.msra.mxu0 %v1697
    %1999 = vmatprep.subr.bf16.mxu0 %v1714
    %2000 = vmatpush1.bf16.msra.mxu0 %v1713
    %2001 = vmatprep.subr.bf16.mxu0 %v1730
    %2002 = vmatpush1.bf16.msra.mxu0 %v1729
    %2003 = vmatprep.subr.bf16.mxu0 %v1746
    %2004 = vmatpush1.bf16.msra.mxu0 %v1745
    %2005 = vmatprep.subr.bf16.mxu0 %v1762
    %2006 = vmatpush1.bf16.msra.mxu0 %v1761
    %2007 = vmatprep.subr.bf16.mxu0 %v1778
    %2008 = vmatpush1.bf16.msra.mxu0 %v1777
    %2009 = vmatprep.subr.bf16.mxu0 %v1794
    %2010 = vmatpush1.bf16.msra.mxu0 %v1793
    %2011 = vmatprep.subr.bf16.mxu0 %v1810
    %2012 = vmatpush1.bf16.msra.mxu0 %v1809
    %2013 = vmatprep.subr.bf16.mxu0 0
    %2014 = vmatpush1.bf16.msra.mxu0 0
    %2015 = vmatprep.subr.bf16.mxu0 0
    %2016 = vmatpush1.bf16.msra.mxu0 0
    %2017 = vmatprep.subr.bf16.mxu0 0
    %2018 = vmatpush1.bf16.msra.mxu0 0
    %2019 = vmatprep.subr.bf16.mxu0 0
    %2020 = vmatpush1.bf16.msra.mxu0 0
    %2021 = vmatprep.subr.bf16.mxu0 0
    %2022 = vmatpush1.bf16.msra.mxu0 0
    %2023 = vmatprep.subr.bf16.mxu0 0
    %2024 = vmatpush1.bf16.msra.mxu0 0
    %2025 = vmatprep.subr.bf16.mxu0 0
    %2026 = vmatpush1.bf16.msra.mxu0 0
    %2027 = vmatprep.mubr.bf16.mxu0 %v1829
    %2028 = vmatmul.mubr.bf16.gmra.mrb[0].mxu0 %v1824
    %v2029 = vpop.f32.mrb[0].mxu0
    %v2030 = vadd.f32 0.0, %v2029
    %v2031 = vpop.f32.mrb[0].mxu0
    %v2032 = vadd.f32 0.0, %v2031
    %v2033 = vpop.f32.mrb[0].mxu0
    %v2034 = vpop.f32.mrb[0].mxu0
    %2035 = vdwg.mxu0
    %2036 = vmatprep.subr.bf16.mxu0 %v1684
    %2037 = vmatpush1.bf16.msra.mxu0 %v1683
    %2038 = vmatprep.subr.bf16.mxu0 %v1700
    %2039 = vmatpush1.bf16.msra.mxu0 %v1699
    %2040 = vmatprep.subr.bf16.mxu0 %v1716
    %2041 = vmatpush1.bf16.msra.mxu0 %v1715
    %2042 = vmatprep.subr.bf16.mxu0 %v1732
    %2043 = vmatpush1.bf16.msra.mxu0 %v1731
    %2044 = vmatprep.subr.bf16.mxu0 %v1748
    %2045 = vmatpush1.bf16.msra.mxu0 %v1747
    %2046 = vmatprep.subr.bf16.mxu0 %v1764
    %2047 = vmatpush1.bf16.msra.mxu0 %v1763
    %2048 = vmatprep.subr.bf16.mxu0 %v1780
    %2049 = vmatpush1.bf16.msra.mxu0 %v1779
    %2050 = vmatprep.subr.bf16.mxu0 %v1796
    %2051 = vmatpush1.bf16.msra.mxu0 %v1795
    %2052 = vmatprep.subr.bf16.mxu0 %v1812
    %2053 = vmatpush1.bf16.msra.mxu0 %v1811
    %2054 = vmatprep.subr.bf16.mxu0 0
    %2055 = vmatpush1.bf16.msra.mxu0 0
    %2056 = vmatprep.subr.bf16.mxu0 0
    %2057 = vmatpush1.bf16.msra.mxu0 0
    %2058 = vmatprep.subr.bf16.mxu0 0
    %2059 = vmatpush1.bf16.msra.mxu0 0
    %2060 = vmatprep.subr.bf16.mxu0 0
    %2061 = vmatpush1.bf16.msra.mxu0 0
    %2062 = vmatprep.subr.bf16.mxu0 0
    %2063 = vmatpush1.bf16.msra.mxu0 0
    %2064 = vmatprep.subr.bf16.mxu0 0
    %2065 = vmatpush1.bf16.msra.mxu0 0
    %2066 = vmatprep.subr.bf16.mxu0 0
    %2067 = vmatpush1.bf16.msra.mxu0 0
    %2068 = vmatprep.mubr.bf16.mxu0 %v1829
    %2069 = vmatmul.mubr.bf16.gmra.mrb[0].mxu0 %v1824
    %v2070 = vpop.f32.mrb[0].mxu0
    %v2071 = vadd.f32 0.0, %v2070
    %v2072 = vpop.f32.mrb[0].mxu0
    %v2073 = vadd.f32 0.0, %v2072
    %v2074 = vpop.f32.mrb[0].mxu0
    %v2075 = vpop.f32.mrb[0].mxu0
    %2076 = vdwg.mxu0
    %2077 = vmatprep.subr.bf16.mxu0 %v1686
    %2078 = vmatpush1.bf16.msra.mxu0 %v1685
    %2079 = vmatprep.subr.bf16.mxu0 %v1702
    %2080 = vmatpush1.bf16.msra.mxu0 %v1701
    %2081 = vmatprep.subr.bf16.mxu0 %v1718
    %2082 = vmatpush1.bf16.msra.mxu0 %v1717
    %2083 = vmatprep.subr.bf16.mxu0 %v1734
    %2084 = vmatpush1.bf16.msra.mxu0 %v1733
    %2085 = vmatprep.subr.bf16.mxu0 %v1750
    %2086 = vmatpush1.bf16.msra.mxu0 %v1749
    %2087 = vmatprep.subr.bf16.mxu0 %v1766
    %2088 = vmatpush1.bf16.msra.mxu0 %v1765
    %2089 = vmatprep.subr.bf16.mxu0 %v1782
    %2090 = vmatpush1.bf16.msra.mxu0 %v1781
    %2091 = vmatprep.subr.bf16.mxu0 %v1798
    %2092 = vmatpush1.bf16.msra.mxu0 %v1797
    %2093 = vmatprep.subr.bf16.mxu0 %v1814
    %2094 = vmatpush1.bf16.msra.mxu0 %v1813
    %2095 = vmatprep.subr.bf16.mxu0 0
    %2096 = vmatpush1.bf16.msra.mxu0 0
    %2097 = vmatprep.subr.bf16.mxu0 0
    %2098 = vmatpush1.bf16.msra.mxu0 0
    %2099 = vmatprep.subr.bf16.mxu0 0
    %2100 = vmatpush1.bf16.msra.mxu0 0
    %2101 = vmatprep.subr.bf16.mxu0 0
    %2102 = vmatpush1.bf16.msra.mxu0 0
    %2103 = vmatprep.subr.bf16.mxu0 0
    %2104 = vmatpush1.bf16.msra.mxu0 0
    %2105 = vmatprep.subr.bf16.mxu0 0
    %2106 = vmatpush1.bf16.msra.mxu0 0
    %2107 = vmatprep.subr.bf16.mxu0 0
    %2108 = vmatpush1.bf16.msra.mxu0 0
    %2109 = vmatprep.mubr.bf16.mxu0 %v1829
    %2110 = vmatmul.mubr.bf16.gmra.mrb[0].mxu0 %v1824
    %v2111 = vpop.f32.mrb[0].mxu0
    %v2112 = vadd.f32 0.0, %v2111
    %v2113 = vpop.f32.mrb[0].mxu0
    %v2114 = vadd.f32 0.0, %v2113
    %v2115 = vpop.f32.mrb[0].mxu0
    %v2116 = vpop.f32.mrb[0].mxu0
    %2117 = vdwg.mxu0
    %2118 = vmatprep.subr.bf16.mxu0 %v1688
    %2119 = vmatpush1.bf16.msra.mxu0 %v1687
    %2120 = vmatprep.subr.bf16.mxu0 %v1704
    %2121 = vmatpush1.bf16.msra.mxu0 %v1703
    %2122 = vmatprep.subr.bf16.mxu0 %v1720
    %2123 = vmatpush1.bf16.msra.mxu0 %v1719
    %2124 = vmatprep.subr.bf16.mxu0 %v1736
    %2125 = vmatpush1.bf16.msra.mxu0 %v1735
    %2126 = vmatprep.subr.bf16.mxu0 %v1752
    %2127 = vmatpush1.bf16.msra.mxu0 %v1751
    %2128 = vmatprep.subr.bf16.mxu0 %v1768
    %2129 = vmatpush1.bf16.msra.mxu0 %v1767
    %2130 = vmatprep.subr.bf16.mxu0 %v1784
    %2131 = vmatpush1.bf16.msra.mxu0 %v1783
    %2132 = vmatprep.subr.bf16.mxu0 %v1800
    %2133 = vmatpush1.bf16.msra.mxu0 %v1799
    %2134 = vmatprep.subr.bf16.mxu0 %v1816
    %2135 = vmatpush1.bf16.msra.mxu0 %v1815
    %2136 = vmatprep.subr.bf16.mxu0 0
    %2137 = vmatpush1.bf16.msra.mxu0 0
    %2138 = vmatprep.subr.bf16.mxu0 0
    %2139 = vmatpush1.bf16.msra.mxu0 0
    %2140 = vmatprep.subr.bf16.mxu0 0
    %2141 = vmatpush1.bf16.msra.mxu0 0
    %2142 = vmatprep.subr.bf16.mxu0 0
    %2143 = vmatpush1.bf16.msra.mxu0 0
    %2144 = vmatprep.subr.bf16.mxu0 0
    %2145 = vmatpush1.bf16.msra.mxu0 0
    %2146 = vmatprep.subr.bf16.mxu0 0
    %2147 = vmatpush1.bf16.msra.mxu0 0
    %2148 = vmatprep.subr.bf16.mxu0 0
    %2149 = vmatpush1.bf16.msra.mxu0 0
    %2150 = vmatprep.mubr.bf16.mxu0 %v1829
    %2151 = vmatmul.mubr.bf16.gmra.mrb[0].mxu0 %v1824
    %v2152 = vpop.f32.mrb[0].mxu0
    %v2153 = vadd.f32 0.0, %v2152
    %v2154 = vpop.f32.mrb[0].mxu0
    %v2155 = vadd.f32 0.0, %v2154
    %v2156 = vpop.f32.mrb[0].mxu0
    %v2157 = vpop.f32.mrb[0].mxu0
    %2158 = vdwg.mxu0
    %v2161 = vlaneseq
    %v2162 = vshrl.u32 %v2161, 7
    %v2163 = vsub.s32 0, %v2162
    %v2164 = vrot.slane %v119, %v2163
    %v2165 = vlaneseq
    %v2166 = vshrl.u32 %v2165, 7
    %v2167 = vsub.s32 1, %v2166
    %v2168 = vrot.slane %v119, %v2167
    %v2169 = vlaneseq
    %v2170 = vshrl.u32 %v2169, 7
    %v2171 = vsub.s32 2, %v2170
    %v2172 = vrot.slane %v119, %v2171
    %v2173 = vlaneseq
    %v2174 = vshrl.u32 %v2173, 7
    %v2175 = vsub.s32 3, %v2174
    %v2176 = vrot.slane %v119, %v2175
    %v2177 = vlaneseq
    %v2178 = vshrl.u32 %v2177, 7
    %v2179 = vsub.s32 4, %v2178
    %v2180 = vrot.slane %v119, %v2179
    %v2181 = vlaneseq
    %v2182 = vshrl.u32 %v2181, 7
    %v2183 = vsub.s32 5, %v2182
    %v2184 = vrot.slane %v119, %v2183
    %v2185 = vlaneseq
    %v2186 = vshrl.u32 %v2185, 7
    %v2187 = vsub.s32 6, %v2186
    %v2188 = vrot.slane %v119, %v2187
    %v2189 = vlaneseq
    %v2190 = vshrl.u32 %v2189, 7
    %v2191 = vsub.s32 7, %v2190
    %v2192 = vrot.slane %v119, %v2191
    %v2193 = vlaneseq
    %v2194 = vshrl.u32 %v2193, 7
    %v2195 = vsub.s32 0, %v2194
    %v2196 = vrot.slane %v120, %v2195
    %v2197 = vlaneseq
    %v2198 = vshrl.u32 %v2197, 7
    %v2199 = vsub.s32 1, %v2198
    %v2200 = vrot.slane %v120, %v2199
    %v2201 = vlaneseq
    %v2202 = vshrl.u32 %v2201, 7
    %v2203 = vsub.s32 2, %v2202
    %v2204 = vrot.slane %v120, %v2203
    %v2205 = vlaneseq
    %v2206 = vshrl.u32 %v2205, 7
    %v2207 = vsub.s32 3, %v2206
    %v2208 = vrot.slane %v120, %v2207
    %v2209 = vlaneseq
    %v2210 = vshrl.u32 %v2209, 7
    %v2211 = vsub.s32 4, %v2210
    %v2212 = vrot.slane %v120, %v2211
    %v2213 = vlaneseq
    %v2214 = vshrl.u32 %v2213, 7
    %v2215 = vsub.s32 5, %v2214
    %v2216 = vrot.slane %v120, %v2215
    %v2217 = vlaneseq
    %v2218 = vshrl.u32 %v2217, 7
    %v2219 = vsub.s32 6, %v2218
    %v2220 = vrot.slane %v120, %v2219
    %v2221 = vlaneseq
    %v2222 = vshrl.u32 %v2221, 7
    %v2223 = vsub.s32 7, %v2222
    %v2224 = vrot.slane %v120, %v2223
    %v2241 = vmul.f32 %v1866, %v2164
    %v2242 = vmul.f32 %v1868, %v2168
    %v2243 = vmul.f32 %v1907, %v2172
    %v2244 = vmul.f32 %v1909, %v2176
    %v2245 = vmul.f32 %v1948, %v2180
    %v2246 = vmul.f32 %v1950, %v2184
    %v2247 = vmul.f32 %v1989, %v2188
    %v2248 = vmul.f32 %v1991, %v2192
    %v2249 = vmul.f32 %v2030, %v2196
    %v2250 = vmul.f32 %v2032, %v2200
    %v2251 = vmul.f32 %v2071, %v2204
    %v2252 = vmul.f32 %v2073, %v2208
    %v2253 = vmul.f32 %v2112, %v2212
    %v2254 = vmul.f32 %v2114, %v2216
    %v2255 = vmul.f32 %v2153, %v2220
    %v2256 = vmul.f32 %v2155, %v2224
    %v2257 = vpack.c.bf16 %v2241, %v2241
    %v2258 = vpack.c.bf16 %v2242, %v2242
    %v2259 = vpack.c.bf16 %v2243, %v2243
    %v2260 = vpack.c.bf16 %v2244, %v2244
    %v2261 = vpack.c.bf16 %v2245, %v2245
    %v2262 = vpack.c.bf16 %v2246, %v2246
    %v2263 = vpack.c.bf16 %v2247, %v2247
    %v2264 = vpack.c.bf16 %v2248, %v2248
    %v2273 = vcombine.low %v2257, %v2258
    %v2274 = vcombine.low %v2259, %v2260
    %v2276 = vunpack.c.l.s4 1983009808
    %v2277 = vunpack.c.0.s8 %v2276
    %v2278 = vlaneseq
    %v2279 = vshrl.u32 %v2278, 7
    %v2280 = vsub.s32 %v2277, %v2279
    %v2281 = vrot.slane %v2273, %v2280
    %v2283 = vunpack.c.l.s4 1983009808
    %v2284 = vunpack.c.0.s8 %v2283
    %v2285 = vlaneseq
    %v2286 = vshrl.u32 %v2285, 7
    %v2287 = vsub.s32 %v2284, %v2286
    %v2288 = vrot.slane %v2274, %v2287
    %v2289 = vcombine.low %v2281, %v2288
    %v2290 = vcombine.low %v2261, %v2262
    %v2291 = vcombine.low %v2263, %v2264
    %v2293 = vunpack.c.l.s4 1983009808
    %v2294 = vunpack.c.0.s8 %v2293
    %v2295 = vlaneseq
    %v2296 = vshrl.u32 %v2295, 7
    %v2297 = vsub.s32 %v2294, %v2296
    %v2298 = vrot.slane %v2290, %v2297
    %v2300 = vunpack.c.l.s4 1983009808
    %v2301 = vunpack.c.0.s8 %v2300
    %v2302 = vlaneseq
    %v2303 = vshrl.u32 %v2302, 7
    %v2304 = vsub.s32 %v2301, %v2303
    %v2305 = vrot.slane %v2291, %v2304
    %v2306 = vcombine.low %v2298, %v2305
    %2309 = vst [vmem:[#allocation3 + $0x6] sm:$0xff] %v2289
    %2310 = vst [vmem:[#allocation3 + $0xe] sm:$0xff] %v2306
    %v2311 = vpack.c.bf16 %v2249, %v2249
    %v2312 = vpack.c.bf16 %v2250, %v2250
    %v2313 = vpack.c.bf16 %v2251, %v2251
    %v2314 = vpack.c.bf16 %v2252, %v2252
    %v2315 = vpack.c.bf16 %v2253, %v2253
    %v2316 = vpack.c.bf16 %v2254, %v2254
    %v2317 = vpack.c.bf16 %v2255, %v2255
    %v2318 = vpack.c.bf16 %v2256, %v2256
    %v2327 = vcombine.low %v2311, %v2312
    %v2328 = vcombine.low %v2313, %v2314
    %v2330 = vunpack.c.l.s4 1983009808
    %v2331 = vunpack.c.0.s8 %v2330
    %v2332 = vlaneseq
    %v2333 = vshrl.u32 %v2332, 7
    %v2334 = vsub.s32 %v2331, %v2333
    %v2335 = vrot.slane %v2327, %v2334
    %v2337 = vunpack.c.l.s4 1983009808
    %v2338 = vunpack.c.0.s8 %v2337
    %v2339 = vlaneseq
    %v2340 = vshrl.u32 %v2339, 7
    %v2341 = vsub.s32 %v2338, %v2340
    %v2342 = vrot.slane %v2328, %v2341
    %v2343 = vcombine.low %v2335, %v2342
    %v2344 = vcombine.low %v2315, %v2316
    %v2345 = vcombine.low %v2317, %v2318
    %v2347 = vunpack.c.l.s4 1983009808
    %v2348 = vunpack.c.0.s8 %v2347
    %v2349 = vlaneseq
    %v2350 = vshrl.u32 %v2349, 7
    %v2351 = vsub.s32 %v2348, %v2350
    %v2352 = vrot.slane %v2344, %v2351
    %v2354 = vunpack.c.l.s4 1983009808
    %v2355 = vunpack.c.0.s8 %v2354
    %v2356 = vlaneseq
    %v2357 = vshrl.u32 %v2356, 7
    %v2358 = vsub.s32 %v2355, %v2357
    %v2359 = vrot.slane %v2345, %v2358
    %v2360 = vcombine.low %v2352, %v2359
    %2363 = vst [vmem:[#allocation3 + $0x22] sm:$0xff] %v2343
    %2364 = vst [vmem:[#allocation3 + $0x2a] sm:$0xff] %v2360
    %v2365 = vld [vmem:[#allocation3 + $0x4] sm:$0xff]
    %v2366 = vld [vmem:[#allocation3 + $0xc] sm:$0xff]
    %v2367 = vld [vmem:[#allocation3 + $0x14] sm:$0x3]
    %v2368 = vld [vmem:[#allocation3 + $0x2] sm:$0xff]
    %v2369 = vld [vmem:[#allocation3 + $0xa] sm:$0xff]
    %v2370 = vld [vmem:[#allocation3 + $0x12] sm:$0x3]
    %v2371 = vld [vmem:[#allocation3] sm:$0xff]
    %v2372 = vld [vmem:[#allocation3 + $0x8] sm:$0xff]
    %v2373 = vld [vmem:[#allocation3 + $0x10] sm:$0x3]
    %v2377 = vcombine.high %v2365, %v2365
    %v2379 = vunpack.c.l.s4 1983009808
    %v2380 = vunpack.c.0.s8 %v2379
    %v2381 = vlaneseq
    %v2382 = vshrl.u32 %v2381, 7
    %v2383 = vsub.s32 %v2380, %v2382
    %v2384 = vrot.slane %v2365, %v2383
    %v2386 = vunpack.c.l.s4 1983009808
    %v2387 = vunpack.c.0.s8 %v2386
    %v2388 = vlaneseq
    %v2389 = vshrl.u32 %v2388, 7
    %v2390 = vsub.s32 %v2387, %v2389
    %v2391 = vrot.slane %v2377, %v2390
    %v2392 = vcombine.high %v2384, %v2384
    %v2393 = vcombine.high %v2391, %v2391
    %v2394 = vcombine.high %v2366, %v2366
    %v2396 = vunpack.c.l.s4 1983009808
    %v2397 = vunpack.c.0.s8 %v2396
    %v2398 = vlaneseq
    %v2399 = vshrl.u32 %v2398, 7
    %v2400 = vsub.s32 %v2397, %v2399
    %v2401 = vrot.slane %v2366, %v2400
    %v2403 = vunpack.c.l.s4 1983009808
    %v2404 = vunpack.c.0.s8 %v2403
    %v2405 = vlaneseq
    %v2406 = vshrl.u32 %v2405, 7
    %v2407 = vsub.s32 %v2404, %v2406
    %v2408 = vrot.slane %v2394, %v2407
    %v2409 = vcombine.high %v2401, %v2401
    %v2410 = vcombine.high %v2408, %v2408
    %v2412 = vunpack.c.l.s4 1983009808
    %v2413 = vunpack.c.0.s8 %v2412
    %v2414 = vlaneseq
    %v2415 = vshrl.u32 %v2414, 7
    %v2416 = vsub.s32 %v2413, %v2415
    %v2417 = vrot.slane %v2367, %v2416
    %v2418 = vcombine.low %v2365, %v2365
    %v2420 = vunpack.c.l.s4 1983009808
    %v2421 = vunpack.c.0.s8 %v2420
    %v2422 = vlaneseq
    %v2423 = vshrl.u32 %v2422, 7
    %v2424 = vsub.s32 %v2421, %v2423
    %v2425 = vrot.slane %v2418, %v2424
    %v2426 = vcombine.high %v2425, %v2425
    %v2427 = vcombine.low %v2366, %v2366
    %v2429 = vunpack.c.l.s4 1983009808
    %v2430 = vunpack.c.0.s8 %v2429
    %v2431 = vlaneseq
    %v2432 = vshrl.u32 %v2431, 7
    %v2433 = vsub.s32 %v2430, %v2432
    %v2434 = vrot.slane %v2427, %v2433
    %v2435 = vcombine.high %v2434, %v2434
    %v2436 = vcombine.low %v2367, %v2367
    %v2438 = vunpack.c.l.s4 1983009808
    %v2439 = vunpack.c.0.s8 %v2438
    %v2440 = vlaneseq
    %v2441 = vshrl.u32 %v2440, 7
    %v2442 = vsub.s32 %v2439, %v2441
    %v2443 = vrot.slane %v2436, %v2442
    %2444 = vrot.lane.b32.xlu0 %v2425, 33
    %v2445 = vpop.permute.xlu0 %2444
    %2446 = vrot.lane.b32.xlu0 %v2426, 33
    %v2447 = vpop.permute.xlu0 %2446
    %2448 = vrot.lane.b32.xlu0 %v2384, 33
    %v2449 = vpop.permute.xlu0 %2448
    %2450 = vrot.lane.b32.xlu0 %v2392, 33
    %v2451 = vpop.permute.xlu0 %2450
    %2452 = vrot.lane.b32.xlu0 %v2434, 33
    %v2453 = vpop.permute.xlu0 %2452
    %2454 = vrot.lane.b32.xlu0 %v2435, 33
    %v2455 = vpop.permute.xlu0 %2454
    %2456 = vrot.lane.b32.xlu0 %v2401, 33
    %v2457 = vpop.permute.xlu0 %2456
    %2458 = vrot.lane.b32.xlu0 %v2409, 33
    %v2459 = vpop.permute.xlu0 %2458
    %2460 = vrot.lane.b32.xlu0 %v2443, 33
    %v2461 = vpop.permute.xlu0 %2460
    %v2462 = vsel %vm193, %v2445, %v2447
    %v2463 = vsel %vm193, %v2447, %v2449
    %v2464 = vsel %vm193, %v2449, %v2451
    %v2465 = vsel %vm193, %v2451, %v2453
    %v2466 = vsel %vm193, %v2453, %v2455
    %v2467 = vsel %vm193, %v2455, %v2457
    %v2468 = vsel %vm193, %v2457, %v2459
    %v2469 = vsel %vm193, %v2459, %v2461
    %v2473 = vcombine.high %v2368, %v2368
    %v2475 = vunpack.c.l.s4 1983009808
    %v2476 = vunpack.c.0.s8 %v2475
    %v2477 = vlaneseq
    %v2478 = vshrl.u32 %v2477, 7
    %v2479 = vsub.s32 %v2476, %v2478
    %v2480 = vrot.slane %v2368, %v2479
    %v2482 = vunpack.c.l.s4 1983009808
    %v2483 = vunpack.c.0.s8 %v2482
    %v2484 = vlaneseq
    %v2485 = vshrl.u32 %v2484, 7
    %v2486 = vsub.s32 %v2483, %v2485
    %v2487 = vrot.slane %v2473, %v2486
    %v2488 = vcombine.low %v2480, %v2480
    %v2489 = vcombine.low %v2487, %v2487
    %v2490 = vcombine.high %v2369, %v2369
    %v2492 = vunpack.c.l.s4 1983009808
    %v2493 = vunpack.c.0.s8 %v2492
    %v2494 = vlaneseq
    %v2495 = vshrl.u32 %v2494, 7
    %v2496 = vsub.s32 %v2493, %v2495
    %v2497 = vrot.slane %v2369, %v2496
    %v2499 = vunpack.c.l.s4 1983009808
    %v2500 = vunpack.c.0.s8 %v2499
    %v2501 = vlaneseq
    %v2502 = vshrl.u32 %v2501, 7
    %v2503 = vsub.s32 %v2500, %v2502
    %v2504 = vrot.slane %v2490, %v2503
    %v2505 = vcombine.low %v2497, %v2497
    %v2506 = vcombine.low %v2504, %v2504
    %v2508 = vunpack.c.l.s4 1983009808
    %v2509 = vunpack.c.0.s8 %v2508
    %v2510 = vlaneseq
    %v2511 = vshrl.u32 %v2510, 7
    %v2512 = vsub.s32 %v2509, %v2511
    %v2513 = vrot.slane %v2370, %v2512
    %v2514 = vcombine.low %v2513, %v2513
    %2515 = vrot.lane.b32.xlu0 %v2488, 99
    %v2516 = vpop.permute.xlu0 %2515
    %2517 = vrot.lane.b32.xlu0 %v2480, 99
    %v2518 = vpop.permute.xlu0 %2517
    %2519 = vrot.lane.b32.xlu0 %v2489, 99
    %v2520 = vpop.permute.xlu0 %2519
    %2521 = vrot.lane.b32.xlu0 %v2487, 99
    %v2522 = vpop.permute.xlu0 %2521
    %2523 = vrot.lane.b32.xlu0 %v2505, 99
    %v2524 = vpop.permute.xlu0 %2523
    %2525 = vrot.lane.b32.xlu0 %v2497, 99
    %v2526 = vpop.permute.xlu0 %2525
    %2527 = vrot.lane.b32.xlu0 %v2506, 99
    %v2528 = vpop.permute.xlu0 %2527
    %2529 = vrot.lane.b32.xlu0 %v2504, 99
    %v2530 = vpop.permute.xlu0 %2529
    %2531 = vrot.lane.b32.xlu0 %v2514, 99
    %v2532 = vpop.permute.xlu0 %2531
    %vm2533 = vcmask 809984
    %v2534 = vsel %vm2533, %v2516, %v2518
    %v2535 = vsel %vm2533, %v2518, %v2520
    %v2536 = vsel %vm2533, %v2520, %v2522
    %v2537 = vsel %vm2533, %v2522, %v2524
    %v2538 = vsel %vm2533, %v2524, %v2526
    %v2539 = vsel %vm2533, %v2526, %v2528
    %v2540 = vsel %vm2533, %v2528, %v2530
    %v2541 = vsel %vm2533, %v2530, %v2532
    %v2545 = vcombine.low %v2371, %v2371
    %v2547 = vunpack.c.l.s4 1983009808
    %v2548 = vunpack.c.0.s8 %v2547
    %v2549 = vlaneseq
    %v2550 = vshrl.u32 %v2549, 7
    %v2551 = vsub.s32 %v2548, %v2550
    %v2552 = vrot.slane %v2545, %v2551
    %v2554 = vunpack.c.l.s4 1983009808
    %v2555 = vunpack.c.0.s8 %v2554
    %v2556 = vlaneseq
    %v2557 = vshrl.u32 %v2556, 7
    %v2558 = vsub.s32 %v2555, %v2557
    %v2559 = vrot.slane %v2371, %v2558
    %v2560 = vcombine.low %v2552, %v2552
    %v2561 = vcombine.low %v2559, %v2559
    %v2562 = vcombine.low %v2372, %v2372
    %v2564 = vunpack.c.l.s4 1983009808
    %v2565 = vunpack.c.0.s8 %v2564
    %v2566 = vlaneseq
    %v2567 = vshrl.u32 %v2566, 7
    %v2568 = vsub.s32 %v2565, %v2567
    %v2569 = vrot.slane %v2562, %v2568
    %v2571 = vunpack.c.l.s4 1983009808
    %v2572 = vunpack.c.0.s8 %v2571
    %v2573 = vlaneseq
    %v2574 = vshrl.u32 %v2573, 7
    %v2575 = vsub.s32 %v2572, %v2574
    %v2576 = vrot.slane %v2372, %v2575
    %v2577 = vcombine.low %v2569, %v2569
    %v2578 = vcombine.low %v2576, %v2576
    %v2579 = vcombine.low %v2373, %v2373
    %v2581 = vunpack.c.l.s4 1983009808
    %v2582 = vunpack.c.0.s8 %v2581
    %v2583 = vlaneseq
    %v2584 = vshrl.u32 %v2583, 7
    %v2585 = vsub.s32 %v2582, %v2584
    %v2586 = vrot.slane %v2579, %v2585
    %v2587 = vcombine.low %v2586, %v2586
    %2588 = vrot.lane.b32.xlu0 %v2560, 103
    %v2589 = vpop.permute.xlu0 %2588
    %2590 = vrot.lane.b32.xlu0 %v2552, 103
    %v2591 = vpop.permute.xlu0 %2590
    %2592 = vrot.lane.b32.xlu0 %v2561, 103
    %v2593 = vpop.permute.xlu0 %2592
    %2594 = vrot.lane.b32.xlu0 %v2559, 103
    %v2595 = vpop.permute.xlu0 %2594
    %2596 = vrot.lane.b32.xlu0 %v2577, 103
    %v2597 = vpop.permute.xlu0 %2596
    %2598 = vrot.lane.b32.xlu0 %v2569, 103
    %v2599 = vpop.permute.xlu0 %2598
    %2600 = vrot.lane.b32.xlu0 %v2578, 103
    %v2601 = vpop.permute.xlu0 %2600
    %2602 = vrot.lane.b32.xlu0 %v2576, 103
    %v2603 = vpop.permute.xlu0 %2602
    %2604 = vrot.lane.b32.xlu0 %v2587, 103
    %v2605 = vpop.permute.xlu0 %2604
    %vm2606 = vcmask 842752
    %v2607 = vsel %vm2606, %v2589, %v2591
    %v2608 = vsel %vm2606, %v2591, %v2593
    %v2609 = vsel %vm2606, %v2593, %v2595
    %v2610 = vsel %vm2606, %v2595, %v2597
    %v2611 = vsel %vm2606, %v2597, %v2599
    %v2612 = vsel %vm2606, %v2599, %v2601
    %v2613 = vsel %vm2606, %v2601, %v2603
    %v2614 = vsel %vm2606, %v2603, %v2605
    %vm2615 = vcmask 1041408
    %v2618 = vsel %vm2615, %v2384, %v2445
    %v2621 = vsel %vm2615, %v2392, %v2462
    %v2624 = vsel %vm2615, %v2391, %v2463
    %v2627 = vsel %vm2615, %v2393, %v2464
    %v2630 = vsel %vm2615, %v2401, %v2465
    %v2633 = vsel %vm2615, %v2409, %v2466
    %v2636 = vsel %vm2615, %v2408, %v2467
    %v2639 = vsel %vm2615, %v2410, %v2468
    %v2642 = vsel %vm2615, %v2417, %v2469
    %vm2643 = vcmask 1043456
    %v2645 = vsel %vm2643, %v2618, %v2534
    %v2647 = vsel %vm2643, %v2621, %v2535
    %v2649 = vsel %vm2643, %v2624, %v2536
    %v2651 = vsel %vm2643, %v2627, %v2537
    %v2653 = vsel %vm2643, %v2630, %v2538
    %v2655 = vsel %vm2643, %v2633, %v2539
    %v2657 = vsel %vm2643, %v2636, %v2540
    %v2659 = vsel %vm2643, %v2639, %v2541
    %v2661 = vsel %vm2643, %v2642, %v2532
    %vm2662 = vcmask 1045504
    %v2664 = vsel %vm2662, %v2645, %v2607
    %v2666 = vsel %vm2662, %v2647, %v2608
    %v2668 = vsel %vm2662, %v2649, %v2609
    %v2670 = vsel %vm2662, %v2651, %v2610
    %v2672 = vsel %vm2662, %v2653, %v2611
    %v2674 = vsel %vm2662, %v2655, %v2612
    %v2676 = vsel %vm2662, %v2657, %v2613
    %v2678 = vsel %vm2662, %v2659, %v2614
    %v2680 = vsel %vm2662, %v2661, %v2605
    %2690 = vrot.lane.b32.xlu0 %v2664, 33
    %v2691 = vpop.permute.xlu0 %2690
    %2692 = vrot.lane.b32.xlu0 %v2666, 33
    %v2693 = vpop.permute.xlu0 %2692
    %2694 = vrot.lane.b32.xlu0 %v2668, 33
    %v2695 = vpop.permute.xlu0 %2694
    %2696 = vrot.lane.b32.xlu0 %v2670, 33
    %v2697 = vpop.permute.xlu0 %2696
    %2698 = vrot.lane.b32.xlu0 %v2672, 33
    %v2699 = vpop.permute.xlu0 %2698
    %2700 = vrot.lane.b32.xlu0 %v2674, 33
    %v2701 = vpop.permute.xlu0 %2700
    %2702 = vrot.lane.b32.xlu0 %v2676, 33
    %v2703 = vpop.permute.xlu0 %2702
    %2704 = vrot.lane.b32.xlu0 %v2678, 33
    %v2705 = vpop.permute.xlu0 %2704
    %2706 = vrot.lane.b32.xlu0 %v2680, 33
    %v2707 = vpop.permute.xlu0 %2706
    %v2708 = vsel %vm193, %v2691, %v2693
    %v2709 = vsel %vm193, %v2693, %v2695
    %v2710 = vsel %vm193, %v2695, %v2697
    %v2711 = vsel %vm193, %v2697, %v2699
    %v2712 = vsel %vm193, %v2699, %v2701
    %v2713 = vsel %vm193, %v2701, %v2703
    %v2714 = vsel %vm193, %v2703, %v2705
    %v2715 = vsel %vm193, %v2705, %v2707
    %2724 = vst [vmem:[#allocation2] sm:$0xff] %v2708
    %2725 = vst [vmem:[#allocation2 + $0x8] sm:$0xff] %v2709
    %2726 = vst [vmem:[#allocation2 + $0x10] sm:$0xff] %v2710
    %2727 = vst [vmem:[#allocation2 + $0x18] sm:$0xff] %v2711
    %2728 = vst [vmem:[#allocation2 + $0x20] sm:$0xff] %v2712
    %2729 = vst [vmem:[#allocation2 + $0x28] sm:$0xff] %v2713
    %2730 = vst [vmem:[#allocation2 + $0x30] sm:$0xff] %v2714
    %2731 = vst [vmem:[#allocation2 + $0x38] sm:$0xff] %v2715
    %v2732 = vld [vmem:[#allocation3 + $0x20] sm:$0xff]
    %v2733 = vld [vmem:[#allocation3 + $0x28] sm:$0xff]
    %v2734 = vld [vmem:[#allocation3 + $0x30] sm:$0x3]
    %v2735 = vld [vmem:[#allocation3 + $0x1e] sm:$0xff]
    %v2736 = vld [vmem:[#allocation3 + $0x26] sm:$0xff]
    %v2737 = vld [vmem:[#allocation3 + $0x2e] sm:$0x3]
    %v2738 = vld [vmem:[#allocation3 + $0x1c] sm:$0xff]
    %v2739 = vld [vmem:[#allocation3 + $0x24] sm:$0xff]
    %v2740 = vld [vmem:[#allocation3 + $0x2c] sm:$0x3]
    %v2744 = vcombine.high %v2732, %v2732
    %v2746 = vunpack.c.l.s4 1983009808
    %v2747 = vunpack.c.0.s8 %v2746
    %v2748 = vlaneseq
    %v2749 = vshrl.u32 %v2748, 7
    %v2750 = vsub.s32 %v2747, %v2749
    %v2751 = vrot.slane %v2732, %v2750
    %v2753 = vunpack.c.l.s4 1983009808
    %v2754 = vunpack.c.0.s8 %v2753
    %v2755 = vlaneseq
    %v2756 = vshrl.u32 %v2755, 7
    %v2757 = vsub.s32 %v2754, %v2756
    %v2758 = vrot.slane %v2744, %v2757
    %v2759 = vcombine.high %v2751, %v2751
    %v2760 = vcombine.high %v2758, %v2758
    %v2761 = vcombine.high %v2733, %v2733
    %v2763 = vunpack.c.l.s4 1983009808
    %v2764 = vunpack.c.0.s8 %v2763
    %v2765 = vlaneseq
    %v2766 = vshrl.u32 %v2765, 7
    %v2767 = vsub.s32 %v2764, %v2766
    %v2768 = vrot.slane %v2733, %v2767
    %v2770 = vunpack.c.l.s4 1983009808
    %v2771 = vunpack.c.0.s8 %v2770
    %v2772 = vlaneseq
    %v2773 = vshrl.u32 %v2772, 7
    %v2774 = vsub.s32 %v2771, %v2773
    %v2775 = vrot.slane %v2761, %v2774
    %v2776 = vcombine.high %v2768, %v2768
    %v2777 = vcombine.high %v2775, %v2775
    %v2779 = vunpack.c.l.s4 1983009808
    %v2780 = vunpack.c.0.s8 %v2779
    %v2781 = vlaneseq
    %v2782 = vshrl.u32 %v2781, 7
    %v2783 = vsub.s32 %v2780, %v2782
    %v2784 = vrot.slane %v2734, %v2783
    %v2785 = vcombine.low %v2732, %v2732
    %v2787 = vunpack.c.l.s4 1983009808
    %v2788 = vunpack.c.0.s8 %v2787
    %v2789 = vlaneseq
    %v2790 = vshrl.u32 %v2789, 7
    %v2791 = vsub.s32 %v2788, %v2790
    %v2792 = vrot.slane %v2785, %v2791
    %v2793 = vcombine.high %v2792, %v2792
    %v2794 = vcombine.low %v2733, %v2733
    %v2796 = vunpack.c.l.s4 1983009808
    %v2797 = vunpack.c.0.s8 %v2796
    %v2798 = vlaneseq
    %v2799 = vshrl.u32 %v2798, 7
    %v2800 = vsub.s32 %v2797, %v2799
    %v2801 = vrot.slane %v2794, %v2800
    %v2802 = vcombine.high %v2801, %v2801
    %v2803 = vcombine.low %v2734, %v2734
    %v2805 = vunpack.c.l.s4 1983009808
    %v2806 = vunpack.c.0.s8 %v2805
    %v2807 = vlaneseq
    %v2808 = vshrl.u32 %v2807, 7
    %v2809 = vsub.s32 %v2806, %v2808
    %v2810 = vrot.slane %v2803, %v2809
    %2811 = vrot.lane.b32.xlu0 %v2792, 33
    %v2812 = vpop.permute.xlu0 %2811
    %2813 = vrot.lane.b32.xlu0 %v2793, 33
    %v2814 = vpop.permute.xlu0 %2813
    %2815 = vrot.lane.b32.xlu0 %v2751, 33
    %v2816 = vpop.permute.xlu0 %2815
    %2817 = vrot.lane.b32.xlu0 %v2759, 33
    %v2818 = vpop.permute.xlu0 %2817
    %2819 = vrot.lane.b32.xlu0 %v2801, 33
    %v2820 = vpop.permute.xlu0 %2819
    %2821 = vrot.lane.b32.xlu0 %v2802, 33
    %v2822 = vpop.permute.xlu0 %2821
    %2823 = vrot.lane.b32.xlu0 %v2768, 33
    %v2824 = vpop.permute.xlu0 %2823
    %2825 = vrot.lane.b32.xlu0 %v2776, 33
    %v2826 = vpop.permute.xlu0 %2825
    %2827 = vrot.lane.b32.xlu0 %v2810, 33
    %v2828 = vpop.permute.xlu0 %2827
    %v2829 = vsel %vm193, %v2812, %v2814
    %v2830 = vsel %vm193, %v2814, %v2816
    %v2831 = vsel %vm193, %v2816, %v2818
    %v2832 = vsel %vm193, %v2818, %v2820
    %v2833 = vsel %vm193, %v2820, %v2822
    %v2834 = vsel %vm193, %v2822, %v2824
    %v2835 = vsel %vm193, %v2824, %v2826
    %v2836 = vsel %vm193, %v2826, %v2828
    %v2840 = vcombine.high %v2735, %v2735
    %v2842 = vunpack.c.l.s4 1983009808
    %v2843 = vunpack.c.0.s8 %v2842
    %v2844 = vlaneseq
    %v2845 = vshrl.u32 %v2844, 7
    %v2846 = vsub.s32 %v2843, %v2845
    %v2847 = vrot.slane %v2735, %v2846
    %v2849 = vunpack.c.l.s4 1983009808
    %v2850 = vunpack.c.0.s8 %v2849
    %v2851 = vlaneseq
    %v2852 = vshrl.u32 %v2851, 7
    %v2853 = vsub.s32 %v2850, %v2852
    %v2854 = vrot.slane %v2840, %v2853
    %v2855 = vcombine.low %v2847, %v2847
    %v2856 = vcombine.low %v2854, %v2854
    %v2857 = vcombine.high %v2736, %v2736
    %v2859 = vunpack.c.l.s4 1983009808
    %v2860 = vunpack.c.0.s8 %v2859
    %v2861 = vlaneseq
    %v2862 = vshrl.u32 %v2861, 7
    %v2863 = vsub.s32 %v2860, %v2862
    %v2864 = vrot.slane %v2736, %v2863
    %v2866 = vunpack.c.l.s4 1983009808
    %v2867 = vunpack.c.0.s8 %v2866
    %v2868 = vlaneseq
    %v2869 = vshrl.u32 %v2868, 7
    %v2870 = vsub.s32 %v2867, %v2869
    %v2871 = vrot.slane %v2857, %v2870
    %v2872 = vcombine.low %v2864, %v2864
    %v2873 = vcombine.low %v2871, %v2871
    %v2875 = vunpack.c.l.s4 1983009808
    %v2876 = vunpack.c.0.s8 %v2875
    %v2877 = vlaneseq
    %v2878 = vshrl.u32 %v2877, 7
    %v2879 = vsub.s32 %v2876, %v2878
    %v2880 = vrot.slane %v2737, %v2879
    %v2881 = vcombine.low %v2880, %v2880
    %2882 = vrot.lane.b32.xlu0 %v2855, 99
    %v2883 = vpop.permute.xlu0 %2882
    %2884 = vrot.lane.b32.xlu0 %v2847, 99
    %v2885 = vpop.permute.xlu0 %2884
    %2886 = vrot.lane.b32.xlu0 %v2856, 99
    %v2887 = vpop.permute.xlu0 %2886
    %2888 = vrot.lane.b32.xlu0 %v2854, 99
    %v2889 = vpop.permute.xlu0 %2888
    %2890 = vrot.lane.b32.xlu0 %v2872, 99
    %v2891 = vpop.permute.xlu0 %2890
    %2892 = vrot.lane.b32.xlu0 %v2864, 99
    %v2893 = vpop.permute.xlu0 %2892
    %2894 = vrot.lane.b32.xlu0 %v2873, 99
    %v2895 = vpop.permute.xlu0 %2894
    %2896 = vrot.lane.b32.xlu0 %v2871, 99
    %v2897 = vpop.permute.xlu0 %2896
    %2898 = vrot.lane.b32.xlu0 %v2881, 99
    %v2899 = vpop.permute.xlu0 %2898
    %v2900 = vsel %vm2533, %v2883, %v2885
    %v2901 = vsel %vm2533, %v2885, %v2887
    %v2902 = vsel %vm2533, %v2887, %v2889
    %v2903 = vsel %vm2533, %v2889, %v2891
    %v2904 = vsel %vm2533, %v2891, %v2893
    %v2905 = vsel %vm2533, %v2893, %v2895
    %v2906 = vsel %vm2533, %v2895, %v2897
    %v2907 = vsel %vm2533, %v2897, %v2899
    %v2911 = vcombine.low %v2738, %v2738
    %v2913 = vunpack.c.l.s4 1983009808
    %v2914 = vunpack.c.0.s8 %v2913
    %v2915 = vlaneseq
    %v2916 = vshrl.u32 %v2915, 7
    %v2917 = vsub.s32 %v2914, %v2916
    %v2918 = vrot.slane %v2911, %v2917
    %v2920 = vunpack.c.l.s4 1983009808
    %v2921 = vunpack.c.0.s8 %v2920
    %v2922 = vlaneseq
    %v2923 = vshrl.u32 %v2922, 7
    %v2924 = vsub.s32 %v2921, %v2923
    %v2925 = vrot.slane %v2738, %v2924
    %v2926 = vcombine.low %v2918, %v2918
    %v2927 = vcombine.low %v2925, %v2925
    %v2928 = vcombine.low %v2739, %v2739
    %v2930 = vunpack.c.l.s4 1983009808
    %v2931 = vunpack.c.0.s8 %v2930
    %v2932 = vlaneseq
    %v2933 = vshrl.u32 %v2932, 7
    %v2934 = vsub.s32 %v2931, %v2933
    %v2935 = vrot.slane %v2928, %v2934
    %v2937 = vunpack.c.l.s4 1983009808
    %v2938 = vunpack.c.0.s8 %v2937
    %v2939 = vlaneseq
    %v2940 = vshrl.u32 %v2939, 7
    %v2941 = vsub.s32 %v2938, %v2940
    %v2942 = vrot.slane %v2739, %v2941
    %v2943 = vcombine.low %v2935, %v2935
    %v2944 = vcombine.low %v2942, %v2942
    %v2945 = vcombine.low %v2740, %v2740
    %v2947 = vunpack.c.l.s4 1983009808
    %v2948 = vunpack.c.0.s8 %v2947
    %v2949 = vlaneseq
    %v2950 = vshrl.u32 %v2949, 7
    %v2951 = vsub.s32 %v2948, %v2950
    %v2952 = vrot.slane %v2945, %v2951
    %v2953 = vcombine.low %v2952, %v2952
    %2954 = vrot.lane.b32.xlu0 %v2926, 103
    %v2955 = vpop.permute.xlu0 %2954
    %2956 = vrot.lane.b32.xlu0 %v2918, 103
    %v2957 = vpop.permute.xlu0 %2956
    %2958 = vrot.lane.b32.xlu0 %v2927, 103
    %v2959 = vpop.permute.xlu0 %2958
    %2960 = vrot.lane.b32.xlu0 %v2925, 103
    %v2961 = vpop.permute.xlu0 %2960
    %2962 = vrot.lane.b32.xlu0 %v2943, 103
    %v2963 = vpop.permute.xlu0 %2962
    %2964 = vrot.lane.b32.xlu0 %v2935, 103
    %v2965 = vpop.permute.xlu0 %2964
    %2966 = vrot.lane.b32.xlu0 %v2944, 103
    %v2967 = vpop.permute.xlu0 %2966
    %2968 = vrot.lane.b32.xlu0 %v2942, 103
    %v2969 = vpop.permute.xlu0 %2968
    %2970 = vrot.lane.b32.xlu0 %v2953, 103
    %v2971 = vpop.permute.xlu0 %2970
    %v2972 = vsel %vm2606, %v2955, %v2957
    %v2973 = vsel %vm2606, %v2957, %v2959
    %v2974 = vsel %vm2606, %v2959, %v2961
    %v2975 = vsel %vm2606, %v2961, %v2963
    %v2976 = vsel %vm2606, %v2963, %v2965
    %v2977 = vsel %vm2606, %v2965, %v2967
    %v2978 = vsel %vm2606, %v2967, %v2969
    %v2979 = vsel %vm2606, %v2969, %v2971
    %v2982 = vsel %vm2615, %v2751, %v2812
    %v2985 = vsel %vm2615, %v2759, %v2829
    %v2988 = vsel %vm2615, %v2758, %v2830
    %v2991 = vsel %vm2615, %v2760, %v2831
    %v2994 = vsel %vm2615, %v2768, %v2832
    %v2997 = vsel %vm2615, %v2776, %v2833
    %v3000 = vsel %vm2615, %v2775, %v2834
    %v3003 = vsel %vm2615, %v2777, %v2835
    %v3006 = vsel %vm2615, %v2784, %v2836
    %v3008 = vsel %vm2643, %v2982, %v2900
    %v3010 = vsel %vm2643, %v2985, %v2901
    %v3012 = vsel %vm2643, %v2988, %v2902
    %v3014 = vsel %vm2643, %v2991, %v2903
    %v3016 = vsel %vm2643, %v2994, %v2904
    %v3018 = vsel %vm2643, %v2997, %v2905
    %v3020 = vsel %vm2643, %v3000, %v2906
    %v3022 = vsel %vm2643, %v3003, %v2907
    %v3024 = vsel %vm2643, %v3006, %v2899
    %v3026 = vsel %vm2662, %v3008, %v2972
    %v3028 = vsel %vm2662, %v3010, %v2973
    %v3030 = vsel %vm2662, %v3012, %v2974
    %v3032 = vsel %vm2662, %v3014, %v2975
    %v3034 = vsel %vm2662, %v3016, %v2976
    %v3036 = vsel %vm2662, %v3018, %v2977
    %v3038 = vsel %vm2662, %v3020, %v2978
    %v3040 = vsel %vm2662, %v3022, %v2979
    %v3042 = vsel %vm2662, %v3024, %v2971
    %3052 = vrot.lane.b32.xlu0 %v3026, 33
    %v3053 = vpop.permute.xlu0 %3052
    %3054 = vrot.lane.b32.xlu0 %v3028, 33
    %v3055 = vpop.permute.xlu0 %3054
    %3056 = vrot.lane.b32.xlu0 %v3030, 33
    %v3057 = vpop.permute.xlu0 %3056
    %3058 = vrot.lane.b32.xlu0 %v3032, 33
    %v3059 = vpop.permute.xlu0 %3058
    %3060 = vrot.lane.b32.xlu0 %v3034, 33
    %v3061 = vpop.permute.xlu0 %3060
    %3062 = vrot.lane.b32.xlu0 %v3036, 33
    %v3063 = vpop.permute.xlu0 %3062
    %3064 = vrot.lane.b32.xlu0 %v3038, 33
    %v3065 = vpop.permute.xlu0 %3064
    %3066 = vrot.lane.b32.xlu0 %v3040, 33
    %v3067 = vpop.permute.xlu0 %3066
    %3068 = vrot.lane.b32.xlu0 %v3042, 33
    %v3069 = vpop.permute.xlu0 %3068
    %v3070 = vsel %vm193, %v3053, %v3055
    %v3071 = vsel %vm193, %v3055, %v3057
    %v3072 = vsel %vm193, %v3057, %v3059
    %v3073 = vsel %vm193, %v3059, %v3061
    %v3074 = vsel %vm193, %v3061, %v3063
    %v3075 = vsel %vm193, %v3063, %v3065
    %v3076 = vsel %vm193, %v3065, %v3067
    %v3077 = vsel %vm193, %v3067, %v3069
    %3086 = vst [vmem:[#allocation2 + $0x40] sm:$0xff] %v3070
    %3087 = vst [vmem:[#allocation2 + $0x48] sm:$0xff] %v3071
    %3088 = vst [vmem:[#allocation2 + $0x50] sm:$0xff] %v3072
    %3089 = vst [vmem:[#allocation2 + $0x58] sm:$0xff] %v3073
    %3090 = vst [vmem:[#allocation2 + $0x60] sm:$0xff] %v3074
    %3091 = vst [vmem:[#allocation2 + $0x68] sm:$0xff] %v3075
    %3092 = vst [vmem:[#allocation2 + $0x70] sm:$0xff] %v3076
    %3093 = vst [vmem:[#allocation2 + $0x78] sm:$0xff] %v3077
    %v3094 = vld [vmem:[#allocation3 + $0x4] sm:$0xff]
    %v3095 = vld [vmem:[#allocation3 + $0xc] sm:$0xff]
    %v3096 = vld [vmem:[#allocation3 + $0x14] sm:$0x3]
    %v3097 = vld [vmem:[#allocation3 + $0x2] sm:$0xff]
    %v3098 = vld [vmem:[#allocation3 + $0xa] sm:$0xff]
    %v3102 = vcombine.high %v3094, %v3094
    %v3104 = vunpack.c.l.s4 1983009808
    %v3105 = vunpack.c.0.s8 %v3104
    %v3106 = vlaneseq
    %v3107 = vshrl.u32 %v3106, 7
    %v3108 = vsub.s32 %v3105, %v3107
    %v3109 = vrot.slane %v3094, %v3108
    %v3111 = vunpack.c.l.s4 1983009808
    %v3112 = vunpack.c.0.s8 %v3111
    %v3113 = vlaneseq
    %v3114 = vshrl.u32 %v3113, 7
    %v3115 = vsub.s32 %v3112, %v3114
    %v3116 = vrot.slane %v3102, %v3115
    %v3117 = vcombine.high %v3109, %v3109
    %v3118 = vcombine.high %v3116, %v3116
    %v3119 = vcombine.high %v3095, %v3095
    %v3121 = vunpack.c.l.s4 1983009808
    %v3122 = vunpack.c.0.s8 %v3121
    %v3123 = vlaneseq
    %v3124 = vshrl.u32 %v3123, 7
    %v3125 = vsub.s32 %v3122, %v3124
    %v3126 = vrot.slane %v3095, %v3125
    %v3128 = vunpack.c.l.s4 1983009808
    %v3129 = vunpack.c.0.s8 %v3128
    %v3130 = vlaneseq
    %v3131 = vshrl.u32 %v3130, 7
    %v3132 = vsub.s32 %v3129, %v3131
    %v3133 = vrot.slane %v3119, %v3132
    %v3134 = vcombine.high %v3126, %v3126
    %v3135 = vcombine.high %v3133, %v3133
    %v3137 = vunpack.c.l.s4 1983009808
    %v3138 = vunpack.c.0.s8 %v3137
    %v3139 = vlaneseq
    %v3140 = vshrl.u32 %v3139, 7
    %v3141 = vsub.s32 %v3138, %v3140
    %v3142 = vrot.slane %v3096, %v3141
    %v3143 = vcombine.low %v3094, %v3094
    %v3145 = vunpack.c.l.s4 1983009808
    %v3146 = vunpack.c.0.s8 %v3145
    %v3147 = vlaneseq
    %v3148 = vshrl.u32 %v3147, 7
    %v3149 = vsub.s32 %v3146, %v3148
    %v3150 = vrot.slane %v3143, %v3149
    %v3151 = vcombine.high %v3150, %v3150
    %v3152 = vcombine.low %v3095, %v3095
    %v3154 = vunpack.c.l.s4 1983009808
    %v3155 = vunpack.c.0.s8 %v3154
    %v3156 = vlaneseq
    %v3157 = vshrl.u32 %v3156, 7
    %v3158 = vsub.s32 %v3155, %v3157
    %v3159 = vrot.slane %v3152, %v3158
    %v3160 = vcombine.high %v3159, %v3159
    %v3161 = vcombine.low %v3096, %v3096
    %v3163 = vunpack.c.l.s4 1983009808
    %v3164 = vunpack.c.0.s8 %v3163
    %v3165 = vlaneseq
    %v3166 = vshrl.u32 %v3165, 7
    %v3167 = vsub.s32 %v3164, %v3166
    %v3168 = vrot.slane %v3161, %v3167
    %3169 = vrot.lane.b32.xlu0 %v3150, 32
    %v3170 = vpop.permute.xlu0 %3169
    %3171 = vrot.lane.b32.xlu0 %v3151, 32
    %v3172 = vpop.permute.xlu0 %3171
    %3173 = vrot.lane.b32.xlu0 %v3109, 32
    %v3174 = vpop.permute.xlu0 %3173
    %3175 = vrot.lane.b32.xlu0 %v3117, 32
    %v3176 = vpop.permute.xlu0 %3175
    %3177 = vrot.lane.b32.xlu0 %v3159, 32
    %v3178 = vpop.permute.xlu0 %3177
    %3179 = vrot.lane.b32.xlu0 %v3160, 32
    %v3180 = vpop.permute.xlu0 %3179
    %3181 = vrot.lane.b32.xlu0 %v3126, 32
    %v3182 = vpop.permute.xlu0 %3181
    %3183 = vrot.lane.b32.xlu0 %v3134, 32
    %v3184 = vpop.permute.xlu0 %3183
    %3185 = vrot.lane.b32.xlu0 %v3168, 32
    %v3186 = vpop.permute.xlu0 %3185
    %v3187 = vsel %vm372, %v3170, %v3172
    %v3188 = vsel %vm372, %v3172, %v3174
    %v3189 = vsel %vm372, %v3174, %v3176
    %v3190 = vsel %vm372, %v3176, %v3178
    %v3191 = vsel %vm372, %v3178, %v3180
    %v3192 = vsel %vm372, %v3180, %v3182
    %v3193 = vsel %vm372, %v3182, %v3184
    %v3194 = vsel %vm372, %v3184, %v3186
    %v3195 = vcombine.low %v3109, %v3109
    %v3196 = vcombine.low %v3116, %v3116
    %v3197 = vcombine.low %v3126, %v3126
    %v3198 = vcombine.low %v3133, %v3133
    %3199 = vrot.lane.b32.xlu0 %v3195, 96
    %v3200 = vpop.permute.xlu0 %3199
    %3201 = vrot.lane.b32.xlu0 %v3109, 96
    %v3202 = vpop.permute.xlu0 %3201
    %3203 = vrot.lane.b32.xlu0 %v3196, 96
    %v3204 = vpop.permute.xlu0 %3203
    %3205 = vrot.lane.b32.xlu0 %v3116, 96
    %v3206 = vpop.permute.xlu0 %3205
    %3207 = vrot.lane.b32.xlu0 %v3197, 96
    %v3208 = vpop.permute.xlu0 %3207
    %3209 = vrot.lane.b32.xlu0 %v3126, 96
    %v3210 = vpop.permute.xlu0 %3209
    %3211 = vrot.lane.b32.xlu0 %v3198, 96
    %v3212 = vpop.permute.xlu0 %3211
    %3213 = vrot.lane.b32.xlu0 %v3133, 96
    %v3214 = vpop.permute.xlu0 %3213
    %v3215 = vsel %vm1379, %v3200, %v3202
    %v3216 = vsel %vm1379, %v3202, %v3204
    %v3217 = vsel %vm1379, %v3204, %v3206
    %v3218 = vsel %vm1379, %v3206, %v3208
    %v3219 = vsel %vm1379, %v3208, %v3210
    %v3220 = vsel %vm1379, %v3210, %v3212
    %v3221 = vsel %vm1379, %v3212, %v3214
    %v3224 = vcombine.low %v3097, %v3097
    %v3226 = vunpack.c.l.s4 1983009808
    %v3227 = vunpack.c.0.s8 %v3226
    %v3228 = vlaneseq
    %v3229 = vshrl.u32 %v3228, 7
    %v3230 = vsub.s32 %v3227, %v3229
    %v3231 = vrot.slane %v3224, %v3230
    %v3233 = vunpack.c.l.s4 1983009808
    %v3234 = vunpack.c.0.s8 %v3233
    %v3235 = vlaneseq
    %v3236 = vshrl.u32 %v3235, 7
    %v3237 = vsub.s32 %v3234, %v3236
    %v3238 = vrot.slane %v3097, %v3237
    %v3239 = vcombine.low %v3231, %v3231
    %v3240 = vcombine.low %v3238, %v3238
    %v3241 = vcombine.low %v3098, %v3098
    %v3243 = vunpack.c.l.s4 1983009808
    %v3244 = vunpack.c.0.s8 %v3243
    %v3245 = vlaneseq
    %v3246 = vshrl.u32 %v3245, 7
    %v3247 = vsub.s32 %v3244, %v3246
    %v3248 = vrot.slane %v3241, %v3247
    %v3250 = vunpack.c.l.s4 1983009808
    %v3251 = vunpack.c.0.s8 %v3250
    %v3252 = vlaneseq
    %v3253 = vshrl.u32 %v3252, 7
    %v3254 = vsub.s32 %v3251, %v3253
    %v3255 = vrot.slane %v3098, %v3254
    %v3256 = vcombine.low %v3248, %v3248
    %v3257 = vcombine.low %v3255, %v3255
    %3258 = vrot.lane.b32.xlu0 %v3239, 96
    %v3259 = vpop.permute.xlu0 %3258
    %3260 = vrot.lane.b32.xlu0 %v3231, 96
    %v3261 = vpop.permute.xlu0 %3260
    %3262 = vrot.lane.b32.xlu0 %v3240, 96
    %v3263 = vpop.permute.xlu0 %3262
    %3264 = vrot.lane.b32.xlu0 %v3238, 96
    %v3265 = vpop.permute.xlu0 %3264
    %3266 = vrot.lane.b32.xlu0 %v3256, 96
    %v3267 = vpop.permute.xlu0 %3266
    %3268 = vrot.lane.b32.xlu0 %v3248, 96
    %v3269 = vpop.permute.xlu0 %3268
    %3270 = vrot.lane.b32.xlu0 %v3257, 96
    %v3271 = vpop.permute.xlu0 %3270
    %3272 = vrot.lane.b32.xlu0 %v3255, 96
    %v3273 = vpop.permute.xlu0 %3272
    %v3274 = vsel %vm1379, %v3259, %v3261
    %v3275 = vsel %vm1379, %v3261, %v3263
    %v3276 = vsel %vm1379, %v3263, %v3265
    %v3277 = vsel %vm1379, %v3265, %v3267
    %v3278 = vsel %vm1379, %v3267, %v3269
    %v3279 = vsel %vm1379, %v3269, %v3271
    %v3280 = vsel %vm1379, %v3271, %v3273
    %v3283 = vsel %vm2615, %v3109, %v3170
    %v3286 = vsel %vm2615, %v3117, %v3187
    %v3289 = vsel %vm2615, %v3116, %v3188
    %v3292 = vsel %vm2615, %v3118, %v3189
    %v3295 = vsel %vm2615, %v3126, %v3190
    %v3298 = vsel %vm2615, %v3134, %v3191
    %v3301 = vsel %vm2615, %v3133, %v3192
    %v3304 = vsel %vm2615, %v3135, %v3193
    %v3307 = vsel %vm2615, %v3142, %v3194
    %v3309 = vsel %vm2643, %v3283, %v3200
    %v3311 = vsel %vm2643, %v3286, %v3215
    %v3313 = vsel %vm2643, %v3289, %v3216
    %v3315 = vsel %vm2643, %v3292, %v3217
    %v3317 = vsel %vm2643, %v3295, %v3218
    %v3319 = vsel %vm2643, %v3298, %v3219
    %v3321 = vsel %vm2643, %v3301, %v3220
    %v3323 = vsel %vm2643, %v3304, %v3221
    %v3325 = vsel %vm2643, %v3307, %v3214
    %v3327 = vsel %vm2662, %v3309, %v3259
    %v3329 = vsel %vm2662, %v3311, %v3274
    %v3331 = vsel %vm2662, %v3313, %v3275
    %v3333 = vsel %vm2662, %v3315, %v3276
    %v3335 = vsel %vm2662, %v3317, %v3277
    %v3337 = vsel %vm2662, %v3319, %v3278
    %v3339 = vsel %vm2662, %v3321, %v3279
    %v3341 = vsel %vm2662, %v3323, %v3280
    %v3343 = vsel %vm2662, %v3325, %v3273
    %3353 = vrot.lane.b32.xlu0 %v3327, 32
    %v3354 = vpop.permute.xlu0 %3353
    %3355 = vrot.lane.b32.xlu0 %v3329, 32
    %v3356 = vpop.permute.xlu0 %3355
    %3357 = vrot.lane.b32.xlu0 %v3331, 32
    %v3358 = vpop.permute.xlu0 %3357
    %3359 = vrot.lane.b32.xlu0 %v3333, 32
    %v3360 = vpop.permute.xlu0 %3359
    %3361 = vrot.lane.b32.xlu0 %v3335, 32
    %v3362 = vpop.permute.xlu0 %3361
    %3363 = vrot.lane.b32.xlu0 %v3337, 32
    %v3364 = vpop.permute.xlu0 %3363
    %3365 = vrot.lane.b32.xlu0 %v3339, 32
    %v3366 = vpop.permute.xlu0 %3365
    %3367 = vrot.lane.b32.xlu0 %v3341, 32
    %v3368 = vpop.permute.xlu0 %3367
    %3369 = vrot.lane.b32.xlu0 %v3343, 32
    %v3370 = vpop.permute.xlu0 %3369
    %v3371 = vsel %vm372, %v3354, %v3356
    %v3372 = vsel %vm372, %v3356, %v3358
    %v3373 = vsel %vm372, %v3358, %v3360
    %v3374 = vsel %vm372, %v3360, %v3362
    %v3375 = vsel %vm372, %v3362, %v3364
    %v3376 = vsel %vm372, %v3364, %v3366
    %v3377 = vsel %vm372, %v3366, %v3368
    %v3378 = vsel %vm372, %v3368, %v3370
    %3387 = vst [vmem:[#allocation2 + $0x80] sm:$0xff] %v3371
    %3388 = vst [vmem:[#allocation2 + $0x88] sm:$0xff] %v3372
    %3389 = vst [vmem:[#allocation2 + $0x90] sm:$0xff] %v3373
    %3390 = vst [vmem:[#allocation2 + $0x98] sm:$0xff] %v3374
    %3391 = vst [vmem:[#allocation2 + $0xa0] sm:$0xff] %v3375
    %3392 = vst [vmem:[#allocation2 + $0xa8] sm:$0xff] %v3376
    %3393 = vst [vmem:[#allocation2 + $0xb0] sm:$0xff] %v3377
    %3394 = vst [vmem:[#allocation2 + $0xb8] sm:$0xff] %v3378
    %v3395 = vld [vmem:[#allocation3 + $0x20] sm:$0xff]
    %v3396 = vld [vmem:[#allocation3 + $0x28] sm:$0xff]
    %v3397 = vld [vmem:[#allocation3 + $0x30] sm:$0x3]
    %v3398 = vld [vmem:[#allocation3 + $0x1e] sm:$0xff]
    %v3399 = vld [vmem:[#allocation3 + $0x26] sm:$0xff]
    %v3403 = vcombine.high %v3395, %v3395
    %v3405 = vunpack.c.l.s4 1983009808
    %v3406 = vunpack.c.0.s8 %v3405
    %v3407 = vlaneseq
    %v3408 = vshrl.u32 %v3407, 7
    %v3409 = vsub.s32 %v3406, %v3408
    %v3410 = vrot.slane %v3395, %v3409
    %v3412 = vunpack.c.l.s4 1983009808
    %v3413 = vunpack.c.0.s8 %v3412
    %v3414 = vlaneseq
    %v3415 = vshrl.u32 %v3414, 7
    %v3416 = vsub.s32 %v3413, %v3415
    %v3417 = vrot.slane %v3403, %v3416
    %v3418 = vcombine.high %v3410, %v3410
    %v3419 = vcombine.high %v3417, %v3417
    %v3420 = vcombine.high %v3396, %v3396
    %v3422 = vunpack.c.l.s4 1983009808
    %v3423 = vunpack.c.0.s8 %v3422
    %v3424 = vlaneseq
    %v3425 = vshrl.u32 %v3424, 7
    %v3426 = vsub.s32 %v3423, %v3425
    %v3427 = vrot.slane %v3396, %v3426
    %v3429 = vunpack.c.l.s4 1983009808
    %v3430 = vunpack.c.0.s8 %v3429
    %v3431 = vlaneseq
    %v3432 = vshrl.u32 %v3431, 7
    %v3433 = vsub.s32 %v3430, %v3432
    %v3434 = vrot.slane %v3420, %v3433
    %v3435 = vcombine.high %v3427, %v3427
    %v3436 = vcombine.high %v3434, %v3434
    %v3438 = vunpack.c.l.s4 1983009808
    %v3439 = vunpack.c.0.s8 %v3438
    %v3440 = vlaneseq
    %v3441 = vshrl.u32 %v3440, 7
    %v3442 = vsub.s32 %v3439, %v3441
    %v3443 = vrot.slane %v3397, %v3442
    %v3444 = vcombine.low %v3395, %v3395
    %v3446 = vunpack.c.l.s4 1983009808
    %v3447 = vunpack.c.0.s8 %v3446
    %v3448 = vlaneseq
    %v3449 = vshrl.u32 %v3448, 7
    %v3450 = vsub.s32 %v3447, %v3449
    %v3451 = vrot.slane %v3444, %v3450
    %v3452 = vcombine.high %v3451, %v3451
    %v3453 = vcombine.low %v3396, %v3396
    %v3455 = vunpack.c.l.s4 1983009808
    %v3456 = vunpack.c.0.s8 %v3455
    %v3457 = vlaneseq
    %v3458 = vshrl.u32 %v3457, 7
    %v3459 = vsub.s32 %v3456, %v3458
    %v3460 = vrot.slane %v3453, %v3459
    %v3461 = vcombine.high %v3460, %v3460
    %v3462 = vcombine.low %v3397, %v3397
    %v3464 = vunpack.c.l.s4 1983009808
    %v3465 = vunpack.c.0.s8 %v3464
    %v3466 = vlaneseq
    %v3467 = vshrl.u32 %v3466, 7
    %v3468 = vsub.s32 %v3465, %v3467
    %v3469 = vrot.slane %v3462, %v3468
    %3470 = vrot.lane.b32.xlu0 %v3451, 32
    %v3471 = vpop.permute.xlu0 %3470
    %3472 = vrot.lane.b32.xlu0 %v3452, 32
    %v3473 = vpop.permute.xlu0 %3472
    %3474 = vrot.lane.b32.xlu0 %v3410, 32
    %v3475 = vpop.permute.xlu0 %3474
    %3476 = vrot.lane.b32.xlu0 %v3418, 32
    %v3477 = vpop.permute.xlu0 %3476
    %3478 = vrot.lane.b32.xlu0 %v3460, 32
    %v3479 = vpop.permute.xlu0 %3478
    %3480 = vrot.lane.b32.xlu0 %v3461, 32
    %v3481 = vpop.permute.xlu0 %3480
    %3482 = vrot.lane.b32.xlu0 %v3427, 32
    %v3483 = vpop.permute.xlu0 %3482
    %3484 = vrot.lane.b32.xlu0 %v3435, 32
    %v3485 = vpop.permute.xlu0 %3484
    %3486 = vrot.lane.b32.xlu0 %v3469, 32
    %v3487 = vpop.permute.xlu0 %3486
    %v3488 = vsel %vm372, %v3471, %v3473
    %v3489 = vsel %vm372, %v3473, %v3475
    %v3490 = vsel %vm372, %v3475, %v3477
    %v3491 = vsel %vm372, %v3477, %v3479
    %v3492 = vsel %vm372, %v3479, %v3481
    %v3493 = vsel %vm372, %v3481, %v3483
    %v3494 = vsel %vm372, %v3483, %v3485
    %v3495 = vsel %vm372, %v3485, %v3487
    %v3496 = vcombine.low %v3410, %v3410
    %v3497 = vcombine.low %v3417, %v3417
    %v3498 = vcombine.low %v3427, %v3427
    %v3499 = vcombine.low %v3434, %v3434
    %3500 = vrot.lane.b32.xlu0 %v3496, 96
    %v3501 = vpop.permute.xlu0 %3500
    %3502 = vrot.lane.b32.xlu0 %v3410, 96
    %v3503 = vpop.permute.xlu0 %3502
    %3504 = vrot.lane.b32.xlu0 %v3497, 96
    %v3505 = vpop.permute.xlu0 %3504
    %3506 = vrot.lane.b32.xlu0 %v3417, 96
    %v3507 = vpop.permute.xlu0 %3506
    %3508 = vrot.lane.b32.xlu0 %v3498, 96
    %v3509 = vpop.permute.xlu0 %3508
    %3510 = vrot.lane.b32.xlu0 %v3427, 96
    %v3511 = vpop.permute.xlu0 %3510
    %3512 = vrot.lane.b32.xlu0 %v3499, 96
    %v3513 = vpop.permute.xlu0 %3512
    %3514 = vrot.lane.b32.xlu0 %v3434, 96
    %v3515 = vpop.permute.xlu0 %3514
    %v3516 = vsel %vm1379, %v3501, %v3503
    %v3517 = vsel %vm1379, %v3503, %v3505
    %v3518 = vsel %vm1379, %v3505, %v3507
    %v3519 = vsel %vm1379, %v3507, %v3509
    %v3520 = vsel %vm1379, %v3509, %v3511
    %v3521 = vsel %vm1379, %v3511, %v3513
    %v3522 = vsel %vm1379, %v3513, %v3515
    %v3525 = vcombine.low %v3398, %v3398
    %v3527 = vunpack.c.l.s4 1983009808
    %v3528 = vunpack.c.0.s8 %v3527
    %v3529 = vlaneseq
    %v3530 = vshrl.u32 %v3529, 7
    %v3531 = vsub.s32 %v3528, %v3530
    %v3532 = vrot.slane %v3525, %v3531
    %v3534 = vunpack.c.l.s4 1983009808
    %v3535 = vunpack.c.0.s8 %v3534
    %v3536 = vlaneseq
    %v3537 = vshrl.u32 %v3536, 7
    %v3538 = vsub.s32 %v3535, %v3537
    %v3539 = vrot.slane %v3398, %v3538
    %v3540 = vcombine.low %v3532, %v3532
    %v3541 = vcombine.low %v3539, %v3539
    %v3542 = vcombine.low %v3399, %v3399
    %v3544 = vunpack.c.l.s4 1983009808
    %v3545 = vunpack.c.0.s8 %v3544
    %v3546 = vlaneseq
    %v3547 = vshrl.u32 %v3546, 7
    %v3548 = vsub.s32 %v3545, %v3547
    %v3549 = vrot.slane %v3542, %v3548
    %v3551 = vunpack.c.l.s4 1983009808
    %v3552 = vunpack.c.0.s8 %v3551
    %v3553 = vlaneseq
    %v3554 = vshrl.u32 %v3553, 7
    %v3555 = vsub.s32 %v3552, %v3554
    %v3556 = vrot.slane %v3399, %v3555
    %v3557 = vcombine.low %v3549, %v3549
    %v3558 = vcombine.low %v3556, %v3556
    %3559 = vrot.lane.b32.xlu0 %v3540, 96
    %v3560 = vpop.permute.xlu0 %3559
    %3561 = vrot.lane.b32.xlu0 %v3532, 96
    %v3562 = vpop.permute.xlu0 %3561
    %3563 = vrot.lane.b32.xlu0 %v3541, 96
    %v3564 = vpop.permute.xlu0 %3563
    %3565 = vrot.lane.b32.xlu0 %v3539, 96
    %v3566 = vpop.permute.xlu0 %3565
    %3567 = vrot.lane.b32.xlu0 %v3557, 96
    %v3568 = vpop.permute.xlu0 %3567
    %3569 = vrot.lane.b32.xlu0 %v3549, 96
    %v3570 = vpop.permute.xlu0 %3569
    %3571 = vrot.lane.b32.xlu0 %v3558, 96
    %v3572 = vpop.permute.xlu0 %3571
    %3573 = vrot.lane.b32.xlu0 %v3556, 96
    %v3574 = vpop.permute.xlu0 %3573
    %v3575 = vsel %vm1379, %v3560, %v3562
    %v3576 = vsel %vm1379, %v3562, %v3564
    %v3577 = vsel %vm1379, %v3564, %v3566
    %v3578 = vsel %vm1379, %v3566, %v3568
    %v3579 = vsel %vm1379, %v3568, %v3570
    %v3580 = vsel %vm1379, %v3570, %v3572
    %v3581 = vsel %vm1379, %v3572, %v3574
    %v3584 = vsel %vm2615, %v3410, %v3471
    %v3587 = vsel %vm2615, %v3418, %v3488
    %v3590 = vsel %vm2615, %v3417, %v3489
    %v3593 = vsel %vm2615, %v3419, %v3490
    %v3596 = vsel %vm2615, %v3427, %v3491
    %v3599 = vsel %vm2615, %v3435, %v3492
    %v3602 = vsel %vm2615, %v3434, %v3493
    %v3605 = vsel %vm2615, %v3436, %v3494
    %v3608 = vsel %vm2615, %v3443, %v3495
    %v3610 = vsel %vm2643, %v3584, %v3501
    %v3612 = vsel %vm2643, %v3587, %v3516
    %v3614 = vsel %vm2643, %v3590, %v3517
    %v3616 = vsel %vm2643, %v3593, %v3518
    %v3618 = vsel %vm2643, %v3596, %v3519
    %v3620 = vsel %vm2643, %v3599, %v3520
    %v3622 = vsel %vm2643, %v3602, %v3521
    %v3624 = vsel %vm2643, %v3605, %v3522
    %v3626 = vsel %vm2643, %v3608, %v3515
    %v3628 = vsel %vm2662, %v3610, %v3560
    %v3630 = vsel %vm2662, %v3612, %v3575
    %v3632 = vsel %vm2662, %v3614, %v3576
    %v3634 = vsel %vm2662, %v3616, %v3577
    %v3636 = vsel %vm2662, %v3618, %v3578
    %v3638 = vsel %vm2662, %v3620, %v3579
    %v3640 = vsel %vm2662, %v3622, %v3580
    %v3642 = vsel %vm2662, %v3624, %v3581
    %v3644 = vsel %vm2662, %v3626, %v3574
    %3654 = vrot.lane.b32.xlu0 %v3628, 32
    %v3655 = vpop.permute.xlu0 %3654
    %3656 = vrot.lane.b32.xlu0 %v3630, 32
    %v3657 = vpop.permute.xlu0 %3656
    %3658 = vrot.lane.b32.xlu0 %v3632, 32
    %v3659 = vpop.permute.xlu0 %3658
    %3660 = vrot.lane.b32.xlu0 %v3634, 32
    %v3661 = vpop.permute.xlu0 %3660
    %3662 = vrot.lane.b32.xlu0 %v3636, 32
    %v3663 = vpop.permute.xlu0 %3662
    %3664 = vrot.lane.b32.xlu0 %v3638, 32
    %v3665 = vpop.permute.xlu0 %3664
    %3666 = vrot.lane.b32.xlu0 %v3640, 32
    %v3667 = vpop.permute.xlu0 %3666
    %3668 = vrot.lane.b32.xlu0 %v3642, 32
    %v3669 = vpop.permute.xlu0 %3668
    %3670 = vrot.lane.b32.xlu0 %v3644, 32
    %v3671 = vpop.permute.xlu0 %3670
    %v3672 = vsel %vm372, %v3655, %v3657
    %v3673 = vsel %vm372, %v3657, %v3659
    %v3674 = vsel %vm372, %v3659, %v3661
    %v3675 = vsel %vm372, %v3661, %v3663
    %v3676 = vsel %vm372, %v3663, %v3665
    %v3677 = vsel %vm372, %v3665, %v3667
    %v3678 = vsel %vm372, %v3667, %v3669
    %v3679 = vsel %vm372, %v3669, %v3671
    %3688 = vst [vmem:[#allocation2 + $0xc0] sm:$0xff] %v3672
    %3689 = vst [vmem:[#allocation2 + $0xc8] sm:$0xff] %v3673
    %3690 = vst [vmem:[#allocation2 + $0xd0] sm:$0xff] %v3674
    %3691 = vst [vmem:[#allocation2 + $0xd8] sm:$0xff] %v3675
    %3692 = vst [vmem:[#allocation2 + $0xe0] sm:$0xff] %v3676
    %3693 = vst [vmem:[#allocation2 + $0xe8] sm:$0xff] %v3677
    %3694 = vst [vmem:[#allocation2 + $0xf0] sm:$0xff] %v3678
    %3695 = vst [vmem:[#allocation2 + $0xf8] sm:$0xff] %v3679
    %v3696 = vld [vmem:[#allocation3 + $0x4] sm:$0xff]
    %v3697 = vld [vmem:[#allocation3 + $0xc] sm:$0xff]
    %v3698 = vld [vmem:[#allocation3 + $0x14] sm:$0x3]
    %v3699 = vld [vmem:[#allocation3 + $0x2] sm:$0xff]
    %v3700 = vld [vmem:[#allocation3 + $0xa] sm:$0xff]
    %v3701 = vld [vmem:[#allocation3 + $0x12] sm:$0x3]
    %v3705 = vcombine.high %v3696, %v3696
    %v3707 = vunpack.c.l.s4 1983009808
    %v3708 = vunpack.c.0.s8 %v3707
    %v3709 = vlaneseq
    %v3710 = vshrl.u32 %v3709, 7
    %v3711 = vsub.s32 %v3708, %v3710
    %v3712 = vrot.slane %v3696, %v3711
    %v3714 = vunpack.c.l.s4 1983009808
    %v3715 = vunpack.c.0.s8 %v3714
    %v3716 = vlaneseq
    %v3717 = vshrl.u32 %v3716, 7
    %v3718 = vsub.s32 %v3715, %v3717
    %v3719 = vrot.slane %v3705, %v3718
    %v3720 = vcombine.high %v3712, %v3712
    %v3721 = vcombine.high %v3719, %v3719
    %v3722 = vcombine.high %v3697, %v3697
    %v3724 = vunpack.c.l.s4 1983009808
    %v3725 = vunpack.c.0.s8 %v3724
    %v3726 = vlaneseq
    %v3727 = vshrl.u32 %v3726, 7
    %v3728 = vsub.s32 %v3725, %v3727
    %v3729 = vrot.slane %v3697, %v3728
    %v3731 = vunpack.c.l.s4 1983009808
    %v3732 = vunpack.c.0.s8 %v3731
    %v3733 = vlaneseq
    %v3734 = vshrl.u32 %v3733, 7
    %v3735 = vsub.s32 %v3732, %v3734
    %v3736 = vrot.slane %v3722, %v3735
    %v3737 = vcombine.high %v3729, %v3729
    %v3738 = vcombine.high %v3736, %v3736
    %v3740 = vunpack.c.l.s4 1983009808
    %v3741 = vunpack.c.0.s8 %v3740
    %v3742 = vlaneseq
    %v3743 = vshrl.u32 %v3742, 7
    %v3744 = vsub.s32 %v3741, %v3743
    %v3745 = vrot.slane %v3698, %v3744
    %v3746 = vcombine.low %v3696, %v3696
    %v3748 = vunpack.c.l.s4 1983009808
    %v3749 = vunpack.c.0.s8 %v3748
    %v3750 = vlaneseq
    %v3751 = vshrl.u32 %v3750, 7
    %v3752 = vsub.s32 %v3749, %v3751
    %v3753 = vrot.slane %v3746, %v3752
    %v3754 = vcombine.high %v3753, %v3753
    %v3755 = vcombine.low %v3697, %v3697
    %v3757 = vunpack.c.l.s4 1983009808
    %v3758 = vunpack.c.0.s8 %v3757
    %v3759 = vlaneseq
    %v3760 = vshrl.u32 %v3759, 7
    %v3761 = vsub.s32 %v3758, %v3760
    %v3762 = vrot.slane %v3755, %v3761
    %v3763 = vcombine.high %v3762, %v3762
    %v3764 = vcombine.low %v3698, %v3698
    %v3766 = vunpack.c.l.s4 1983009808
    %v3767 = vunpack.c.0.s8 %v3766
    %v3768 = vlaneseq
    %v3769 = vshrl.u32 %v3768, 7
    %v3770 = vsub.s32 %v3767, %v3769
    %v3771 = vrot.slane %v3764, %v3770
    %3772 = vrot.lane.b32.xlu0 %v3753, 31
    %v3773 = vpop.permute.xlu0 %3772
    %3774 = vrot.lane.b32.xlu0 %v3754, 31
    %v3775 = vpop.permute.xlu0 %3774
    %3776 = vrot.lane.b32.xlu0 %v3712, 31
    %v3777 = vpop.permute.xlu0 %3776
    %3778 = vrot.lane.b32.xlu0 %v3720, 31
    %v3779 = vpop.permute.xlu0 %3778
    %3780 = vrot.lane.b32.xlu0 %v3762, 31
    %v3781 = vpop.permute.xlu0 %3780
    %3782 = vrot.lane.b32.xlu0 %v3763, 31
    %v3783 = vpop.permute.xlu0 %3782
    %3784 = vrot.lane.b32.xlu0 %v3729, 31
    %v3785 = vpop.permute.xlu0 %3784
    %3786 = vrot.lane.b32.xlu0 %v3737, 31
    %v3787 = vpop.permute.xlu0 %3786
    %3788 = vrot.lane.b32.xlu0 %v3771, 31
    %v3789 = vpop.permute.xlu0 %3788
    %v3790 = vsel %vm551, %v3773, %v3775
    %v3791 = vsel %vm551, %v3775, %v3777
    %v3792 = vsel %vm551, %v3777, %v3779
    %v3793 = vsel %vm551, %v3779, %v3781
    %v3794 = vsel %vm551, %v3781, %v3783
    %v3795 = vsel %vm551, %v3783, %v3785
    %v3796 = vsel %vm551, %v3785, %v3787
    %v3797 = vsel %vm551, %v3787, %v3789
    %v3798 = vcombine.low %v3712, %v3712
    %v3799 = vcombine.low %v3719, %v3719
    %v3800 = vcombine.low %v3729, %v3729
    %v3801 = vcombine.low %v3736, %v3736
    %v3802 = vcombine.low %v3745, %v3745
    %3803 = vrot.lane.b32.xlu0 %v3798, 93
    %v3804 = vpop.permute.xlu0 %3803
    %3805 = vrot.lane.b32.xlu0 %v3712, 93
    %v3806 = vpop.permute.xlu0 %3805
    %3807 = vrot.lane.b32.xlu0 %v3799, 93
    %v3808 = vpop.permute.xlu0 %3807
    %3809 = vrot.lane.b32.xlu0 %v3719, 93
    %v3810 = vpop.permute.xlu0 %3809
    %3811 = vrot.lane.b32.xlu0 %v3800, 93
    %v3812 = vpop.permute.xlu0 %3811
    %3813 = vrot.lane.b32.xlu0 %v3729, 93
    %v3814 = vpop.permute.xlu0 %3813
    %3815 = vrot.lane.b32.xlu0 %v3801, 93
    %v3816 = vpop.permute.xlu0 %3815
    %3817 = vrot.lane.b32.xlu0 %v3736, 93
    %v3818 = vpop.permute.xlu0 %3817
    %3819 = vrot.lane.b32.xlu0 %v3802, 93
    %v3820 = vpop.permute.xlu0 %3819
    %vm3821 = vcmask 760832
    %v3822 = vsel %vm3821, %v3804, %v3806
    %v3823 = vsel %vm3821, %v3806, %v3808
    %v3824 = vsel %vm3821, %v3808, %v3810
    %v3825 = vsel %vm3821, %v3810, %v3812
    %v3826 = vsel %vm3821, %v3812, %v3814
    %v3827 = vsel %vm3821, %v3814, %v3816
    %v3828 = vsel %vm3821, %v3816, %v3818
    %v3829 = vsel %vm3821, %v3818, %v3820
    %v3833 = vcombine.low %v3699, %v3699
    %v3835 = vunpack.c.l.s4 1983009808
    %v3836 = vunpack.c.0.s8 %v3835
    %v3837 = vlaneseq
    %v3838 = vshrl.u32 %v3837, 7
    %v3839 = vsub.s32 %v3836, %v3838
    %v3840 = vrot.slane %v3833, %v3839
    %v3842 = vunpack.c.l.s4 1983009808
    %v3843 = vunpack.c.0.s8 %v3842
    %v3844 = vlaneseq
    %v3845 = vshrl.u32 %v3844, 7
    %v3846 = vsub.s32 %v3843, %v3845
    %v3847 = vrot.slane %v3699, %v3846
    %v3848 = vcombine.low %v3840, %v3840
    %v3849 = vcombine.low %v3847, %v3847
    %v3850 = vcombine.low %v3700, %v3700
    %v3852 = vunpack.c.l.s4 1983009808
    %v3853 = vunpack.c.0.s8 %v3852
    %v3854 = vlaneseq
    %v3855 = vshrl.u32 %v3854, 7
    %v3856 = vsub.s32 %v3853, %v3855
    %v3857 = vrot.slane %v3850, %v3856
    %v3859 = vunpack.c.l.s4 1983009808
    %v3860 = vunpack.c.0.s8 %v3859
    %v3861 = vlaneseq
    %v3862 = vshrl.u32 %v3861, 7
    %v3863 = vsub.s32 %v3860, %v3862
    %v3864 = vrot.slane %v3700, %v3863
    %v3865 = vcombine.low %v3857, %v3857
    %v3866 = vcombine.low %v3864, %v3864
    %v3867 = vcombine.low %v3701, %v3701
    %v3869 = vunpack.c.l.s4 1983009808
    %v3870 = vunpack.c.0.s8 %v3869
    %v3871 = vlaneseq
    %v3872 = vshrl.u32 %v3871, 7
    %v3873 = vsub.s32 %v3870, %v3872
    %v3874 = vrot.slane %v3867, %v3873
    %v3875 = vcombine.low %v3874, %v3874
    %3876 = vrot.lane.b32.xlu0 %v3848, 89
    %v3877 = vpop.permute.xlu0 %3876
    %3878 = vrot.lane.b32.xlu0 %v3840, 89
    %v3879 = vpop.permute.xlu0 %3878
    %3880 = vrot.lane.b32.xlu0 %v3849, 89
    %v3881 = vpop.permute.xlu0 %3880
    %3882 = vrot.lane.b32.xlu0 %v3847, 89
    %v3883 = vpop.permute.xlu0 %3882
    %3884 = vrot.lane.b32.xlu0 %v3865, 89
    %v3885 = vpop.permute.xlu0 %3884
    %3886 = vrot.lane.b32.xlu0 %v3857, 89
    %v3887 = vpop.permute.xlu0 %3886
    %3888 = vrot.lane.b32.xlu0 %v3866, 89
    %v3889 = vpop.permute.xlu0 %3888
    %3890 = vrot.lane.b32.xlu0 %v3864, 89
    %v3891 = vpop.permute.xlu0 %3890
    %3892 = vrot.lane.b32.xlu0 %v3875, 89
    %v3893 = vpop.permute.xlu0 %3892
    %vm3894 = vcmask 728064
    %v3895 = vsel %vm3894, %v3877, %v3879
    %v3896 = vsel %vm3894, %v3879, %v3881
    %v3897 = vsel %vm3894, %v3881, %v3883
    %v3898 = vsel %vm3894, %v3883, %v3885
    %v3899 = vsel %vm3894, %v3885, %v3887
    %v3900 = vsel %vm3894, %v3887, %v3889
    %v3901 = vsel %vm3894, %v3889, %v3891
    %v3902 = vsel %vm3894, %v3891, %v3893
    %v3905 = vsel %vm2615, %v3712, %v3773
    %v3908 = vsel %vm2615, %v3720, %v3790
    %v3911 = vsel %vm2615, %v3719, %v3791
    %v3914 = vsel %vm2615, %v3721, %v3792
    %v3917 = vsel %vm2615, %v3729, %v3793
    %v3920 = vsel %vm2615, %v3737, %v3794
    %v3923 = vsel %vm2615, %v3736, %v3795
    %v3926 = vsel %vm2615, %v3738, %v3796
    %v3929 = vsel %vm2615, %v3745, %v3797
    %v3931 = vsel %vm2643, %v3905, %v3804
    %v3933 = vsel %vm2643, %v3908, %v3822
    %v3935 = vsel %vm2643, %v3911, %v3823
    %v3937 = vsel %vm2643, %v3914, %v3824
    %v3939 = vsel %vm2643, %v3917, %v3825
    %v3941 = vsel %vm2643, %v3920, %v3826
    %v3943 = vsel %vm2643, %v3923, %v3827
    %v3945 = vsel %vm2643, %v3926, %v3828
    %v3947 = vsel %vm2643, %v3929, %v3829
    %v3949 = vsel %vm2662, %v3931, %v3877
    %v3951 = vsel %vm2662, %v3933, %v3895
    %v3953 = vsel %vm2662, %v3935, %v3896
    %v3955 = vsel %vm2662, %v3937, %v3897
    %v3957 = vsel %vm2662, %v3939, %v3898
    %v3959 = vsel %vm2662, %v3941, %v3899
    %v3961 = vsel %vm2662, %v3943, %v3900
    %v3963 = vsel %vm2662, %v3945, %v3901
    %v3965 = vsel %vm2662, %v3947, %v3902
    %3975 = vrot.lane.b32.xlu0 %v3949, 31
    %v3976 = vpop.permute.xlu0 %3975
    %3977 = vrot.lane.b32.xlu0 %v3951, 31
    %v3978 = vpop.permute.xlu0 %3977
    %3979 = vrot.lane.b32.xlu0 %v3953, 31
    %v3980 = vpop.permute.xlu0 %3979
    %3981 = vrot.lane.b32.xlu0 %v3955, 31
    %v3982 = vpop.permute.xlu0 %3981
    %3983 = vrot.lane.b32.xlu0 %v3957, 31
    %v3984 = vpop.permute.xlu0 %3983
    %3985 = vrot.lane.b32.xlu0 %v3959, 31
    %v3986 = vpop.permute.xlu0 %3985
    %3987 = vrot.lane.b32.xlu0 %v3961, 31
    %v3988 = vpop.permute.xlu0 %3987
    %3989 = vrot.lane.b32.xlu0 %v3963, 31
    %v3990 = vpop.permute.xlu0 %3989
    %3991 = vrot.lane.b32.xlu0 %v3965, 31
    %v3992 = vpop.permute.xlu0 %3991
    %v3993 = vsel %vm551, %v3976, %v3978
    %v3994 = vsel %vm551, %v3978, %v3980
    %v3995 = vsel %vm551, %v3980, %v3982
    %v3996 = vsel %vm551, %v3982, %v3984
    %v3997 = vsel %vm551, %v3984, %v3986
    %v3998 = vsel %vm551, %v3986, %v3988
    %v3999 = vsel %vm551, %v3988, %v3990
    %v4000 = vsel %vm551, %v3990, %v3992
    %4009 = vst [vmem:[#allocation2 + $0x100] sm:$0xff] %v3993
    %4010 = vst [vmem:[#allocation2 + $0x108] sm:$0xff] %v3994
    %4011 = vst [vmem:[#allocation2 + $0x110] sm:$0xff] %v3995
    %4012 = vst [vmem:[#allocation2 + $0x118] sm:$0xff] %v3996
    %4013 = vst [vmem:[#allocation2 + $0x120] sm:$0xff] %v3997
    %4014 = vst [vmem:[#allocation2 + $0x128] sm:$0xff] %v3998
    %4015 = vst [vmem:[#allocation2 + $0x130] sm:$0xff] %v3999
    %4016 = vst [vmem:[#allocation2 + $0x138] sm:$0xff] %v4000
    %v4017 = vld [vmem:[#allocation3 + $0x20] sm:$0xff]
    %v4018 = vld [vmem:[#allocation3 + $0x28] sm:$0xff]
    %v4019 = vld [vmem:[#allocation3 + $0x30] sm:$0x3]
    %v4020 = vld [vmem:[#allocation3 + $0x1e] sm:$0xff]
    %v4021 = vld [vmem:[#allocation3 + $0x26] sm:$0xff]
    %v4022 = vld [vmem:[#allocation3 + $0x2e] sm:$0x3]
    %v4026 = vcombine.high %v4017, %v4017
    %v4028 = vunpack.c.l.s4 1983009808
    %v4029 = vunpack.c.0.s8 %v4028
    %v4030 = vlaneseq
    %v4031 = vshrl.u32 %v4030, 7
    %v4032 = vsub.s32 %v4029, %v4031
    %v4033 = vrot.slane %v4017, %v4032
    %v4035 = vunpack.c.l.s4 1983009808
    %v4036 = vunpack.c.0.s8 %v4035
    %v4037 = vlaneseq
    %v4038 = vshrl.u32 %v4037, 7
    %v4039 = vsub.s32 %v4036, %v4038
    %v4040 = vrot.slane %v4026, %v4039
    %v4041 = vcombine.high %v4033, %v4033
    %v4042 = vcombine.high %v4040, %v4040
    %v4043 = vcombine.high %v4018, %v4018
    %v4045 = vunpack.c.l.s4 1983009808
    %v4046 = vunpack.c.0.s8 %v4045
    %v4047 = vlaneseq
    %v4048 = vshrl.u32 %v4047, 7
    %v4049 = vsub.s32 %v4046, %v4048
    %v4050 = vrot.slane %v4018, %v4049
    %v4052 = vunpack.c.l.s4 1983009808
    %v4053 = vunpack.c.0.s8 %v4052
    %v4054 = vlaneseq
    %v4055 = vshrl.u32 %v4054, 7
    %v4056 = vsub.s32 %v4053, %v4055
    %v4057 = vrot.slane %v4043, %v4056
    %v4058 = vcombine.high %v4050, %v4050
    %v4059 = vcombine.high %v4057, %v4057
    %v4061 = vunpack.c.l.s4 1983009808
    %v4062 = vunpack.c.0.s8 %v4061
    %v4063 = vlaneseq
    %v4064 = vshrl.u32 %v4063, 7
    %v4065 = vsub.s32 %v4062, %v4064
    %v4066 = vrot.slane %v4019, %v4065
    %v4067 = vcombine.low %v4017, %v4017
    %v4069 = vunpack.c.l.s4 1983009808
    %v4070 = vunpack.c.0.s8 %v4069
    %v4071 = vlaneseq
    %v4072 = vshrl.u32 %v4071, 7
    %v4073 = vsub.s32 %v4070, %v4072
    %v4074 = vrot.slane %v4067, %v4073
    %v4075 = vcombine.high %v4074, %v4074
    %v4076 = vcombine.low %v4018, %v4018
    %v4078 = vunpack.c.l.s4 1983009808
    %v4079 = vunpack.c.0.s8 %v4078
    %v4080 = vlaneseq
    %v4081 = vshrl.u32 %v4080, 7
    %v4082 = vsub.s32 %v4079, %v4081
    %v4083 = vrot.slane %v4076, %v4082
    %v4084 = vcombine.high %v4083, %v4083
    %v4085 = vcombine.low %v4019, %v4019
    %v4087 = vunpack.c.l.s4 1983009808
    %v4088 = vunpack.c.0.s8 %v4087
    %v4089 = vlaneseq
    %v4090 = vshrl.u32 %v4089, 7
    %v4091 = vsub.s32 %v4088, %v4090
    %v4092 = vrot.slane %v4085, %v4091
    %4093 = vrot.lane.b32.xlu0 %v4074, 31
    %v4094 = vpop.permute.xlu0 %4093
    %4095 = vrot.lane.b32.xlu0 %v4075, 31
    %v4096 = vpop.permute.xlu0 %4095
    %4097 = vrot.lane.b32.xlu0 %v4033, 31
    %v4098 = vpop.permute.xlu0 %4097
    %4099 = vrot.lane.b32.xlu0 %v4041, 31
    %v4100 = vpop.permute.xlu0 %4099
    %4101 = vrot.lane.b32.xlu0 %v4083, 31
    %v4102 = vpop.permute.xlu0 %4101
    %4103 = vrot.lane.b32.xlu0 %v4084, 31
    %v4104 = vpop.permute.xlu0 %4103
    %4105 = vrot.lane.b32.xlu0 %v4050, 31
    %v4106 = vpop.permute.xlu0 %4105
    %4107 = vrot.lane.b32.xlu0 %v4058, 31
    %v4108 = vpop.permute.xlu0 %4107
    %4109 = vrot.lane.b32.xlu0 %v4092, 31
    %v4110 = vpop.permute.xlu0 %4109
    %v4111 = vsel %vm551, %v4094, %v4096
    %v4112 = vsel %vm551, %v4096, %v4098
    %v4113 = vsel %vm551, %v4098, %v4100
    %v4114 = vsel %vm551, %v4100, %v4102
    %v4115 = vsel %vm551, %v4102, %v4104
    %v4116 = vsel %vm551, %v4104, %v4106
    %v4117 = vsel %vm551, %v4106, %v4108
    %v4118 = vsel %vm551, %v4108, %v4110
    %v4119 = vcombine.low %v4033, %v4033
    %v4120 = vcombine.low %v4040, %v4040
    %v4121 = vcombine.low %v4050, %v4050
    %v4122 = vcombine.low %v4057, %v4057
    %v4123 = vcombine.low %v4066, %v4066
    %4124 = vrot.lane.b32.xlu0 %v4119, 93
    %v4125 = vpop.permute.xlu0 %4124
    %4126 = vrot.lane.b32.xlu0 %v4033, 93
    %v4127 = vpop.permute.xlu0 %4126
    %4128 = vrot.lane.b32.xlu0 %v4120, 93
    %v4129 = vpop.permute.xlu0 %4128
    %4130 = vrot.lane.b32.xlu0 %v4040, 93
    %v4131 = vpop.permute.xlu0 %4130
    %4132 = vrot.lane.b32.xlu0 %v4121, 93
    %v4133 = vpop.permute.xlu0 %4132
    %4134 = vrot.lane.b32.xlu0 %v4050, 93
    %v4135 = vpop.permute.xlu0 %4134
    %4136 = vrot.lane.b32.xlu0 %v4122, 93
    %v4137 = vpop.permute.xlu0 %4136
    %4138 = vrot.lane.b32.xlu0 %v4057, 93
    %v4139 = vpop.permute.xlu0 %4138
    %4140 = vrot.lane.b32.xlu0 %v4123, 93
    %v4141 = vpop.permute.xlu0 %4140
    %v4142 = vsel %vm3821, %v4125, %v4127
    %v4143 = vsel %vm3821, %v4127, %v4129
    %v4144 = vsel %vm3821, %v4129, %v4131
    %v4145 = vsel %vm3821, %v4131, %v4133
    %v4146 = vsel %vm3821, %v4133, %v4135
    %v4147 = vsel %vm3821, %v4135, %v4137
    %v4148 = vsel %vm3821, %v4137, %v4139
    %v4149 = vsel %vm3821, %v4139, %v4141
    %v4153 = vcombine.low %v4020, %v4020
    %v4155 = vunpack.c.l.s4 1983009808
    %v4156 = vunpack.c.0.s8 %v4155
    %v4157 = vlaneseq
    %v4158 = vshrl.u32 %v4157, 7
    %v4159 = vsub.s32 %v4156, %v4158
    %v4160 = vrot.slane %v4153, %v4159
    %v4162 = vunpack.c.l.s4 1983009808
    %v4163 = vunpack.c.0.s8 %v4162
    %v4164 = vlaneseq
    %v4165 = vshrl.u32 %v4164, 7
    %v4166 = vsub.s32 %v4163, %v4165
    %v4167 = vrot.slane %v4020, %v4166
    %v4168 = vcombine.low %v4160, %v4160
    %v4169 = vcombine.low %v4167, %v4167
    %v4170 = vcombine.low %v4021, %v4021
    %v4172 = vunpack.c.l.s4 1983009808
    %v4173 = vunpack.c.0.s8 %v4172
    %v4174 = vlaneseq
    %v4175 = vshrl.u32 %v4174, 7
    %v4176 = vsub.s32 %v4173, %v4175
    %v4177 = vrot.slane %v4170, %v4176
    %v4179 = vunpack.c.l.s4 1983009808
    %v4180 = vunpack.c.0.s8 %v4179
    %v4181 = vlaneseq
    %v4182 = vshrl.u32 %v4181, 7
    %v4183 = vsub.s32 %v4180, %v4182
    %v4184 = vrot.slane %v4021, %v4183
    %v4185 = vcombine.low %v4177, %v4177
    %v4186 = vcombine.low %v4184, %v4184
    %v4187 = vcombine.low %v4022, %v4022
    %v4189 = vunpack.c.l.s4 1983009808
    %v4190 = vunpack.c.0.s8 %v4189
    %v4191 = vlaneseq
    %v4192 = vshrl.u32 %v4191, 7
    %v4193 = vsub.s32 %v4190, %v4192
    %v4194 = vrot.slane %v4187, %v4193
    %v4195 = vcombine.low %v4194, %v4194
    %4196 = vrot.lane.b32.xlu0 %v4168, 89
    %v4197 = vpop.permute.xlu0 %4196
    %4198 = vrot.lane.b32.xlu0 %v4160, 89
    %v4199 = vpop.permute.xlu0 %4198
    %4200 = vrot.lane.b32.xlu0 %v4169, 89
    %v4201 = vpop.permute.xlu0 %4200
    %4202 = vrot.lane.b32.xlu0 %v4167, 89
    %v4203 = vpop.permute.xlu0 %4202
    %4204 = vrot.lane.b32.xlu0 %v4185, 89
    %v4205 = vpop.permute.xlu0 %4204
    %4206 = vrot.lane.b32.xlu0 %v4177, 89
    %v4207 = vpop.permute.xlu0 %4206
    %4208 = vrot.lane.b32.xlu0 %v4186, 89
    %v4209 = vpop.permute.xlu0 %4208
    %4210 = vrot.lane.b32.xlu0 %v4184, 89
    %v4211 = vpop.permute.xlu0 %4210
    %4212 = vrot.lane.b32.xlu0 %v4195, 89
    %v4213 = vpop.permute.xlu0 %4212
    %v4214 = vsel %vm3894, %v4197, %v4199
    %v4215 = vsel %vm3894, %v4199, %v4201
    %v4216 = vsel %vm3894, %v4201, %v4203
    %v4217 = vsel %vm3894, %v4203, %v4205
    %v4218 = vsel %vm3894, %v4205, %v4207
    %v4219 = vsel %vm3894, %v4207, %v4209
    %v4220 = vsel %vm3894, %v4209, %v4211
    %v4221 = vsel %vm3894, %v4211, %v4213
    %v4224 = vsel %vm2615, %v4033, %v4094
    %v4227 = vsel %vm2615, %v4041, %v4111
    %v4230 = vsel %vm2615, %v4040, %v4112
    %v4233 = vsel %vm2615, %v4042, %v4113
    %v4236 = vsel %vm2615, %v4050, %v4114
    %v4239 = vsel %vm2615, %v4058, %v4115
    %v4242 = vsel %vm2615, %v4057, %v4116
    %v4245 = vsel %vm2615, %v4059, %v4117
    %v4248 = vsel %vm2615, %v4066, %v4118
    %v4250 = vsel %vm2643, %v4224, %v4125
    %v4252 = vsel %vm2643, %v4227, %v4142
    %v4254 = vsel %vm2643, %v4230, %v4143
    %v4256 = vsel %vm2643, %v4233, %v4144
    %v4258 = vsel %vm2643, %v4236, %v4145
    %v4260 = vsel %vm2643, %v4239, %v4146
    %v4262 = vsel %vm2643, %v4242, %v4147
    %v4264 = vsel %vm2643, %v4245, %v4148
    %v4266 = vsel %vm2643, %v4248, %v4149
    %v4268 = vsel %vm2662, %v4250, %v4197
    %v4270 = vsel %vm2662, %v4252, %v4214
    %v4272 = vsel %vm2662, %v4254, %v4215
    %v4274 = vsel %vm2662, %v4256, %v4216
    %v4276 = vsel %vm2662, %v4258, %v4217
    %v4278 = vsel %vm2662, %v4260, %v4218
    %v4280 = vsel %vm2662, %v4262, %v4219
    %v4282 = vsel %vm2662, %v4264, %v4220
    %v4284 = vsel %vm2662, %v4266, %v4221
    %4294 = vrot.lane.b32.xlu0 %v4268, 31
    %v4295 = vpop.permute.xlu0 %4294
    %4296 = vrot.lane.b32.xlu0 %v4270, 31
    %v4297 = vpop.permute.xlu0 %4296
    %4298 = vrot.lane.b32.xlu0 %v4272, 31
    %v4299 = vpop.permute.xlu0 %4298
    %4300 = vrot.lane.b32.xlu0 %v4274, 31
    %v4301 = vpop.permute.xlu0 %4300
    %4302 = vrot.lane.b32.xlu0 %v4276, 31
    %v4303 = vpop.permute.xlu0 %4302
    %4304 = vrot.lane.b32.xlu0 %v4278, 31
    %v4305 = vpop.permute.xlu0 %4304
    %4306 = vrot.lane.b32.xlu0 %v4280, 31
    %v4307 = vpop.permute.xlu0 %4306
    %4308 = vrot.lane.b32.xlu0 %v4282, 31
    %v4309 = vpop.permute.xlu0 %4308
    %4310 = vrot.lane.b32.xlu0 %v4284, 31
    %v4311 = vpop.permute.xlu0 %4310
    %v4312 = vsel %vm551, %v4295, %v4297
    %v4313 = vsel %vm551, %v4297, %v4299
    %v4314 = vsel %vm551, %v4299, %v4301
    %v4315 = vsel %vm551, %v4301, %v4303
    %v4316 = vsel %vm551, %v4303, %v4305
    %v4317 = vsel %vm551, %v4305, %v4307
    %v4318 = vsel %vm551, %v4307, %v4309
    %v4319 = vsel %vm551, %v4309, %v4311
    %4328 = vst [vmem:[#allocation2 + $0x140] sm:$0xff] %v4312
    %4329 = vst [vmem:[#allocation2 + $0x148] sm:$0xff] %v4313
    %4330 = vst [vmem:[#allocation2 + $0x150] sm:$0xff] %v4314
    %4331 = vst [vmem:[#allocation2 + $0x158] sm:$0xff] %v4315
    %4332 = vst [vmem:[#allocation2 + $0x160] sm:$0xff] %v4316
    %4333 = vst [vmem:[#allocation2 + $0x168] sm:$0xff] %v4317
    %4334 = vst [vmem:[#allocation2 + $0x170] sm:$0xff] %v4318
    %4335 = vst [vmem:[#allocation2 + $0x178] sm:$0xff] %v4319
    %v4336 = vld [vmem:[#allocation3 + $0x4] sm:$0xff]
    %v4337 = vld [vmem:[#allocation3 + $0xc] sm:$0xff]
    %v4338 = vld [vmem:[#allocation3 + $0x14] sm:$0x3]
    %v4342 = vcombine.high %v4336, %v4336
    %v4344 = vunpack.c.l.s4 1983009808
    %v4345 = vunpack.c.0.s8 %v4344
    %v4346 = vlaneseq
    %v4347 = vshrl.u32 %v4346, 7
    %v4348 = vsub.s32 %v4345, %v4347
    %v4349 = vrot.slane %v4336, %v4348
    %v4351 = vunpack.c.l.s4 1983009808
    %v4352 = vunpack.c.0.s8 %v4351
    %v4353 = vlaneseq
    %v4354 = vshrl.u32 %v4353, 7
    %v4355 = vsub.s32 %v4352, %v4354
    %v4356 = vrot.slane %v4342, %v4355
    %v4357 = vcombine.high %v4349, %v4349
    %v4358 = vcombine.high %v4356, %v4356
    %v4359 = vcombine.high %v4337, %v4337
    %v4361 = vunpack.c.l.s4 1983009808
    %v4362 = vunpack.c.0.s8 %v4361
    %v4363 = vlaneseq
    %v4364 = vshrl.u32 %v4363, 7
    %v4365 = vsub.s32 %v4362, %v4364
    %v4366 = vrot.slane %v4337, %v4365
    %v4368 = vunpack.c.l.s4 1983009808
    %v4369 = vunpack.c.0.s8 %v4368
    %v4370 = vlaneseq
    %v4371 = vshrl.u32 %v4370, 7
    %v4372 = vsub.s32 %v4369, %v4371
    %v4373 = vrot.slane %v4359, %v4372
    %v4374 = vcombine.high %v4366, %v4366
    %v4375 = vcombine.high %v4373, %v4373
    %v4377 = vunpack.c.l.s4 1983009808
    %v4378 = vunpack.c.0.s8 %v4377
    %v4379 = vlaneseq
    %v4380 = vshrl.u32 %v4379, 7
    %v4381 = vsub.s32 %v4378, %v4380
    %v4382 = vrot.slane %v4338, %v4381
    %v4383 = vcombine.low %v4336, %v4336
    %v4385 = vunpack.c.l.s4 1983009808
    %v4386 = vunpack.c.0.s8 %v4385
    %v4387 = vlaneseq
    %v4388 = vshrl.u32 %v4387, 7
    %v4389 = vsub.s32 %v4386, %v4388
    %v4390 = vrot.slane %v4383, %v4389
    %v4391 = vcombine.high %v4390, %v4390
    %v4392 = vcombine.low %v4337, %v4337
    %v4394 = vunpack.c.l.s4 1983009808
    %v4395 = vunpack.c.0.s8 %v4394
    %v4396 = vlaneseq
    %v4397 = vshrl.u32 %v4396, 7
    %v4398 = vsub.s32 %v4395, %v4397
    %v4399 = vrot.slane %v4392, %v4398
    %v4400 = vcombine.high %v4399, %v4399
    %v4401 = vcombine.low %v4338, %v4338
    %v4403 = vunpack.c.l.s4 1983009808
    %v4404 = vunpack.c.0.s8 %v4403
    %v4405 = vlaneseq
    %v4406 = vshrl.u32 %v4405, 7
    %v4407 = vsub.s32 %v4404, %v4406
    %v4408 = vrot.slane %v4401, %v4407
    %4409 = vrot.lane.b32.xlu0 %v4390, 1
    %v4410 = vpop.permute.xlu0 %4409
    %4411 = vrot.lane.b32.xlu0 %v4391, 1
    %v4412 = vpop.permute.xlu0 %4411
    %4413 = vrot.lane.b32.xlu0 %v4349, 1
    %v4414 = vpop.permute.xlu0 %4413
    %4415 = vrot.lane.b32.xlu0 %v4357, 1
    %v4416 = vpop.permute.xlu0 %4415
    %4417 = vrot.lane.b32.xlu0 %v4399, 1
    %v4418 = vpop.permute.xlu0 %4417
    %4419 = vrot.lane.b32.xlu0 %v4400, 1
    %v4420 = vpop.permute.xlu0 %4419
    %4421 = vrot.lane.b32.xlu0 %v4366, 1
    %v4422 = vpop.permute.xlu0 %4421
    %4423 = vrot.lane.b32.xlu0 %v4374, 1
    %v4424 = vpop.permute.xlu0 %4423
    %4425 = vrot.lane.b32.xlu0 %v4408, 1
    %v4426 = vpop.permute.xlu0 %4425
    %v4427 = vsel %vm730, %v4410, %v4412
    %v4428 = vsel %vm730, %v4412, %v4414
    %v4429 = vsel %vm730, %v4414, %v4416
    %v4430 = vsel %vm730, %v4416, %v4418
    %v4431 = vsel %vm730, %v4418, %v4420
    %v4432 = vsel %vm730, %v4420, %v4422
    %v4433 = vsel %vm730, %v4422, %v4424
    %v4434 = vsel %vm730, %v4424, %v4426
    %v4435 = vcombine.low %v4349, %v4349
    %v4436 = vcombine.low %v4356, %v4356
    %v4437 = vcombine.low %v4366, %v4366
    %v4438 = vcombine.low %v4373, %v4373
    %v4439 = vcombine.low %v4382, %v4382
    %4440 = vrot.lane.b32.xlu0 %v4435, 3
    %v4441 = vpop.permute.xlu0 %4440
    %4442 = vrot.lane.b32.xlu0 %v4349, 3
    %v4443 = vpop.permute.xlu0 %4442
    %4444 = vrot.lane.b32.xlu0 %v4436, 3
    %v4445 = vpop.permute.xlu0 %4444
    %4446 = vrot.lane.b32.xlu0 %v4356, 3
    %v4447 = vpop.permute.xlu0 %4446
    %4448 = vrot.lane.b32.xlu0 %v4437, 3
    %v4449 = vpop.permute.xlu0 %4448
    %4450 = vrot.lane.b32.xlu0 %v4366, 3
    %v4451 = vpop.permute.xlu0 %4450
    %4452 = vrot.lane.b32.xlu0 %v4438, 3
    %v4453 = vpop.permute.xlu0 %4452
    %4454 = vrot.lane.b32.xlu0 %v4373, 3
    %v4455 = vpop.permute.xlu0 %4454
    %4456 = vrot.lane.b32.xlu0 %v4439, 3
    %v4457 = vpop.permute.xlu0 %4456
    %vm4458 = vcmask 23552
    %v4459 = vsel %vm4458, %v4441, %v4443
    %v4460 = vsel %vm4458, %v4443, %v4445
    %v4461 = vsel %vm4458, %v4445, %v4447
    %v4462 = vsel %vm4458, %v4447, %v4449
    %v4463 = vsel %vm4458, %v4449, %v4451
    %v4464 = vsel %vm4458, %v4451, %v4453
    %v4465 = vsel %vm4458, %v4453, %v4455
    %v4466 = vsel %vm4458, %v4455, %v4457
    %v4467 = vcombine.low %v4390, %v4390
    %v4468 = vcombine.low %v4399, %v4399
    %v4469 = vcombine.low %v4408, %v4408
    %4470 = vrot.lane.b32.xlu0 %v4467, 7
    %v4471 = vpop.permute.xlu0 %4470
    %4472 = vrot.lane.b32.xlu0 %v4390, 7
    %v4473 = vpop.permute.xlu0 %4472
    %4474 = vrot.lane.b32.xlu0 %v4435, 7
    %v4475 = vpop.permute.xlu0 %4474
    %4476 = vrot.lane.b32.xlu0 %v4349, 7
    %v4477 = vpop.permute.xlu0 %4476
    %4478 = vrot.lane.b32.xlu0 %v4468, 7
    %v4479 = vpop.permute.xlu0 %4478
    %4480 = vrot.lane.b32.xlu0 %v4399, 7
    %v4481 = vpop.permute.xlu0 %4480
    %4482 = vrot.lane.b32.xlu0 %v4437, 7
    %v4483 = vpop.permute.xlu0 %4482
    %4484 = vrot.lane.b32.xlu0 %v4366, 7
    %v4485 = vpop.permute.xlu0 %4484
    %4486 = vrot.lane.b32.xlu0 %v4469, 7
    %v4487 = vpop.permute.xlu0 %4486
    %vm4488 = vcmask 56320
    %v4489 = vsel %vm4488, %v4471, %v4473
    %v4490 = vsel %vm4488, %v4473, %v4475
    %v4491 = vsel %vm4488, %v4475, %v4477
    %v4492 = vsel %vm4488, %v4477, %v4479
    %v4493 = vsel %vm4488, %v4479, %v4481
    %v4494 = vsel %vm4488, %v4481, %v4483
    %v4495 = vsel %vm4488, %v4483, %v4485
    %v4496 = vsel %vm4488, %v4485, %v4487
    %v4499 = vsel %vm2615, %v4349, %v4410
    %v4502 = vsel %vm2615, %v4357, %v4427
    %v4505 = vsel %vm2615, %v4356, %v4428
    %v4508 = vsel %vm2615, %v4358, %v4429
    %v4511 = vsel %vm2615, %v4366, %v4430
    %v4514 = vsel %vm2615, %v4374, %v4431
    %v4517 = vsel %vm2615, %v4373, %v4432
    %v4520 = vsel %vm2615, %v4375, %v4433
    %v4523 = vsel %vm2615, %v4382, %v4434
    %v4525 = vsel %vm2643, %v4499, %v4441
    %v4527 = vsel %vm2643, %v4502, %v4459
    %v4529 = vsel %vm2643, %v4505, %v4460
    %v4531 = vsel %vm2643, %v4508, %v4461
    %v4533 = vsel %vm2643, %v4511, %v4462
    %v4535 = vsel %vm2643, %v4514, %v4463
    %v4537 = vsel %vm2643, %v4517, %v4464
    %v4539 = vsel %vm2643, %v4520, %v4465
    %v4541 = vsel %vm2643, %v4523, %v4466
    %v4543 = vsel %vm2662, %v4525, %v4471
    %v4545 = vsel %vm2662, %v4527, %v4489
    %v4547 = vsel %vm2662, %v4529, %v4490
    %v4549 = vsel %vm2662, %v4531, %v4491
    %v4551 = vsel %vm2662, %v4533, %v4492
    %v4553 = vsel %vm2662, %v4535, %v4493
    %v4555 = vsel %vm2662, %v4537, %v4494
    %v4557 = vsel %vm2662, %v4539, %v4495
    %v4559 = vsel %vm2662, %v4541, %v4496
    %4569 = vrot.lane.b32.xlu0 %v4543, 1
    %v4570 = vpop.permute.xlu0 %4569
    %4571 = vrot.lane.b32.xlu0 %v4545, 1
    %v4572 = vpop.permute.xlu0 %4571
    %4573 = vrot.lane.b32.xlu0 %v4547, 1
    %v4574 = vpop.permute.xlu0 %4573
    %4575 = vrot.lane.b32.xlu0 %v4549, 1
    %v4576 = vpop.permute.xlu0 %4575
    %4577 = vrot.lane.b32.xlu0 %v4551, 1
    %v4578 = vpop.permute.xlu0 %4577
    %4579 = vrot.lane.b32.xlu0 %v4553, 1
    %v4580 = vpop.permute.xlu0 %4579
    %4581 = vrot.lane.b32.xlu0 %v4555, 1
    %v4582 = vpop.permute.xlu0 %4581
    %4583 = vrot.lane.b32.xlu0 %v4557, 1
    %v4584 = vpop.permute.xlu0 %4583
    %4585 = vrot.lane.b32.xlu0 %v4559, 1
    %v4586 = vpop.permute.xlu0 %4585
    %v4587 = vsel %vm730, %v4570, %v4572
    %v4588 = vsel %vm730, %v4572, %v4574
    %v4589 = vsel %vm730, %v4574, %v4576
    %v4590 = vsel %vm730, %v4576, %v4578
    %v4591 = vsel %vm730, %v4578, %v4580
    %v4592 = vsel %vm730, %v4580, %v4582
    %v4593 = vsel %vm730, %v4582, %v4584
    %v4594 = vsel %vm730, %v4584, %v4586
    %4603 = vst [vmem:[#allocation2 + $0x180] sm:$0xff] %v4587
    %4604 = vst [vmem:[#allocation2 + $0x188] sm:$0xff] %v4588
    %4605 = vst [vmem:[#allocation2 + $0x190] sm:$0xff] %v4589
    %4606 = vst [vmem:[#allocation2 + $0x198] sm:$0xff] %v4590
    %4607 = vst [vmem:[#allocation2 + $0x1a0] sm:$0xff] %v4591
    %4608 = vst [vmem:[#allocation2 + $0x1a8] sm:$0xff] %v4592
    %4609 = vst [vmem:[#allocation2 + $0x1b0] sm:$0xff] %v4593
    %4610 = vst [vmem:[#allocation2 + $0x1b8] sm:$0xff] %v4594
    %v4611 = vld [vmem:[#allocation3 + $0x20] sm:$0xff]
    %v4612 = vld [vmem:[#allocation3 + $0x28] sm:$0xff]
    %v4613 = vld [vmem:[#allocation3 + $0x30] sm:$0x3]
    %v4617 = vcombine.high %v4611, %v4611
    %v4619 = vunpack.c.l.s4 1983009808
    %v4620 = vunpack.c.0.s8 %v4619
    %v4621 = vlaneseq
    %v4622 = vshrl.u32 %v4621, 7
    %v4623 = vsub.s32 %v4620, %v4622
    %v4624 = vrot.slane %v4611, %v4623
    %v4626 = vunpack.c.l.s4 1983009808
    %v4627 = vunpack.c.0.s8 %v4626
    %v4628 = vlaneseq
    %v4629 = vshrl.u32 %v4628, 7
    %v4630 = vsub.s32 %v4627, %v4629
    %v4631 = vrot.slane %v4617, %v4630
    %v4632 = vcombine.high %v4624, %v4624
    %v4633 = vcombine.high %v4631, %v4631
    %v4634 = vcombine.high %v4612, %v4612
    %v4636 = vunpack.c.l.s4 1983009808
    %v4637 = vunpack.c.0.s8 %v4636
    %v4638 = vlaneseq
    %v4639 = vshrl.u32 %v4638, 7
    %v4640 = vsub.s32 %v4637, %v4639
    %v4641 = vrot.slane %v4612, %v4640
    %v4643 = vunpack.c.l.s4 1983009808
    %v4644 = vunpack.c.0.s8 %v4643
    %v4645 = vlaneseq
    %v4646 = vshrl.u32 %v4645, 7
    %v4647 = vsub.s32 %v4644, %v4646
    %v4648 = vrot.slane %v4634, %v4647
    %v4649 = vcombine.high %v4641, %v4641
    %v4650 = vcombine.high %v4648, %v4648
    %v4652 = vunpack.c.l.s4 1983009808
    %v4653 = vunpack.c.0.s8 %v4652
    %v4654 = vlaneseq
    %v4655 = vshrl.u32 %v4654, 7
    %v4656 = vsub.s32 %v4653, %v4655
    %v4657 = vrot.slane %v4613, %v4656
    %v4658 = vcombine.low %v4611, %v4611
    %v4660 = vunpack.c.l.s4 1983009808
    %v4661 = vunpack.c.0.s8 %v4660
    %v4662 = vlaneseq
    %v4663 = vshrl.u32 %v4662, 7
    %v4664 = vsub.s32 %v4661, %v4663
    %v4665 = vrot.slane %v4658, %v4664
    %v4666 = vcombine.high %v4665, %v4665
    %v4667 = vcombine.low %v4612, %v4612
    %v4669 = vunpack.c.l.s4 1983009808
    %v4670 = vunpack.c.0.s8 %v4669
    %v4671 = vlaneseq
    %v4672 = vshrl.u32 %v4671, 7
    %v4673 = vsub.s32 %v4670, %v4672
    %v4674 = vrot.slane %v4667, %v4673
    %v4675 = vcombine.high %v4674, %v4674
    %v4676 = vcombine.low %v4613, %v4613
    %v4678 = vunpack.c.l.s4 1983009808
    %v4679 = vunpack.c.0.s8 %v4678
    %v4680 = vlaneseq
    %v4681 = vshrl.u32 %v4680, 7
    %v4682 = vsub.s32 %v4679, %v4681
    %v4683 = vrot.slane %v4676, %v4682
    %4684 = vrot.lane.b32.xlu0 %v4665, 1
    %v4685 = vpop.permute.xlu0 %4684
    %4686 = vrot.lane.b32.xlu0 %v4666, 1
    %v4687 = vpop.permute.xlu0 %4686
    %4688 = vrot.lane.b32.xlu0 %v4624, 1
    %v4689 = vpop.permute.xlu0 %4688
    %4690 = vrot.lane.b32.xlu0 %v4632, 1
    %v4691 = vpop.permute.xlu0 %4690
    %4692 = vrot.lane.b32.xlu0 %v4674, 1
    %v4693 = vpop.permute.xlu0 %4692
    %4694 = vrot.lane.b32.xlu0 %v4675, 1
    %v4695 = vpop.permute.xlu0 %4694
    %4696 = vrot.lane.b32.xlu0 %v4641, 1
    %v4697 = vpop.permute.xlu0 %4696
    %4698 = vrot.lane.b32.xlu0 %v4649, 1
    %v4699 = vpop.permute.xlu0 %4698
    %4700 = vrot.lane.b32.xlu0 %v4683, 1
    %v4701 = vpop.permute.xlu0 %4700
    %v4702 = vsel %vm730, %v4685, %v4687
    %v4703 = vsel %vm730, %v4687, %v4689
    %v4704 = vsel %vm730, %v4689, %v4691
    %v4705 = vsel %vm730, %v4691, %v4693
    %v4706 = vsel %vm730, %v4693, %v4695
    %v4707 = vsel %vm730, %v4695, %v4697
    %v4708 = vsel %vm730, %v4697, %v4699
    %v4709 = vsel %vm730, %v4699, %v4701
    %v4710 = vcombine.low %v4624, %v4624
    %v4711 = vcombine.low %v4631, %v4631
    %v4712 = vcombine.low %v4641, %v4641
    %v4713 = vcombine.low %v4648, %v4648
    %v4714 = vcombine.low %v4657, %v4657
    %4715 = vrot.lane.b32.xlu0 %v4710, 3
    %v4716 = vpop.permute.xlu0 %4715
    %4717 = vrot.lane.b32.xlu0 %v4624, 3
    %v4718 = vpop.permute.xlu0 %4717
    %4719 = vrot.lane.b32.xlu0 %v4711, 3
    %v4720 = vpop.permute.xlu0 %4719
    %4721 = vrot.lane.b32.xlu0 %v4631, 3
    %v4722 = vpop.permute.xlu0 %4721
    %4723 = vrot.lane.b32.xlu0 %v4712, 3
    %v4724 = vpop.permute.xlu0 %4723
    %4725 = vrot.lane.b32.xlu0 %v4641, 3
    %v4726 = vpop.permute.xlu0 %4725
    %4727 = vrot.lane.b32.xlu0 %v4713, 3
    %v4728 = vpop.permute.xlu0 %4727
    %4729 = vrot.lane.b32.xlu0 %v4648, 3
    %v4730 = vpop.permute.xlu0 %4729
    %4731 = vrot.lane.b32.xlu0 %v4714, 3
    %v4732 = vpop.permute.xlu0 %4731
    %v4733 = vsel %vm4458, %v4716, %v4718
    %v4734 = vsel %vm4458, %v4718, %v4720
    %v4735 = vsel %vm4458, %v4720, %v4722
    %v4736 = vsel %vm4458, %v4722, %v4724
    %v4737 = vsel %vm4458, %v4724, %v4726
    %v4738 = vsel %vm4458, %v4726, %v4728
    %v4739 = vsel %vm4458, %v4728, %v4730
    %v4740 = vsel %vm4458, %v4730, %v4732
    %v4741 = vcombine.low %v4665, %v4665
    %v4742 = vcombine.low %v4674, %v4674
    %v4743 = vcombine.low %v4683, %v4683
    %4744 = vrot.lane.b32.xlu0 %v4741, 7
    %v4745 = vpop.permute.xlu0 %4744
    %4746 = vrot.lane.b32.xlu0 %v4665, 7
    %v4747 = vpop.permute.xlu0 %4746
    %4748 = vrot.lane.b32.xlu0 %v4710, 7
    %v4749 = vpop.permute.xlu0 %4748
    %4750 = vrot.lane.b32.xlu0 %v4624, 7
    %v4751 = vpop.permute.xlu0 %4750
    %4752 = vrot.lane.b32.xlu0 %v4742, 7
    %v4753 = vpop.permute.xlu0 %4752
    %4754 = vrot.lane.b32.xlu0 %v4674, 7
    %v4755 = vpop.permute.xlu0 %4754
    %4756 = vrot.lane.b32.xlu0 %v4712, 7
    %v4757 = vpop.permute.xlu0 %4756
    %4758 = vrot.lane.b32.xlu0 %v4641, 7
    %v4759 = vpop.permute.xlu0 %4758
    %4760 = vrot.lane.b32.xlu0 %v4743, 7
    %v4761 = vpop.permute.xlu0 %4760
    %v4762 = vsel %vm4488, %v4745, %v4747
    %v4763 = vsel %vm4488, %v4747, %v4749
    %v4764 = vsel %vm4488, %v4749, %v4751
    %v4765 = vsel %vm4488, %v4751, %v4753
    %v4766 = vsel %vm4488, %v4753, %v4755
    %v4767 = vsel %vm4488, %v4755, %v4757
    %v4768 = vsel %vm4488, %v4757, %v4759
    %v4769 = vsel %vm4488, %v4759, %v4761
    %v4772 = vsel %vm2615, %v4624, %v4685
    %v4775 = vsel %vm2615, %v4632, %v4702
    %v4778 = vsel %vm2615, %v4631, %v4703
    %v4781 = vsel %vm2615, %v4633, %v4704
    %v4784 = vsel %vm2615, %v4641, %v4705
    %v4787 = vsel %vm2615, %v4649, %v4706
    %v4790 = vsel %vm2615, %v4648, %v4707
    %v4793 = vsel %vm2615, %v4650, %v4708
    %v4796 = vsel %vm2615, %v4657, %v4709
    %v4798 = vsel %vm2643, %v4772, %v4716
    %v4800 = vsel %vm2643, %v4775, %v4733
    %v4802 = vsel %vm2643, %v4778, %v4734
    %v4804 = vsel %vm2643, %v4781, %v4735
    %v4806 = vsel %vm2643, %v4784, %v4736
    %v4808 = vsel %vm2643, %v4787, %v4737
    %v4810 = vsel %vm2643, %v4790, %v4738
    %v4812 = vsel %vm2643, %v4793, %v4739
    %v4814 = vsel %vm2643, %v4796, %v4740
    %v4816 = vsel %vm2662, %v4798, %v4745
    %v4818 = vsel %vm2662, %v4800, %v4762
    %v4820 = vsel %vm2662, %v4802, %v4763
    %v4822 = vsel %vm2662, %v4804, %v4764
    %v4824 = vsel %vm2662, %v4806, %v4765
    %v4826 = vsel %vm2662, %v4808, %v4766
    %v4828 = vsel %vm2662, %v4810, %v4767
    %v4830 = vsel %vm2662, %v4812, %v4768
    %v4832 = vsel %vm2662, %v4814, %v4769
    %4842 = vrot.lane.b32.xlu0 %v4816, 1
    %v4843 = vpop.permute.xlu0 %4842
    %4844 = vrot.lane.b32.xlu0 %v4818, 1
    %v4845 = vpop.permute.xlu0 %4844
    %4846 = vrot.lane.b32.xlu0 %v4820, 1
    %v4847 = vpop.permute.xlu0 %4846
    %4848 = vrot.lane.b32.xlu0 %v4822, 1
    %v4849 = vpop.permute.xlu0 %4848
    %4850 = vrot.lane.b32.xlu0 %v4824, 1
    %v4851 = vpop.permute.xlu0 %4850
    %4852 = vrot.lane.b32.xlu0 %v4826, 1
    %v4853 = vpop.permute.xlu0 %4852
    %4854 = vrot.lane.b32.xlu0 %v4828, 1
    %v4855 = vpop.permute.xlu0 %4854
    %4856 = vrot.lane.b32.xlu0 %v4830, 1
    %v4857 = vpop.permute.xlu0 %4856
    %4858 = vrot.lane.b32.xlu0 %v4832, 1
    %v4859 = vpop.permute.xlu0 %4858
    %v4860 = vsel %vm730, %v4843, %v4845
    %v4861 = vsel %vm730, %v4845, %v4847
    %v4862 = vsel %vm730, %v4847, %v4849
    %v4863 = vsel %vm730, %v4849, %v4851
    %v4864 = vsel %vm730, %v4851, %v4853
    %v4865 = vsel %vm730, %v4853, %v4855
    %v4866 = vsel %vm730, %v4855, %v4857
    %v4867 = vsel %vm730, %v4857, %v4859
    %4876 = vst [vmem:[#allocation2 + $0x1c0] sm:$0xff] %v4860
    %4877 = vst [vmem:[#allocation2 + $0x1c8] sm:$0xff] %v4861
    %4878 = vst [vmem:[#allocation2 + $0x1d0] sm:$0xff] %v4862
    %4879 = vst [vmem:[#allocation2 + $0x1d8] sm:$0xff] %v4863
    %4880 = vst [vmem:[#allocation2 + $0x1e0] sm:$0xff] %v4864
    %4881 = vst [vmem:[#allocation2 + $0x1e8] sm:$0xff] %v4865
    %4882 = vst [vmem:[#allocation2 + $0x1f0] sm:$0xff] %v4866
    %4883 = vst [vmem:[#allocation2 + $0x1f8] sm:$0xff] %v4867
    %v4884 = vld [vmem:[#allocation3 + $0x6] sm:$0xff]
    %v4885 = vld [vmem:[#allocation3 + $0xe] sm:$0xff]
    %v4888 = vcombine.high %v4884, %v4884
    %v4890 = vunpack.c.l.s4 1983009808
    %v4891 = vunpack.c.0.s8 %v4890
    %v4892 = vlaneseq
    %v4893 = vshrl.u32 %v4892, 7
    %v4894 = vsub.s32 %v4891, %v4893
    %v4895 = vrot.slane %v4884, %v4894
    %v4897 = vunpack.c.l.s4 1983009808
    %v4898 = vunpack.c.0.s8 %v4897
    %v4899 = vlaneseq
    %v4900 = vshrl.u32 %v4899, 7
    %v4901 = vsub.s32 %v4898, %v4900
    %v4902 = vrot.slane %v4888, %v4901
    %v4903 = vcombine.high %v4895, %v4895
    %v4904 = vcombine.high %v4902, %v4902
    %v4905 = vcombine.high %v4885, %v4885
    %v4907 = vunpack.c.l.s4 1983009808
    %v4908 = vunpack.c.0.s8 %v4907
    %v4909 = vlaneseq
    %v4910 = vshrl.u32 %v4909, 7
    %v4911 = vsub.s32 %v4908, %v4910
    %v4912 = vrot.slane %v4885, %v4911
    %v4914 = vunpack.c.l.s4 1983009808
    %v4915 = vunpack.c.0.s8 %v4914
    %v4916 = vlaneseq
    %v4917 = vshrl.u32 %v4916, 7
    %v4918 = vsub.s32 %v4915, %v4917
    %v4919 = vrot.slane %v4905, %v4918
    %v4920 = vcombine.high %v4912, %v4912
    %v4921 = vcombine.high %v4919, %v4919
    %v4922 = vcombine.low %v4884, %v4884
    %v4924 = vunpack.c.l.s4 1983009808
    %v4925 = vunpack.c.0.s8 %v4924
    %v4926 = vlaneseq
    %v4927 = vshrl.u32 %v4926, 7
    %v4928 = vsub.s32 %v4925, %v4927
    %v4929 = vrot.slane %v4922, %v4928
    %v4930 = vcombine.high %v4929, %v4929
    %v4931 = vcombine.low %v4885, %v4885
    %v4933 = vunpack.c.l.s4 1983009808
    %v4934 = vunpack.c.0.s8 %v4933
    %v4935 = vlaneseq
    %v4936 = vshrl.u32 %v4935, 7
    %v4937 = vsub.s32 %v4934, %v4936
    %v4938 = vrot.slane %v4931, %v4937
    %v4939 = vcombine.high %v4938, %v4938
    %v4940 = vcombine.low %v4895, %v4895
    %v4941 = vcombine.low %v4902, %v4902
    %v4942 = vcombine.low %v4912, %v4912
    %v4943 = vcombine.low %v4919, %v4919
    %v4944 = vcombine.low %v4929, %v4929
    %v4945 = vcombine.low %v4938, %v4938
    %v4948 = vsel %vm2615, %v4895, %v4929
    %v4951 = vsel %vm2615, %v4903, %v4930
    %v4953 = vsel %vm2615, %v4902, %v4895
    %v4955 = vsel %vm2615, %v4904, %v4903
    %v4958 = vsel %vm2615, %v4912, %v4938
    %v4961 = vsel %vm2615, %v4920, %v4939
    %v4963 = vsel %vm2615, %v4919, %v4912
    %v4965 = vsel %vm2615, %v4921, %v4920
    %v4967 = vsel %vm2643, %v4948, %v4940
    %v4968 = vsel %vm2643, %v4951, %v4895
    %v4970 = vsel %vm2643, %v4953, %v4941
    %v4971 = vsel %vm2643, %v4955, %v4902
    %v4973 = vsel %vm2643, %v4958, %v4942
    %v4974 = vsel %vm2643, %v4961, %v4912
    %v4976 = vsel %vm2643, %v4963, %v4943
    %v4977 = vsel %vm2643, %v4965, %v4919
    %v4979 = vsel %vm2662, %v4967, %v4944
    %v4981 = vsel %vm2662, %v4968, %v4929
    %v4983 = vsel %vm2662, %v4970, %v4940
    %v4985 = vsel %vm2662, %v4971, %v4895
    %v4988 = vsel %vm2662, %v4973, %v4945
    %v4990 = vsel %vm2662, %v4974, %v4938
    %v4992 = vsel %vm2662, %v4976, %v4942
    %v4994 = vsel %vm2662, %v4977, %v4912
    %4996 = vst [vmem:[#allocation2 + $0x200] sm:$0xff] %v4979
    %4997 = vst [vmem:[#allocation2 + $0x208] sm:$0xff] %v4981
    %4998 = vst [vmem:[#allocation2 + $0x210] sm:$0xff] %v4983
    %4999 = vst [vmem:[#allocation2 + $0x218] sm:$0xff] %v4985
    %5000 = vst [vmem:[#allocation2 + $0x220] sm:$0xff] %v4988
    %5001 = vst [vmem:[#allocation2 + $0x228] sm:$0xff] %v4990
    %5002 = vst [vmem:[#allocation2 + $0x230] sm:$0xff] %v4992
    %5003 = vst [vmem:[#allocation2 + $0x238] sm:$0xff] %v4994
    %v5004 = vld [vmem:[#allocation3 + $0x22] sm:$0xff]
    %v5005 = vld [vmem:[#allocation3 + $0x2a] sm:$0xff]
    %v5008 = vcombine.high %v5004, %v5004
    %v5010 = vunpack.c.l.s4 1983009808
    %v5011 = vunpack.c.0.s8 %v5010
    %v5012 = vlaneseq
    %v5013 = vshrl.u32 %v5012, 7
    %v5014 = vsub.s32 %v5011, %v5013
    %v5015 = vrot.slane %v5004, %v5014
    %v5017 = vunpack.c.l.s4 1983009808
    %v5018 = vunpack.c.0.s8 %v5017
    %v5019 = vlaneseq
    %v5020 = vshrl.u32 %v5019, 7
    %v5021 = vsub.s32 %v5018, %v5020
    %v5022 = vrot.slane %v5008, %v5021
    %v5023 = vcombine.high %v5015, %v5015
    %v5024 = vcombine.high %v5022, %v5022
    %v5025 = vcombine.high %v5005, %v5005
    %v5027 = vunpack.c.l.s4 1983009808
    %v5028 = vunpack.c.0.s8 %v5027
    %v5029 = vlaneseq
    %v5030 = vshrl.u32 %v5029, 7
    %v5031 = vsub.s32 %v5028, %v5030
    %v5032 = vrot.slane %v5005, %v5031
    %v5034 = vunpack.c.l.s4 1983009808
    %v5035 = vunpack.c.0.s8 %v5034
    %v5036 = vlaneseq
    %v5037 = vshrl.u32 %v5036, 7
    %v5038 = vsub.s32 %v5035, %v5037
    %v5039 = vrot.slane %v5025, %v5038
    %v5040 = vcombine.high %v5032, %v5032
    %v5041 = vcombine.high %v5039, %v5039
    %v5042 = vcombine.low %v5004, %v5004
    %v5044 = vunpack.c.l.s4 1983009808
    %v5045 = vunpack.c.0.s8 %v5044
    %v5046 = vlaneseq
    %v5047 = vshrl.u32 %v5046, 7
    %v5048 = vsub.s32 %v5045, %v5047
    %v5049 = vrot.slane %v5042, %v5048
    %v5050 = vcombine.high %v5049, %v5049
    %v5051 = vcombine.low %v5005, %v5005
    %v5053 = vunpack.c.l.s4 1983009808
    %v5054 = vunpack.c.0.s8 %v5053
    %v5055 = vlaneseq
    %v5056 = vshrl.u32 %v5055, 7
    %v5057 = vsub.s32 %v5054, %v5056
    %v5058 = vrot.slane %v5051, %v5057
    %v5059 = vcombine.high %v5058, %v5058
    %v5060 = vcombine.low %v5015, %v5015
    %v5061 = vcombine.low %v5022, %v5022
    %v5062 = vcombine.low %v5032, %v5032
    %v5063 = vcombine.low %v5039, %v5039
    %v5064 = vcombine.low %v5049, %v5049
    %v5065 = vcombine.low %v5058, %v5058
    %v5068 = vsel %vm2615, %v5015, %v5049
    %v5071 = vsel %vm2615, %v5023, %v5050
    %v5073 = vsel %vm2615, %v5022, %v5015
    %v5075 = vsel %vm2615, %v5024, %v5023
    %v5078 = vsel %vm2615, %v5032, %v5058
    %v5081 = vsel %vm2615, %v5040, %v5059
    %v5083 = vsel %vm2615, %v5039, %v5032
    %v5085 = vsel %vm2615, %v5041, %v5040
    %v5087 = vsel %vm2643, %v5068, %v5060
    %v5088 = vsel %vm2643, %v5071, %v5015
    %v5090 = vsel %vm2643, %v5073, %v5061
    %v5091 = vsel %vm2643, %v5075, %v5022
    %v5093 = vsel %vm2643, %v5078, %v5062
    %v5094 = vsel %vm2643, %v5081, %v5032
    %v5096 = vsel %vm2643, %v5083, %v5063
    %v5097 = vsel %vm2643, %v5085, %v5039
    %v5099 = vsel %vm2662, %v5087, %v5064
    %v5101 = vsel %vm2662, %v5088, %v5049
    %v5103 = vsel %vm2662, %v5090, %v5060
    %v5105 = vsel %vm2662, %v5091, %v5015
    %v5108 = vsel %vm2662, %v5093, %v5065
    %v5110 = vsel %vm2662, %v5094, %v5058
    %v5112 = vsel %vm2662, %v5096, %v5062
    %v5114 = vsel %vm2662, %v5097, %v5032
    %5116 = vst [vmem:[#allocation2 + $0x240] sm:$0xff] %v5099
    %5117 = vst [vmem:[#allocation2 + $0x248] sm:$0xff] %v5101
    %5118 = vst [vmem:[#allocation2 + $0x250] sm:$0xff] %v5103
    %5119 = vst [vmem:[#allocation2 + $0x258] sm:$0xff] %v5105
    %5120 = vst [vmem:[#allocation2 + $0x260] sm:$0xff] %v5108
    %5121 = vst [vmem:[#allocation2 + $0x268] sm:$0xff] %v5110
    %5122 = vst [vmem:[#allocation2 + $0x270] sm:$0xff] %v5112
    %5123 = vst [vmem:[#allocation2 + $0x278] sm:$0xff] %v5114
    %v5124 = vld [vmem:[#allocation3 + $0x6] sm:$0xff]
    %v5125 = vld [vmem:[#allocation3 + $0xe] sm:$0xff]
    %v5126 = vld [vmem:[#allocation3 + $0x16] sm:$0x3]
    %v5130 = vcombine.high %v5124, %v5124
    %v5132 = vunpack.c.l.s4 1983009808
    %v5133 = vunpack.c.0.s8 %v5132
    %v5134 = vlaneseq
    %v5135 = vshrl.u32 %v5134, 7
    %v5136 = vsub.s32 %v5133, %v5135
    %v5137 = vrot.slane %v5124, %v5136
    %v5139 = vunpack.c.l.s4 1983009808
    %v5140 = vunpack.c.0.s8 %v5139
    %v5141 = vlaneseq
    %v5142 = vshrl.u32 %v5141, 7
    %v5143 = vsub.s32 %v5140, %v5142
    %v5144 = vrot.slane %v5130, %v5143
    %v5145 = vcombine.high %v5137, %v5137
    %v5146 = vcombine.high %v5144, %v5144
    %v5147 = vcombine.high %v5125, %v5125
    %v5149 = vunpack.c.l.s4 1983009808
    %v5150 = vunpack.c.0.s8 %v5149
    %v5151 = vlaneseq
    %v5152 = vshrl.u32 %v5151, 7
    %v5153 = vsub.s32 %v5150, %v5152
    %v5154 = vrot.slane %v5125, %v5153
    %v5156 = vunpack.c.l.s4 1983009808
    %v5157 = vunpack.c.0.s8 %v5156
    %v5158 = vlaneseq
    %v5159 = vshrl.u32 %v5158, 7
    %v5160 = vsub.s32 %v5157, %v5159
    %v5161 = vrot.slane %v5147, %v5160
    %v5162 = vcombine.high %v5154, %v5154
    %v5163 = vcombine.high %v5161, %v5161
    %v5165 = vunpack.c.l.s4 1983009808
    %v5166 = vunpack.c.0.s8 %v5165
    %v5167 = vlaneseq
    %v5168 = vshrl.u32 %v5167, 7
    %v5169 = vsub.s32 %v5166, %v5168
    %v5170 = vrot.slane %v5126, %v5169
    %v5171 = vcombine.low %v5124, %v5124
    %v5173 = vunpack.c.l.s4 1983009808
    %v5174 = vunpack.c.0.s8 %v5173
    %v5175 = vlaneseq
    %v5176 = vshrl.u32 %v5175, 7
    %v5177 = vsub.s32 %v5174, %v5176
    %v5178 = vrot.slane %v5171, %v5177
    %v5179 = vcombine.high %v5178, %v5178
    %v5180 = vcombine.low %v5125, %v5125
    %v5182 = vunpack.c.l.s4 1983009808
    %v5183 = vunpack.c.0.s8 %v5182
    %v5184 = vlaneseq
    %v5185 = vshrl.u32 %v5184, 7
    %v5186 = vsub.s32 %v5183, %v5185
    %v5187 = vrot.slane %v5180, %v5186
    %v5188 = vcombine.high %v5187, %v5187
    %v5189 = vcombine.low %v5126, %v5126
    %v5191 = vunpack.c.l.s4 1983009808
    %v5192 = vunpack.c.0.s8 %v5191
    %v5193 = vlaneseq
    %v5194 = vshrl.u32 %v5193, 7
    %v5195 = vsub.s32 %v5192, %v5194
    %v5196 = vrot.slane %v5189, %v5195
    %5197 = vrot.lane.b32.xlu0 %v5178, 127
    %v5198 = vpop.permute.xlu0 %5197
    %5199 = vrot.lane.b32.xlu0 %v5179, 127
    %v5200 = vpop.permute.xlu0 %5199
    %5201 = vrot.lane.b32.xlu0 %v5137, 127
    %v5202 = vpop.permute.xlu0 %5201
    %5203 = vrot.lane.b32.xlu0 %v5145, 127
    %v5204 = vpop.permute.xlu0 %5203
    %5205 = vrot.lane.b32.xlu0 %v5187, 127
    %v5206 = vpop.permute.xlu0 %5205
    %5207 = vrot.lane.b32.xlu0 %v5188, 127
    %v5208 = vpop.permute.xlu0 %5207
    %5209 = vrot.lane.b32.xlu0 %v5154, 127
    %v5210 = vpop.permute.xlu0 %5209
    %5211 = vrot.lane.b32.xlu0 %v5162, 127
    %v5212 = vpop.permute.xlu0 %5211
    %5213 = vrot.lane.b32.xlu0 %v5196, 127
    %v5214 = vpop.permute.xlu0 %5213
    %v5215 = vsel %vm1021, %v5198, %v5200
    %v5216 = vsel %vm1021, %v5200, %v5202
    %v5217 = vsel %vm1021, %v5202, %v5204
    %v5218 = vsel %vm1021, %v5204, %v5206
    %v5219 = vsel %vm1021, %v5206, %v5208
    %v5220 = vsel %vm1021, %v5208, %v5210
    %v5221 = vsel %vm1021, %v5210, %v5212
    %v5222 = vsel %vm1021, %v5212, %v5214
    %v5223 = vcombine.low %v5137, %v5137
    %v5224 = vcombine.low %v5144, %v5144
    %v5225 = vcombine.low %v5154, %v5154
    %v5226 = vcombine.low %v5161, %v5161
    %v5227 = vcombine.low %v5170, %v5170
    %5228 = vrot.lane.b32.xlu0 %v5223, 125
    %v5229 = vpop.permute.xlu0 %5228
    %5230 = vrot.lane.b32.xlu0 %v5137, 125
    %v5231 = vpop.permute.xlu0 %5230
    %5232 = vrot.lane.b32.xlu0 %v5224, 125
    %v5233 = vpop.permute.xlu0 %5232
    %5234 = vrot.lane.b32.xlu0 %v5144, 125
    %v5235 = vpop.permute.xlu0 %5234
    %5236 = vrot.lane.b32.xlu0 %v5225, 125
    %v5237 = vpop.permute.xlu0 %5236
    %5238 = vrot.lane.b32.xlu0 %v5154, 125
    %v5239 = vpop.permute.xlu0 %5238
    %5240 = vrot.lane.b32.xlu0 %v5226, 125
    %v5241 = vpop.permute.xlu0 %5240
    %5242 = vrot.lane.b32.xlu0 %v5161, 125
    %v5243 = vpop.permute.xlu0 %5242
    %5244 = vrot.lane.b32.xlu0 %v5227, 125
    %v5245 = vpop.permute.xlu0 %5244
    %vm5246 = vcmask 1022976
    %v5247 = vsel %vm5246, %v5229, %v5231
    %v5248 = vsel %vm5246, %v5231, %v5233
    %v5249 = vsel %vm5246, %v5233, %v5235
    %v5250 = vsel %vm5246, %v5235, %v5237
    %v5251 = vsel %vm5246, %v5237, %v5239
    %v5252 = vsel %vm5246, %v5239, %v5241
    %v5253 = vsel %vm5246, %v5241, %v5243
    %v5254 = vsel %vm5246, %v5243, %v5245
    %v5255 = vcombine.low %v5178, %v5178
    %v5256 = vcombine.low %v5187, %v5187
    %v5257 = vcombine.low %v5196, %v5196
    %5258 = vrot.lane.b32.xlu0 %v5255, 121
    %v5259 = vpop.permute.xlu0 %5258
    %5260 = vrot.lane.b32.xlu0 %v5178, 121
    %v5261 = vpop.permute.xlu0 %5260
    %5262 = vrot.lane.b32.xlu0 %v5223, 121
    %v5263 = vpop.permute.xlu0 %5262
    %5264 = vrot.lane.b32.xlu0 %v5137, 121
    %v5265 = vpop.permute.xlu0 %5264
    %5266 = vrot.lane.b32.xlu0 %v5256, 121
    %v5267 = vpop.permute.xlu0 %5266
    %5268 = vrot.lane.b32.xlu0 %v5187, 121
    %v5269 = vpop.permute.xlu0 %5268
    %5270 = vrot.lane.b32.xlu0 %v5225, 121
    %v5271 = vpop.permute.xlu0 %5270
    %5272 = vrot.lane.b32.xlu0 %v5154, 121
    %v5273 = vpop.permute.xlu0 %5272
    %5274 = vrot.lane.b32.xlu0 %v5257, 121
    %v5275 = vpop.permute.xlu0 %5274
    %vm5276 = vcmask 990208
    %v5277 = vsel %vm5276, %v5259, %v5261
    %v5278 = vsel %vm5276, %v5261, %v5263
    %v5279 = vsel %vm5276, %v5263, %v5265
    %v5280 = vsel %vm5276, %v5265, %v5267
    %v5281 = vsel %vm5276, %v5267, %v5269
    %v5282 = vsel %vm5276, %v5269, %v5271
    %v5283 = vsel %vm5276, %v5271, %v5273
    %v5284 = vsel %vm5276, %v5273, %v5275
    %v5287 = vsel %vm2615, %v5137, %v5215
    %v5290 = vsel %vm2615, %v5145, %v5216
    %v5293 = vsel %vm2615, %v5144, %v5217
    %v5296 = vsel %vm2615, %v5146, %v5218
    %v5299 = vsel %vm2615, %v5154, %v5219
    %v5302 = vsel %vm2615, %v5162, %v5220
    %v5305 = vsel %vm2615, %v5161, %v5221
    %v5308 = vsel %vm2615, %v5163, %v5222
    %v5311 = vsel %vm2615, %v5170, %v5214
    %v5313 = vsel %vm2643, %v5287, %v5247
    %v5315 = vsel %vm2643, %v5290, %v5248
    %v5317 = vsel %vm2643, %v5293, %v5249
    %v5319 = vsel %vm2643, %v5296, %v5250
    %v5321 = vsel %vm2643, %v5299, %v5251
    %v5323 = vsel %vm2643, %v5302, %v5252
    %v5325 = vsel %vm2643, %v5305, %v5253
    %v5327 = vsel %vm2643, %v5308, %v5254
    %v5329 = vsel %vm2643, %v5311, %v5245
    %v5331 = vsel %vm2662, %v5313, %v5277
    %v5333 = vsel %vm2662, %v5315, %v5278
    %v5335 = vsel %vm2662, %v5317, %v5279
    %v5337 = vsel %vm2662, %v5319, %v5280
    %v5339 = vsel %vm2662, %v5321, %v5281
    %v5341 = vsel %vm2662, %v5323, %v5282
    %v5343 = vsel %vm2662, %v5325, %v5283
    %v5345 = vsel %vm2662, %v5327, %v5284
    %v5347 = vsel %vm2662, %v5329, %v5275
    %5357 = vrot.lane.b32.xlu0 %v5331, 127
    %v5358 = vpop.permute.xlu0 %5357
    %5359 = vrot.lane.b32.xlu0 %v5333, 127
    %v5360 = vpop.permute.xlu0 %5359
    %5361 = vrot.lane.b32.xlu0 %v5335, 127
    %v5362 = vpop.permute.xlu0 %5361
    %5363 = vrot.lane.b32.xlu0 %v5337, 127
    %v5364 = vpop.permute.xlu0 %5363
    %5365 = vrot.lane.b32.xlu0 %v5339, 127
    %v5366 = vpop.permute.xlu0 %5365
    %5367 = vrot.lane.b32.xlu0 %v5341, 127
    %v5368 = vpop.permute.xlu0 %5367
    %5369 = vrot.lane.b32.xlu0 %v5343, 127
    %v5370 = vpop.permute.xlu0 %5369
    %5371 = vrot.lane.b32.xlu0 %v5345, 127
    %v5372 = vpop.permute.xlu0 %5371
    %5373 = vrot.lane.b32.xlu0 %v5347, 127
    %v5374 = vpop.permute.xlu0 %5373
    %v5375 = vsel %vm1021, %v5358, %v5360
    %v5376 = vsel %vm1021, %v5360, %v5362
    %v5377 = vsel %vm1021, %v5362, %v5364
    %v5378 = vsel %vm1021, %v5364, %v5366
    %v5379 = vsel %vm1021, %v5366, %v5368
    %v5380 = vsel %vm1021, %v5368, %v5370
    %v5381 = vsel %vm1021, %v5370, %v5372
    %v5382 = vsel %vm1021, %v5372, %v5374
    %5391 = vst [vmem:[#allocation2 + $0x280] sm:$0xff] %v5375
    %5392 = vst [vmem:[#allocation2 + $0x288] sm:$0xff] %v5376
    %5393 = vst [vmem:[#allocation2 + $0x290] sm:$0xff] %v5377
    %5394 = vst [vmem:[#allocation2 + $0x298] sm:$0xff] %v5378
    %5395 = vst [vmem:[#allocation2 + $0x2a0] sm:$0xff] %v5379
    %5396 = vst [vmem:[#allocation2 + $0x2a8] sm:$0xff] %v5380
    %5397 = vst [vmem:[#allocation2 + $0x2b0] sm:$0xff] %v5381
    %5398 = vst [vmem:[#allocation2 + $0x2b8] sm:$0xff] %v5382
    %v5399 = vld [vmem:[#allocation3 + $0x22] sm:$0xff]
    %v5400 = vld [vmem:[#allocation3 + $0x2a] sm:$0xff]
    %v5401 = vld [vmem:[#allocation3 + $0x32] sm:$0x3]
    %v5405 = vcombine.high %v5399, %v5399
    %v5407 = vunpack.c.l.s4 1983009808
    %v5408 = vunpack.c.0.s8 %v5407
    %v5409 = vlaneseq
    %v5410 = vshrl.u32 %v5409, 7
    %v5411 = vsub.s32 %v5408, %v5410
    %v5412 = vrot.slane %v5399, %v5411
    %v5414 = vunpack.c.l.s4 1983009808
    %v5415 = vunpack.c.0.s8 %v5414
    %v5416 = vlaneseq
    %v5417 = vshrl.u32 %v5416, 7
    %v5418 = vsub.s32 %v5415, %v5417
    %v5419 = vrot.slane %v5405, %v5418
    %v5420 = vcombine.high %v5412, %v5412
    %v5421 = vcombine.high %v5419, %v5419
    %v5422 = vcombine.high %v5400, %v5400
    %v5424 = vunpack.c.l.s4 1983009808
    %v5425 = vunpack.c.0.s8 %v5424
    %v5426 = vlaneseq
    %v5427 = vshrl.u32 %v5426, 7
    %v5428 = vsub.s32 %v5425, %v5427
    %v5429 = vrot.slane %v5400, %v5428
    %v5431 = vunpack.c.l.s4 1983009808
    %v5432 = vunpack.c.0.s8 %v5431
    %v5433 = vlaneseq
    %v5434 = vshrl.u32 %v5433, 7
    %v5435 = vsub.s32 %v5432, %v5434
    %v5436 = vrot.slane %v5422, %v5435
    %v5437 = vcombine.high %v5429, %v5429
    %v5438 = vcombine.high %v5436, %v5436
    %v5440 = vunpack.c.l.s4 1983009808
    %v5441 = vunpack.c.0.s8 %v5440
    %v5442 = vlaneseq
    %v5443 = vshrl.u32 %v5442, 7
    %v5444 = vsub.s32 %v5441, %v5443
    %v5445 = vrot.slane %v5401, %v5444
    %v5446 = vcombine.low %v5399, %v5399
    %v5448 = vunpack.c.l.s4 1983009808
    %v5449 = vunpack.c.0.s8 %v5448
    %v5450 = vlaneseq
    %v5451 = vshrl.u32 %v5450, 7
    %v5452 = vsub.s32 %v5449, %v5451
    %v5453 = vrot.slane %v5446, %v5452
    %v5454 = vcombine.high %v5453, %v5453
    %v5455 = vcombine.low %v5400, %v5400
    %v5457 = vunpack.c.l.s4 1983009808
    %v5458 = vunpack.c.0.s8 %v5457
    %v5459 = vlaneseq
    %v5460 = vshrl.u32 %v5459, 7
    %v5461 = vsub.s32 %v5458, %v5460
    %v5462 = vrot.slane %v5455, %v5461
    %v5463 = vcombine.high %v5462, %v5462
    %v5464 = vcombine.low %v5401, %v5401
    %v5466 = vunpack.c.l.s4 1983009808
    %v5467 = vunpack.c.0.s8 %v5466
    %v5468 = vlaneseq
    %v5469 = vshrl.u32 %v5468, 7
    %v5470 = vsub.s32 %v5467, %v5469
    %v5471 = vrot.slane %v5464, %v5470
    %5472 = vrot.lane.b32.xlu0 %v5453, 127
    %v5473 = vpop.permute.xlu0 %5472
    %5474 = vrot.lane.b32.xlu0 %v5454, 127
    %v5475 = vpop.permute.xlu0 %5474
    %5476 = vrot.lane.b32.xlu0 %v5412, 127
    %v5477 = vpop.permute.xlu0 %5476
    %5478 = vrot.lane.b32.xlu0 %v5420, 127
    %v5479 = vpop.permute.xlu0 %5478
    %5480 = vrot.lane.b32.xlu0 %v5462, 127
    %v5481 = vpop.permute.xlu0 %5480
    %5482 = vrot.lane.b32.xlu0 %v5463, 127
    %v5483 = vpop.permute.xlu0 %5482
    %5484 = vrot.lane.b32.xlu0 %v5429, 127
    %v5485 = vpop.permute.xlu0 %5484
    %5486 = vrot.lane.b32.xlu0 %v5437, 127
    %v5487 = vpop.permute.xlu0 %5486
    %5488 = vrot.lane.b32.xlu0 %v5471, 127
    %v5489 = vpop.permute.xlu0 %5488
    %v5490 = vsel %vm1021, %v5473, %v5475
    %v5491 = vsel %vm1021, %v5475, %v5477
    %v5492 = vsel %vm1021, %v5477, %v5479
    %v5493 = vsel %vm1021, %v5479, %v5481
    %v5494 = vsel %vm1021, %v5481, %v5483
    %v5495 = vsel %vm1021, %v5483, %v5485
    %v5496 = vsel %vm1021, %v5485, %v5487
    %v5497 = vsel %vm1021, %v5487, %v5489
    %v5498 = vcombine.low %v5412, %v5412
    %v5499 = vcombine.low %v5419, %v5419
    %v5500 = vcombine.low %v5429, %v5429
    %v5501 = vcombine.low %v5436, %v5436
    %v5502 = vcombine.low %v5445, %v5445
    %5503 = vrot.lane.b32.xlu0 %v5498, 125
    %v5504 = vpop.permute.xlu0 %5503
    %5505 = vrot.lane.b32.xlu0 %v5412, 125
    %v5506 = vpop.permute.xlu0 %5505
    %5507 = vrot.lane.b32.xlu0 %v5499, 125
    %v5508 = vpop.permute.xlu0 %5507
    %5509 = vrot.lane.b32.xlu0 %v5419, 125
    %v5510 = vpop.permute.xlu0 %5509
    %5511 = vrot.lane.b32.xlu0 %v5500, 125
    %v5512 = vpop.permute.xlu0 %5511
    %5513 = vrot.lane.b32.xlu0 %v5429, 125
    %v5514 = vpop.permute.xlu0 %5513
    %5515 = vrot.lane.b32.xlu0 %v5501, 125
    %v5516 = vpop.permute.xlu0 %5515
    %5517 = vrot.lane.b32.xlu0 %v5436, 125
    %v5518 = vpop.permute.xlu0 %5517
    %5519 = vrot.lane.b32.xlu0 %v5502, 125
    %v5520 = vpop.permute.xlu0 %5519
    %v5521 = vsel %vm5246, %v5504, %v5506
    %v5522 = vsel %vm5246, %v5506, %v5508
    %v5523 = vsel %vm5246, %v5508, %v5510
    %v5524 = vsel %vm5246, %v5510, %v5512
    %v5525 = vsel %vm5246, %v5512, %v5514
    %v5526 = vsel %vm5246, %v5514, %v5516
    %v5527 = vsel %vm5246, %v5516, %v5518
    %v5528 = vsel %vm5246, %v5518, %v5520
    %v5529 = vcombine.low %v5453, %v5453
    %v5530 = vcombine.low %v5462, %v5462
    %v5531 = vcombine.low %v5471, %v5471
    %5532 = vrot.lane.b32.xlu0 %v5529, 121
    %v5533 = vpop.permute.xlu0 %5532
    %5534 = vrot.lane.b32.xlu0 %v5453, 121
    %v5535 = vpop.permute.xlu0 %5534
    %5536 = vrot.lane.b32.xlu0 %v5498, 121
    %v5537 = vpop.permute.xlu0 %5536
    %5538 = vrot.lane.b32.xlu0 %v5412, 121
    %v5539 = vpop.permute.xlu0 %5538
    %5540 = vrot.lane.b32.xlu0 %v5530, 121
    %v5541 = vpop.permute.xlu0 %5540
    %5542 = vrot.lane.b32.xlu0 %v5462, 121
    %v5543 = vpop.permute.xlu0 %5542
    %5544 = vrot.lane.b32.xlu0 %v5500, 121
    %v5545 = vpop.permute.xlu0 %5544
    %5546 = vrot.lane.b32.xlu0 %v5429, 121
    %v5547 = vpop.permute.xlu0 %5546
    %5548 = vrot.lane.b32.xlu0 %v5531, 121
    %v5549 = vpop.permute.xlu0 %5548
    %v5550 = vsel %vm5276, %v5533, %v5535
    %v5551 = vsel %vm5276, %v5535, %v5537
    %v5552 = vsel %vm5276, %v5537, %v5539
    %v5553 = vsel %vm5276, %v5539, %v5541
    %v5554 = vsel %vm5276, %v5541, %v5543
    %v5555 = vsel %vm5276, %v5543, %v5545
    %v5556 = vsel %vm5276, %v5545, %v5547
    %v5557 = vsel %vm5276, %v5547, %v5549
    %v5560 = vsel %vm2615, %v5412, %v5490
    %v5563 = vsel %vm2615, %v5420, %v5491
    %v5566 = vsel %vm2615, %v5419, %v5492
    %v5569 = vsel %vm2615, %v5421, %v5493
    %v5572 = vsel %vm2615, %v5429, %v5494
    %v5575 = vsel %vm2615, %v5437, %v5495
    %v5578 = vsel %vm2615, %v5436, %v5496
    %v5581 = vsel %vm2615, %v5438, %v5497
    %v5584 = vsel %vm2615, %v5445, %v5489
    %v5586 = vsel %vm2643, %v5560, %v5521
    %v5588 = vsel %vm2643, %v5563, %v5522
    %v5590 = vsel %vm2643, %v5566, %v5523
    %v5592 = vsel %vm2643, %v5569, %v5524
    %v5594 = vsel %vm2643, %v5572, %v5525
    %v5596 = vsel %vm2643, %v5575, %v5526
    %v5598 = vsel %vm2643, %v5578, %v5527
    %v5600 = vsel %vm2643, %v5581, %v5528
    %v5602 = vsel %vm2643, %v5584, %v5520
    %v5604 = vsel %vm2662, %v5586, %v5550
    %v5606 = vsel %vm2662, %v5588, %v5551
    %v5608 = vsel %vm2662, %v5590, %v5552
    %v5610 = vsel %vm2662, %v5592, %v5553
    %v5612 = vsel %vm2662, %v5594, %v5554
    %v5614 = vsel %vm2662, %v5596, %v5555
    %v5616 = vsel %vm2662, %v5598, %v5556
    %v5618 = vsel %vm2662, %v5600, %v5557
    %v5620 = vsel %vm2662, %v5602, %v5549
    %5630 = vrot.lane.b32.xlu0 %v5604, 127
    %v5631 = vpop.permute.xlu0 %5630
    %5632 = vrot.lane.b32.xlu0 %v5606, 127
    %v5633 = vpop.permute.xlu0 %5632
    %5634 = vrot.lane.b32.xlu0 %v5608, 127
    %v5635 = vpop.permute.xlu0 %5634
    %5636 = vrot.lane.b32.xlu0 %v5610, 127
    %v5637 = vpop.permute.xlu0 %5636
    %5638 = vrot.lane.b32.xlu0 %v5612, 127
    %v5639 = vpop.permute.xlu0 %5638
    %5640 = vrot.lane.b32.xlu0 %v5614, 127
    %v5641 = vpop.permute.xlu0 %5640
    %5642 = vrot.lane.b32.xlu0 %v5616, 127
    %v5643 = vpop.permute.xlu0 %5642
    %5644 = vrot.lane.b32.xlu0 %v5618, 127
    %v5645 = vpop.permute.xlu0 %5644
    %5646 = vrot.lane.b32.xlu0 %v5620, 127
    %v5647 = vpop.permute.xlu0 %5646
    %v5648 = vsel %vm1021, %v5631, %v5633
    %v5649 = vsel %vm1021, %v5633, %v5635
    %v5650 = vsel %vm1021, %v5635, %v5637
    %v5651 = vsel %vm1021, %v5637, %v5639
    %v5652 = vsel %vm1021, %v5639, %v5641
    %v5653 = vsel %vm1021, %v5641, %v5643
    %v5654 = vsel %vm1021, %v5643, %v5645
    %v5655 = vsel %vm1021, %v5645, %v5647
    %5664 = vst [vmem:[#allocation2 + $0x2c0] sm:$0xff] %v5648
    %5665 = vst [vmem:[#allocation2 + $0x2c8] sm:$0xff] %v5649
    %5666 = vst [vmem:[#allocation2 + $0x2d0] sm:$0xff] %v5650
    %5667 = vst [vmem:[#allocation2 + $0x2d8] sm:$0xff] %v5651
    %5668 = vst [vmem:[#allocation2 + $0x2e0] sm:$0xff] %v5652
    %5669 = vst [vmem:[#allocation2 + $0x2e8] sm:$0xff] %v5653
    %5670 = vst [vmem:[#allocation2 + $0x2f0] sm:$0xff] %v5654
    %5671 = vst [vmem:[#allocation2 + $0x2f8] sm:$0xff] %v5655
    %v5672 = vld [vmem:[#allocation3 + $0x6] sm:$0xff]
    %v5673 = vld [vmem:[#allocation3 + $0xe] sm:$0xff]
    %v5674 = vld [vmem:[#allocation3 + $0x16] sm:$0x3]
    %v5675 = vld [vmem:[#allocation3 + $0x8] sm:$0xff]
    %v5676 = vld [vmem:[#allocation3 + $0x10] sm:$0xff]
    %v5677 = vld [vmem:[#allocation3 + $0x18] sm:$0x3]
    %v5681 = vcombine.high %v5672, %v5672
    %v5683 = vunpack.c.l.s4 1983009808
    %v5684 = vunpack.c.0.s8 %v5683
    %v5685 = vlaneseq
    %v5686 = vshrl.u32 %v5685, 7
    %v5687 = vsub.s32 %v5684, %v5686
    %v5688 = vrot.slane %v5672, %v5687
    %v5690 = vunpack.c.l.s4 1983009808
    %v5691 = vunpack.c.0.s8 %v5690
    %v5692 = vlaneseq
    %v5693 = vshrl.u32 %v5692, 7
    %v5694 = vsub.s32 %v5691, %v5693
    %v5695 = vrot.slane %v5681, %v5694
    %v5696 = vcombine.high %v5688, %v5688
    %v5697 = vcombine.high %v5695, %v5695
    %v5698 = vcombine.high %v5673, %v5673
    %v5700 = vunpack.c.l.s4 1983009808
    %v5701 = vunpack.c.0.s8 %v5700
    %v5702 = vlaneseq
    %v5703 = vshrl.u32 %v5702, 7
    %v5704 = vsub.s32 %v5701, %v5703
    %v5705 = vrot.slane %v5673, %v5704
    %v5707 = vunpack.c.l.s4 1983009808
    %v5708 = vunpack.c.0.s8 %v5707
    %v5709 = vlaneseq
    %v5710 = vshrl.u32 %v5709, 7
    %v5711 = vsub.s32 %v5708, %v5710
    %v5712 = vrot.slane %v5698, %v5711
    %v5713 = vcombine.high %v5705, %v5705
    %v5714 = vcombine.high %v5712, %v5712
    %v5716 = vunpack.c.l.s4 1983009808
    %v5717 = vunpack.c.0.s8 %v5716
    %v5718 = vlaneseq
    %v5719 = vshrl.u32 %v5718, 7
    %v5720 = vsub.s32 %v5717, %v5719
    %v5721 = vrot.slane %v5674, %v5720
    %v5722 = vcombine.low %v5672, %v5672
    %v5724 = vunpack.c.l.s4 1983009808
    %v5725 = vunpack.c.0.s8 %v5724
    %v5726 = vlaneseq
    %v5727 = vshrl.u32 %v5726, 7
    %v5728 = vsub.s32 %v5725, %v5727
    %v5729 = vrot.slane %v5722, %v5728
    %v5730 = vcombine.high %v5729, %v5729
    %v5731 = vcombine.low %v5673, %v5673
    %v5733 = vunpack.c.l.s4 1983009808
    %v5734 = vunpack.c.0.s8 %v5733
    %v5735 = vlaneseq
    %v5736 = vshrl.u32 %v5735, 7
    %v5737 = vsub.s32 %v5734, %v5736
    %v5738 = vrot.slane %v5731, %v5737
    %v5739 = vcombine.high %v5738, %v5738
    %v5740 = vcombine.low %v5674, %v5674
    %v5742 = vunpack.c.l.s4 1983009808
    %v5743 = vunpack.c.0.s8 %v5742
    %v5744 = vlaneseq
    %v5745 = vshrl.u32 %v5744, 7
    %v5746 = vsub.s32 %v5743, %v5745
    %v5747 = vrot.slane %v5740, %v5746
    %5748 = vrot.lane.b32.xlu0 %v5729, 97
    %v5749 = vpop.permute.xlu0 %5748
    %5750 = vrot.lane.b32.xlu0 %v5730, 97
    %v5751 = vpop.permute.xlu0 %5750
    %5752 = vrot.lane.b32.xlu0 %v5688, 97
    %v5753 = vpop.permute.xlu0 %5752
    %5754 = vrot.lane.b32.xlu0 %v5696, 97
    %v5755 = vpop.permute.xlu0 %5754
    %5756 = vrot.lane.b32.xlu0 %v5738, 97
    %v5757 = vpop.permute.xlu0 %5756
    %5758 = vrot.lane.b32.xlu0 %v5739, 97
    %v5759 = vpop.permute.xlu0 %5758
    %5760 = vrot.lane.b32.xlu0 %v5705, 97
    %v5761 = vpop.permute.xlu0 %5760
    %5762 = vrot.lane.b32.xlu0 %v5713, 97
    %v5763 = vpop.permute.xlu0 %5762
    %5764 = vrot.lane.b32.xlu0 %v5747, 97
    %v5765 = vpop.permute.xlu0 %5764
    %v5766 = vsel %vm1200, %v5749, %v5751
    %v5767 = vsel %vm1200, %v5751, %v5753
    %v5768 = vsel %vm1200, %v5753, %v5755
    %v5769 = vsel %vm1200, %v5755, %v5757
    %v5770 = vsel %vm1200, %v5757, %v5759
    %v5771 = vsel %vm1200, %v5759, %v5761
    %v5772 = vsel %vm1200, %v5761, %v5763
    %v5773 = vsel %vm1200, %v5763, %v5765
    %v5774 = vcombine.low %v5688, %v5688
    %v5775 = vcombine.low %v5695, %v5695
    %v5776 = vcombine.low %v5705, %v5705
    %v5777 = vcombine.low %v5712, %v5712
    %v5778 = vcombine.low %v5721, %v5721
    %5779 = vrot.lane.b32.xlu0 %v5774, 35
    %v5780 = vpop.permute.xlu0 %5779
    %5781 = vrot.lane.b32.xlu0 %v5688, 35
    %v5782 = vpop.permute.xlu0 %5781
    %5783 = vrot.lane.b32.xlu0 %v5775, 35
    %v5784 = vpop.permute.xlu0 %5783
    %5785 = vrot.lane.b32.xlu0 %v5695, 35
    %v5786 = vpop.permute.xlu0 %5785
    %5787 = vrot.lane.b32.xlu0 %v5776, 35
    %v5788 = vpop.permute.xlu0 %5787
    %5789 = vrot.lane.b32.xlu0 %v5705, 35
    %v5790 = vpop.permute.xlu0 %5789
    %5791 = vrot.lane.b32.xlu0 %v5777, 35
    %v5792 = vpop.permute.xlu0 %5791
    %5793 = vrot.lane.b32.xlu0 %v5712, 35
    %v5794 = vpop.permute.xlu0 %5793
    %5795 = vrot.lane.b32.xlu0 %v5778, 35
    %v5796 = vpop.permute.xlu0 %5795
    %vm5797 = vcmask 285696
    %v5798 = vsel %vm5797, %v5780, %v5782
    %v5799 = vsel %vm5797, %v5782, %v5784
    %v5800 = vsel %vm5797, %v5784, %v5786
    %v5801 = vsel %vm5797, %v5786, %v5788
    %v5802 = vsel %vm5797, %v5788, %v5790
    %v5803 = vsel %vm5797, %v5790, %v5792
    %v5804 = vsel %vm5797, %v5792, %v5794
    %v5805 = vsel %vm5797, %v5794, %v5796
    %v5809 = vcombine.low %v5675, %v5675
    %v5811 = vunpack.c.l.s4 1983009808
    %v5812 = vunpack.c.0.s8 %v5811
    %v5813 = vlaneseq
    %v5814 = vshrl.u32 %v5813, 7
    %v5815 = vsub.s32 %v5812, %v5814
    %v5816 = vrot.slane %v5809, %v5815
    %v5818 = vunpack.c.l.s4 1983009808
    %v5819 = vunpack.c.0.s8 %v5818
    %v5820 = vlaneseq
    %v5821 = vshrl.u32 %v5820, 7
    %v5822 = vsub.s32 %v5819, %v5821
    %v5823 = vrot.slane %v5675, %v5822
    %v5824 = vcombine.low %v5816, %v5816
    %v5825 = vcombine.low %v5823, %v5823
    %v5826 = vcombine.low %v5676, %v5676
    %v5828 = vunpack.c.l.s4 1983009808
    %v5829 = vunpack.c.0.s8 %v5828
    %v5830 = vlaneseq
    %v5831 = vshrl.u32 %v5830, 7
    %v5832 = vsub.s32 %v5829, %v5831
    %v5833 = vrot.slane %v5826, %v5832
    %v5835 = vunpack.c.l.s4 1983009808
    %v5836 = vunpack.c.0.s8 %v5835
    %v5837 = vlaneseq
    %v5838 = vshrl.u32 %v5837, 7
    %v5839 = vsub.s32 %v5836, %v5838
    %v5840 = vrot.slane %v5676, %v5839
    %v5841 = vcombine.low %v5833, %v5833
    %v5842 = vcombine.low %v5840, %v5840
    %v5843 = vcombine.low %v5677, %v5677
    %v5845 = vunpack.c.l.s4 1983009808
    %v5846 = vunpack.c.0.s8 %v5845
    %v5847 = vlaneseq
    %v5848 = vshrl.u32 %v5847, 7
    %v5849 = vsub.s32 %v5846, %v5848
    %v5850 = vrot.slane %v5843, %v5849
    %v5851 = vcombine.low %v5850, %v5850
    %5852 = vrot.lane.b32.xlu0 %v5824, 39
    %v5853 = vpop.permute.xlu0 %5852
    %5854 = vrot.lane.b32.xlu0 %v5816, 39
    %v5855 = vpop.permute.xlu0 %5854
    %5856 = vrot.lane.b32.xlu0 %v5825, 39
    %v5857 = vpop.permute.xlu0 %5856
    %5858 = vrot.lane.b32.xlu0 %v5823, 39
    %v5859 = vpop.permute.xlu0 %5858
    %5860 = vrot.lane.b32.xlu0 %v5841, 39
    %v5861 = vpop.permute.xlu0 %5860
    %5862 = vrot.lane.b32.xlu0 %v5833, 39
    %v5863 = vpop.permute.xlu0 %5862
    %5864 = vrot.lane.b32.xlu0 %v5842, 39
    %v5865 = vpop.permute.xlu0 %5864
    %5866 = vrot.lane.b32.xlu0 %v5840, 39
    %v5867 = vpop.permute.xlu0 %5866
    %5868 = vrot.lane.b32.xlu0 %v5851, 39
    %v5869 = vpop.permute.xlu0 %5868
    %vm5870 = vcmask 318464
    %v5871 = vsel %vm5870, %v5853, %v5855
    %v5872 = vsel %vm5870, %v5855, %v5857
    %v5873 = vsel %vm5870, %v5857, %v5859
    %v5874 = vsel %vm5870, %v5859, %v5861
    %v5875 = vsel %vm5870, %v5861, %v5863
    %v5876 = vsel %vm5870, %v5863, %v5865
    %v5877 = vsel %vm5870, %v5865, %v5867
    %v5878 = vsel %vm5870, %v5867, %v5869
    %v5881 = vsel %vm2615, %v5688, %v5766
    %v5884 = vsel %vm2615, %v5696, %v5767
    %v5887 = vsel %vm2615, %v5695, %v5768
    %v5890 = vsel %vm2615, %v5697, %v5769
    %v5893 = vsel %vm2615, %v5705, %v5770
    %v5896 = vsel %vm2615, %v5713, %v5771
    %v5899 = vsel %vm2615, %v5712, %v5772
    %v5902 = vsel %vm2615, %v5714, %v5773
    %v5905 = vsel %vm2615, %v5721, %v5765
    %v5907 = vsel %vm2643, %v5881, %v5798
    %v5909 = vsel %vm2643, %v5884, %v5799
    %v5911 = vsel %vm2643, %v5887, %v5800
    %v5913 = vsel %vm2643, %v5890, %v5801
    %v5915 = vsel %vm2643, %v5893, %v5802
    %v5917 = vsel %vm2643, %v5896, %v5803
    %v5919 = vsel %vm2643, %v5899, %v5804
    %v5921 = vsel %vm2643, %v5902, %v5805
    %v5923 = vsel %vm2643, %v5905, %v5796
    %v5925 = vsel %vm2662, %v5907, %v5871
    %v5927 = vsel %vm2662, %v5909, %v5872
    %v5929 = vsel %vm2662, %v5911, %v5873
    %v5931 = vsel %vm2662, %v5913, %v5874
    %v5933 = vsel %vm2662, %v5915, %v5875
    %v5935 = vsel %vm2662, %v5917, %v5876
    %v5937 = vsel %vm2662, %v5919, %v5877
    %v5939 = vsel %vm2662, %v5921, %v5878
    %v5941 = vsel %vm2662, %v5923, %v5869
    %5951 = vrot.lane.b32.xlu0 %v5925, 97
    %v5952 = vpop.permute.xlu0 %5951
    %5953 = vrot.lane.b32.xlu0 %v5927, 97
    %v5954 = vpop.permute.xlu0 %5953
    %5955 = vrot.lane.b32.xlu0 %v5929, 97
    %v5956 = vpop.permute.xlu0 %5955
    %5957 = vrot.lane.b32.xlu0 %v5931, 97
    %v5958 = vpop.permute.xlu0 %5957
    %5959 = vrot.lane.b32.xlu0 %v5933, 97
    %v5960 = vpop.permute.xlu0 %5959
    %5961 = vrot.lane.b32.xlu0 %v5935, 97
    %v5962 = vpop.permute.xlu0 %5961
    %5963 = vrot.lane.b32.xlu0 %v5937, 97
    %v5964 = vpop.permute.xlu0 %5963
    %5965 = vrot.lane.b32.xlu0 %v5939, 97
    %v5966 = vpop.permute.xlu0 %5965
    %5967 = vrot.lane.b32.xlu0 %v5941, 97
    %v5968 = vpop.permute.xlu0 %5967
    %v5969 = vsel %vm1200, %v5952, %v5954
    %v5970 = vsel %vm1200, %v5954, %v5956
    %v5971 = vsel %vm1200, %v5956, %v5958
    %v5972 = vsel %vm1200, %v5958, %v5960
    %v5973 = vsel %vm1200, %v5960, %v5962
    %v5974 = vsel %vm1200, %v5962, %v5964
    %v5975 = vsel %vm1200, %v5964, %v5966
    %v5976 = vsel %vm1200, %v5966, %v5968
    %5985 = vst [vmem:[#allocation2 + $0x300] sm:$0xff] %v5969
    %5986 = vst [vmem:[#allocation2 + $0x308] sm:$0xff] %v5970
    %5987 = vst [vmem:[#allocation2 + $0x310] sm:$0xff] %v5971
    %5988 = vst [vmem:[#allocation2 + $0x318] sm:$0xff] %v5972
    %5989 = vst [vmem:[#allocation2 + $0x320] sm:$0xff] %v5973
    %5990 = vst [vmem:[#allocation2 + $0x328] sm:$0xff] %v5974
    %5991 = vst [vmem:[#allocation2 + $0x330] sm:$0xff] %v5975
    %5992 = vst [vmem:[#allocation2 + $0x338] sm:$0xff] %v5976
    %v5993 = vld [vmem:[#allocation3 + $0x22] sm:$0xff]
    %v5994 = vld [vmem:[#allocation3 + $0x2a] sm:$0xff]
    %v5995 = vld [vmem:[#allocation3 + $0x32] sm:$0x3]
    %v5996 = vld [vmem:[#allocation3 + $0x24] sm:$0xff]
    %v5997 = vld [vmem:[#allocation3 + $0x2c] sm:$0xff]
    %v5998 = vld [vmem:[#allocation3 + $0x34] sm:$0x3]
    %v6002 = vcombine.high %v5993, %v5993
    %v6004 = vunpack.c.l.s4 1983009808
    %v6005 = vunpack.c.0.s8 %v6004
    %v6006 = vlaneseq
    %v6007 = vshrl.u32 %v6006, 7
    %v6008 = vsub.s32 %v6005, %v6007
    %v6009 = vrot.slane %v5993, %v6008
    %v6011 = vunpack.c.l.s4 1983009808
    %v6012 = vunpack.c.0.s8 %v6011
    %v6013 = vlaneseq
    %v6014 = vshrl.u32 %v6013, 7
    %v6015 = vsub.s32 %v6012, %v6014
    %v6016 = vrot.slane %v6002, %v6015
    %v6017 = vcombine.high %v6009, %v6009
    %v6018 = vcombine.high %v6016, %v6016
    %v6019 = vcombine.high %v5994, %v5994
    %v6021 = vunpack.c.l.s4 1983009808
    %v6022 = vunpack.c.0.s8 %v6021
    %v6023 = vlaneseq
    %v6024 = vshrl.u32 %v6023, 7
    %v6025 = vsub.s32 %v6022, %v6024
    %v6026 = vrot.slane %v5994, %v6025
    %v6028 = vunpack.c.l.s4 1983009808
    %v6029 = vunpack.c.0.s8 %v6028
    %v6030 = vlaneseq
    %v6031 = vshrl.u32 %v6030, 7
    %v6032 = vsub.s32 %v6029, %v6031
    %v6033 = vrot.slane %v6019, %v6032
    %v6034 = vcombine.high %v6026, %v6026
    %v6035 = vcombine.high %v6033, %v6033
    %v6037 = vunpack.c.l.s4 1983009808
    %v6038 = vunpack.c.0.s8 %v6037
    %v6039 = vlaneseq
    %v6040 = vshrl.u32 %v6039, 7
    %v6041 = vsub.s32 %v6038, %v6040
    %v6042 = vrot.slane %v5995, %v6041
    %v6043 = vcombine.low %v5993, %v5993
    %v6045 = vunpack.c.l.s4 1983009808
    %v6046 = vunpack.c.0.s8 %v6045
    %v6047 = vlaneseq
    %v6048 = vshrl.u32 %v6047, 7
    %v6049 = vsub.s32 %v6046, %v6048
    %v6050 = vrot.slane %v6043, %v6049
    %v6051 = vcombine.high %v6050, %v6050
    %v6052 = vcombine.low %v5994, %v5994
    %v6054 = vunpack.c.l.s4 1983009808
    %v6055 = vunpack.c.0.s8 %v6054
    %v6056 = vlaneseq
    %v6057 = vshrl.u32 %v6056, 7
    %v6058 = vsub.s32 %v6055, %v6057
    %v6059 = vrot.slane %v6052, %v6058
    %v6060 = vcombine.high %v6059, %v6059
    %v6061 = vcombine.low %v5995, %v5995
    %v6063 = vunpack.c.l.s4 1983009808
    %v6064 = vunpack.c.0.s8 %v6063
    %v6065 = vlaneseq
    %v6066 = vshrl.u32 %v6065, 7
    %v6067 = vsub.s32 %v6064, %v6066
    %v6068 = vrot.slane %v6061, %v6067
    %6069 = vrot.lane.b32.xlu0 %v6050, 97
    %v6070 = vpop.permute.xlu0 %6069
    %6071 = vrot.lane.b32.xlu0 %v6051, 97
    %v6072 = vpop.permute.xlu0 %6071
    %6073 = vrot.lane.b32.xlu0 %v6009, 97
    %v6074 = vpop.permute.xlu0 %6073
    %6075 = vrot.lane.b32.xlu0 %v6017, 97
    %v6076 = vpop.permute.xlu0 %6075
    %6077 = vrot.lane.b32.xlu0 %v6059, 97
    %v6078 = vpop.permute.xlu0 %6077
    %6079 = vrot.lane.b32.xlu0 %v6060, 97
    %v6080 = vpop.permute.xlu0 %6079
    %6081 = vrot.lane.b32.xlu0 %v6026, 97
    %v6082 = vpop.permute.xlu0 %6081
    %6083 = vrot.lane.b32.xlu0 %v6034, 97
    %v6084 = vpop.permute.xlu0 %6083
    %6085 = vrot.lane.b32.xlu0 %v6068, 97
    %v6086 = vpop.permute.xlu0 %6085
    %v6087 = vsel %vm1200, %v6070, %v6072
    %v6088 = vsel %vm1200, %v6072, %v6074
    %v6089 = vsel %vm1200, %v6074, %v6076
    %v6090 = vsel %vm1200, %v6076, %v6078
    %v6091 = vsel %vm1200, %v6078, %v6080
    %v6092 = vsel %vm1200, %v6080, %v6082
    %v6093 = vsel %vm1200, %v6082, %v6084
    %v6094 = vsel %vm1200, %v6084, %v6086
    %v6095 = vcombine.low %v6009, %v6009
    %v6096 = vcombine.low %v6016, %v6016
    %v6097 = vcombine.low %v6026, %v6026
    %v6098 = vcombine.low %v6033, %v6033
    %v6099 = vcombine.low %v6042, %v6042
    %6100 = vrot.lane.b32.xlu0 %v6095, 35
    %v6101 = vpop.permute.xlu0 %6100
    %6102 = vrot.lane.b32.xlu0 %v6009, 35
    %v6103 = vpop.permute.xlu0 %6102
    %6104 = vrot.lane.b32.xlu0 %v6096, 35
    %v6105 = vpop.permute.xlu0 %6104
    %6106 = vrot.lane.b32.xlu0 %v6016, 35
    %v6107 = vpop.permute.xlu0 %6106
    %6108 = vrot.lane.b32.xlu0 %v6097, 35
    %v6109 = vpop.permute.xlu0 %6108
    %6110 = vrot.lane.b32.xlu0 %v6026, 35
    %v6111 = vpop.permute.xlu0 %6110
    %6112 = vrot.lane.b32.xlu0 %v6098, 35
    %v6113 = vpop.permute.xlu0 %6112
    %6114 = vrot.lane.b32.xlu0 %v6033, 35
    %v6115 = vpop.permute.xlu0 %6114
    %6116 = vrot.lane.b32.xlu0 %v6099, 35
    %v6117 = vpop.permute.xlu0 %6116
    %v6118 = vsel %vm5797, %v6101, %v6103
    %v6119 = vsel %vm5797, %v6103, %v6105
    %v6120 = vsel %vm5797, %v6105, %v6107
    %v6121 = vsel %vm5797, %v6107, %v6109
    %v6122 = vsel %vm5797, %v6109, %v6111
    %v6123 = vsel %vm5797, %v6111, %v6113
    %v6124 = vsel %vm5797, %v6113, %v6115
    %v6125 = vsel %vm5797, %v6115, %v6117
    %v6129 = vcombine.low %v5996, %v5996
    %v6131 = vunpack.c.l.s4 1983009808
    %v6132 = vunpack.c.0.s8 %v6131
    %v6133 = vlaneseq
    %v6134 = vshrl.u32 %v6133, 7
    %v6135 = vsub.s32 %v6132, %v6134
    %v6136 = vrot.slane %v6129, %v6135
    %v6138 = vunpack.c.l.s4 1983009808
    %v6139 = vunpack.c.0.s8 %v6138
    %v6140 = vlaneseq
    %v6141 = vshrl.u32 %v6140, 7
    %v6142 = vsub.s32 %v6139, %v6141
    %v6143 = vrot.slane %v5996, %v6142
    %v6144 = vcombine.low %v6136, %v6136
    %v6145 = vcombine.low %v6143, %v6143
    %v6146 = vcombine.low %v5997, %v5997
    %v6148 = vunpack.c.l.s4 1983009808
    %v6149 = vunpack.c.0.s8 %v6148
    %v6150 = vlaneseq
    %v6151 = vshrl.u32 %v6150, 7
    %v6152 = vsub.s32 %v6149, %v6151
    %v6153 = vrot.slane %v6146, %v6152
    %v6155 = vunpack.c.l.s4 1983009808
    %v6156 = vunpack.c.0.s8 %v6155
    %v6157 = vlaneseq
    %v6158 = vshrl.u32 %v6157, 7
    %v6159 = vsub.s32 %v6156, %v6158
    %v6160 = vrot.slane %v5997, %v6159
    %v6161 = vcombine.low %v6153, %v6153
    %v6162 = vcombine.low %v6160, %v6160
    %v6163 = vcombine.low %v5998, %v5998
    %v6165 = vunpack.c.l.s4 1983009808
    %v6166 = vunpack.c.0.s8 %v6165
    %v6167 = vlaneseq
    %v6168 = vshrl.u32 %v6167, 7
    %v6169 = vsub.s32 %v6166, %v6168
    %v6170 = vrot.slane %v6163, %v6169
    %v6171 = vcombine.low %v6170, %v6170
    %6172 = vrot.lane.b32.xlu0 %v6144, 39
    %v6173 = vpop.permute.xlu0 %6172
    %6174 = vrot.lane.b32.xlu0 %v6136, 39
    %v6175 = vpop.permute.xlu0 %6174
    %6176 = vrot.lane.b32.xlu0 %v6145, 39
    %v6177 = vpop.permute.xlu0 %6176
    %6178 = vrot.lane.b32.xlu0 %v6143, 39
    %v6179 = vpop.permute.xlu0 %6178
    %6180 = vrot.lane.b32.xlu0 %v6161, 39
    %v6181 = vpop.permute.xlu0 %6180
    %6182 = vrot.lane.b32.xlu0 %v6153, 39
    %v6183 = vpop.permute.xlu0 %6182
    %6184 = vrot.lane.b32.xlu0 %v6162, 39
    %v6185 = vpop.permute.xlu0 %6184
    %6186 = vrot.lane.b32.xlu0 %v6160, 39
    %v6187 = vpop.permute.xlu0 %6186
    %6188 = vrot.lane.b32.xlu0 %v6171, 39
    %v6189 = vpop.permute.xlu0 %6188
    %v6190 = vsel %vm5870, %v6173, %v6175
    %v6191 = vsel %vm5870, %v6175, %v6177
    %v6192 = vsel %vm5870, %v6177, %v6179
    %v6193 = vsel %vm5870, %v6179, %v6181
    %v6194 = vsel %vm5870, %v6181, %v6183
    %v6195 = vsel %vm5870, %v6183, %v6185
    %v6196 = vsel %vm5870, %v6185, %v6187
    %v6197 = vsel %vm5870, %v6187, %v6189
    %v6200 = vsel %vm2615, %v6009, %v6087
    %v6203 = vsel %vm2615, %v6017, %v6088
    %v6206 = vsel %vm2615, %v6016, %v6089
    %v6209 = vsel %vm2615, %v6018, %v6090
    %v6212 = vsel %vm2615, %v6026, %v6091
    %v6215 = vsel %vm2615, %v6034, %v6092
    %v6218 = vsel %vm2615, %v6033, %v6093
    %v6221 = vsel %vm2615, %v6035, %v6094
    %v6224 = vsel %vm2615, %v6042, %v6086
    %v6226 = vsel %vm2643, %v6200, %v6118
    %v6228 = vsel %vm2643, %v6203, %v6119
    %v6230 = vsel %vm2643, %v6206, %v6120
    %v6232 = vsel %vm2643, %v6209, %v6121
    %v6234 = vsel %vm2643, %v6212, %v6122
    %v6236 = vsel %vm2643, %v6215, %v6123
    %v6238 = vsel %vm2643, %v6218, %v6124
    %v6240 = vsel %vm2643, %v6221, %v6125
    %v6242 = vsel %vm2643, %v6224, %v6117
    %v6244 = vsel %vm2662, %v6226, %v6190
    %v6246 = vsel %vm2662, %v6228, %v6191
    %v6248 = vsel %vm2662, %v6230, %v6192
    %v6250 = vsel %vm2662, %v6232, %v6193
    %v6252 = vsel %vm2662, %v6234, %v6194
    %v6254 = vsel %vm2662, %v6236, %v6195
    %v6256 = vsel %vm2662, %v6238, %v6196
    %v6258 = vsel %vm2662, %v6240, %v6197
    %v6260 = vsel %vm2662, %v6242, %v6189
    %6270 = vrot.lane.b32.xlu0 %v6244, 97
    %v6271 = vpop.permute.xlu0 %6270
    %6272 = vrot.lane.b32.xlu0 %v6246, 97
    %v6273 = vpop.permute.xlu0 %6272
    %6274 = vrot.lane.b32.xlu0 %v6248, 97
    %v6275 = vpop.permute.xlu0 %6274
    %6276 = vrot.lane.b32.xlu0 %v6250, 97
    %v6277 = vpop.permute.xlu0 %6276
    %6278 = vrot.lane.b32.xlu0 %v6252, 97
    %v6279 = vpop.permute.xlu0 %6278
    %6280 = vrot.lane.b32.xlu0 %v6254, 97
    %v6281 = vpop.permute.xlu0 %6280
    %6282 = vrot.lane.b32.xlu0 %v6256, 97
    %v6283 = vpop.permute.xlu0 %6282
    %6284 = vrot.lane.b32.xlu0 %v6258, 97
    %v6285 = vpop.permute.xlu0 %6284
    %6286 = vrot.lane.b32.xlu0 %v6260, 97
    %v6287 = vpop.permute.xlu0 %6286
    %v6288 = vsel %vm1200, %v6271, %v6273
    %v6289 = vsel %vm1200, %v6273, %v6275
    %v6290 = vsel %vm1200, %v6275, %v6277
    %v6291 = vsel %vm1200, %v6277, %v6279
    %v6292 = vsel %vm1200, %v6279, %v6281
    %v6293 = vsel %vm1200, %v6281, %v6283
    %v6294 = vsel %vm1200, %v6283, %v6285
    %v6295 = vsel %vm1200, %v6285, %v6287
    %6304 = vst [vmem:[#allocation2 + $0x340] sm:$0xff] %v6288
    %6305 = vst [vmem:[#allocation2 + $0x348] sm:$0xff] %v6289
    %6306 = vst [vmem:[#allocation2 + $0x350] sm:$0xff] %v6290
    %6307 = vst [vmem:[#allocation2 + $0x358] sm:$0xff] %v6291
    %6308 = vst [vmem:[#allocation2 + $0x360] sm:$0xff] %v6292
    %6309 = vst [vmem:[#allocation2 + $0x368] sm:$0xff] %v6293
    %6310 = vst [vmem:[#allocation2 + $0x370] sm:$0xff] %v6294
    %6311 = vst [vmem:[#allocation2 + $0x378] sm:$0xff] %v6295
    %v6312 = vld [vmem:[#allocation3 + $0x6] sm:$0xff]
    %v6313 = vld [vmem:[#allocation3 + $0xe] sm:$0xff]
    %v6314 = vld [vmem:[#allocation3 + $0x16] sm:$0x3]
    %v6315 = vld [vmem:[#allocation3 + $0x8] sm:$0xff]
    %v6316 = vld [vmem:[#allocation3 + $0x10] sm:$0xff]
    %v6317 = vld [vmem:[#allocation3 + $0xa] sm:$0xff]
    %v6318 = vld [vmem:[#allocation3 + $0x12] sm:$0xff]
    %v6322 = vcombine.high %v6312, %v6312
    %v6324 = vunpack.c.l.s4 1983009808
    %v6325 = vunpack.c.0.s8 %v6324
    %v6326 = vlaneseq
    %v6327 = vshrl.u32 %v6326, 7
    %v6328 = vsub.s32 %v6325, %v6327
    %v6329 = vrot.slane %v6312, %v6328
    %v6331 = vunpack.c.l.s4 1983009808
    %v6332 = vunpack.c.0.s8 %v6331
    %v6333 = vlaneseq
    %v6334 = vshrl.u32 %v6333, 7
    %v6335 = vsub.s32 %v6332, %v6334
    %v6336 = vrot.slane %v6322, %v6335
    %v6337 = vcombine.high %v6329, %v6329
    %v6338 = vcombine.high %v6336, %v6336
    %v6339 = vcombine.high %v6313, %v6313
    %v6341 = vunpack.c.l.s4 1983009808
    %v6342 = vunpack.c.0.s8 %v6341
    %v6343 = vlaneseq
    %v6344 = vshrl.u32 %v6343, 7
    %v6345 = vsub.s32 %v6342, %v6344
    %v6346 = vrot.slane %v6313, %v6345
    %v6348 = vunpack.c.l.s4 1983009808
    %v6349 = vunpack.c.0.s8 %v6348
    %v6350 = vlaneseq
    %v6351 = vshrl.u32 %v6350, 7
    %v6352 = vsub.s32 %v6349, %v6351
    %v6353 = vrot.slane %v6339, %v6352
    %v6354 = vcombine.high %v6346, %v6346
    %v6355 = vcombine.high %v6353, %v6353
    %v6357 = vunpack.c.l.s4 1983009808
    %v6358 = vunpack.c.0.s8 %v6357
    %v6359 = vlaneseq
    %v6360 = vshrl.u32 %v6359, 7
    %v6361 = vsub.s32 %v6358, %v6360
    %v6362 = vrot.slane %v6314, %v6361
    %v6363 = vcombine.low %v6312, %v6312
    %v6365 = vunpack.c.l.s4 1983009808
    %v6366 = vunpack.c.0.s8 %v6365
    %v6367 = vlaneseq
    %v6368 = vshrl.u32 %v6367, 7
    %v6369 = vsub.s32 %v6366, %v6368
    %v6370 = vrot.slane %v6363, %v6369
    %v6371 = vcombine.high %v6370, %v6370
    %v6372 = vcombine.low %v6313, %v6313
    %v6374 = vunpack.c.l.s4 1983009808
    %v6375 = vunpack.c.0.s8 %v6374
    %v6376 = vlaneseq
    %v6377 = vshrl.u32 %v6376, 7
    %v6378 = vsub.s32 %v6375, %v6377
    %v6379 = vrot.slane %v6372, %v6378
    %v6380 = vcombine.high %v6379, %v6379
    %v6381 = vcombine.low %v6314, %v6314
    %v6383 = vunpack.c.l.s4 1983009808
    %v6384 = vunpack.c.0.s8 %v6383
    %v6385 = vlaneseq
    %v6386 = vshrl.u32 %v6385, 7
    %v6387 = vsub.s32 %v6384, %v6386
    %v6388 = vrot.slane %v6381, %v6387
    %6389 = vrot.lane.b32.xlu0 %v6370, 96
    %v6390 = vpop.permute.xlu0 %6389
    %6391 = vrot.lane.b32.xlu0 %v6371, 96
    %v6392 = vpop.permute.xlu0 %6391
    %6393 = vrot.lane.b32.xlu0 %v6329, 96
    %v6394 = vpop.permute.xlu0 %6393
    %6395 = vrot.lane.b32.xlu0 %v6337, 96
    %v6396 = vpop.permute.xlu0 %6395
    %6397 = vrot.lane.b32.xlu0 %v6379, 96
    %v6398 = vpop.permute.xlu0 %6397
    %6399 = vrot.lane.b32.xlu0 %v6380, 96
    %v6400 = vpop.permute.xlu0 %6399
    %6401 = vrot.lane.b32.xlu0 %v6346, 96
    %v6402 = vpop.permute.xlu0 %6401
    %6403 = vrot.lane.b32.xlu0 %v6354, 96
    %v6404 = vpop.permute.xlu0 %6403
    %6405 = vrot.lane.b32.xlu0 %v6388, 96
    %v6406 = vpop.permute.xlu0 %6405
    %v6407 = vsel %vm1379, %v6390, %v6392
    %v6408 = vsel %vm1379, %v6392, %v6394
    %v6409 = vsel %vm1379, %v6394, %v6396
    %v6410 = vsel %vm1379, %v6396, %v6398
    %v6411 = vsel %vm1379, %v6398, %v6400
    %v6412 = vsel %vm1379, %v6400, %v6402
    %v6413 = vsel %vm1379, %v6402, %v6404
    %v6414 = vsel %vm1379, %v6404, %v6406
    %v6417 = vcombine.high %v6315, %v6315
    %v6419 = vunpack.c.l.s4 1983009808
    %v6420 = vunpack.c.0.s8 %v6419
    %v6421 = vlaneseq
    %v6422 = vshrl.u32 %v6421, 7
    %v6423 = vsub.s32 %v6420, %v6422
    %v6424 = vrot.slane %v6315, %v6423
    %v6426 = vunpack.c.l.s4 1983009808
    %v6427 = vunpack.c.0.s8 %v6426
    %v6428 = vlaneseq
    %v6429 = vshrl.u32 %v6428, 7
    %v6430 = vsub.s32 %v6427, %v6429
    %v6431 = vrot.slane %v6417, %v6430
    %v6432 = vcombine.low %v6424, %v6424
    %v6433 = vcombine.low %v6431, %v6431
    %v6434 = vcombine.high %v6316, %v6316
    %v6436 = vunpack.c.l.s4 1983009808
    %v6437 = vunpack.c.0.s8 %v6436
    %v6438 = vlaneseq
    %v6439 = vshrl.u32 %v6438, 7
    %v6440 = vsub.s32 %v6437, %v6439
    %v6441 = vrot.slane %v6316, %v6440
    %v6443 = vunpack.c.l.s4 1983009808
    %v6444 = vunpack.c.0.s8 %v6443
    %v6445 = vlaneseq
    %v6446 = vshrl.u32 %v6445, 7
    %v6447 = vsub.s32 %v6444, %v6446
    %v6448 = vrot.slane %v6434, %v6447
    %v6449 = vcombine.low %v6441, %v6441
    %v6450 = vcombine.low %v6448, %v6448
    %6451 = vrot.lane.b32.xlu0 %v6432, 32
    %v6452 = vpop.permute.xlu0 %6451
    %6453 = vrot.lane.b32.xlu0 %v6424, 32
    %v6454 = vpop.permute.xlu0 %6453
    %6455 = vrot.lane.b32.xlu0 %v6433, 32
    %v6456 = vpop.permute.xlu0 %6455
    %6457 = vrot.lane.b32.xlu0 %v6431, 32
    %v6458 = vpop.permute.xlu0 %6457
    %6459 = vrot.lane.b32.xlu0 %v6449, 32
    %v6460 = vpop.permute.xlu0 %6459
    %6461 = vrot.lane.b32.xlu0 %v6441, 32
    %v6462 = vpop.permute.xlu0 %6461
    %6463 = vrot.lane.b32.xlu0 %v6450, 32
    %v6464 = vpop.permute.xlu0 %6463
    %6465 = vrot.lane.b32.xlu0 %v6448, 32
    %v6466 = vpop.permute.xlu0 %6465
    %v6467 = vsel %vm372, %v6452, %v6454
    %v6468 = vsel %vm372, %v6454, %v6456
    %v6469 = vsel %vm372, %v6456, %v6458
    %v6470 = vsel %vm372, %v6458, %v6460
    %v6471 = vsel %vm372, %v6460, %v6462
    %v6472 = vsel %vm372, %v6462, %v6464
    %v6473 = vsel %vm372, %v6464, %v6466
    %v6476 = vcombine.low %v6317, %v6317
    %v6478 = vunpack.c.l.s4 1983009808
    %v6479 = vunpack.c.0.s8 %v6478
    %v6480 = vlaneseq
    %v6481 = vshrl.u32 %v6480, 7
    %v6482 = vsub.s32 %v6479, %v6481
    %v6483 = vrot.slane %v6476, %v6482
    %v6485 = vunpack.c.l.s4 1983009808
    %v6486 = vunpack.c.0.s8 %v6485
    %v6487 = vlaneseq
    %v6488 = vshrl.u32 %v6487, 7
    %v6489 = vsub.s32 %v6486, %v6488
    %v6490 = vrot.slane %v6317, %v6489
    %v6491 = vcombine.low %v6483, %v6483
    %v6492 = vcombine.low %v6490, %v6490
    %v6493 = vcombine.low %v6318, %v6318
    %v6495 = vunpack.c.l.s4 1983009808
    %v6496 = vunpack.c.0.s8 %v6495
    %v6497 = vlaneseq
    %v6498 = vshrl.u32 %v6497, 7
    %v6499 = vsub.s32 %v6496, %v6498
    %v6500 = vrot.slane %v6493, %v6499
    %v6502 = vunpack.c.l.s4 1983009808
    %v6503 = vunpack.c.0.s8 %v6502
    %v6504 = vlaneseq
    %v6505 = vshrl.u32 %v6504, 7
    %v6506 = vsub.s32 %v6503, %v6505
    %v6507 = vrot.slane %v6318, %v6506
    %v6508 = vcombine.low %v6500, %v6500
    %v6509 = vcombine.low %v6507, %v6507
    %6510 = vrot.lane.b32.xlu0 %v6491, 32
    %v6511 = vpop.permute.xlu0 %6510
    %6512 = vrot.lane.b32.xlu0 %v6483, 32
    %v6513 = vpop.permute.xlu0 %6512
    %6514 = vrot.lane.b32.xlu0 %v6492, 32
    %v6515 = vpop.permute.xlu0 %6514
    %6516 = vrot.lane.b32.xlu0 %v6490, 32
    %v6517 = vpop.permute.xlu0 %6516
    %6518 = vrot.lane.b32.xlu0 %v6508, 32
    %v6519 = vpop.permute.xlu0 %6518
    %6520 = vrot.lane.b32.xlu0 %v6500, 32
    %v6521 = vpop.permute.xlu0 %6520
    %6522 = vrot.lane.b32.xlu0 %v6509, 32
    %v6523 = vpop.permute.xlu0 %6522
    %6524 = vrot.lane.b32.xlu0 %v6507, 32
    %v6525 = vpop.permute.xlu0 %6524
    %v6526 = vsel %vm372, %v6511, %v6513
    %v6527 = vsel %vm372, %v6513, %v6515
    %v6528 = vsel %vm372, %v6515, %v6517
    %v6529 = vsel %vm372, %v6517, %v6519
    %v6530 = vsel %vm372, %v6519, %v6521
    %v6531 = vsel %vm372, %v6521, %v6523
    %v6532 = vsel %vm372, %v6523, %v6525
    %v6535 = vsel %vm2615, %v6329, %v6407
    %v6538 = vsel %vm2615, %v6337, %v6408
    %v6541 = vsel %vm2615, %v6336, %v6409
    %v6544 = vsel %vm2615, %v6338, %v6410
    %v6547 = vsel %vm2615, %v6346, %v6411
    %v6550 = vsel %vm2615, %v6354, %v6412
    %v6553 = vsel %vm2615, %v6353, %v6413
    %v6556 = vsel %vm2615, %v6355, %v6414
    %v6559 = vsel %vm2615, %v6362, %v6406
    %v6561 = vsel %vm2643, %v6535, %v6452
    %v6563 = vsel %vm2643, %v6538, %v6467
    %v6565 = vsel %vm2643, %v6541, %v6468
    %v6567 = vsel %vm2643, %v6544, %v6469
    %v6569 = vsel %vm2643, %v6547, %v6470
    %v6571 = vsel %vm2643, %v6550, %v6471
    %v6573 = vsel %vm2643, %v6553, %v6472
    %v6575 = vsel %vm2643, %v6556, %v6473
    %v6577 = vsel %vm2643, %v6559, %v6466
    %v6579 = vsel %vm2662, %v6561, %v6511
    %v6581 = vsel %vm2662, %v6563, %v6526
    %v6583 = vsel %vm2662, %v6565, %v6527
    %v6585 = vsel %vm2662, %v6567, %v6528
    %v6587 = vsel %vm2662, %v6569, %v6529
    %v6589 = vsel %vm2662, %v6571, %v6530
    %v6591 = vsel %vm2662, %v6573, %v6531
    %v6593 = vsel %vm2662, %v6575, %v6532
    %v6595 = vsel %vm2662, %v6577, %v6525
    %6605 = vrot.lane.b32.xlu0 %v6579, 96
    %v6606 = vpop.permute.xlu0 %6605
    %6607 = vrot.lane.b32.xlu0 %v6581, 96
    %v6608 = vpop.permute.xlu0 %6607
    %6609 = vrot.lane.b32.xlu0 %v6583, 96
    %v6610 = vpop.permute.xlu0 %6609
    %6611 = vrot.lane.b32.xlu0 %v6585, 96
    %v6612 = vpop.permute.xlu0 %6611
    %6613 = vrot.lane.b32.xlu0 %v6587, 96
    %v6614 = vpop.permute.xlu0 %6613
    %6615 = vrot.lane.b32.xlu0 %v6589, 96
    %v6616 = vpop.permute.xlu0 %6615
    %6617 = vrot.lane.b32.xlu0 %v6591, 96
    %v6618 = vpop.permute.xlu0 %6617
    %6619 = vrot.lane.b32.xlu0 %v6593, 96
    %v6620 = vpop.permute.xlu0 %6619
    %6621 = vrot.lane.b32.xlu0 %v6595, 96
    %v6622 = vpop.permute.xlu0 %6621
    %v6623 = vsel %vm1379, %v6606, %v6608
    %v6624 = vsel %vm1379, %v6608, %v6610
    %v6625 = vsel %vm1379, %v6610, %v6612
    %v6626 = vsel %vm1379, %v6612, %v6614
    %v6627 = vsel %vm1379, %v6614, %v6616
    %v6628 = vsel %vm1379, %v6616, %v6618
    %v6629 = vsel %vm1379, %v6618, %v6620
    %v6630 = vsel %vm1379, %v6620, %v6622
    %6639 = vst [vmem:[#allocation2 + $0x380] sm:$0xff] %v6623
    %6640 = vst [vmem:[#allocation2 + $0x388] sm:$0xff] %v6624
    %6641 = vst [vmem:[#allocation2 + $0x390] sm:$0xff] %v6625
    %6642 = vst [vmem:[#allocation2 + $0x398] sm:$0xff] %v6626
    %6643 = vst [vmem:[#allocation2 + $0x3a0] sm:$0xff] %v6627
    %6644 = vst [vmem:[#allocation2 + $0x3a8] sm:$0xff] %v6628
    %6645 = vst [vmem:[#allocation2 + $0x3b0] sm:$0xff] %v6629
    %6646 = vst [vmem:[#allocation2 + $0x3b8] sm:$0xff] %v6630
    %v6647 = vld [vmem:[#allocation3 + $0x22] sm:$0xff]
    %v6648 = vld [vmem:[#allocation3 + $0x2a] sm:$0xff]
    %v6649 = vld [vmem:[#allocation3 + $0x32] sm:$0x3]
    %v6650 = vld [vmem:[#allocation3 + $0x24] sm:$0xff]
    %v6651 = vld [vmem:[#allocation3 + $0x2c] sm:$0xff]
    %v6652 = vld [vmem:[#allocation3 + $0x26] sm:$0xff]
    %v6653 = vld [vmem:[#allocation3 + $0x2e] sm:$0xff]
    %v6657 = vcombine.high %v6647, %v6647
    %v6659 = vunpack.c.l.s4 1983009808
    %v6660 = vunpack.c.0.s8 %v6659
    %v6661 = vlaneseq
    %v6662 = vshrl.u32 %v6661, 7
    %v6663 = vsub.s32 %v6660, %v6662
    %v6664 = vrot.slane %v6647, %v6663
    %v6666 = vunpack.c.l.s4 1983009808
    %v6667 = vunpack.c.0.s8 %v6666
    %v6668 = vlaneseq
    %v6669 = vshrl.u32 %v6668, 7
    %v6670 = vsub.s32 %v6667, %v6669
    %v6671 = vrot.slane %v6657, %v6670
    %v6672 = vcombine.high %v6664, %v6664
    %v6673 = vcombine.high %v6671, %v6671
    %v6674 = vcombine.high %v6648, %v6648
    %v6676 = vunpack.c.l.s4 1983009808
    %v6677 = vunpack.c.0.s8 %v6676
    %v6678 = vlaneseq
    %v6679 = vshrl.u32 %v6678, 7
    %v6680 = vsub.s32 %v6677, %v6679
    %v6681 = vrot.slane %v6648, %v6680
    %v6683 = vunpack.c.l.s4 1983009808
    %v6684 = vunpack.c.0.s8 %v6683
    %v6685 = vlaneseq
    %v6686 = vshrl.u32 %v6685, 7
    %v6687 = vsub.s32 %v6684, %v6686
    %v6688 = vrot.slane %v6674, %v6687
    %v6689 = vcombine.high %v6681, %v6681
    %v6690 = vcombine.high %v6688, %v6688
    %v6692 = vunpack.c.l.s4 1983009808
    %v6693 = vunpack.c.0.s8 %v6692
    %v6694 = vlaneseq
    %v6695 = vshrl.u32 %v6694, 7
    %v6696 = vsub.s32 %v6693, %v6695
    %v6697 = vrot.slane %v6649, %v6696
    %v6698 = vcombine.low %v6647, %v6647
    %v6700 = vunpack.c.l.s4 1983009808
    %v6701 = vunpack.c.0.s8 %v6700
    %v6702 = vlaneseq
    %v6703 = vshrl.u32 %v6702, 7
    %v6704 = vsub.s32 %v6701, %v6703
    %v6705 = vrot.slane %v6698, %v6704
    %v6706 = vcombine.high %v6705, %v6705
    %v6707 = vcombine.low %v6648, %v6648
    %v6709 = vunpack.c.l.s4 1983009808
    %v6710 = vunpack.c.0.s8 %v6709
    %v6711 = vlaneseq
    %v6712 = vshrl.u32 %v6711, 7
    %v6713 = vsub.s32 %v6710, %v6712
    %v6714 = vrot.slane %v6707, %v6713
    %v6715 = vcombine.high %v6714, %v6714
    %v6716 = vcombine.low %v6649, %v6649
    %v6718 = vunpack.c.l.s4 1983009808
    %v6719 = vunpack.c.0.s8 %v6718
    %v6720 = vlaneseq
    %v6721 = vshrl.u32 %v6720, 7
    %v6722 = vsub.s32 %v6719, %v6721
    %v6723 = vrot.slane %v6716, %v6722
    %6724 = vrot.lane.b32.xlu0 %v6705, 96
    %v6725 = vpop.permute.xlu0 %6724
    %6726 = vrot.lane.b32.xlu0 %v6706, 96
    %v6727 = vpop.permute.xlu0 %6726
    %6728 = vrot.lane.b32.xlu0 %v6664, 96
    %v6729 = vpop.permute.xlu0 %6728
    %6730 = vrot.lane.b32.xlu0 %v6672, 96
    %v6731 = vpop.permute.xlu0 %6730
    %6732 = vrot.lane.b32.xlu0 %v6714, 96
    %v6733 = vpop.permute.xlu0 %6732
    %6734 = vrot.lane.b32.xlu0 %v6715, 96
    %v6735 = vpop.permute.xlu0 %6734
    %6736 = vrot.lane.b32.xlu0 %v6681, 96
    %v6737 = vpop.permute.xlu0 %6736
    %6738 = vrot.lane.b32.xlu0 %v6689, 96
    %v6739 = vpop.permute.xlu0 %6738
    %6740 = vrot.lane.b32.xlu0 %v6723, 96
    %v6741 = vpop.permute.xlu0 %6740
    %v6742 = vsel %vm1379, %v6725, %v6727
    %v6743 = vsel %vm1379, %v6727, %v6729
    %v6744 = vsel %vm1379, %v6729, %v6731
    %v6745 = vsel %vm1379, %v6731, %v6733
    %v6746 = vsel %vm1379, %v6733, %v6735
    %v6747 = vsel %vm1379, %v6735, %v6737
    %v6748 = vsel %vm1379, %v6737, %v6739
    %v6749 = vsel %vm1379, %v6739, %v6741
    %v6752 = vcombine.high %v6650, %v6650
    %v6754 = vunpack.c.l.s4 1983009808
    %v6755 = vunpack.c.0.s8 %v6754
    %v6756 = vlaneseq
    %v6757 = vshrl.u32 %v6756, 7
    %v6758 = vsub.s32 %v6755, %v6757
    %v6759 = vrot.slane %v6650, %v6758
    %v6761 = vunpack.c.l.s4 1983009808
    %v6762 = vunpack.c.0.s8 %v6761
    %v6763 = vlaneseq
    %v6764 = vshrl.u32 %v6763, 7
    %v6765 = vsub.s32 %v6762, %v6764
    %v6766 = vrot.slane %v6752, %v6765
    %v6767 = vcombine.low %v6759, %v6759
    %v6768 = vcombine.low %v6766, %v6766
    %v6769 = vcombine.high %v6651, %v6651
    %v6771 = vunpack.c.l.s4 1983009808
    %v6772 = vunpack.c.0.s8 %v6771
    %v6773 = vlaneseq
    %v6774 = vshrl.u32 %v6773, 7
    %v6775 = vsub.s32 %v6772, %v6774
    %v6776 = vrot.slane %v6651, %v6775
    %v6778 = vunpack.c.l.s4 1983009808
    %v6779 = vunpack.c.0.s8 %v6778
    %v6780 = vlaneseq
    %v6781 = vshrl.u32 %v6780, 7
    %v6782 = vsub.s32 %v6779, %v6781
    %v6783 = vrot.slane %v6769, %v6782
    %v6784 = vcombine.low %v6776, %v6776
    %v6785 = vcombine.low %v6783, %v6783
    %6786 = vrot.lane.b32.xlu0 %v6767, 32
    %v6787 = vpop.permute.xlu0 %6786
    %6788 = vrot.lane.b32.xlu0 %v6759, 32
    %v6789 = vpop.permute.xlu0 %6788
    %6790 = vrot.lane.b32.xlu0 %v6768, 32
    %v6791 = vpop.permute.xlu0 %6790
    %6792 = vrot.lane.b32.xlu0 %v6766, 32
    %v6793 = vpop.permute.xlu0 %6792
    %6794 = vrot.lane.b32.xlu0 %v6784, 32
    %v6795 = vpop.permute.xlu0 %6794
    %6796 = vrot.lane.b32.xlu0 %v6776, 32
    %v6797 = vpop.permute.xlu0 %6796
    %6798 = vrot.lane.b32.xlu0 %v6785, 32
    %v6799 = vpop.permute.xlu0 %6798
    %6800 = vrot.lane.b32.xlu0 %v6783, 32
    %v6801 = vpop.permute.xlu0 %6800
    %v6802 = vsel %vm372, %v6787, %v6789
    %v6803 = vsel %vm372, %v6789, %v6791
    %v6804 = vsel %vm372, %v6791, %v6793
    %v6805 = vsel %vm372, %v6793, %v6795
    %v6806 = vsel %vm372, %v6795, %v6797
    %v6807 = vsel %vm372, %v6797, %v6799
    %v6808 = vsel %vm372, %v6799, %v6801
    %v6811 = vcombine.low %v6652, %v6652
    %v6813 = vunpack.c.l.s4 1983009808
    %v6814 = vunpack.c.0.s8 %v6813
    %v6815 = vlaneseq
    %v6816 = vshrl.u32 %v6815, 7
    %v6817 = vsub.s32 %v6814, %v6816
    %v6818 = vrot.slane %v6811, %v6817
    %v6820 = vunpack.c.l.s4 1983009808
    %v6821 = vunpack.c.0.s8 %v6820
    %v6822 = vlaneseq
    %v6823 = vshrl.u32 %v6822, 7
    %v6824 = vsub.s32 %v6821, %v6823
    %v6825 = vrot.slane %v6652, %v6824
    %v6826 = vcombine.low %v6818, %v6818
    %v6827 = vcombine.low %v6825, %v6825
    %v6828 = vcombine.low %v6653, %v6653
    %v6830 = vunpack.c.l.s4 1983009808
    %v6831 = vunpack.c.0.s8 %v6830
    %v6832 = vlaneseq
    %v6833 = vshrl.u32 %v6832, 7
    %v6834 = vsub.s32 %v6831, %v6833
    %v6835 = vrot.slane %v6828, %v6834
    %v6837 = vunpack.c.l.s4 1983009808
    %v6838 = vunpack.c.0.s8 %v6837
    %v6839 = vlaneseq
    %v6840 = vshrl.u32 %v6839, 7
    %v6841 = vsub.s32 %v6838, %v6840
    %v6842 = vrot.slane %v6653, %v6841
    %v6843 = vcombine.low %v6835, %v6835
    %v6844 = vcombine.low %v6842, %v6842
    %6845 = vrot.lane.b32.xlu0 %v6826, 32
    %v6846 = vpop.permute.xlu0 %6845
    %6847 = vrot.lane.b32.xlu0 %v6818, 32
    %v6848 = vpop.permute.xlu0 %6847
    %6849 = vrot.lane.b32.xlu0 %v6827, 32
    %v6850 = vpop.permute.xlu0 %6849
    %6851 = vrot.lane.b32.xlu0 %v6825, 32
    %v6852 = vpop.permute.xlu0 %6851
    %6853 = vrot.lane.b32.xlu0 %v6843, 32
    %v6854 = vpop.permute.xlu0 %6853
    %6855 = vrot.lane.b32.xlu0 %v6835, 32
    %v6856 = vpop.permute.xlu0 %6855
    %6857 = vrot.lane.b32.xlu0 %v6844, 32
    %v6858 = vpop.permute.xlu0 %6857
    %6859 = vrot.lane.b32.xlu0 %v6842, 32
    %v6860 = vpop.permute.xlu0 %6859
    %v6861 = vsel %vm372, %v6846, %v6848
    %v6862 = vsel %vm372, %v6848, %v6850
    %v6863 = vsel %vm372, %v6850, %v6852
    %v6864 = vsel %vm372, %v6852, %v6854
    %v6865 = vsel %vm372, %v6854, %v6856
    %v6866 = vsel %vm372, %v6856, %v6858
    %v6867 = vsel %vm372, %v6858, %v6860
    %v6870 = vsel %vm2615, %v6664, %v6742
    %v6873 = vsel %vm2615, %v6672, %v6743
    %v6876 = vsel %vm2615, %v6671, %v6744
    %v6879 = vsel %vm2615, %v6673, %v6745
    %v6882 = vsel %vm2615, %v6681, %v6746
    %v6885 = vsel %vm2615, %v6689, %v6747
    %v6888 = vsel %vm2615, %v6688, %v6748
    %v6891 = vsel %vm2615, %v6690, %v6749
    %v6894 = vsel %vm2615, %v6697, %v6741
    %v6896 = vsel %vm2643, %v6870, %v6787
    %v6898 = vsel %vm2643, %v6873, %v6802
    %v6900 = vsel %vm2643, %v6876, %v6803
    %v6902 = vsel %vm2643, %v6879, %v6804
    %v6904 = vsel %vm2643, %v6882, %v6805
    %v6906 = vsel %vm2643, %v6885, %v6806
    %v6908 = vsel %vm2643, %v6888, %v6807
    %v6910 = vsel %vm2643, %v6891, %v6808
    %v6912 = vsel %vm2643, %v6894, %v6801
    %v6914 = vsel %vm2662, %v6896, %v6846
    %v6916 = vsel %vm2662, %v6898, %v6861
    %v6918 = vsel %vm2662, %v6900, %v6862
    %v6920 = vsel %vm2662, %v6902, %v6863
    %v6922 = vsel %vm2662, %v6904, %v6864
    %v6924 = vsel %vm2662, %v6906, %v6865
    %v6926 = vsel %vm2662, %v6908, %v6866
    %v6928 = vsel %vm2662, %v6910, %v6867
    %v6930 = vsel %vm2662, %v6912, %v6860
    %6940 = vrot.lane.b32.xlu0 %v6914, 96
    %v6941 = vpop.permute.xlu0 %6940
    %6942 = vrot.lane.b32.xlu0 %v6916, 96
    %v6943 = vpop.permute.xlu0 %6942
    %6944 = vrot.lane.b32.xlu0 %v6918, 96
    %v6945 = vpop.permute.xlu0 %6944
    %6946 = vrot.lane.b32.xlu0 %v6920, 96
    %v6947 = vpop.permute.xlu0 %6946
    %6948 = vrot.lane.b32.xlu0 %v6922, 96
    %v6949 = vpop.permute.xlu0 %6948
    %6950 = vrot.lane.b32.xlu0 %v6924, 96
    %v6951 = vpop.permute.xlu0 %6950
    %6952 = vrot.lane.b32.xlu0 %v6926, 96
    %v6953 = vpop.permute.xlu0 %6952
    %6954 = vrot.lane.b32.xlu0 %v6928, 96
    %v6955 = vpop.permute.xlu0 %6954
    %6956 = vrot.lane.b32.xlu0 %v6930, 96
    %v6957 = vpop.permute.xlu0 %6956
    %v6958 = vsel %vm1379, %v6941, %v6943
    %v6959 = vsel %vm1379, %v6943, %v6945
    %v6960 = vsel %vm1379, %v6945, %v6947
    %v6961 = vsel %vm1379, %v6947, %v6949
    %v6962 = vsel %vm1379, %v6949, %v6951
    %v6963 = vsel %vm1379, %v6951, %v6953
    %v6964 = vsel %vm1379, %v6953, %v6955
    %v6965 = vsel %vm1379, %v6955, %v6957
    %6974 = vst [vmem:[#allocation2 + $0x3c0] sm:$0xff] %v6958
    %6975 = vst [vmem:[#allocation2 + $0x3c8] sm:$0xff] %v6959
    %6976 = vst [vmem:[#allocation2 + $0x3d0] sm:$0xff] %v6960
    %6977 = vst [vmem:[#allocation2 + $0x3d8] sm:$0xff] %v6961
    %6978 = vst [vmem:[#allocation2 + $0x3e0] sm:$0xff] %v6962
    %6979 = vst [vmem:[#allocation2 + $0x3e8] sm:$0xff] %v6963
    %6980 = vst [vmem:[#allocation2 + $0x3f0] sm:$0xff] %v6964
    %6981 = vst [vmem:[#allocation2 + $0x3f8] sm:$0xff] %v6965
    %v6982 = vld [vmem:[#allocation3 + $0x6] sm:$0xff]
    %v6983 = vld [vmem:[#allocation3 + $0xe] sm:$0xff]
    %v6984 = vld [vmem:[#allocation3 + $0x16] sm:$0x3]
    %v6985 = vld [vmem:[#allocation3 + $0x8] sm:$0xff]
    %v6986 = vld [vmem:[#allocation3 + $0x10] sm:$0xff]
    %v6987 = vld [vmem:[#allocation3 + $0x18] sm:$0x3]
    %v6988 = vld [vmem:[#allocation3 + $0xa] sm:$0xff]
    %v6989 = vld [vmem:[#allocation3 + $0x12] sm:$0xff]
    %v6990 = vld [vmem:[#allocation3 + $0x1a] sm:$0x3]
    %v6994 = vcombine.high %v6982, %v6982
    %v6996 = vunpack.c.l.s4 1983009808
    %v6997 = vunpack.c.0.s8 %v6996
    %v6998 = vlaneseq
    %v6999 = vshrl.u32 %v6998, 7
    %v7000 = vsub.s32 %v6997, %v6999
    %v7001 = vrot.slane %v6982, %v7000
    %v7003 = vunpack.c.l.s4 1983009808
    %v7004 = vunpack.c.0.s8 %v7003
    %v7005 = vlaneseq
    %v7006 = vshrl.u32 %v7005, 7
    %v7007 = vsub.s32 %v7004, %v7006
    %v7008 = vrot.slane %v6994, %v7007
    %v7009 = vcombine.high %v7001, %v7001
    %v7010 = vcombine.high %v7008, %v7008
    %v7011 = vcombine.high %v6983, %v6983
    %v7013 = vunpack.c.l.s4 1983009808
    %v7014 = vunpack.c.0.s8 %v7013
    %v7015 = vlaneseq
    %v7016 = vshrl.u32 %v7015, 7
    %v7017 = vsub.s32 %v7014, %v7016
    %v7018 = vrot.slane %v6983, %v7017
    %v7020 = vunpack.c.l.s4 1983009808
    %v7021 = vunpack.c.0.s8 %v7020
    %v7022 = vlaneseq
    %v7023 = vshrl.u32 %v7022, 7
    %v7024 = vsub.s32 %v7021, %v7023
    %v7025 = vrot.slane %v7011, %v7024
    %v7026 = vcombine.high %v7018, %v7018
    %v7027 = vcombine.high %v7025, %v7025
    %v7029 = vunpack.c.l.s4 1983009808
    %v7030 = vunpack.c.0.s8 %v7029
    %v7031 = vlaneseq
    %v7032 = vshrl.u32 %v7031, 7
    %v7033 = vsub.s32 %v7030, %v7032
    %v7034 = vrot.slane %v6984, %v7033
    %v7035 = vcombine.low %v6982, %v6982
    %v7037 = vunpack.c.l.s4 1983009808
    %v7038 = vunpack.c.0.s8 %v7037
    %v7039 = vlaneseq
    %v7040 = vshrl.u32 %v7039, 7
    %v7041 = vsub.s32 %v7038, %v7040
    %v7042 = vrot.slane %v7035, %v7041
    %v7043 = vcombine.high %v7042, %v7042
    %v7044 = vcombine.low %v6983, %v6983
    %v7046 = vunpack.c.l.s4 1983009808
    %v7047 = vunpack.c.0.s8 %v7046
    %v7048 = vlaneseq
    %v7049 = vshrl.u32 %v7048, 7
    %v7050 = vsub.s32 %v7047, %v7049
    %v7051 = vrot.slane %v7044, %v7050
    %v7052 = vcombine.high %v7051, %v7051
    %v7053 = vcombine.low %v6984, %v6984
    %v7055 = vunpack.c.l.s4 1983009808
    %v7056 = vunpack.c.0.s8 %v7055
    %v7057 = vlaneseq
    %v7058 = vshrl.u32 %v7057, 7
    %v7059 = vsub.s32 %v7056, %v7058
    %v7060 = vrot.slane %v7053, %v7059
    %7061 = vrot.lane.b32.xlu0 %v7042, 95
    %v7062 = vpop.permute.xlu0 %7061
    %7063 = vrot.lane.b32.xlu0 %v7043, 95
    %v7064 = vpop.permute.xlu0 %7063
    %7065 = vrot.lane.b32.xlu0 %v7001, 95
    %v7066 = vpop.permute.xlu0 %7065
    %7067 = vrot.lane.b32.xlu0 %v7009, 95
    %v7068 = vpop.permute.xlu0 %7067
    %7069 = vrot.lane.b32.xlu0 %v7051, 95
    %v7070 = vpop.permute.xlu0 %7069
    %7071 = vrot.lane.b32.xlu0 %v7052, 95
    %v7072 = vpop.permute.xlu0 %7071
    %7073 = vrot.lane.b32.xlu0 %v7018, 95
    %v7074 = vpop.permute.xlu0 %7073
    %7075 = vrot.lane.b32.xlu0 %v7026, 95
    %v7076 = vpop.permute.xlu0 %7075
    %7077 = vrot.lane.b32.xlu0 %v7060, 95
    %v7078 = vpop.permute.xlu0 %7077
    %v7079 = vsel %vm1558, %v7062, %v7064
    %v7080 = vsel %vm1558, %v7064, %v7066
    %v7081 = vsel %vm1558, %v7066, %v7068
    %v7082 = vsel %vm1558, %v7068, %v7070
    %v7083 = vsel %vm1558, %v7070, %v7072
    %v7084 = vsel %vm1558, %v7072, %v7074
    %v7085 = vsel %vm1558, %v7074, %v7076
    %v7086 = vsel %vm1558, %v7076, %v7078
    %v7090 = vcombine.high %v6985, %v6985
    %v7092 = vunpack.c.l.s4 1983009808
    %v7093 = vunpack.c.0.s8 %v7092
    %v7094 = vlaneseq
    %v7095 = vshrl.u32 %v7094, 7
    %v7096 = vsub.s32 %v7093, %v7095
    %v7097 = vrot.slane %v6985, %v7096
    %v7099 = vunpack.c.l.s4 1983009808
    %v7100 = vunpack.c.0.s8 %v7099
    %v7101 = vlaneseq
    %v7102 = vshrl.u32 %v7101, 7
    %v7103 = vsub.s32 %v7100, %v7102
    %v7104 = vrot.slane %v7090, %v7103
    %v7105 = vcombine.low %v7097, %v7097
    %v7106 = vcombine.low %v7104, %v7104
    %v7107 = vcombine.high %v6986, %v6986
    %v7109 = vunpack.c.l.s4 1983009808
    %v7110 = vunpack.c.0.s8 %v7109
    %v7111 = vlaneseq
    %v7112 = vshrl.u32 %v7111, 7
    %v7113 = vsub.s32 %v7110, %v7112
    %v7114 = vrot.slane %v6986, %v7113
    %v7116 = vunpack.c.l.s4 1983009808
    %v7117 = vunpack.c.0.s8 %v7116
    %v7118 = vlaneseq
    %v7119 = vshrl.u32 %v7118, 7
    %v7120 = vsub.s32 %v7117, %v7119
    %v7121 = vrot.slane %v7107, %v7120
    %v7122 = vcombine.low %v7114, %v7114
    %v7123 = vcombine.low %v7121, %v7121
    %v7125 = vunpack.c.l.s4 1983009808
    %v7126 = vunpack.c.0.s8 %v7125
    %v7127 = vlaneseq
    %v7128 = vshrl.u32 %v7127, 7
    %v7129 = vsub.s32 %v7126, %v7128
    %v7130 = vrot.slane %v6987, %v7129
    %v7131 = vcombine.low %v7130, %v7130
    %7132 = vrot.lane.b32.xlu0 %v7105, 29
    %v7133 = vpop.permute.xlu0 %7132
    %7134 = vrot.lane.b32.xlu0 %v7097, 29
    %v7135 = vpop.permute.xlu0 %7134
    %7136 = vrot.lane.b32.xlu0 %v7106, 29
    %v7137 = vpop.permute.xlu0 %7136
    %7138 = vrot.lane.b32.xlu0 %v7104, 29
    %v7139 = vpop.permute.xlu0 %7138
    %7140 = vrot.lane.b32.xlu0 %v7122, 29
    %v7141 = vpop.permute.xlu0 %7140
    %7142 = vrot.lane.b32.xlu0 %v7114, 29
    %v7143 = vpop.permute.xlu0 %7142
    %7144 = vrot.lane.b32.xlu0 %v7123, 29
    %v7145 = vpop.permute.xlu0 %7144
    %7146 = vrot.lane.b32.xlu0 %v7121, 29
    %v7147 = vpop.permute.xlu0 %7146
    %7148 = vrot.lane.b32.xlu0 %v7131, 29
    %v7149 = vpop.permute.xlu0 %7148
    %vm7150 = vcmask 236544
    %v7151 = vsel %vm7150, %v7133, %v7135
    %v7152 = vsel %vm7150, %v7135, %v7137
    %v7153 = vsel %vm7150, %v7137, %v7139
    %v7154 = vsel %vm7150, %v7139, %v7141
    %v7155 = vsel %vm7150, %v7141, %v7143
    %v7156 = vsel %vm7150, %v7143, %v7145
    %v7157 = vsel %vm7150, %v7145, %v7147
    %v7158 = vsel %vm7150, %v7147, %v7149
    %v7162 = vcombine.low %v6988, %v6988
    %v7164 = vunpack.c.l.s4 1983009808
    %v7165 = vunpack.c.0.s8 %v7164
    %v7166 = vlaneseq
    %v7167 = vshrl.u32 %v7166, 7
    %v7168 = vsub.s32 %v7165, %v7167
    %v7169 = vrot.slane %v7162, %v7168
    %v7171 = vunpack.c.l.s4 1983009808
    %v7172 = vunpack.c.0.s8 %v7171
    %v7173 = vlaneseq
    %v7174 = vshrl.u32 %v7173, 7
    %v7175 = vsub.s32 %v7172, %v7174
    %v7176 = vrot.slane %v6988, %v7175
    %v7177 = vcombine.low %v7169, %v7169
    %v7178 = vcombine.low %v7176, %v7176
    %v7179 = vcombine.low %v6989, %v6989
    %v7181 = vunpack.c.l.s4 1983009808
    %v7182 = vunpack.c.0.s8 %v7181
    %v7183 = vlaneseq
    %v7184 = vshrl.u32 %v7183, 7
    %v7185 = vsub.s32 %v7182, %v7184
    %v7186 = vrot.slane %v7179, %v7185
    %v7188 = vunpack.c.l.s4 1983009808
    %v7189 = vunpack.c.0.s8 %v7188
    %v7190 = vlaneseq
    %v7191 = vshrl.u32 %v7190, 7
    %v7192 = vsub.s32 %v7189, %v7191
    %v7193 = vrot.slane %v6989, %v7192
    %v7194 = vcombine.low %v7186, %v7186
    %v7195 = vcombine.low %v7193, %v7193
    %v7196 = vcombine.low %v6990, %v6990
    %v7198 = vunpack.c.l.s4 1983009808
    %v7199 = vunpack.c.0.s8 %v7198
    %v7200 = vlaneseq
    %v7201 = vshrl.u32 %v7200, 7
    %v7202 = vsub.s32 %v7199, %v7201
    %v7203 = vrot.slane %v7196, %v7202
    %v7204 = vcombine.low %v7203, %v7203
    %7205 = vrot.lane.b32.xlu0 %v7177, 25
    %v7206 = vpop.permute.xlu0 %7205
    %7207 = vrot.lane.b32.xlu0 %v7169, 25
    %v7208 = vpop.permute.xlu0 %7207
    %7209 = vrot.lane.b32.xlu0 %v7178, 25
    %v7210 = vpop.permute.xlu0 %7209
    %7211 = vrot.lane.b32.xlu0 %v7176, 25
    %v7212 = vpop.permute.xlu0 %7211
    %7213 = vrot.lane.b32.xlu0 %v7194, 25
    %v7214 = vpop.permute.xlu0 %7213
    %7215 = vrot.lane.b32.xlu0 %v7186, 25
    %v7216 = vpop.permute.xlu0 %7215
    %7217 = vrot.lane.b32.xlu0 %v7195, 25
    %v7218 = vpop.permute.xlu0 %7217
    %7219 = vrot.lane.b32.xlu0 %v7193, 25
    %v7220 = vpop.permute.xlu0 %7219
    %7221 = vrot.lane.b32.xlu0 %v7204, 25
    %v7222 = vpop.permute.xlu0 %7221
    %vm7223 = vcmask 203776
    %v7224 = vsel %vm7223, %v7206, %v7208
    %v7225 = vsel %vm7223, %v7208, %v7210
    %v7226 = vsel %vm7223, %v7210, %v7212
    %v7227 = vsel %vm7223, %v7212, %v7214
    %v7228 = vsel %vm7223, %v7214, %v7216
    %v7229 = vsel %vm7223, %v7216, %v7218
    %v7230 = vsel %vm7223, %v7218, %v7220
    %v7231 = vsel %vm7223, %v7220, %v7222
    %v7234 = vsel %vm2615, %v7001, %v7079
    %v7237 = vsel %vm2615, %v7009, %v7080
    %v7240 = vsel %vm2615, %v7008, %v7081
    %v7243 = vsel %vm2615, %v7010, %v7082
    %v7246 = vsel %vm2615, %v7018, %v7083
    %v7249 = vsel %vm2615, %v7026, %v7084
    %v7252 = vsel %vm2615, %v7025, %v7085
    %v7255 = vsel %vm2615, %v7027, %v7086
    %v7258 = vsel %vm2615, %v7034, %v7078
    %v7260 = vsel %vm2643, %v7234, %v7133
    %v7262 = vsel %vm2643, %v7237, %v7151
    %v7264 = vsel %vm2643, %v7240, %v7152
    %v7266 = vsel %vm2643, %v7243, %v7153
    %v7268 = vsel %vm2643, %v7246, %v7154
    %v7270 = vsel %vm2643, %v7249, %v7155
    %v7272 = vsel %vm2643, %v7252, %v7156
    %v7274 = vsel %vm2643, %v7255, %v7157
    %v7276 = vsel %vm2643, %v7258, %v7158
    %v7278 = vsel %vm2662, %v7260, %v7206
    %v7280 = vsel %vm2662, %v7262, %v7224
    %v7282 = vsel %vm2662, %v7264, %v7225
    %v7284 = vsel %vm2662, %v7266, %v7226
    %v7286 = vsel %vm2662, %v7268, %v7227
    %v7288 = vsel %vm2662, %v7270, %v7228
    %v7290 = vsel %vm2662, %v7272, %v7229
    %v7292 = vsel %vm2662, %v7274, %v7230
    %v7294 = vsel %vm2662, %v7276, %v7231
    %7304 = vrot.lane.b32.xlu0 %v7278, 95
    %v7305 = vpop.permute.xlu0 %7304
    %7306 = vrot.lane.b32.xlu0 %v7280, 95
    %v7307 = vpop.permute.xlu0 %7306
    %7308 = vrot.lane.b32.xlu0 %v7282, 95
    %v7309 = vpop.permute.xlu0 %7308
    %7310 = vrot.lane.b32.xlu0 %v7284, 95
    %v7311 = vpop.permute.xlu0 %7310
    %7312 = vrot.lane.b32.xlu0 %v7286, 95
    %v7313 = vpop.permute.xlu0 %7312
    %7314 = vrot.lane.b32.xlu0 %v7288, 95
    %v7315 = vpop.permute.xlu0 %7314
    %7316 = vrot.lane.b32.xlu0 %v7290, 95
    %v7317 = vpop.permute.xlu0 %7316
    %7318 = vrot.lane.b32.xlu0 %v7292, 95
    %v7319 = vpop.permute.xlu0 %7318
    %7320 = vrot.lane.b32.xlu0 %v7294, 95
    %v7321 = vpop.permute.xlu0 %7320
    %v7322 = vsel %vm1558, %v7305, %v7307
    %v7323 = vsel %vm1558, %v7307, %v7309
    %v7324 = vsel %vm1558, %v7309, %v7311
    %v7325 = vsel %vm1558, %v7311, %v7313
    %v7326 = vsel %vm1558, %v7313, %v7315
    %v7327 = vsel %vm1558, %v7315, %v7317
    %v7328 = vsel %vm1558, %v7317, %v7319
    %v7329 = vsel %vm1558, %v7319, %v7321
    %7338 = vst [vmem:[#allocation2 + $0x400] sm:$0xff] %v7322
    %7339 = vst [vmem:[#allocation2 + $0x408] sm:$0xff] %v7323
    %7340 = vst [vmem:[#allocation2 + $0x410] sm:$0xff] %v7324
    %7341 = vst [vmem:[#allocation2 + $0x418] sm:$0xff] %v7325
    %7342 = vst [vmem:[#allocation2 + $0x420] sm:$0xff] %v7326
    %7343 = vst [vmem:[#allocation2 + $0x428] sm:$0xff] %v7327
    %7344 = vst [vmem:[#allocation2 + $0x430] sm:$0xff] %v7328
    %7345 = vst [vmem:[#allocation2 + $0x438] sm:$0xff] %v7329
    %v7346 = vld [vmem:[#allocation3 + $0x22] sm:$0xff]
    %v7347 = vld [vmem:[#allocation3 + $0x2a] sm:$0xff]
    %v7348 = vld [vmem:[#allocation3 + $0x32] sm:$0x3]
    %v7349 = vld [vmem:[#allocation3 + $0x24] sm:$0xff]
    %v7350 = vld [vmem:[#allocation3 + $0x2c] sm:$0xff]
    %v7351 = vld [vmem:[#allocation3 + $0x34] sm:$0x3]
    %v7352 = vld [vmem:[#allocation3 + $0x26] sm:$0xff]
    %v7353 = vld [vmem:[#allocation3 + $0x2e] sm:$0xff]
    %v7354 = vld [vmem:[#allocation3 + $0x36] sm:$0x3]
    %v7358 = vcombine.high %v7346, %v7346
    %v7360 = vunpack.c.l.s4 1983009808
    %v7361 = vunpack.c.0.s8 %v7360
    %v7362 = vlaneseq
    %v7363 = vshrl.u32 %v7362, 7
    %v7364 = vsub.s32 %v7361, %v7363
    %v7365 = vrot.slane %v7346, %v7364
    %v7367 = vunpack.c.l.s4 1983009808
    %v7368 = vunpack.c.0.s8 %v7367
    %v7369 = vlaneseq
    %v7370 = vshrl.u32 %v7369, 7
    %v7371 = vsub.s32 %v7368, %v7370
    %v7372 = vrot.slane %v7358, %v7371
    %v7373 = vcombine.high %v7365, %v7365
    %v7374 = vcombine.high %v7372, %v7372
    %v7375 = vcombine.high %v7347, %v7347
    %v7377 = vunpack.c.l.s4 1983009808
    %v7378 = vunpack.c.0.s8 %v7377
    %v7379 = vlaneseq
    %v7380 = vshrl.u32 %v7379, 7
    %v7381 = vsub.s32 %v7378, %v7380
    %v7382 = vrot.slane %v7347, %v7381
    %v7384 = vunpack.c.l.s4 1983009808
    %v7385 = vunpack.c.0.s8 %v7384
    %v7386 = vlaneseq
    %v7387 = vshrl.u32 %v7386, 7
    %v7388 = vsub.s32 %v7385, %v7387
    %v7389 = vrot.slane %v7375, %v7388
    %v7390 = vcombine.high %v7382, %v7382
    %v7391 = vcombine.high %v7389, %v7389
    %v7393 = vunpack.c.l.s4 1983009808
    %v7394 = vunpack.c.0.s8 %v7393
    %v7395 = vlaneseq
    %v7396 = vshrl.u32 %v7395, 7
    %v7397 = vsub.s32 %v7394, %v7396
    %v7398 = vrot.slane %v7348, %v7397
    %v7399 = vcombine.low %v7346, %v7346
    %v7401 = vunpack.c.l.s4 1983009808
    %v7402 = vunpack.c.0.s8 %v7401
    %v7403 = vlaneseq
    %v7404 = vshrl.u32 %v7403, 7
    %v7405 = vsub.s32 %v7402, %v7404
    %v7406 = vrot.slane %v7399, %v7405
    %v7407 = vcombine.high %v7406, %v7406
    %v7408 = vcombine.low %v7347, %v7347
    %v7410 = vunpack.c.l.s4 1983009808
    %v7411 = vunpack.c.0.s8 %v7410
    %v7412 = vlaneseq
    %v7413 = vshrl.u32 %v7412, 7
    %v7414 = vsub.s32 %v7411, %v7413
    %v7415 = vrot.slane %v7408, %v7414
    %v7416 = vcombine.high %v7415, %v7415
    %v7417 = vcombine.low %v7348, %v7348
    %v7419 = vunpack.c.l.s4 1983009808
    %v7420 = vunpack.c.0.s8 %v7419
    %v7421 = vlaneseq
    %v7422 = vshrl.u32 %v7421, 7
    %v7423 = vsub.s32 %v7420, %v7422
    %v7424 = vrot.slane %v7417, %v7423
    %7425 = vrot.lane.b32.xlu0 %v7406, 95
    %v7426 = vpop.permute.xlu0 %7425
    %7427 = vrot.lane.b32.xlu0 %v7407, 95
    %v7428 = vpop.permute.xlu0 %7427
    %7429 = vrot.lane.b32.xlu0 %v7365, 95
    %v7430 = vpop.permute.xlu0 %7429
    %7431 = vrot.lane.b32.xlu0 %v7373, 95
    %v7432 = vpop.permute.xlu0 %7431
    %7433 = vrot.lane.b32.xlu0 %v7415, 95
    %v7434 = vpop.permute.xlu0 %7433
    %7435 = vrot.lane.b32.xlu0 %v7416, 95
    %v7436 = vpop.permute.xlu0 %7435
    %7437 = vrot.lane.b32.xlu0 %v7382, 95
    %v7438 = vpop.permute.xlu0 %7437
    %7439 = vrot.lane.b32.xlu0 %v7390, 95
    %v7440 = vpop.permute.xlu0 %7439
    %7441 = vrot.lane.b32.xlu0 %v7424, 95
    %v7442 = vpop.permute.xlu0 %7441
    %v7443 = vsel %vm1558, %v7426, %v7428
    %v7444 = vsel %vm1558, %v7428, %v7430
    %v7445 = vsel %vm1558, %v7430, %v7432
    %v7446 = vsel %vm1558, %v7432, %v7434
    %v7447 = vsel %vm1558, %v7434, %v7436
    %v7448 = vsel %vm1558, %v7436, %v7438
    %v7449 = vsel %vm1558, %v7438, %v7440
    %v7450 = vsel %vm1558, %v7440, %v7442
    %v7454 = vcombine.high %v7349, %v7349
    %v7456 = vunpack.c.l.s4 1983009808
    %v7457 = vunpack.c.0.s8 %v7456
    %v7458 = vlaneseq
    %v7459 = vshrl.u32 %v7458, 7
    %v7460 = vsub.s32 %v7457, %v7459
    %v7461 = vrot.slane %v7349, %v7460
    %v7463 = vunpack.c.l.s4 1983009808
    %v7464 = vunpack.c.0.s8 %v7463
    %v7465 = vlaneseq
    %v7466 = vshrl.u32 %v7465, 7
    %v7467 = vsub.s32 %v7464, %v7466
    %v7468 = vrot.slane %v7454, %v7467
    %v7469 = vcombine.low %v7461, %v7461
    %v7470 = vcombine.low %v7468, %v7468
    %v7471 = vcombine.high %v7350, %v7350
    %v7473 = vunpack.c.l.s4 1983009808
    %v7474 = vunpack.c.0.s8 %v7473
    %v7475 = vlaneseq
    %v7476 = vshrl.u32 %v7475, 7
    %v7477 = vsub.s32 %v7474, %v7476
    %v7478 = vrot.slane %v7350, %v7477
    %v7480 = vunpack.c.l.s4 1983009808
    %v7481 = vunpack.c.0.s8 %v7480
    %v7482 = vlaneseq
    %v7483 = vshrl.u32 %v7482, 7
    %v7484 = vsub.s32 %v7481, %v7483
    %v7485 = vrot.slane %v7471, %v7484
    %v7486 = vcombine.low %v7478, %v7478
    %v7487 = vcombine.low %v7485, %v7485
    %v7489 = vunpack.c.l.s4 1983009808
    %v7490 = vunpack.c.0.s8 %v7489
    %v7491 = vlaneseq
    %v7492 = vshrl.u32 %v7491, 7
    %v7493 = vsub.s32 %v7490, %v7492
    %v7494 = vrot.slane %v7351, %v7493
    %v7495 = vcombine.low %v7494, %v7494
    %7496 = vrot.lane.b32.xlu0 %v7469, 29
    %v7497 = vpop.permute.xlu0 %7496
    %7498 = vrot.lane.b32.xlu0 %v7461, 29
    %v7499 = vpop.permute.xlu0 %7498
    %7500 = vrot.lane.b32.xlu0 %v7470, 29
    %v7501 = vpop.permute.xlu0 %7500
    %7502 = vrot.lane.b32.xlu0 %v7468, 29
    %v7503 = vpop.permute.xlu0 %7502
    %7504 = vrot.lane.b32.xlu0 %v7486, 29
    %v7505 = vpop.permute.xlu0 %7504
    %7506 = vrot.lane.b32.xlu0 %v7478, 29
    %v7507 = vpop.permute.xlu0 %7506
    %7508 = vrot.lane.b32.xlu0 %v7487, 29
    %v7509 = vpop.permute.xlu0 %7508
    %7510 = vrot.lane.b32.xlu0 %v7485, 29
    %v7511 = vpop.permute.xlu0 %7510
    %7512 = vrot.lane.b32.xlu0 %v7495, 29
    %v7513 = vpop.permute.xlu0 %7512
    %v7514 = vsel %vm7150, %v7497, %v7499
    %v7515 = vsel %vm7150, %v7499, %v7501
    %v7516 = vsel %vm7150, %v7501, %v7503
    %v7517 = vsel %vm7150, %v7503, %v7505
    %v7518 = vsel %vm7150, %v7505, %v7507
    %v7519 = vsel %vm7150, %v7507, %v7509
    %v7520 = vsel %vm7150, %v7509, %v7511
    %v7521 = vsel %vm7150, %v7511, %v7513
    %v7525 = vcombine.low %v7352, %v7352
    %v7527 = vunpack.c.l.s4 1983009808
    %v7528 = vunpack.c.0.s8 %v7527
    %v7529 = vlaneseq
    %v7530 = vshrl.u32 %v7529, 7
    %v7531 = vsub.s32 %v7528, %v7530
    %v7532 = vrot.slane %v7525, %v7531
    %v7534 = vunpack.c.l.s4 1983009808
    %v7535 = vunpack.c.0.s8 %v7534
    %v7536 = vlaneseq
    %v7537 = vshrl.u32 %v7536, 7
    %v7538 = vsub.s32 %v7535, %v7537
    %v7539 = vrot.slane %v7352, %v7538
    %v7540 = vcombine.low %v7532, %v7532
    %v7541 = vcombine.low %v7539, %v7539
    %v7542 = vcombine.low %v7353, %v7353
    %v7544 = vunpack.c.l.s4 1983009808
    %v7545 = vunpack.c.0.s8 %v7544
    %v7546 = vlaneseq
    %v7547 = vshrl.u32 %v7546, 7
    %v7548 = vsub.s32 %v7545, %v7547
    %v7549 = vrot.slane %v7542, %v7548
    %v7551 = vunpack.c.l.s4 1983009808
    %v7552 = vunpack.c.0.s8 %v7551
    %v7553 = vlaneseq
    %v7554 = vshrl.u32 %v7553, 7
    %v7555 = vsub.s32 %v7552, %v7554
    %v7556 = vrot.slane %v7353, %v7555
    %v7557 = vcombine.low %v7549, %v7549
    %v7558 = vcombine.low %v7556, %v7556
    %v7559 = vcombine.low %v7354, %v7354
    %v7561 = vunpack.c.l.s4 1983009808
    %v7562 = vunpack.c.0.s8 %v7561
    %v7563 = vlaneseq
    %v7564 = vshrl.u32 %v7563, 7
    %v7565 = vsub.s32 %v7562, %v7564
    %v7566 = vrot.slane %v7559, %v7565
    %v7567 = vcombine.low %v7566, %v7566
    %7568 = vrot.lane.b32.xlu0 %v7540, 25
    %v7569 = vpop.permute.xlu0 %7568
    %7570 = vrot.lane.b32.xlu0 %v7532, 25
    %v7571 = vpop.permute.xlu0 %7570
    %7572 = vrot.lane.b32.xlu0 %v7541, 25
    %v7573 = vpop.permute.xlu0 %7572
    %7574 = vrot.lane.b32.xlu0 %v7539, 25
    %v7575 = vpop.permute.xlu0 %7574
    %7576 = vrot.lane.b32.xlu0 %v7557, 25
    %v7577 = vpop.permute.xlu0 %7576
    %7578 = vrot.lane.b32.xlu0 %v7549, 25
    %v7579 = vpop.permute.xlu0 %7578
    %7580 = vrot.lane.b32.xlu0 %v7558, 25
    %v7581 = vpop.permute.xlu0 %7580
    %7582 = vrot.lane.b32.xlu0 %v7556, 25
    %v7583 = vpop.permute.xlu0 %7582
    %7584 = vrot.lane.b32.xlu0 %v7567, 25
    %v7585 = vpop.permute.xlu0 %7584
    %v7586 = vsel %vm7223, %v7569, %v7571
    %v7587 = vsel %vm7223, %v7571, %v7573
    %v7588 = vsel %vm7223, %v7573, %v7575
    %v7589 = vsel %vm7223, %v7575, %v7577
    %v7590 = vsel %vm7223, %v7577, %v7579
    %v7591 = vsel %vm7223, %v7579, %v7581
    %v7592 = vsel %vm7223, %v7581, %v7583
    %v7593 = vsel %vm7223, %v7583, %v7585
    %v7596 = vsel %vm2615, %v7365, %v7443
    %v7599 = vsel %vm2615, %v7373, %v7444
    %v7602 = vsel %vm2615, %v7372, %v7445
    %v7605 = vsel %vm2615, %v7374, %v7446
    %v7608 = vsel %vm2615, %v7382, %v7447
    %v7611 = vsel %vm2615, %v7390, %v7448
    %v7614 = vsel %vm2615, %v7389, %v7449
    %v7617 = vsel %vm2615, %v7391, %v7450
    %v7620 = vsel %vm2615, %v7398, %v7442
    %v7622 = vsel %vm2643, %v7596, %v7497
    %v7624 = vsel %vm2643, %v7599, %v7514
    %v7626 = vsel %vm2643, %v7602, %v7515
    %v7628 = vsel %vm2643, %v7605, %v7516
    %v7630 = vsel %vm2643, %v7608, %v7517
    %v7632 = vsel %vm2643, %v7611, %v7518
    %v7634 = vsel %vm2643, %v7614, %v7519
    %v7636 = vsel %vm2643, %v7617, %v7520
    %v7638 = vsel %vm2643, %v7620, %v7521
    %v7640 = vsel %vm2662, %v7622, %v7569
    %v7642 = vsel %vm2662, %v7624, %v7586
    %v7644 = vsel %vm2662, %v7626, %v7587
    %v7646 = vsel %vm2662, %v7628, %v7588
    %v7648 = vsel %vm2662, %v7630, %v7589
    %v7650 = vsel %vm2662, %v7632, %v7590
    %v7652 = vsel %vm2662, %v7634, %v7591
    %v7654 = vsel %vm2662, %v7636, %v7592
    %v7656 = vsel %vm2662, %v7638, %v7593
    %7666 = vrot.lane.b32.xlu0 %v7640, 95
    %v7667 = vpop.permute.xlu0 %7666
    %7668 = vrot.lane.b32.xlu0 %v7642, 95
    %v7669 = vpop.permute.xlu0 %7668
    %7670 = vrot.lane.b32.xlu0 %v7644, 95
    %v7671 = vpop.permute.xlu0 %7670
    %7672 = vrot.lane.b32.xlu0 %v7646, 95
    %v7673 = vpop.permute.xlu0 %7672
    %7674 = vrot.lane.b32.xlu0 %v7648, 95
    %v7675 = vpop.permute.xlu0 %7674
    %7676 = vrot.lane.b32.xlu0 %v7650, 95
    %v7677 = vpop.permute.xlu0 %7676
    %7678 = vrot.lane.b32.xlu0 %v7652, 95
    %v7679 = vpop.permute.xlu0 %7678
    %7680 = vrot.lane.b32.xlu0 %v7654, 95
    %v7681 = vpop.permute.xlu0 %7680
    %7682 = vrot.lane.b32.xlu0 %v7656, 95
    %v7683 = vpop.permute.xlu0 %7682
    %v7684 = vsel %vm1558, %v7667, %v7669
    %v7685 = vsel %vm1558, %v7669, %v7671
    %v7686 = vsel %vm1558, %v7671, %v7673
    %v7687 = vsel %vm1558, %v7673, %v7675
    %v7688 = vsel %vm1558, %v7675, %v7677
    %v7689 = vsel %vm1558, %v7677, %v7679
    %v7690 = vsel %vm1558, %v7679, %v7681
    %v7691 = vsel %vm1558, %v7681, %v7683
    %7700 = vst [vmem:[#allocation2 + $0x440] sm:$0xff] %v7684
    %7701 = vst [vmem:[#allocation2 + $0x448] sm:$0xff] %v7685
    %7702 = vst [vmem:[#allocation2 + $0x450] sm:$0xff] %v7686
    %7703 = vst [vmem:[#allocation2 + $0x458] sm:$0xff] %v7687
    %7704 = vst [vmem:[#allocation2 + $0x460] sm:$0xff] %v7688
    %7705 = vst [vmem:[#allocation2 + $0x468] sm:$0xff] %v7689
    %7706 = vst [vmem:[#allocation2 + $0x470] sm:$0xff] %v7690
    %7707 = vst [vmem:[#allocation2 + $0x478] sm:$0xff] %v7691
    %v7708 = vld [vmem:[#allocation10] sm:$0xff]
    %v7709 = vld [vmem:[#allocation10 + $0x8] sm:$0xff]
    %v7710 = vld [vmem:[#allocation2] sm:$0xff]
    %v7711 = vld [vmem:[#allocation2 + $0x8] sm:$0xff]
    %v7712 = vld [vmem:[#allocation2 + $0x10] sm:$0xff]
    %v7713 = vld [vmem:[#allocation2 + $0x18] sm:$0xff]
    %v7714 = vld [vmem:[#allocation2 + $0x20] sm:$0xff]
    %v7715 = vld [vmem:[#allocation2 + $0x28] sm:$0xff]
    %v7716 = vld [vmem:[#allocation2 + $0x30] sm:$0xff]
    %v7717 = vld [vmem:[#allocation2 + $0x38] sm:$0xff]
    %v7718 = vld [vmem:[#allocation2 + $0x40] sm:$0xff]
    %v7719 = vld [vmem:[#allocation2 + $0x48] sm:$0xff]
    %v7720 = vld [vmem:[#allocation2 + $0x50] sm:$0xff]
    %v7721 = vld [vmem:[#allocation2 + $0x58] sm:$0xff]
    %v7722 = vld [vmem:[#allocation2 + $0x60] sm:$0xff]
    %v7723 = vld [vmem:[#allocation2 + $0x68] sm:$0xff]
    %v7724 = vld [vmem:[#allocation2 + $0x70] sm:$0xff]
    %v7725 = vld [vmem:[#allocation2 + $0x78] sm:$0xff]
    %v7726 = vld [vmem:[#allocation2 + $0x80] sm:$0xff]
    %v7727 = vld [vmem:[#allocation2 + $0x88] sm:$0xff]
    %v7728 = vld [vmem:[#allocation2 + $0x90] sm:$0xff]
    %v7729 = vld [vmem:[#allocation2 + $0x98] sm:$0xff]
    %v7730 = vld [vmem:[#allocation2 + $0xa0] sm:$0xff]
    %v7731 = vld [vmem:[#allocation2 + $0xa8] sm:$0xff]
    %v7732 = vld [vmem:[#allocation2 + $0xb0] sm:$0xff]
    %v7733 = vld [vmem:[#allocation2 + $0xb8] sm:$0xff]
    %v7734 = vld [vmem:[#allocation2 + $0xc0] sm:$0xff]
    %v7735 = vld [vmem:[#allocation2 + $0xc8] sm:$0xff]
    %v7736 = vld [vmem:[#allocation2 + $0xd0] sm:$0xff]
    %v7737 = vld [vmem:[#allocation2 + $0xd8] sm:$0xff]
    %v7738 = vld [vmem:[#allocation2 + $0xe0] sm:$0xff]
    %v7739 = vld [vmem:[#allocation2 + $0xe8] sm:$0xff]
    %v7740 = vld [vmem:[#allocation2 + $0xf0] sm:$0xff]
    %v7741 = vld [vmem:[#allocation2 + $0xf8] sm:$0xff]
    %v7742 = vld [vmem:[#allocation2 + $0x100] sm:$0xff]
    %v7743 = vld [vmem:[#allocation2 + $0x108] sm:$0xff]
    %v7744 = vld [vmem:[#allocation2 + $0x110] sm:$0xff]
    %v7745 = vld [vmem:[#allocation2 + $0x118] sm:$0xff]
    %v7746 = vld [vmem:[#allocation2 + $0x120] sm:$0xff]
    %v7747 = vld [vmem:[#allocation2 + $0x128] sm:$0xff]
    %v7748 = vld [vmem:[#allocation2 + $0x130] sm:$0xff]
    %v7749 = vld [vmem:[#allocation2 + $0x138] sm:$0xff]
    %v7750 = vld [vmem:[#allocation2 + $0x140] sm:$0xff]
    %v7751 = vld [vmem:[#allocation2 + $0x148] sm:$0xff]
    %v7752 = vld [vmem:[#allocation2 + $0x150] sm:$0xff]
    %v7753 = vld [vmem:[#allocation2 + $0x158] sm:$0xff]
    %v7754 = vld [vmem:[#allocation2 + $0x160] sm:$0xff]
    %v7755 = vld [vmem:[#allocation2 + $0x168] sm:$0xff]
    %v7756 = vld [vmem:[#allocation2 + $0x170] sm:$0xff]
    %v7757 = vld [vmem:[#allocation2 + $0x178] sm:$0xff]
    %v7758 = vld [vmem:[#allocation2 + $0x180] sm:$0xff]
    %v7759 = vld [vmem:[#allocation2 + $0x188] sm:$0xff]
    %v7760 = vld [vmem:[#allocation2 + $0x190] sm:$0xff]
    %v7761 = vld [vmem:[#allocation2 + $0x198] sm:$0xff]
    %v7762 = vld [vmem:[#allocation2 + $0x1a0] sm:$0xff]
    %v7763 = vld [vmem:[#allocation2 + $0x1a8] sm:$0xff]
    %v7764 = vld [vmem:[#allocation2 + $0x1b0] sm:$0xff]
    %v7765 = vld [vmem:[#allocation2 + $0x1b8] sm:$0xff]
    %v7766 = vld [vmem:[#allocation2 + $0x1c0] sm:$0xff]
    %v7767 = vld [vmem:[#allocation2 + $0x1c8] sm:$0xff]
    %v7768 = vld [vmem:[#allocation2 + $0x1d0] sm:$0xff]
    %v7769 = vld [vmem:[#allocation2 + $0x1d8] sm:$0xff]
    %v7770 = vld [vmem:[#allocation2 + $0x1e0] sm:$0xff]
    %v7771 = vld [vmem:[#allocation2 + $0x1e8] sm:$0xff]
    %v7772 = vld [vmem:[#allocation2 + $0x1f0] sm:$0xff]
    %v7773 = vld [vmem:[#allocation2 + $0x1f8] sm:$0xff]
    %v7774 = vld [vmem:[#allocation2 + $0x200] sm:$0xff]
    %v7775 = vld [vmem:[#allocation2 + $0x208] sm:$0xff]
    %v7776 = vld [vmem:[#allocation2 + $0x210] sm:$0xff]
    %v7777 = vld [vmem:[#allocation2 + $0x218] sm:$0xff]
    %v7778 = vld [vmem:[#allocation2 + $0x220] sm:$0xff]
    %v7779 = vld [vmem:[#allocation2 + $0x228] sm:$0xff]
    %v7780 = vld [vmem:[#allocation2 + $0x230] sm:$0xff]
    %v7781 = vld [vmem:[#allocation2 + $0x238] sm:$0xff]
    %v7782 = vld [vmem:[#allocation2 + $0x240] sm:$0xff]
    %v7783 = vld [vmem:[#allocation2 + $0x248] sm:$0xff]
    %v7784 = vld [vmem:[#allocation2 + $0x250] sm:$0xff]
    %v7785 = vld [vmem:[#allocation2 + $0x258] sm:$0xff]
    %v7786 = vld [vmem:[#allocation2 + $0x260] sm:$0xff]
    %v7787 = vld [vmem:[#allocation2 + $0x268] sm:$0xff]
    %v7788 = vld [vmem:[#allocation2 + $0x270] sm:$0xff]
    %v7789 = vld [vmem:[#allocation2 + $0x278] sm:$0xff]
    %v7790 = vld [vmem:[#allocation2 + $0x280] sm:$0xff]
    %v7791 = vld [vmem:[#allocation2 + $0x288] sm:$0xff]
    %v7792 = vld [vmem:[#allocation2 + $0x290] sm:$0xff]
    %v7793 = vld [vmem:[#allocation2 + $0x298] sm:$0xff]
    %v7794 = vld [vmem:[#allocation2 + $0x2a0] sm:$0xff]
    %v7795 = vld [vmem:[#allocation2 + $0x2a8] sm:$0xff]
    %v7796 = vld [vmem:[#allocation2 + $0x2b0] sm:$0xff]
    %v7797 = vld [vmem:[#allocation2 + $0x2b8] sm:$0xff]
    %v7798 = vld [vmem:[#allocation2 + $0x2c0] sm:$0xff]
    %v7799 = vld [vmem:[#allocation2 + $0x2c8] sm:$0xff]
    %v7800 = vld [vmem:[#allocation2 + $0x2d0] sm:$0xff]
    %v7801 = vld [vmem:[#allocation2 + $0x2d8] sm:$0xff]
    %v7802 = vld [vmem:[#allocation2 + $0x2e0] sm:$0xff]
    %v7803 = vld [vmem:[#allocation2 + $0x2e8] sm:$0xff]
    %v7804 = vld [vmem:[#allocation2 + $0x2f0] sm:$0xff]
    %v7805 = vld [vmem:[#allocation2 + $0x2f8] sm:$0xff]
    %v7806 = vld [vmem:[#allocation2 + $0x300] sm:$0xff]
    %v7807 = vld [vmem:[#allocation2 + $0x308] sm:$0xff]
    %v7808 = vld [vmem:[#allocation2 + $0x310] sm:$0xff]
    %v7809 = vld [vmem:[#allocation2 + $0x318] sm:$0xff]
    %v7810 = vld [vmem:[#allocation2 + $0x320] sm:$0xff]
    %v7811 = vld [vmem:[#allocation2 + $0x328] sm:$0xff]
    %v7812 = vld [vmem:[#allocation2 + $0x330] sm:$0xff]
    %v7813 = vld [vmem:[#allocation2 + $0x338] sm:$0xff]
    %v7814 = vld [vmem:[#allocation2 + $0x340] sm:$0xff]
    %v7815 = vld [vmem:[#allocation2 + $0x348] sm:$0xff]
    %v7816 = vld [vmem:[#allocation2 + $0x350] sm:$0xff]
    %v7817 = vld [vmem:[#allocation2 + $0x358] sm:$0xff]
    %v7818 = vld [vmem:[#allocation2 + $0x360] sm:$0xff]
    %v7819 = vld [vmem:[#allocation2 + $0x368] sm:$0xff]
    %v7820 = vld [vmem:[#allocation2 + $0x370] sm:$0xff]
    %v7821 = vld [vmem:[#allocation2 + $0x378] sm:$0xff]
    %v7822 = vld [vmem:[#allocation2 + $0x380] sm:$0xff]
    %v7823 = vld [vmem:[#allocation2 + $0x388] sm:$0xff]
    %v7824 = vld [vmem:[#allocation2 + $0x390] sm:$0xff]
    %v7825 = vld [vmem:[#allocation2 + $0x398] sm:$0xff]
    %v7826 = vld [vmem:[#allocation2 + $0x3a0] sm:$0xff]
    %v7827 = vld [vmem:[#allocation2 + $0x3a8] sm:$0xff]
    %v7828 = vld [vmem:[#allocation2 + $0x3b0] sm:$0xff]
    %v7829 = vld [vmem:[#allocation2 + $0x3b8] sm:$0xff]
    %v7830 = vld [vmem:[#allocation2 + $0x3c0] sm:$0xff]
    %v7831 = vld [vmem:[#allocation2 + $0x3c8] sm:$0xff]
    %v7832 = vld [vmem:[#allocation2 + $0x3d0] sm:$0xff]
    %v7833 = vld [vmem:[#allocation2 + $0x3d8] sm:$0xff]
    %v7834 = vld [vmem:[#allocation2 + $0x3e0] sm:$0xff]
    %v7835 = vld [vmem:[#allocation2 + $0x3e8] sm:$0xff]
    %v7836 = vld [vmem:[#allocation2 + $0x3f0] sm:$0xff]
    %v7837 = vld [vmem:[#allocation2 + $0x3f8] sm:$0xff]
    %v7838 = vld [vmem:[#allocation2 + $0x400] sm:$0xff]
    %v7839 = vld [vmem:[#allocation2 + $0x408] sm:$0xff]
    %v7840 = vld [vmem:[#allocation2 + $0x410] sm:$0xff]
    %v7841 = vld [vmem:[#allocation2 + $0x418] sm:$0xff]
    %v7842 = vld [vmem:[#allocation2 + $0x420] sm:$0xff]
    %v7843 = vld [vmem:[#allocation2 + $0x428] sm:$0xff]
    %v7844 = vld [vmem:[#allocation2 + $0x430] sm:$0xff]
    %v7845 = vld [vmem:[#allocation2 + $0x438] sm:$0xff]
    %v7846 = vld [vmem:[#allocation2 + $0x440] sm:$0xff]
    %v7847 = vld [vmem:[#allocation2 + $0x448] sm:$0xff]
    %v7848 = vld [vmem:[#allocation2 + $0x450] sm:$0xff]
    %v7849 = vld [vmem:[#allocation2 + $0x458] sm:$0xff]
    %v7850 = vld [vmem:[#allocation2 + $0x460] sm:$0xff]
    %v7851 = vld [vmem:[#allocation2 + $0x468] sm:$0xff]
    %v7852 = vld [vmem:[#allocation2 + $0x470] sm:$0xff]
    %v7853 = vld [vmem:[#allocation2 + $0x478] sm:$0xff]
    %v7856 = vunpack.c.l.b16 %v7708
    %v7857 = vunpack.c.h.b16 %v7708
    %v7858 = vunpack.c.l.b16 %v7709
    %v7859 = vunpack.c.h.b16 %v7709
    %v7860 = vpack.c.b16 %v7858, %v7856
    %v7861 = vpack.c.b16 %v7859, %v7857
    %v7864 = vsel %vm1827, %v7861, 0
    %7866 = vmatprep.subr.bf16.mxu0 %v7711
    %7867 = vmatpush1.bf16.msra.mxu0 %v7710
    %7868 = vmatprep.subr.bf16.mxu0 %v7727
    %7869 = vmatpush1.bf16.msra.mxu0 %v7726
    %7870 = vmatprep.subr.bf16.mxu0 %v7743
    %7871 = vmatpush1.bf16.msra.mxu0 %v7742
    %7872 = vmatprep.subr.bf16.mxu0 %v7759
    %7873 = vmatpush1.bf16.msra.mxu0 %v7758
    %7874 = vmatprep.subr.bf16.mxu0 %v7775
    %7875 = vmatpush1.bf16.msra.mxu0 %v7774
    %7876 = vmatprep.subr.bf16.mxu0 %v7791
    %7877 = vmatpush1.bf16.msra.mxu0 %v7790
    %7878 = vmatprep.subr.bf16.mxu0 %v7807
    %7879 = vmatpush1.bf16.msra.mxu0 %v7806
    %7880 = vmatprep.subr.bf16.mxu0 %v7823
    %7881 = vmatpush1.bf16.msra.mxu0 %v7822
    %7882 = vmatprep.subr.bf16.mxu0 %v7839
    %7883 = vmatpush1.bf16.msra.mxu0 %v7838
    %7884 = vmatprep.subr.bf16.mxu0 0
    %7885 = vmatpush1.bf16.msra.mxu0 0
    %7886 = vmatprep.subr.bf16.mxu0 0
    %7887 = vmatpush1.bf16.msra.mxu0 0
    %7888 = vmatprep.subr.bf16.mxu0 0
    %7889 = vmatpush1.bf16.msra.mxu0 0
    %7890 = vmatprep.subr.bf16.mxu0 0
    %7891 = vmatpush1.bf16.msra.mxu0 0
    %7892 = vmatprep.subr.bf16.mxu0 0
    %7893 = vmatpush1.bf16.msra.mxu0 0
    %7894 = vmatprep.subr.bf16.mxu0 0
    %7895 = vmatpush1.bf16.msra.mxu0 0
    %7896 = vmatprep.subr.bf16.mxu0 0
    %7897 = vmatpush1.bf16.msra.mxu0 0
    %7898 = vmatprep.mubr.bf16.mxu0 %v7864
    %7899 = vmatmul.mubr.bf16.gmra.mrb[0].mxu0 %v7860
    %v7900 = vpop.f32.mrb[0].mxu0
    %v7901 = vadd.f32 0.0, %v7900
    %v7902 = vpop.f32.mrb[0].mxu0
    %v7903 = vadd.f32 0.0, %v7902
    %v7904 = vpop.f32.mrb[0].mxu0
    %v7905 = vadd.f32 0.0, %v7904
    %v7906 = vpop.f32.mrb[0].mxu0
    %v7907 = vadd.f32 0.0, %v7906
    %7908 = vdwg.mxu0
    %7909 = vmatprep.subr.bf16.mxu0 %v7713
    %7910 = vmatpush1.bf16.msra.mxu0 %v7712
    %7911 = vmatprep.subr.bf16.mxu0 %v7729
    %7912 = vmatpush1.bf16.msra.mxu0 %v7728
    %7913 = vmatprep.subr.bf16.mxu0 %v7745
    %7914 = vmatpush1.bf16.msra.mxu0 %v7744
    %7915 = vmatprep.subr.bf16.mxu0 %v7761
    %7916 = vmatpush1.bf16.msra.mxu0 %v7760
    %7917 = vmatprep.subr.bf16.mxu0 %v7777
    %7918 = vmatpush1.bf16.msra.mxu0 %v7776
    %7919 = vmatprep.subr.bf16.mxu0 %v7793
    %7920 = vmatpush1.bf16.msra.mxu0 %v7792
    %7921 = vmatprep.subr.bf16.mxu0 %v7809
    %7922 = vmatpush1.bf16.msra.mxu0 %v7808
    %7923 = vmatprep.subr.bf16.mxu0 %v7825
    %7924 = vmatpush1.bf16.msra.mxu0 %v7824
    %7925 = vmatprep.subr.bf16.mxu0 %v7841
    %7926 = vmatpush1.bf16.msra.mxu0 %v7840
    %7927 = vmatprep.subr.bf16.mxu0 0
    %7928 = vmatpush1.bf16.msra.mxu0 0
    %7929 = vmatprep.subr.bf16.mxu0 0
    %7930 = vmatpush1.bf16.msra.mxu0 0
    %7931 = vmatprep.subr.bf16.mxu0 0
    %7932 = vmatpush1.bf16.msra.mxu0 0
    %7933 = vmatprep.subr.bf16.mxu0 0
    %7934 = vmatpush1.bf16.msra.mxu0 0
    %7935 = vmatprep.subr.bf16.mxu0 0
    %7936 = vmatpush1.bf16.msra.mxu0 0
    %7937 = vmatprep.subr.bf16.mxu0 0
    %7938 = vmatpush1.bf16.msra.mxu0 0
    %7939 = vmatprep.subr.bf16.mxu0 0
    %7940 = vmatpush1.bf16.msra.mxu0 0
    %7941 = vmatprep.mubr.bf16.mxu0 %v7864
    %7942 = vmatmul.mubr.bf16.gmra.mrb[0].mxu0 %v7860
    %v7943 = vpop.f32.mrb[0].mxu0
    %v7944 = vadd.f32 0.0, %v7943
    %v7945 = vpop.f32.mrb[0].mxu0
    %v7946 = vadd.f32 0.0, %v7945
    %v7947 = vpop.f32.mrb[0].mxu0
    %v7948 = vadd.f32 0.0, %v7947
    %v7949 = vpop.f32.mrb[0].mxu0
    %v7950 = vadd.f32 0.0, %v7949
    %7951 = vdwg.mxu0
    %7952 = vmatprep.subr.bf16.mxu0 %v7715
    %7953 = vmatpush1.bf16.msra.mxu0 %v7714
    %7954 = vmatprep.subr.bf16.mxu0 %v7731
    %7955 = vmatpush1.bf16.msra.mxu0 %v7730
    %7956 = vmatprep.subr.bf16.mxu0 %v7747
    %7957 = vmatpush1.bf16.msra.mxu0 %v7746
    %7958 = vmatprep.subr.bf16.mxu0 %v7763
    %7959 = vmatpush1.bf16.msra.mxu0 %v7762
    %7960 = vmatprep.subr.bf16.mxu0 %v7779
    %7961 = vmatpush1.bf16.msra.mxu0 %v7778
    %7962 = vmatprep.subr.bf16.mxu0 %v7795
    %7963 = vmatpush1.bf16.msra.mxu0 %v7794
    %7964 = vmatprep.subr.bf16.mxu0 %v7811
    %7965 = vmatpush1.bf16.msra.mxu0 %v7810
    %7966 = vmatprep.subr.bf16.mxu0 %v7827
    %7967 = vmatpush1.bf16.msra.mxu0 %v7826
    %7968 = vmatprep.subr.bf16.mxu0 %v7843
    %7969 = vmatpush1.bf16.msra.mxu0 %v7842
    %7970 = vmatprep.subr.bf16.mxu0 0
    %7971 = vmatpush1.bf16.msra.mxu0 0
    %7972 = vmatprep.subr.bf16.mxu0 0
    %7973 = vmatpush1.bf16.msra.mxu0 0
    %7974 = vmatprep.subr.bf16.mxu0 0
    %7975 = vmatpush1.bf16.msra.mxu0 0
    %7976 = vmatprep.subr.bf16.mxu0 0
    %7977 = vmatpush1.bf16.msra.mxu0 0
    %7978 = vmatprep.subr.bf16.mxu0 0
    %7979 = vmatpush1.bf16.msra.mxu0 0
    %7980 = vmatprep.subr.bf16.mxu0 0
    %7981 = vmatpush1.bf16.msra.mxu0 0
    %7982 = vmatprep.subr.bf16.mxu0 0
    %7983 = vmatpush1.bf16.msra.mxu0 0
    %7984 = vmatprep.mubr.bf16.mxu0 %v7864
    %7985 = vmatmul.mubr.bf16.gmra.mrb[0].mxu0 %v7860
    %v7986 = vpop.f32.mrb[0].mxu0
    %v7987 = vadd.f32 0.0, %v7986
    %v7988 = vpop.f32.mrb[0].mxu0
    %v7989 = vadd.f32 0.0, %v7988
    %v7990 = vpop.f32.mrb[0].mxu0
    %v7991 = vadd.f32 0.0, %v7990
    %v7992 = vpop.f32.mrb[0].mxu0
    %v7993 = vadd.f32 0.0, %v7992
    %7994 = vdwg.mxu0
    %7995 = vmatprep.subr.bf16.mxu0 %v7717
    %7996 = vmatpush1.bf16.msra.mxu0 %v7716
    %7997 = vmatprep.subr.bf16.mxu0 %v7733
    %7998 = vmatpush1.bf16.msra.mxu0 %v7732
    %7999 = vmatprep.subr.bf16.mxu0 %v7749
    %8000 = vmatpush1.bf16.msra.mxu0 %v7748
    %8001 = vmatprep.subr.bf16.mxu0 %v7765
    %8002 = vmatpush1.bf16.msra.mxu0 %v7764
    %8003 = vmatprep.subr.bf16.mxu0 %v7781
    %8004 = vmatpush1.bf16.msra.mxu0 %v7780
    %8005 = vmatprep.subr.bf16.mxu0 %v7797
    %8006 = vmatpush1.bf16.msra.mxu0 %v7796
    %8007 = vmatprep.subr.bf16.mxu0 %v7813
    %8008 = vmatpush1.bf16.msra.mxu0 %v7812
    %8009 = vmatprep.subr.bf16.mxu0 %v7829
    %8010 = vmatpush1.bf16.msra.mxu0 %v7828
    %8011 = vmatprep.subr.bf16.mxu0 %v7845
    %8012 = vmatpush1.bf16.msra.mxu0 %v7844
    %8013 = vmatprep.subr.bf16.mxu0 0
    %8014 = vmatpush1.bf16.msra.mxu0 0
    %8015 = vmatprep.subr.bf16.mxu0 0
    %8016 = vmatpush1.bf16.msra.mxu0 0
    %8017 = vmatprep.subr.bf16.mxu0 0
    %8018 = vmatpush1.bf16.msra.mxu0 0
    %8019 = vmatprep.subr.bf16.mxu0 0
    %8020 = vmatpush1.bf16.msra.mxu0 0
    %8021 = vmatprep.subr.bf16.mxu0 0
    %8022 = vmatpush1.bf16.msra.mxu0 0
    %8023 = vmatprep.subr.bf16.mxu0 0
    %8024 = vmatpush1.bf16.msra.mxu0 0
    %8025 = vmatprep.subr.bf16.mxu0 0
    %8026 = vmatpush1.bf16.msra.mxu0 0
    %8027 = vmatprep.mubr.bf16.mxu0 %v7864
    %8028 = vmatmul.mubr.bf16.gmra.mrb[0].mxu0 %v7860
    %v8029 = vpop.f32.mrb[0].mxu0
    %v8030 = vadd.f32 0.0, %v8029
    %v8031 = vpop.f32.mrb[0].mxu0
    %v8032 = vadd.f32 0.0, %v8031
    %v8033 = vpop.f32.mrb[0].mxu0
    %v8034 = vadd.f32 0.0, %v8033
    %v8035 = vpop.f32.mrb[0].mxu0
    %v8036 = vadd.f32 0.0, %v8035
    %8037 = vdwg.mxu0
    %8038 = vmatprep.subr.bf16.mxu0 %v7719
    %8039 = vmatpush1.bf16.msra.mxu0 %v7718
    %8040 = vmatprep.subr.bf16.mxu0 %v7735
    %8041 = vmatpush1.bf16.msra.mxu0 %v7734
    %8042 = vmatprep.subr.bf16.mxu0 %v7751
    %8043 = vmatpush1.bf16.msra.mxu0 %v7750
    %8044 = vmatprep.subr.bf16.mxu0 %v7767
    %8045 = vmatpush1.bf16.msra.mxu0 %v7766
    %8046 = vmatprep.subr.bf16.mxu0 %v7783
    %8047 = vmatpush1.bf16.msra.mxu0 %v7782
    %8048 = vmatprep.subr.bf16.mxu0 %v7799
    %8049 = vmatpush1.bf16.msra.mxu0 %v7798
    %8050 = vmatprep.subr.bf16.mxu0 %v7815
    %8051 = vmatpush1.bf16.msra.mxu0 %v7814
    %8052 = vmatprep.subr.bf16.mxu0 %v7831
    %8053 = vmatpush1.bf16.msra.mxu0 %v7830
    %8054 = vmatprep.subr.bf16.mxu0 %v7847
    %8055 = vmatpush1.bf16.msra.mxu0 %v7846
    %8056 = vmatprep.subr.bf16.mxu0 0
    %8057 = vmatpush1.bf16.msra.mxu0 0
    %8058 = vmatprep.subr.bf16.mxu0 0
    %8059 = vmatpush1.bf16.msra.mxu0 0
    %8060 = vmatprep.subr.bf16.mxu0 0
    %8061 = vmatpush1.bf16.msra.mxu0 0
    %8062 = vmatprep.subr.bf16.mxu0 0
    %8063 = vmatpush1.bf16.msra.mxu0 0
    %8064 = vmatprep.subr.bf16.mxu0 0
    %8065 = vmatpush1.bf16.msra.mxu0 0
    %8066 = vmatprep.subr.bf16.mxu0 0
    %8067 = vmatpush1.bf16.msra.mxu0 0
    %8068 = vmatprep.subr.bf16.mxu0 0
    %8069 = vmatpush1.bf16.msra.mxu0 0
    %8070 = vmatprep.mubr.bf16.mxu0 %v7864
    %8071 = vmatmul.mubr.bf16.gmra.mrb[0].mxu0 %v7860
    %v8072 = vpop.f32.mrb[0].mxu0
    %v8073 = vadd.f32 0.0, %v8072
    %v8074 = vpop.f32.mrb[0].mxu0
    %v8075 = vadd.f32 0.0, %v8074
    %v8076 = vpop.f32.mrb[0].mxu0
    %v8077 = vadd.f32 0.0, %v8076
    %v8078 = vpop.f32.mrb[0].mxu0
    %v8079 = vadd.f32 0.0, %v8078
    %8080 = vdwg.mxu0
    %8081 = vmatprep.subr.bf16.mxu0 %v7721
    %8082 = vmatpush1.bf16.msra.mxu0 %v7720
    %8083 = vmatprep.subr.bf16.mxu0 %v7737
    %8084 = vmatpush1.bf16.msra.mxu0 %v7736
    %8085 = vmatprep.subr.bf16.mxu0 %v7753
    %8086 = vmatpush1.bf16.msra.mxu0 %v7752
    %8087 = vmatprep.subr.bf16.mxu0 %v7769
    %8088 = vmatpush1.bf16.msra.mxu0 %v7768
    %8089 = vmatprep.subr.bf16.mxu0 %v7785
    %8090 = vmatpush1.bf16.msra.mxu0 %v7784
    %8091 = vmatprep.subr.bf16.mxu0 %v7801
    %8092 = vmatpush1.bf16.msra.mxu0 %v7800
    %8093 = vmatprep.subr.bf16.mxu0 %v7817
    %8094 = vmatpush1.bf16.msra.mxu0 %v7816
    %8095 = vmatprep.subr.bf16.mxu0 %v7833
    %8096 = vmatpush1.bf16.msra.mxu0 %v7832
    %8097 = vmatprep.subr.bf16.mxu0 %v7849
    %8098 = vmatpush1.bf16.msra.mxu0 %v7848
    %8099 = vmatprep.subr.bf16.mxu0 0
    %8100 = vmatpush1.bf16.msra.mxu0 0
    %8101 = vmatprep.subr.bf16.mxu0 0
    %8102 = vmatpush1.bf16.msra.mxu0 0
    %8103 = vmatprep.subr.bf16.mxu0 0
    %8104 = vmatpush1.bf16.msra.mxu0 0
    %8105 = vmatprep.subr.bf16.mxu0 0
    %8106 = vmatpush1.bf16.msra.mxu0 0
    %8107 = vmatprep.subr.bf16.mxu0 0
    %8108 = vmatpush1.bf16.msra.mxu0 0
    %8109 = vmatprep.subr.bf16.mxu0 0
    %8110 = vmatpush1.bf16.msra.mxu0 0
    %8111 = vmatprep.subr.bf16.mxu0 0
    %8112 = vmatpush1.bf16.msra.mxu0 0
    %8113 = vmatprep.mubr.bf16.mxu0 %v7864
    %8114 = vmatmul.mubr.bf16.gmra.mrb[0].mxu0 %v7860
    %v8115 = vpop.f32.mrb[0].mxu0
    %v8116 = vadd.f32 0.0, %v8115
    %v8117 = vpop.f32.mrb[0].mxu0
    %v8118 = vadd.f32 0.0, %v8117
    %v8119 = vpop.f32.mrb[0].mxu0
    %v8120 = vadd.f32 0.0, %v8119
    %v8121 = vpop.f32.mrb[0].mxu0
    %v8122 = vadd.f32 0.0, %v8121
    %8123 = vdwg.mxu0
    %8124 = vmatprep.subr.bf16.mxu0 %v7723
    %8125 = vmatpush1.bf16.msra.mxu0 %v7722
    %8126 = vmatprep.subr.bf16.mxu0 %v7739
    %8127 = vmatpush1.bf16.msra.mxu0 %v7738
    %8128 = vmatprep.subr.bf16.mxu0 %v7755
    %8129 = vmatpush1.bf16.msra.mxu0 %v7754
    %8130 = vmatprep.subr.bf16.mxu0 %v7771
    %8131 = vmatpush1.bf16.msra.mxu0 %v7770
    %8132 = vmatprep.subr.bf16.mxu0 %v7787
    %8133 = vmatpush1.bf16.msra.mxu0 %v7786
    %8134 = vmatprep.subr.bf16.mxu0 %v7803
    %8135 = vmatpush1.bf16.msra.mxu0 %v7802
    %8136 = vmatprep.subr.bf16.mxu0 %v7819
    %8137 = vmatpush1.bf16.msra.mxu0 %v7818
    %8138 = vmatprep.subr.bf16.mxu0 %v7835
    %8139 = vmatpush1.bf16.msra.mxu0 %v7834
    %8140 = vmatprep.subr.bf16.mxu0 %v7851
    %8141 = vmatpush1.bf16.msra.mxu0 %v7850
    %8142 = vmatprep.subr.bf16.mxu0 0
    %8143 = vmatpush1.bf16.msra.mxu0 0
    %8144 = vmatprep.subr.bf16.mxu0 0
    %8145 = vmatpush1.bf16.msra.mxu0 0
    %8146 = vmatprep.subr.bf16.mxu0 0
    %8147 = vmatpush1.bf16.msra.mxu0 0
    %8148 = vmatprep.subr.bf16.mxu0 0
    %8149 = vmatpush1.bf16.msra.mxu0 0
    %8150 = vmatprep.subr.bf16.mxu0 0
    %8151 = vmatpush1.bf16.msra.mxu0 0
    %8152 = vmatprep.subr.bf16.mxu0 0
    %8153 = vmatpush1.bf16.msra.mxu0 0
    %8154 = vmatprep.subr.bf16.mxu0 0
    %8155 = vmatpush1.bf16.msra.mxu0 0
    %8156 = vmatprep.mubr.bf16.mxu0 %v7864
    %8157 = vmatmul.mubr.bf16.gmra.mrb[0].mxu0 %v7860
    %v8158 = vpop.f32.mrb[0].mxu0
    %v8159 = vadd.f32 0.0, %v8158
    %v8160 = vpop.f32.mrb[0].mxu0
    %v8161 = vadd.f32 0.0, %v8160
    %v8162 = vpop.f32.mrb[0].mxu0
    %v8163 = vadd.f32 0.0, %v8162
    %v8164 = vpop.f32.mrb[0].mxu0
    %v8165 = vadd.f32 0.0, %v8164
    %8166 = vdwg.mxu0
    %8167 = vmatprep.subr.bf16.mxu0 %v7725
    %8168 = vmatpush1.bf16.msra.mxu0 %v7724
    %8169 = vmatprep.subr.bf16.mxu0 %v7741
    %8170 = vmatpush1.bf16.msra.mxu0 %v7740
    %8171 = vmatprep.subr.bf16.mxu0 %v7757
    %8172 = vmatpush1.bf16.msra.mxu0 %v7756
    %8173 = vmatprep.subr.bf16.mxu0 %v7773
    %8174 = vmatpush1.bf16.msra.mxu0 %v7772
    %8175 = vmatprep.subr.bf16.mxu0 %v7789
    %8176 = vmatpush1.bf16.msra.mxu0 %v7788
    %8177 = vmatprep.subr.bf16.mxu0 %v7805
    %8178 = vmatpush1.bf16.msra.mxu0 %v7804
    %8179 = vmatprep.subr.bf16.mxu0 %v7821
    %8180 = vmatpush1.bf16.msra.mxu0 %v7820
    %8181 = vmatprep.subr.bf16.mxu0 %v7837
    %8182 = vmatpush1.bf16.msra.mxu0 %v7836
    %8183 = vmatprep.subr.bf16.mxu0 %v7853
    %8184 = vmatpush1.bf16.msra.mxu0 %v7852
    %8185 = vmatprep.subr.bf16.mxu0 0
    %8186 = vmatpush1.bf16.msra.mxu0 0
    %8187 = vmatprep.subr.bf16.mxu0 0
    %8188 = vmatpush1.bf16.msra.mxu0 0
    %8189 = vmatprep.subr.bf16.mxu0 0
    %8190 = vmatpush1.bf16.msra.mxu0 0
    %8191 = vmatprep.subr.bf16.mxu0 0
    %8192 = vmatpush1.bf16.msra.mxu0 0
    %8193 = vmatprep.subr.bf16.mxu0 0
    %8194 = vmatpush1.bf16.msra.mxu0 0
    %8195 = vmatprep.subr.bf16.mxu0 0
    %8196 = vmatpush1.bf16.msra.mxu0 0
    %8197 = vmatprep.subr.bf16.mxu0 0
    %8198 = vmatpush1.bf16.msra.mxu0 0
    %8199 = vmatprep.mubr.bf16.mxu0 %v7864
    %8200 = vmatmul.mubr.bf16.gmra.mrb[0].mxu0 %v7860
    %v8201 = vpop.f32.mrb[0].mxu0
    %v8202 = vadd.f32 0.0, %v8201
    %v8203 = vpop.f32.mrb[0].mxu0
    %v8204 = vadd.f32 0.0, %v8203
    %v8205 = vpop.f32.mrb[0].mxu0
    %v8206 = vadd.f32 0.0, %v8205
    %v8207 = vpop.f32.mrb[0].mxu0
    %v8208 = vadd.f32 0.0, %v8207
    %8209 = vdwg.mxu0
    %v8210 = vld [vmem:[#allocation7] sm:$0xff]
    %v8211 = vld [vmem:[#allocation7 + $0x8] sm:$0xff]
    %v8212 = vld [vmem:[#allocation7 + $0x10] sm:$0xff]
    %v8213 = vld [vmem:[#allocation7 + $0x18] sm:$0xff]
    %v8214 = vld [vmem:[#allocation7 + $0x20] sm:$0xff]
    %v8215 = vld [vmem:[#allocation7 + $0x28] sm:$0xff]
    %v8216 = vld [vmem:[#allocation7 + $0x30] sm:$0xff]
    %v8217 = vld [vmem:[#allocation7 + $0x38] sm:$0xff]
    %v8218 = vld [vmem:[#allocation7 + $0x40] sm:$0xff]
    %v8219 = vld [vmem:[#allocation7 + $0x48] sm:$0xff]
    %v8220 = vld [vmem:[#allocation7 + $0x50] sm:$0xff]
    %v8221 = vld [vmem:[#allocation7 + $0x58] sm:$0xff]
    %v8222 = vld [vmem:[#allocation7 + $0x60] sm:$0xff]
    %v8223 = vld [vmem:[#allocation7 + $0x68] sm:$0xff]
    %v8224 = vld [vmem:[#allocation7 + $0x70] sm:$0xff]
    %v8225 = vld [vmem:[#allocation7 + $0x78] sm:$0xff]
    %v8226 = vld [vmem:[#allocation7 + $0x80] sm:$0xff]
    %v8227 = vld [vmem:[#allocation7 + $0x88] sm:$0xff]
    %v8228 = vld [vmem:[#allocation7 + $0x90] sm:$0xff]
    %v8229 = vld [vmem:[#allocation7 + $0x98] sm:$0xff]
    %v8230 = vld [vmem:[#allocation7 + $0xa0] sm:$0xff]
    %v8231 = vld [vmem:[#allocation7 + $0xa8] sm:$0xff]
    %v8232 = vld [vmem:[#allocation7 + $0xb0] sm:$0xff]
    %v8233 = vld [vmem:[#allocation7 + $0xb8] sm:$0xff]
    %v8234 = vld [vmem:[#allocation7 + $0xc0] sm:$0xff]
    %v8235 = vld [vmem:[#allocation7 + $0xc8] sm:$0xff]
    %v8236 = vld [vmem:[#allocation7 + $0xd0] sm:$0xff]
    %v8237 = vld [vmem:[#allocation7 + $0xd8] sm:$0xff]
    %v8238 = vld [vmem:[#allocation7 + $0xe0] sm:$0xff]
    %v8239 = vld [vmem:[#allocation7 + $0xe8] sm:$0xff]
    %v8240 = vld [vmem:[#allocation7 + $0xf0] sm:$0xff]
    %v8241 = vld [vmem:[#allocation7 + $0xf8] sm:$0xff]
    %v8242 = vadd.f32 %v8210, %v7901
    %v8243 = vadd.f32 %v8211, %v7903
    %v8244 = vadd.f32 %v8212, %v7944
    %v8245 = vadd.f32 %v8213, %v7946
    %v8246 = vadd.f32 %v8214, %v7987
    %v8247 = vadd.f32 %v8215, %v7989
    %v8248 = vadd.f32 %v8216, %v8030
    %v8249 = vadd.f32 %v8217, %v8032
    %v8250 = vadd.f32 %v8218, %v8073
    %v8251 = vadd.f32 %v8219, %v8075
    %v8252 = vadd.f32 %v8220, %v8116
    %v8253 = vadd.f32 %v8221, %v8118
    %v8254 = vadd.f32 %v8222, %v8159
    %v8255 = vadd.f32 %v8223, %v8161
    %v8256 = vadd.f32 %v8224, %v8202
    %v8257 = vadd.f32 %v8225, %v8204
    %v8258 = vadd.f32 %v8226, %v7905
    %v8259 = vadd.f32 %v8227, %v7907
    %v8260 = vadd.f32 %v8228, %v7948
    %v8261 = vadd.f32 %v8229, %v7950
    %v8262 = vadd.f32 %v8230, %v7991
    %v8263 = vadd.f32 %v8231, %v7993
    %v8264 = vadd.f32 %v8232, %v8034
    %v8265 = vadd.f32 %v8233, %v8036
    %v8266 = vadd.f32 %v8234, %v8077
    %v8267 = vadd.f32 %v8235, %v8079
    %v8268 = vadd.f32 %v8236, %v8120
    %v8269 = vadd.f32 %v8237, %v8122
    %v8270 = vadd.f32 %v8238, %v8163
    %v8271 = vadd.f32 %v8239, %v8165
    %v8272 = vadd.f32 %v8240, %v8206
    %v8273 = vadd.f32 %v8241, %v8208
    %v8274 = vmul.f32 %v8242, %v2164
    %v8275 = vmul.f32 %v8243, %v2168
    %v8276 = vmul.f32 %v8244, %v2172
    %v8277 = vmul.f32 %v8245, %v2176
    %v8278 = vmul.f32 %v8246, %v2180
    %v8279 = vmul.f32 %v8247, %v2184
    %v8280 = vmul.f32 %v8248, %v2188
    %v8281 = vmul.f32 %v8249, %v2192
    %v8282 = vmul.f32 %v8250, %v2196
    %v8283 = vmul.f32 %v8251, %v2200
    %v8284 = vmul.f32 %v8252, %v2204
    %v8285 = vmul.f32 %v8253, %v2208
    %v8286 = vmul.f32 %v8254, %v2212
    %v8287 = vmul.f32 %v8255, %v2216
    %v8288 = vmul.f32 %v8256, %v2220
    %v8289 = vmul.f32 %v8257, %v2224
    %v8290 = vmul.f32 %v8258, %v2164
    %v8291 = vmul.f32 %v8259, %v2168
    %v8292 = vmul.f32 %v8260, %v2172
    %v8293 = vmul.f32 %v8261, %v2176
    %v8294 = vmul.f32 %v8262, %v2180
    %v8295 = vmul.f32 %v8263, %v2184
    %v8296 = vmul.f32 %v8264, %v2188
    %v8297 = vmul.f32 %v8265, %v2192
    %v8298 = vmul.f32 %v8266, %v2196
    %v8299 = vmul.f32 %v8267, %v2200
    %v8300 = vmul.f32 %v8268, %v2204
    %v8301 = vmul.f32 %v8269, %v2208
    %v8302 = vmul.f32 %v8270, %v2212
    %v8303 = vmul.f32 %v8271, %v2216
    %v8304 = vmul.f32 %v8272, %v2220
    %v8305 = vmul.f32 %v8273, %v2224
    %v8306 = vadd.f32 %v8274, %v8275
    %v8307 = vadd.f32 %v8306, %v8276
    %v8308 = vadd.f32 %v8307, %v8277
    %v8309 = vadd.f32 %v8308, %v8278
    %v8310 = vadd.f32 %v8309, %v8279
    %v8311 = vadd.f32 %v8310, %v8280
    %v8312 = vadd.f32 %v8311, %v8281
    %v8313 = vadd.f32 %v8312, %v8282
    %v8314 = vadd.f32 %v8313, %v8283
    %v8315 = vadd.f32 %v8314, %v8284
    %v8316 = vadd.f32 %v8315, %v8285
    %v8317 = vadd.f32 %v8316, %v8286
    %v8318 = vadd.f32 %v8317, %v8287
    %v8319 = vadd.f32 %v8318, %v8288
    %v8320 = vadd.f32 %v8319, %v8289
    %8321 = vadd.xlane.f32.xlu0 %v8320
    %v8322 = vpop.xlane.xlu0 %8321
    %v8323 = vadd.f32 %v8290, %v8291
    %v8324 = vadd.f32 %v8323, %v8292
    %v8325 = vadd.f32 %v8324, %v8293
    %v8326 = vadd.f32 %v8325, %v8294
    %v8327 = vadd.f32 %v8326, %v8295
    %v8328 = vadd.f32 %v8327, %v8296
    %v8329 = vadd.f32 %v8328, %v8297
    %v8330 = vadd.f32 %v8329, %v8298
    %v8331 = vadd.f32 %v8330, %v8299
    %v8332 = vadd.f32 %v8331, %v8300
    %v8333 = vadd.f32 %v8332, %v8301
    %v8334 = vadd.f32 %v8333, %v8302
    %v8335 = vadd.f32 %v8334, %v8303
    %v8336 = vadd.f32 %v8335, %v8304
    %v8337 = vadd.f32 %v8336, %v8305
    %8338 = vadd.xlane.f32.xlu0 %v8337
    %v8339 = vpop.xlane.xlu0 %8338
    %v8340 = vmul.f32 %v8274, %v8274
    %v8341 = vmul.f32 %v8275, %v8275
    %v8342 = vmul.f32 %v8276, %v8276
    %v8343 = vmul.f32 %v8277, %v8277
    %v8344 = vmul.f32 %v8278, %v8278
    %v8345 = vmul.f32 %v8279, %v8279
    %v8346 = vmul.f32 %v8280, %v8280
    %v8347 = vmul.f32 %v8281, %v8281
    %v8348 = vmul.f32 %v8282, %v8282
    %v8349 = vmul.f32 %v8283, %v8283
    %v8350 = vmul.f32 %v8284, %v8284
    %v8351 = vmul.f32 %v8285, %v8285
    %v8352 = vmul.f32 %v8286, %v8286
    %v8353 = vmul.f32 %v8287, %v8287
    %v8354 = vmul.f32 %v8288, %v8288
    %v8355 = vmul.f32 %v8289, %v8289
    %v8356 = vmul.f32 %v8290, %v8290
    %v8357 = vmul.f32 %v8291, %v8291
    %v8358 = vmul.f32 %v8292, %v8292
    %v8359 = vmul.f32 %v8293, %v8293
    %v8360 = vmul.f32 %v8294, %v8294
    %v8361 = vmul.f32 %v8295, %v8295
    %v8362 = vmul.f32 %v8296, %v8296
    %v8363 = vmul.f32 %v8297, %v8297
    %v8364 = vmul.f32 %v8298, %v8298
    %v8365 = vmul.f32 %v8299, %v8299
    %v8366 = vmul.f32 %v8300, %v8300
    %v8367 = vmul.f32 %v8301, %v8301
    %v8368 = vmul.f32 %v8302, %v8302
    %v8369 = vmul.f32 %v8303, %v8303
    %v8370 = vmul.f32 %v8304, %v8304
    %v8371 = vmul.f32 %v8305, %v8305
    %v8372 = vadd.f32 %v8340, %v8341
    %v8373 = vadd.f32 %v8372, %v8342
    %v8374 = vadd.f32 %v8373, %v8343
    %v8375 = vadd.f32 %v8374, %v8344
    %v8376 = vadd.f32 %v8375, %v8345
    %v8377 = vadd.f32 %v8376, %v8346
    %v8378 = vadd.f32 %v8377, %v8347
    %v8379 = vadd.f32 %v8378, %v8348
    %v8380 = vadd.f32 %v8379, %v8349
    %v8381 = vadd.f32 %v8380, %v8350
    %v8382 = vadd.f32 %v8381, %v8351
    %v8383 = vadd.f32 %v8382, %v8352
    %v8384 = vadd.f32 %v8383, %v8353
    %v8385 = vadd.f32 %v8384, %v8354
    %v8386 = vadd.f32 %v8385, %v8355
    %8387 = vadd.xlane.f32.xlu0 %v8386
    %v8388 = vpop.xlane.xlu0 %8387
    %v8389 = vadd.f32 %v8356, %v8357
    %v8390 = vadd.f32 %v8389, %v8358
    %v8391 = vadd.f32 %v8390, %v8359
    %v8392 = vadd.f32 %v8391, %v8360
    %v8393 = vadd.f32 %v8392, %v8361
    %v8394 = vadd.f32 %v8393, %v8362
    %v8395 = vadd.f32 %v8394, %v8363
    %v8396 = vadd.f32 %v8395, %v8364
    %v8397 = vadd.f32 %v8396, %v8365
    %v8398 = vadd.f32 %v8397, %v8366
    %v8399 = vadd.f32 %v8398, %v8367
    %v8400 = vadd.f32 %v8399, %v8368
    %v8401 = vadd.f32 %v8400, %v8369
    %v8402 = vadd.f32 %v8401, %v8370
    %v8403 = vadd.f32 %v8402, %v8371
    %8404 = vadd.xlane.f32.xlu0 %v8403
    %v8405 = vpop.xlane.xlu0 %8404
    %v8406 = vmul.f32 %v8322, 0.001953125
    %v8407 = vmul.f32 %v8339, 0.001953125
    %v8408 = vmul.f32 %v8388, 0.001953125
    %v8409 = vmul.f32 %v8405, 0.001953125
    %v8410 = vmul.f32 %v8406, %v8406
    %v8411 = vmul.f32 %v8407, %v8407
    %v8412 = vsub.f32 %v8408, %v8410
    %v8413 = vsub.f32 %v8409, %v8411
    %v8414 = vld [vmem:[#allocation12] sm:$0xff]
    %v8415 = vld [vmem:[#allocation12 + $0x8] sm:$0xff]
    %v8416 = vadd.f32 %v8412, 0.001
    %v8417 = vadd.f32 %v8413, 0.001
    %v8418 = vrsqrt.pop %v8416
    %v8419 = vrsqrt.pop %v8417
    %v8420 = vmul.f32 %v8414, %v8418
    %v8421 = vmul.f32 %v8415, %v8419
    %v8422 = vld [vmem:[#allocation13] sm:$0xff]
    %v8423 = vld [vmem:[#allocation13 + $0x8] sm:$0xff]
    %v8424 = vmul.f32 %v8406, %v8420
    %v8425 = vmul.f32 %v8407, %v8421
    %v8426 = vsub.f32 %v8422, %v8424
    %v8427 = vsub.f32 %v8423, %v8425
    %8429 = vset.pattern.permute.xlu0 0
    %8430 = vperm.xlu0 %8429, %v8420
    %v8431 = vpop.permute.xlu0 %8430
    %8434 = vset.pattern.permute.xlu0 0
    %8435 = vperm.xlu0 %8434, %v8421
    %v8436 = vpop.permute.xlu0 %8435
    %v8438 = vmul.f32 %v8274, %v8431
    %v8439 = vmul.f32 %v8275, %v8431
    %v8440 = vmul.f32 %v8276, %v8431
    %v8441 = vmul.f32 %v8277, %v8431
    %v8442 = vmul.f32 %v8278, %v8431
    %v8443 = vmul.f32 %v8279, %v8431
    %v8444 = vmul.f32 %v8280, %v8431
    %v8445 = vmul.f32 %v8281, %v8431
    %v8446 = vmul.f32 %v8282, %v8431
    %v8447 = vmul.f32 %v8283, %v8431
    %v8448 = vmul.f32 %v8284, %v8431
    %v8449 = vmul.f32 %v8285, %v8431
    %v8450 = vmul.f32 %v8286, %v8431
    %v8451 = vmul.f32 %v8287, %v8431
    %v8452 = vmul.f32 %v8288, %v8431
    %v8453 = vmul.f32 %v8289, %v8431
    %v8454 = vmul.f32 %v8290, %v8436
    %v8455 = vmul.f32 %v8291, %v8436
    %v8456 = vmul.f32 %v8292, %v8436
    %v8457 = vmul.f32 %v8293, %v8436
    %v8458 = vmul.f32 %v8294, %v8436
    %v8459 = vmul.f32 %v8295, %v8436
    %v8460 = vmul.f32 %v8296, %v8436
    %v8461 = vmul.f32 %v8297, %v8436
    %v8462 = vmul.f32 %v8298, %v8436
    %v8463 = vmul.f32 %v8299, %v8436
    %v8464 = vmul.f32 %v8300, %v8436
    %v8465 = vmul.f32 %v8301, %v8436
    %v8466 = vmul.f32 %v8302, %v8436
    %v8467 = vmul.f32 %v8303, %v8436
    %v8468 = vmul.f32 %v8304, %v8436
    %v8469 = vmul.f32 %v8305, %v8436
    %8471 = vset.pattern.permute.xlu0 0
    %8472 = vperm.xlu0 %8471, %v8426
    %v8473 = vpop.permute.xlu0 %8472
    %8476 = vset.pattern.permute.xlu0 0
    %8477 = vperm.xlu0 %8476, %v8427
    %v8478 = vpop.permute.xlu0 %8477
    %v8480 = vadd.f32 %v8438, %v8473
    %v8481 = vadd.f32 %v8439, %v8473
    %v8482 = vadd.f32 %v8440, %v8473
    %v8483 = vadd.f32 %v8441, %v8473
    %v8484 = vadd.f32 %v8442, %v8473
    %v8485 = vadd.f32 %v8443, %v8473
    %v8486 = vadd.f32 %v8444, %v8473
    %v8487 = vadd.f32 %v8445, %v8473
    %v8488 = vadd.f32 %v8446, %v8473
    %v8489 = vadd.f32 %v8447, %v8473
    %v8490 = vadd.f32 %v8448, %v8473
    %v8491 = vadd.f32 %v8449, %v8473
    %v8492 = vadd.f32 %v8450, %v8473
    %v8493 = vadd.f32 %v8451, %v8473
    %v8494 = vadd.f32 %v8452, %v8473
    %v8495 = vadd.f32 %v8453, %v8473
    %v8496 = vadd.f32 %v8454, %v8478
    %v8497 = vadd.f32 %v8455, %v8478
    %v8498 = vadd.f32 %v8456, %v8478
    %v8499 = vadd.f32 %v8457, %v8478
    %v8500 = vadd.f32 %v8458, %v8478
    %v8501 = vadd.f32 %v8459, %v8478
    %v8502 = vadd.f32 %v8460, %v8478
    %v8503 = vadd.f32 %v8461, %v8478
    %v8504 = vadd.f32 %v8462, %v8478
    %v8505 = vadd.f32 %v8463, %v8478
    %v8506 = vadd.f32 %v8464, %v8478
    %v8507 = vadd.f32 %v8465, %v8478
    %v8508 = vadd.f32 %v8466, %v8478
    %v8509 = vadd.f32 %v8467, %v8478
    %v8510 = vadd.f32 %v8468, %v8478
    %v8511 = vadd.f32 %v8469, %v8478
    %v8512 = vmax.f32 %v8480, 0.0
    %v8513 = vmax.f32 %v8481, 0.0
    %v8514 = vmax.f32 %v8482, 0.0
    %v8515 = vmax.f32 %v8483, 0.0
    %v8516 = vmax.f32 %v8484, 0.0
    %v8517 = vmax.f32 %v8485, 0.0
    %v8518 = vmax.f32 %v8486, 0.0
    %v8519 = vmax.f32 %v8487, 0.0
    %v8520 = vmax.f32 %v8488, 0.0
    %v8521 = vmax.f32 %v8489, 0.0
    %v8522 = vmax.f32 %v8490, 0.0
    %v8523 = vmax.f32 %v8491, 0.0
    %v8524 = vmax.f32 %v8492, 0.0
    %v8525 = vmax.f32 %v8493, 0.0
    %v8526 = vmax.f32 %v8494, 0.0
    %v8527 = vmax.f32 %v8495, 0.0
    %v8528 = vmax.f32 %v8496, 0.0
    %v8529 = vmax.f32 %v8497, 0.0
    %v8530 = vmax.f32 %v8498, 0.0
    %v8531 = vmax.f32 %v8499, 0.0
    %v8532 = vmax.f32 %v8500, 0.0
    %v8533 = vmax.f32 %v8501, 0.0
    %v8534 = vmax.f32 %v8502, 0.0
    %v8535 = vmax.f32 %v8503, 0.0
    %v8536 = vmax.f32 %v8504, 0.0
    %v8537 = vmax.f32 %v8505, 0.0
    %v8538 = vmax.f32 %v8506, 0.0
    %v8539 = vmax.f32 %v8507, 0.0
    %v8540 = vmax.f32 %v8508, 0.0
    %v8541 = vmax.f32 %v8509, 0.0
    %v8542 = vmax.f32 %v8510, 0.0
    %v8543 = vmax.f32 %v8511, 0.0
    %8544 = vst [vmem:[#allocation16] sm:$0xff] %v8512
    %8545 = vst [vmem:[#allocation16 + $0x8] sm:$0xff] %v8513
    %8546 = vst [vmem:[#allocation16 + $0x10] sm:$0xff] %v8514
    %8547 = vst [vmem:[#allocation16 + $0x18] sm:$0xff] %v8515
    %8548 = vst [vmem:[#allocation16 + $0x20] sm:$0xff] %v8516
    %8549 = vst [vmem:[#allocation16 + $0x28] sm:$0xff] %v8517
    %8550 = vst [vmem:[#allocation16 + $0x30] sm:$0xff] %v8518
    %8551 = vst [vmem:[#allocation16 + $0x38] sm:$0xff] %v8519
    %8552 = vst [vmem:[#allocation16 + $0x40] sm:$0xff] %v8520
    %8553 = vst [vmem:[#allocation16 + $0x48] sm:$0xff] %v8521
    %8554 = vst [vmem:[#allocation16 + $0x50] sm:$0xff] %v8522
    %8555 = vst [vmem:[#allocation16 + $0x58] sm:$0xff] %v8523
    %8556 = vst [vmem:[#allocation16 + $0x60] sm:$0xff] %v8524
    %8557 = vst [vmem:[#allocation16 + $0x68] sm:$0xff] %v8525
    %8558 = vst [vmem:[#allocation16 + $0x70] sm:$0xff] %v8526
    %8559 = vst [vmem:[#allocation16 + $0x78] sm:$0xff] %v8527
    %8560 = vst [vmem:[#allocation16 + $0x80] sm:$0xff] %v8528
    %8561 = vst [vmem:[#allocation16 + $0x88] sm:$0xff] %v8529
    %8562 = vst [vmem:[#allocation16 + $0x90] sm:$0xff] %v8530
    %8563 = vst [vmem:[#allocation16 + $0x98] sm:$0xff] %v8531
    %8564 = vst [vmem:[#allocation16 + $0xa0] sm:$0xff] %v8532
    %8565 = vst [vmem:[#allocation16 + $0xa8] sm:$0xff] %v8533
    %8566 = vst [vmem:[#allocation16 + $0xb0] sm:$0xff] %v8534
    %8567 = vst [vmem:[#allocation16 + $0xb8] sm:$0xff] %v8535
    %8568 = vst [vmem:[#allocation16 + $0xc0] sm:$0xff] %v8536
    %8569 = vst [vmem:[#allocation16 + $0xc8] sm:$0xff] %v8537
    %8570 = vst [vmem:[#allocation16 + $0xd0] sm:$0xff] %v8538
    %8571 = vst [vmem:[#allocation16 + $0xd8] sm:$0xff] %v8539
    %8572 = vst [vmem:[#allocation16 + $0xe0] sm:$0xff] %v8540
    %8573 = vst [vmem:[#allocation16 + $0xe8] sm:$0xff] %v8541
    %8574 = vst [vmem:[#allocation16 + $0xf0] sm:$0xff] %v8542
    %8575 = vst [vmem:[#allocation16 + $0xf8] sm:$0xff] %v8543
    // Predicated region
    $region58: #{tpu_custom_call.1} parent=1 // pred_check
      _
    $region59: #{tpu_custom_call.1} parent=1 // pred_check_branch
      %8577 = sbr.rel (0) target = $region61
    $region60: #{tpu_custom_call.1} parent=1 // pred_region
      %s8579 = ssub.s32 4096, 4096
      %8580 = vsyncadd [#allocation6], %s8579
      %s8581 = sshll.u32 [#allocation16], 4
      %s8582 = int_to_ptr.vmem [resolvable:$true] %s8581
      %8587 = dma.vmem_to_hbm [thread:$0]  %s8582, 4096, %s7, [#allocation6], 2048, 2048, 128
    $region61: #{tpu_custom_call.1} parent=1 // pred_fallthru
      _
    // Predicated region
    $region62: #{tpu_custom_call.1} parent=1 // pred_check
      _
    $region63: #{tpu_custom_call.1} parent=1 // pred_check_branch
      %8589 = sbr.rel (0) target = $region65
    $region64: #{tpu_custom_call.1} parent=1 // pred_region
      %8590 = dma.done [#allocation6], 4096
    $region65: #{tpu_custom_call.1} parent=1 // pred_fallthru
      _
    %8591 = vsyncpa [#allocation5], 1
    %8592 = vsyncpa [#allocation8], 1
    %8593 = vsyncpa [#allocation11], 1
    %8594 = vsyncpa [#allocation14], 1
    %8595 = vsyncpa [#allocation6], 1

</llo_original>
